<compile_context>
chip_gen: v7x
topology: tpu7x:2x2x1
jax: 0.10.0
libtpu: 0.0.40
codegen_flags: <defaults>
</compile_context>

<pallas_src>
import functools

import jax
import jax.numpy as jnp
from jax.experimental import pallas as pl
from jax.experimental.pallas import tpu as pltpu

EPS_BN = 1e-5
F32 = jnp.float32
BF16 = jnp.bfloat16


# ------------------------------ fused kernel ------------------------------- #

def fused_spline_net_kernel(
        # graph-level inputs
        xk1_ref, xbf_ref, gath_ref, scat_ref, coef_ref, mask_ref,
        # conv1 (+ relu + bn1)
        w1_ref, w1r_ref, b1_ref, s1_ref, t1_ref,
        # conv2 (+ relu + bn2)
        w2_ref, w2r_ref, b2_ref, s2_ref, t2_ref,
        # lin1 (weight split into x1 / x2 halves -> no lane concat needed)
        wla_ref, wlb_ref, bl_ref, sl_ref, tl_ref,
        # final head: fc1 / fc2 / fc3
        wf1_ref, bf1_ref, sf1_ref, tf1_ref,
        wf2_ref, bf2_ref, sf2_ref, tf2_ref,
        wf3_ref, bf3_ref,
        # output
        out_ref,
        # scratch
        xk2_ref, pool_ref):
    scat = scat_ref[...]                       # (N, E) f32 mean-aggregation matrix
    coef = coef_ref[...]                       # (E, Kt) bf16 spline-basis coefs

    # ---- conv1: single big-K matmul over pre-expanded (E, Kt*Fin) operand ----
    msg1 = jnp.dot(xk1_ref[...], w1_ref[...], preferred_element_type=F32)   # (E,128)
    agg1 = jnp.dot(scat, msg1, preferred_element_type=F32)                  # (N,128)
    root1 = jnp.dot(xbf_ref[...], w1r_ref[...], preferred_element_type=F32)
    x1 = jnp.maximum(agg1 + root1 + b1_ref[...], 0.0) * s1_ref[...] + t1_ref[...]

    # ---- conv2: expand coef (x) gathered x1 into VMEM scratch, one matmul ----
    x1_bf = x1.astype(BF16)
    x1src = jnp.dot(gath_ref[...], x1_bf, preferred_element_type=F32).astype(BF16)
    kt = coef.shape[1]
    f1 = x1src.shape[1]
    for k in range(kt):                        # static unroll: VPU mult + aligned store
        xk2_ref[:, k * f1:(k + 1) * f1] = coef[:, k:k + 1] * x1src
    msg2 = jnp.dot(xk2_ref[...], w2_ref[...], preferred_element_type=F32)   # (E,128)
    agg2 = jnp.dot(scat, msg2, preferred_element_type=F32)                  # (N,128)
    root2 = jnp.dot(x1_bf, w2r_ref[...], preferred_element_type=F32)
    x2 = jnp.maximum(agg2 + root2 + b2_ref[...], 0.0) * s2_ref[...] + t2_ref[...]

    # ---- lin1 on concat([x1, x2]): split-weight form ----
    z = (jnp.dot(x1_bf, wla_ref[...], preferred_element_type=F32) +
         jnp.dot(x2.astype(BF16), wlb_ref[...], preferred_element_type=F32) +
         bl_ref[...])
    h = jnp.maximum(z, 0.0) * sl_ref[...] + tl_ref[...]                     # (N,256)

    # ---- global max pool over the nodes of each graph ----
    # TODO(synk): for large node counts / batches, scalar-prefetch per-graph node
    # offsets and reduce contiguous segments instead of a masked full-N pass per graph.
    mask = mask_ref[...]                                                    # (N, B)
    nb = pool_ref.shape[0]
    for b in range(nb):                                                     # B is tiny
        vals = jnp.where(mask[:, b:b + 1] > 0.5, h, jnp.float32(-1e30))
        pool_ref[b:b + 1, :] = jnp.max(vals, axis=0, keepdims=True)
    g = pool_ref[...]                                                       # (B, 256)

    # ---- final MLP head + log_softmax ----
    def dense_relu_bn(a, w_ref, b_ref, s_ref, t_ref):
        zz = jnp.dot(a.astype(BF16), w_ref[...],
                     preferred_element_type=F32) + b_ref[...]
        return jnp.maximum(zz, 0.0) * s_ref[...] + t_ref[...]

    g = dense_relu_bn(g, wf1_ref, bf1_ref, sf1_ref, tf1_ref)                # (B,256)
    g = dense_relu_bn(g, wf2_ref, bf2_ref, sf2_ref, tf2_ref)                # (B,128)
    logits = jnp.dot(g.astype(BF16), wf3_ref[...],
                     preferred_element_type=F32) + bf3_ref[...]             # (B, C)
    m = jnp.max(logits, axis=-1, keepdims=True)
    zc = logits - m
    lse = jnp.log(jnp.sum(jnp.exp(zc), axis=-1, keepdims=True))
    out_ref[...] = zc - lse


# ------------------------------- JAX "glue" -------------------------------- #

def spline_basis_coeffs(pseudo, kernel_size, dim):
    """Degree-1 open B-spline basis (matching torch_spline_conv), densified to
    an (E, kernel_size**dim) coefficient matrix."""
    e = pseudo.shape[0]
    kt = kernel_size ** dim
    v = pseudo.astype(F32) * (kernel_size - 1)       # open spline
    bot = jnp.floor(v)
    frac = v - bot
    bot = bot.astype(jnp.int32)
    coef = jnp.zeros((e, kt), F32)
    for s in range(2 ** dim):
        b = jnp.ones((e,), F32)
        wi = jnp.zeros((e,), jnp.int32)
        offset = 1
        for d in range(dim):
            km = (s >> d) & 1
            b = b * (frac[:, d] if km == 1 else (1.0 - frac[:, d]))
            # modulo wrap matches torch_spline_conv; the wrapped term carries
            # zero weight for degree-1 open splines so the result is identical.
            wi = wi + ((bot[:, d] + km) % kernel_size) * offset
            offset *= kernel_size
        coef = coef + b[:, None] * jax.nn.one_hot(wi, kt, dtype=F32)
    return coef


def scatter_mean_matrix(targets, num_nodes):
    # TODO(synk): dense (N, E) scatter matrix is O(N*E); for realistic graph
    # sizes replace with a tiled / scalar-prefetch scatter-accumulate (grid over
    # E marked 'arbitrary', accumulator in VMEM scratch).
    onehot = jax.nn.one_hot(targets, num_nodes, dtype=F32).T   # (N, E)
    counts = jnp.sum(onehot, axis=1, keepdims=True)
    return onehot / jnp.maximum(counts, 1.0)


def spline_conv_net(params, x, edge_index, pseudo, batch, num_graphs,
                    kernel_size=3, dim=3):
    n, fin = x.shape
    e = pseudo.shape[0]
    kt = kernel_size ** dim

    coef = spline_basis_coeffs(pseudo, kernel_size, dim)                 # (E, Kt)
    src, dst = edge_index[0], edge_index[1]

    x = x.astype(F32)
    xsrc = x[src]                                                        # (E, Fin)
    # conv1's expanded operand built by XLA (x is a direct input).
    xk1 = (coef[:, :, None] * xsrc[:, None, :]).reshape(e, kt * fin)     # (E, Kt*Fin)
    gath = jax.nn.one_hot(src, n, dtype=BF16)                            # (E, N)
    scat = scatter_mean_matrix(dst, n)                                   # (N, E) f32
    mask = jax.nn.one_hot(batch, num_graphs, dtype=F32)                  # (N, B)

    c1, c2 = params['conv1'], params['conv2']
    l1, p1, p2, p3 = params['lin1'], params['fc1'], params['fc2'], params['fc3']

    fout1 = c1['w_root'].shape[1]
    fout2 = c2['w_root'].shape[1]
    hdim = l1['w'].shape[1]
    classes = p3['w'].shape[1]

    w1 = c1['w'].reshape(kt * fin, fout1).astype(BF16)
    w2 = c2['w'].reshape(kt * fout1, fout2).astype(BF16)
    wl = l1['w'].astype(BF16)
    wla, wlb = wl[:fout1], wl[fout1:]                                    # (128, 256) each

    args = (
        xk1.astype(BF16), x.astype(BF16), gath, scat, coef.astype(BF16), mask,
        w1, c1['w_root'].astype(BF16), c1['bias'], c1['bn_scale'], c1['bn_shift'],
        w2, c2['w_root'].astype(BF16), c2['bias'], c2['bn_scale'], c2['bn_shift'],
        wla, wlb, l1['b'], l1['bn_scale'], l1['bn_shift'],
        p1['w'].astype(BF16), p1['b'], p1['bn_scale'], p1['bn_shift'],
        p2['w'].astype(BF16), p2['b'], p2['bn_scale'], p2['bn_shift'],
        p3['w'].astype(BF16), p3['b'],
    )

    return pl.pallas_call(
        fused_spline_net_kernel,
        out_shape=jax.ShapeDtypeStruct((num_graphs, classes), F32),
        in_specs=[pl.BlockSpec(memory_space=pltpu.MemorySpace.VMEM)
                  for _ in args],
        out_specs=pl.BlockSpec(memory_space=pltpu.MemorySpace.VMEM),
        scratch_shapes=[pltpu.VMEM((e, kt * fout1), BF16),      # conv2 expansion
                        pltpu.VMEM((num_graphs, hdim), F32)],   # pooled features
        compiler_params=pltpu.CompilerParams(
            vmem_limit_bytes=32 * 1024 * 1024),
    )(*args)


# ----------------------------- parameter init ------------------------------ #

def init_params(key, node_features, classes_num, kernel_size=3, dim=3):
    kt = kernel_size ** dim
    keys = jax.random.split(key, 8)

    def lin(k, fin, fout):
        s = 1.0 / jnp.sqrt(jnp.float32(fin))
        w = jax.random.uniform(k, (fin, fout), F32, -s, s)
        return w, jnp.zeros((1, fout), F32)

    def bn(f):
        gamma = jnp.ones((1, f), F32)
        beta = jnp.zeros((1, f), F32)
        rm = jnp.zeros((1, f), F32)
        rv = jnp.ones((1, f), F32)
        scale = gamma / jnp.sqrt(rv + EPS_BN)
        shift = beta - rm * scale
        return scale, shift

    def spline(k, fin, fout):
        k1, k2 = jax.random.split(k)
        s = 1.0 / jnp.sqrt(jnp.float32(fin))
        sc, sh = bn(fout)
        return dict(
            w=jax.random.uniform(k1, (kt, fin, fout), F32, -s, s),
            w_root=jax.random.uniform(k2, (fin, fout), F32, -s, s),
            bias=jnp.zeros((1, fout), F32),
            bn_scale=sc, bn_shift=sh)

    params = {}
    params['conv1'] = spline(keys[0], node_features, 128)
    params['conv2'] = spline(keys[1], 128, 128)
    w, b = lin(keys[2], 256, 256); sc, sh = bn(256)
    params['lin1'] = dict(w=w, b=b, bn_scale=sc, bn_shift=sh)
    w, b = lin(keys[3], 256, 256); sc, sh = bn(256)
    params['fc1'] = dict(w=w, b=b, bn_scale=sc, bn_shift=sh)
    w, b = lin(keys[4], 256, 128); sc, sh = bn(128)
    params['fc2'] = dict(w=w, b=b, bn_scale=sc, bn_shift=sh)
    w, b = lin(keys[5], 128, classes_num)
    params['fc3'] = dict(w=w, b=b)
    return params


# ---------------------------------- main ----------------------------------- #

if __name__ == "__main__":
    NODE_FEATURES, CLASSES, K = 16, 8, 3
    N, E, B = 32, 64, 2                     # nodes, edges, graphs

    key = jax.random.PRNGKey(0)
    kp, kx, ke, kpsd = jax.random.split(key, 4)
    params = init_params(kp, NODE_FEATURES, CLASSES, K)

    x = jax.random.normal(kx, (N, NODE_FEATURES), F32)
    # edges constrained within each graph (nodes 0..15 -> graph 0, 16..31 -> graph 1)
    half = E // 2
    src0 = jax.random.randint(jax.random.fold_in(ke, 0), (half,), 0, N // 2)
    dst0 = jax.random.randint(jax.random.fold_in(ke, 1), (half,), 0, N // 2)
    src1 = jax.random.randint(jax.random.fold_in(ke, 2), (half,), N // 2, N)
    dst1 = jax.random.randint(jax.random.fold_in(ke, 3), (half,), N // 2, N)
    edge_index = jnp.stack([jnp.concatenate([src0, src1]),
                            jnp.concatenate([dst0, dst1])], axis=0).astype(jnp.int32)
    pseudo = jax.random.uniform(kpsd, (E, 3), F32)                 # in [0, 1]^3
    batch = jnp.concatenate([jnp.zeros((N // 2,), jnp.int32),
                             jnp.ones((N // 2,), jnp.int32)])

    fwd = jax.jit(functools.partial(spline_conv_net, num_graphs=B, kernel_size=K))
    out = fwd(params, x, edge_index, pseudo, batch)
    jax.block_until_ready(out)
    assert out.shape == (B, CLASSES), out.shape
    assert bool(jnp.all(jnp.isfinite(out))), "non-finite output"
    print("KERNEL_OK")
</pallas_src>

<mosaic_0001>
module attributes {stable_mosaic.version = 11 : i64} {
  func.func @fused_spline_net_kernel(%arg0: memref<64x432xbf16, #tpu.memory_space<vmem>>, %arg1: memref<32x16xbf16, #tpu.memory_space<vmem>>, %arg2: memref<64x32xbf16, #tpu.memory_space<vmem>>, %arg3: memref<32x64xf32, #tpu.memory_space<vmem>>, %arg4: memref<64x27xbf16, #tpu.memory_space<vmem>>, %arg5: memref<32x2xf32, #tpu.memory_space<vmem>>, %arg6: memref<432x128xbf16, #tpu.memory_space<vmem>>, %arg7: memref<16x128xbf16, #tpu.memory_space<vmem>>, %arg8: memref<1x128xf32, #tpu.memory_space<vmem>>, %arg9: memref<1x128xf32, #tpu.memory_space<vmem>>, %arg10: memref<1x128xf32, #tpu.memory_space<vmem>>, %arg11: memref<3456x128xbf16, #tpu.memory_space<vmem>>, %arg12: memref<128x128xbf16, #tpu.memory_space<vmem>>, %arg13: memref<1x128xf32, #tpu.memory_space<vmem>>, %arg14: memref<1x128xf32, #tpu.memory_space<vmem>>, %arg15: memref<1x128xf32, #tpu.memory_space<vmem>>, %arg16: memref<128x256xbf16, #tpu.memory_space<vmem>>, %arg17: memref<128x256xbf16, #tpu.memory_space<vmem>>, %arg18: memref<1x256xf32, #tpu.memory_space<vmem>>, %arg19: memref<1x256xf32, #tpu.memory_space<vmem>>, %arg20: memref<1x256xf32, #tpu.memory_space<vmem>>, %arg21: memref<256x256xbf16, #tpu.memory_space<vmem>>, %arg22: memref<1x256xf32, #tpu.memory_space<vmem>>, %arg23: memref<1x256xf32, #tpu.memory_space<vmem>>, %arg24: memref<1x256xf32, #tpu.memory_space<vmem>>, %arg25: memref<256x128xbf16, #tpu.memory_space<vmem>>, %arg26: memref<1x128xf32, #tpu.memory_space<vmem>>, %arg27: memref<1x128xf32, #tpu.memory_space<vmem>>, %arg28: memref<1x128xf32, #tpu.memory_space<vmem>>, %arg29: memref<128x8xbf16, #tpu.memory_space<vmem>>, %arg30: memref<1x8xf32, #tpu.memory_space<vmem>>, %arg31: memref<2x8xf32, #tpu.memory_space<vmem>>, %arg32: memref<64x3456xbf16, #tpu.memory_space<vmem>>, %arg33: memref<2x256xf32, #tpu.memory_space<vmem>>) attributes {dimension_semantics = [], scalar_prefetch = 0 : i64, scratch_operands = 2 : i64, tpu.core_type = #tpu.core_type<tc>} {
    %c0 = arith.constant 0 : index
    %c0_0 = arith.constant 0 : index
    %0 = vector.load %arg3[%c0, %c0_0] : memref<32x64xf32, #tpu.memory_space<vmem>>, vector<32x64xf32>
    %c0_1 = arith.constant 0 : index
    %c0_2 = arith.constant 0 : index
    %1 = vector.load %arg4[%c0_1, %c0_2] : memref<64x27xbf16, #tpu.memory_space<vmem>>, vector<64x27xbf16>
    %c0_3 = arith.constant 0 : index
    %c0_4 = arith.constant 0 : index
    %2 = vector.load %arg0[%c0_3, %c0_4] : memref<64x432xbf16, #tpu.memory_space<vmem>>, vector<64x432xbf16>
    %c0_5 = arith.constant 0 : index
    %c0_6 = arith.constant 0 : index
    %3 = vector.load %arg6[%c0_5, %c0_6] : memref<432x128xbf16, #tpu.memory_space<vmem>>, vector<432x128xbf16>
    %cst = arith.constant dense<0.000000e+00> : vector<64x128xf32>
    %4 = tpu.matmul %2, %3, %cst {dimension_numbers = #tpu.dot_dimension_numbers<[1], [0], [0], [1], [0, 0, 1, 1], [], []>} : vector<64x432xbf16>, vector<432x128xbf16>, vector<64x128xf32> -> vector<64x128xf32>
    %cst_7 = arith.constant dense<0.000000e+00> : vector<32x128xf32>
    %5 = tpu.matmul %0, %4, %cst_7 {dimension_numbers = #tpu.dot_dimension_numbers<[1], [0], [0], [1], [0, 0, 1, 1], [], []>} : vector<32x64xf32>, vector<64x128xf32>, vector<32x128xf32> -> vector<32x128xf32>
    %c0_8 = arith.constant 0 : index
    %c0_9 = arith.constant 0 : index
    %6 = vector.load %arg1[%c0_8, %c0_9] : memref<32x16xbf16, #tpu.memory_space<vmem>>, vector<32x16xbf16>
    %c0_10 = arith.constant 0 : index
    %c0_11 = arith.constant 0 : index
    %7 = vector.load %arg7[%c0_10, %c0_11] : memref<16x128xbf16, #tpu.memory_space<vmem>>, vector<16x128xbf16>
    %cst_12 = arith.constant dense<0.000000e+00> : vector<32x128xf32>
    %8 = tpu.matmul %6, %7, %cst_12 {dimension_numbers = #tpu.dot_dimension_numbers<[1], [0], [0], [1], [0, 0, 1, 1], [], []>} : vector<32x16xbf16>, vector<16x128xbf16>, vector<32x128xf32> -> vector<32x128xf32>
    %9 = arith.addf %5, %8 : vector<32x128xf32>
    %c0_13 = arith.constant 0 : index
    %c0_14 = arith.constant 0 : index
    %10 = vector.load %arg8[%c0_13, %c0_14] : memref<1x128xf32, #tpu.memory_space<vmem>>, vector<1x128xf32>
    %11 = vector.broadcast %10 : vector<1x128xf32> to vector<32x128xf32>
    %12 = arith.addf %9, %11 : vector<32x128xf32>
    %cst_15 = arith.constant 0.000000e+00 : f32
    %13 = vector.broadcast %cst_15 : f32 to vector<32x128xf32>
    %14 = arith.maximumf %12, %13 : vector<32x128xf32>
    %c0_16 = arith.constant 0 : index
    %c0_17 = arith.constant 0 : index
    %15 = vector.load %arg9[%c0_16, %c0_17] : memref<1x128xf32, #tpu.memory_space<vmem>>, vector<1x128xf32>
    %16 = vector.broadcast %15 : vector<1x128xf32> to vector<32x128xf32>
    %17 = arith.mulf %14, %16 : vector<32x128xf32>
    %c0_18 = arith.constant 0 : index
    %c0_19 = arith.constant 0 : index
    %18 = vector.load %arg10[%c0_18, %c0_19] : memref<1x128xf32, #tpu.memory_space<vmem>>, vector<1x128xf32>
    %19 = vector.broadcast %18 : vector<1x128xf32> to vector<32x128xf32>
    %20 = arith.addf %17, %19 : vector<32x128xf32>
    %21 = arith.truncf %20 : vector<32x128xf32> to vector<32x128xbf16>
    %c0_20 = arith.constant 0 : index
    %c0_21 = arith.constant 0 : index
    %22 = vector.load %arg2[%c0_20, %c0_21] : memref<64x32xbf16, #tpu.memory_space<vmem>>, vector<64x32xbf16>
    %cst_22 = arith.constant dense<0.000000e+00> : vector<64x128xf32>
    %23 = tpu.matmul %22, %21, %cst_22 {dimension_numbers = #tpu.dot_dimension_numbers<[1], [0], [0], [1], [0, 0, 1, 1], [], []>} : vector<64x32xbf16>, vector<32x128xbf16>, vector<64x128xf32> -> vector<64x128xf32>
    %24 = arith.truncf %23 : vector<64x128xf32> to vector<64x128xbf16>
    %25 = vector.extract_strided_slice %1 {offsets = [0, 0], sizes = [64, 1], strides = [1, 1]} : vector<64x27xbf16> to vector<64x1xbf16>
    %26 = vector.broadcast %25 : vector<64x1xbf16> to vector<64x128xbf16>
    %27 = arith.mulf %26, %24 : vector<64x128xbf16>
    %c0_23 = arith.constant 0 : index
    %c0_24 = arith.constant 0 : index
    %28 = vector.load %arg32[%c0_23, %c0_24] : memref<64x3456xbf16, #tpu.memory_space<vmem>>, vector<64x128xbf16>
    tpu.vector_store %arg32[%c0_23, %c0_24], %27 {strides = array<i32>} : memref<64x3456xbf16, #tpu.memory_space<vmem>>, vector<64x128xbf16>,
    %29 = vector.extract_strided_slice %1 {offsets = [0, 1], sizes = [64, 1], strides = [1, 1]} : vector<64x27xbf16> to vector<64x1xbf16>
    %30 = vector.broadcast %29 : vector<64x1xbf16> to vector<64x128xbf16>
    %31 = arith.mulf %30, %24 : vector<64x128xbf16>
    %c0_25 = arith.constant 0 : index
    %c128 = arith.constant 128 : index
    %32 = vector.load %arg32[%c0_25, %c128] : memref<64x3456xbf16, #tpu.memory_space<vmem>>, vector<64x128xbf16>
    tpu.vector_store %arg32[%c0_25, %c128], %31 {strides = array<i32>} : memref<64x3456xbf16, #tpu.memory_space<vmem>>, vector<64x128xbf16>,
    %33 = vector.extract_strided_slice %1 {offsets = [0, 2], sizes = [64, 1], strides = [1, 1]} : vector<64x27xbf16> to vector<64x1xbf16>
    %34 = vector.broadcast %33 : vector<64x1xbf16> to vector<64x128xbf16>
    %35 = arith.mulf %34, %24 : vector<64x128xbf16>
    %c0_26 = arith.constant 0 : index
    %c256 = arith.constant 256 : index
    %36 = vector.load %arg32[%c0_26, %c256] : memref<64x3456xbf16, #tpu.memory_space<vmem>>, vector<64x128xbf16>
    tpu.vector_store %arg32[%c0_26, %c256], %35 {strides = array<i32>} : memref<64x3456xbf16, #tpu.memory_space<vmem>>, vector<64x128xbf16>,
    %37 = vector.extract_strided_slice %1 {offsets = [0, 3], sizes = [64, 1], strides = [1, 1]} : vector<64x27xbf16> to vector<64x1xbf16>
    %38 = vector.broadcast %37 : vector<64x1xbf16> to vector<64x128xbf16>
    %39 = arith.mulf %38, %24 : vector<64x128xbf16>
    %c0_27 = arith.constant 0 : index
    %c384 = arith.constant 384 : index
    %40 = vector.load %arg32[%c0_27, %c384] : memref<64x3456xbf16, #tpu.memory_space<vmem>>, vector<64x128xbf16>
    tpu.vector_store %arg32[%c0_27, %c384], %39 {strides = array<i32>} : memref<64x3456xbf16, #tpu.memory_space<vmem>>, vector<64x128xbf16>,
    %41 = vector.extract_strided_slice %1 {offsets = [0, 4], sizes = [64, 1], strides = [1, 1]} : vector<64x27xbf16> to vector<64x1xbf16>
    %42 = vector.broadcast %41 : vector<64x1xbf16> to vector<64x128xbf16>
    %43 = arith.mulf %42, %24 : vector<64x128xbf16>
    %c0_28 = arith.constant 0 : index
    %c512 = arith.constant 512 : index
    %44 = vector.load %arg32[%c0_28, %c512] : memref<64x3456xbf16, #tpu.memory_space<vmem>>, vector<64x128xbf16>
    tpu.vector_store %arg32[%c0_28, %c512], %43 {strides = array<i32>} : memref<64x3456xbf16, #tpu.memory_space<vmem>>, vector<64x128xbf16>,
    %45 = vector.extract_strided_slice %1 {offsets = [0, 5], sizes = [64, 1], strides = [1, 1]} : vector<64x27xbf16> to vector<64x1xbf16>
    %46 = vector.broadcast %45 : vector<64x1xbf16> to vector<64x128xbf16>
    %47 = arith.mulf %46, %24 : vector<64x128xbf16>
    %c0_29 = arith.constant 0 : index
    %c640 = arith.constant 640 : index
    %48 = vector.load %arg32[%c0_29, %c640] : memref<64x3456xbf16, #tpu.memory_space<vmem>>, vector<64x128xbf16>
    tpu.vector_store %arg32[%c0_29, %c640], %47 {strides = array<i32>} : memref<64x3456xbf16, #tpu.memory_space<vmem>>, vector<64x128xbf16>,
    %49 = vector.extract_strided_slice %1 {offsets = [0, 6], sizes = [64, 1], strides = [1, 1]} : vector<64x27xbf16> to vector<64x1xbf16>
    %50 = vector.broadcast %49 : vector<64x1xbf16> to vector<64x128xbf16>
    %51 = arith.mulf %50, %24 : vector<64x128xbf16>
    %c0_30 = arith.constant 0 : index
    %c768 = arith.constant 768 : index
    %52 = vector.load %arg32[%c0_30, %c768] : memref<64x3456xbf16, #tpu.memory_space<vmem>>, vector<64x128xbf16>
    tpu.vector_store %arg32[%c0_30, %c768], %51 {strides = array<i32>} : memref<64x3456xbf16, #tpu.memory_space<vmem>>, vector<64x128xbf16>,
    %53 = vector.extract_strided_slice %1 {offsets = [0, 7], sizes = [64, 1], strides = [1, 1]} : vector<64x27xbf16> to vector<64x1xbf16>
    %54 = vector.broadcast %53 : vector<64x1xbf16> to vector<64x128xbf16>
    %55 = arith.mulf %54, %24 : vector<64x128xbf16>
    %c0_31 = arith.constant 0 : index
    %c896 = arith.constant 896 : index
    %56 = vector.load %arg32[%c0_31, %c896] : memref<64x3456xbf16, #tpu.memory_space<vmem>>, vector<64x128xbf16>
    tpu.vector_store %arg32[%c0_31, %c896], %55 {strides = array<i32>} : memref<64x3456xbf16, #tpu.memory_space<vmem>>, vector<64x128xbf16>,
    %57 = vector.extract_strided_slice %1 {offsets = [0, 8], sizes = [64, 1], strides = [1, 1]} : vector<64x27xbf16> to vector<64x1xbf16>
    %58 = vector.broadcast %57 : vector<64x1xbf16> to vector<64x128xbf16>
    %59 = arith.mulf %58, %24 : vector<64x128xbf16>
    %c0_32 = arith.constant 0 : index
    %c1024 = arith.constant 1024 : index
    %60 = vector.load %arg32[%c0_32, %c1024] : memref<64x3456xbf16, #tpu.memory_space<vmem>>, vector<64x128xbf16>
    tpu.vector_store %arg32[%c0_32, %c1024], %59 {strides = array<i32>} : memref<64x3456xbf16, #tpu.memory_space<vmem>>, vector<64x128xbf16>,
    %61 = vector.extract_strided_slice %1 {offsets = [0, 9], sizes = [64, 1], strides = [1, 1]} : vector<64x27xbf16> to vector<64x1xbf16>
    %62 = vector.broadcast %61 : vector<64x1xbf16> to vector<64x128xbf16>
    %63 = arith.mulf %62, %24 : vector<64x128xbf16>
    %c0_33 = arith.constant 0 : index
    %c1152 = arith.constant 1152 : index
    %64 = vector.load %arg32[%c0_33, %c1152] : memref<64x3456xbf16, #tpu.memory_space<vmem>>, vector<64x128xbf16>
    tpu.vector_store %arg32[%c0_33, %c1152], %63 {strides = array<i32>} : memref<64x3456xbf16, #tpu.memory_space<vmem>>, vector<64x128xbf16>,
    %65 = vector.extract_strided_slice %1 {offsets = [0, 10], sizes = [64, 1], strides = [1, 1]} : vector<64x27xbf16> to vector<64x1xbf16>
    %66 = vector.broadcast %65 : vector<64x1xbf16> to vector<64x128xbf16>
    %67 = arith.mulf %66, %24 : vector<64x128xbf16>
    %c0_34 = arith.constant 0 : index
    %c1280 = arith.constant 1280 : index
    %68 = vector.load %arg32[%c0_34, %c1280] : memref<64x3456xbf16, #tpu.memory_space<vmem>>, vector<64x128xbf16>
    tpu.vector_store %arg32[%c0_34, %c1280], %67 {strides = array<i32>} : memref<64x3456xbf16, #tpu.memory_space<vmem>>, vector<64x128xbf16>,
    %69 = vector.extract_strided_slice %1 {offsets = [0, 11], sizes = [64, 1], strides = [1, 1]} : vector<64x27xbf16> to vector<64x1xbf16>
    %70 = vector.broadcast %69 : vector<64x1xbf16> to vector<64x128xbf16>
    %71 = arith.mulf %70, %24 : vector<64x128xbf16>
    %c0_35 = arith.constant 0 : index
    %c1408 = arith.constant 1408 : index
    %72 = vector.load %arg32[%c0_35, %c1408] : memref<64x3456xbf16, #tpu.memory_space<vmem>>, vector<64x128xbf16>
    tpu.vector_store %arg32[%c0_35, %c1408], %71 {strides = array<i32>} : memref<64x3456xbf16, #tpu.memory_space<vmem>>, vector<64x128xbf16>,
    %73 = vector.extract_strided_slice %1 {offsets = [0, 12], sizes = [64, 1], strides = [1, 1]} : vector<64x27xbf16> to vector<64x1xbf16>
    %74 = vector.broadcast %73 : vector<64x1xbf16> to vector<64x128xbf16>
    %75 = arith.mulf %74, %24 : vector<64x128xbf16>
    %c0_36 = arith.constant 0 : index
    %c1536 = arith.constant 1536 : index
    %76 = vector.load %arg32[%c0_36, %c1536] : memref<64x3456xbf16, #tpu.memory_space<vmem>>, vector<64x128xbf16>
    tpu.vector_store %arg32[%c0_36, %c1536], %75 {strides = array<i32>} : memref<64x3456xbf16, #tpu.memory_space<vmem>>, vector<64x128xbf16>,
    %77 = vector.extract_strided_slice %1 {offsets = [0, 13], sizes = [64, 1], strides = [1, 1]} : vector<64x27xbf16> to vector<64x1xbf16>
    %78 = vector.broadcast %77 : vector<64x1xbf16> to vector<64x128xbf16>
    %79 = arith.mulf %78, %24 : vector<64x128xbf16>
    %c0_37 = arith.constant 0 : index
    %c1664 = arith.constant 1664 : index
    %80 = vector.load %arg32[%c0_37, %c1664] : memref<64x3456xbf16, #tpu.memory_space<vmem>>, vector<64x128xbf16>
    tpu.vector_store %arg32[%c0_37, %c1664], %79 {strides = array<i32>} : memref<64x3456xbf16, #tpu.memory_space<vmem>>, vector<64x128xbf16>,
    %81 = vector.extract_strided_slice %1 {offsets = [0, 14], sizes = [64, 1], strides = [1, 1]} : vector<64x27xbf16> to vector<64x1xbf16>
    %82 = vector.broadcast %81 : vector<64x1xbf16> to vector<64x128xbf16>
    %83 = arith.mulf %82, %24 : vector<64x128xbf16>
    %c0_38 = arith.constant 0 : index
    %c1792 = arith.constant 1792 : index
    %84 = vector.load %arg32[%c0_38, %c1792] : memref<64x3456xbf16, #tpu.memory_space<vmem>>, vector<64x128xbf16>
    tpu.vector_store %arg32[%c0_38, %c1792], %83 {strides = array<i32>} : memref<64x3456xbf16, #tpu.memory_space<vmem>>, vector<64x128xbf16>,
    %85 = vector.extract_strided_slice %1 {offsets = [0, 15], sizes = [64, 1], strides = [1, 1]} : vector<64x27xbf16> to vector<64x1xbf16>
    %86 = vector.broadcast %85 : vector<64x1xbf16> to vector<64x128xbf16>
    %87 = arith.mulf %86, %24 : vector<64x128xbf16>
    %c0_39 = arith.constant 0 : index
    %c1920 = arith.constant 1920 : index
    %88 = vector.load %arg32[%c0_39, %c1920] : memref<64x3456xbf16, #tpu.memory_space<vmem>>, vector<64x128xbf16>
    tpu.vector_store %arg32[%c0_39, %c1920], %87 {strides = array<i32>} : memref<64x3456xbf16, #tpu.memory_space<vmem>>, vector<64x128xbf16>,
    %89 = vector.extract_strided_slice %1 {offsets = [0, 16], sizes = [64, 1], strides = [1, 1]} : vector<64x27xbf16> to vector<64x1xbf16>
    %90 = vector.broadcast %89 : vector<64x1xbf16> to vector<64x128xbf16>
    %91 = arith.mulf %90, %24 : vector<64x128xbf16>
    %c0_40 = arith.constant 0 : index
    %c2048 = arith.constant 2048 : index
    %92 = vector.load %arg32[%c0_40, %c2048] : memref<64x3456xbf16, #tpu.memory_space<vmem>>, vector<64x128xbf16>
    tpu.vector_store %arg32[%c0_40, %c2048], %91 {strides = array<i32>} : memref<64x3456xbf16, #tpu.memory_space<vmem>>, vector<64x128xbf16>,
    %93 = vector.extract_strided_slice %1 {offsets = [0, 17], sizes = [64, 1], strides = [1, 1]} : vector<64x27xbf16> to vector<64x1xbf16>
    %94 = vector.broadcast %93 : vector<64x1xbf16> to vector<64x128xbf16>
    %95 = arith.mulf %94, %24 : vector<64x128xbf16>
    %c0_41 = arith.constant 0 : index
    %c2176 = arith.constant 2176 : index
    %96 = vector.load %arg32[%c0_41, %c2176] : memref<64x3456xbf16, #tpu.memory_space<vmem>>, vector<64x128xbf16>
    tpu.vector_store %arg32[%c0_41, %c2176], %95 {strides = array<i32>} : memref<64x3456xbf16, #tpu.memory_space<vmem>>, vector<64x128xbf16>,
    %97 = vector.extract_strided_slice %1 {offsets = [0, 18], sizes = [64, 1], strides = [1, 1]} : vector<64x27xbf16> to vector<64x1xbf16>
    %98 = vector.broadcast %97 : vector<64x1xbf16> to vector<64x128xbf16>
    %99 = arith.mulf %98, %24 : vector<64x128xbf16>
    %c0_42 = arith.constant 0 : index
    %c2304 = arith.constant 2304 : index
    %100 = vector.load %arg32[%c0_42, %c2304] : memref<64x3456xbf16, #tpu.memory_space<vmem>>, vector<64x128xbf16>
    tpu.vector_store %arg32[%c0_42, %c2304], %99 {strides = array<i32>} : memref<64x3456xbf16, #tpu.memory_space<vmem>>, vector<64x128xbf16>,
    %101 = vector.extract_strided_slice %1 {offsets = [0, 19], sizes = [64, 1], strides = [1, 1]} : vector<64x27xbf16> to vector<64x1xbf16>
    %102 = vector.broadcast %101 : vector<64x1xbf16> to vector<64x128xbf16>
    %103 = arith.mulf %102, %24 : vector<64x128xbf16>
    %c0_43 = arith.constant 0 : index
    %c2432 = arith.constant 2432 : index
    %104 = vector.load %arg32[%c0_43, %c2432] : memref<64x3456xbf16, #tpu.memory_space<vmem>>, vector<64x128xbf16>
    tpu.vector_store %arg32[%c0_43, %c2432], %103 {strides = array<i32>} : memref<64x3456xbf16, #tpu.memory_space<vmem>>, vector<64x128xbf16>,
    %105 = vector.extract_strided_slice %1 {offsets = [0, 20], sizes = [64, 1], strides = [1, 1]} : vector<64x27xbf16> to vector<64x1xbf16>
    %106 = vector.broadcast %105 : vector<64x1xbf16> to vector<64x128xbf16>
    %107 = arith.mulf %106, %24 : vector<64x128xbf16>
    %c0_44 = arith.constant 0 : index
    %c2560 = arith.constant 2560 : index
    %108 = vector.load %arg32[%c0_44, %c2560] : memref<64x3456xbf16, #tpu.memory_space<vmem>>, vector<64x128xbf16>
    tpu.vector_store %arg32[%c0_44, %c2560], %107 {strides = array<i32>} : memref<64x3456xbf16, #tpu.memory_space<vmem>>, vector<64x128xbf16>,
    %109 = vector.extract_strided_slice %1 {offsets = [0, 21], sizes = [64, 1], strides = [1, 1]} : vector<64x27xbf16> to vector<64x1xbf16>
    %110 = vector.broadcast %109 : vector<64x1xbf16> to vector<64x128xbf16>
    %111 = arith.mulf %110, %24 : vector<64x128xbf16>
    %c0_45 = arith.constant 0 : index
    %c2688 = arith.constant 2688 : index
    %112 = vector.load %arg32[%c0_45, %c2688] : memref<64x3456xbf16, #tpu.memory_space<vmem>>, vector<64x128xbf16>
    tpu.vector_store %arg32[%c0_45, %c2688], %111 {strides = array<i32>} : memref<64x3456xbf16, #tpu.memory_space<vmem>>, vector<64x128xbf16>,
    %113 = vector.extract_strided_slice %1 {offsets = [0, 22], sizes = [64, 1], strides = [1, 1]} : vector<64x27xbf16> to vector<64x1xbf16>
    %114 = vector.broadcast %113 : vector<64x1xbf16> to vector<64x128xbf16>
    %115 = arith.mulf %114, %24 : vector<64x128xbf16>
    %c0_46 = arith.constant 0 : index
    %c2816 = arith.constant 2816 : index
    %116 = vector.load %arg32[%c0_46, %c2816] : memref<64x3456xbf16, #tpu.memory_space<vmem>>, vector<64x128xbf16>
    tpu.vector_store %arg32[%c0_46, %c2816], %115 {strides = array<i32>} : memref<64x3456xbf16, #tpu.memory_space<vmem>>, vector<64x128xbf16>,
    %117 = vector.extract_strided_slice %1 {offsets = [0, 23], sizes = [64, 1], strides = [1, 1]} : vector<64x27xbf16> to vector<64x1xbf16>
    %118 = vector.broadcast %117 : vector<64x1xbf16> to vector<64x128xbf16>
    %119 = arith.mulf %118, %24 : vector<64x128xbf16>
    %c0_47 = arith.constant 0 : index
    %c2944 = arith.constant 2944 : index
    %120 = vector.load %arg32[%c0_47, %c2944] : memref<64x3456xbf16, #tpu.memory_space<vmem>>, vector<64x128xbf16>
    tpu.vector_store %arg32[%c0_47, %c2944], %119 {strides = array<i32>} : memref<64x3456xbf16, #tpu.memory_space<vmem>>, vector<64x128xbf16>,
    %121 = vector.extract_strided_slice %1 {offsets = [0, 24], sizes = [64, 1], strides = [1, 1]} : vector<64x27xbf16> to vector<64x1xbf16>
    %122 = vector.broadcast %121 : vector<64x1xbf16> to vector<64x128xbf16>
    %123 = arith.mulf %122, %24 : vector<64x128xbf16>
    %c0_48 = arith.constant 0 : index
    %c3072 = arith.constant 3072 : index
    %124 = vector.load %arg32[%c0_48, %c3072] : memref<64x3456xbf16, #tpu.memory_space<vmem>>, vector<64x128xbf16>
    tpu.vector_store %arg32[%c0_48, %c3072], %123 {strides = array<i32>} : memref<64x3456xbf16, #tpu.memory_space<vmem>>, vector<64x128xbf16>,
    %125 = vector.extract_strided_slice %1 {offsets = [0, 25], sizes = [64, 1], strides = [1, 1]} : vector<64x27xbf16> to vector<64x1xbf16>
    %126 = vector.broadcast %125 : vector<64x1xbf16> to vector<64x128xbf16>
    %127 = arith.mulf %126, %24 : vector<64x128xbf16>
    %c0_49 = arith.constant 0 : index
    %c3200 = arith.constant 3200 : index
    %128 = vector.load %arg32[%c0_49, %c3200] : memref<64x3456xbf16, #tpu.memory_space<vmem>>, vector<64x128xbf16>
    tpu.vector_store %arg32[%c0_49, %c3200], %127 {strides = array<i32>} : memref<64x3456xbf16, #tpu.memory_space<vmem>>, vector<64x128xbf16>,
    %129 = vector.extract_strided_slice %1 {offsets = [0, 26], sizes = [64, 1], strides = [1, 1]} : vector<64x27xbf16> to vector<64x1xbf16>
    %130 = vector.broadcast %129 : vector<64x1xbf16> to vector<64x128xbf16>
    %131 = arith.mulf %130, %24 : vector<64x128xbf16>
    %c0_50 = arith.constant 0 : index
    %c3328 = arith.constant 3328 : index
    %132 = vector.load %arg32[%c0_50, %c3328] : memref<64x3456xbf16, #tpu.memory_space<vmem>>, vector<64x128xbf16>
    tpu.vector_store %arg32[%c0_50, %c3328], %131 {strides = array<i32>} : memref<64x3456xbf16, #tpu.memory_space<vmem>>, vector<64x128xbf16>,
    %c0_51 = arith.constant 0 : index
    %c0_52 = arith.constant 0 : index
    %133 = vector.load %arg32[%c0_51, %c0_52] : memref<64x3456xbf16, #tpu.memory_space<vmem>>, vector<64x3456xbf16>
    %c0_53 = arith.constant 0 : index
    %c0_54 = arith.constant 0 : index
    %134 = vector.load %arg11[%c0_53, %c0_54] : memref<3456x128xbf16, #tpu.memory_space<vmem>>, vector<3456x128xbf16>
    %cst_55 = arith.constant dense<0.000000e+00> : vector<64x128xf32>
    %135 = tpu.matmul %133, %134, %cst_55 {dimension_numbers = #tpu.dot_dimension_numbers<[1], [0], [0], [1], [0, 0, 1, 1], [], []>} : vector<64x3456xbf16>, vector<3456x128xbf16>, vector<64x128xf32> -> vector<64x128xf32>
    %cst_56 = arith.constant dense<0.000000e+00> : vector<32x128xf32>
    %136 = tpu.matmul %0, %135, %cst_56 {dimension_numbers = #tpu.dot_dimension_numbers<[1], [0], [0], [1], [0, 0, 1, 1], [], []>} : vector<32x64xf32>, vector<64x128xf32>, vector<32x128xf32> -> vector<32x128xf32>
    %c0_57 = arith.constant 0 : index
    %c0_58 = arith.constant 0 : index
    %137 = vector.load %arg12[%c0_57, %c0_58] : memref<128x128xbf16, #tpu.memory_space<vmem>>, vector<128x128xbf16>
    %cst_59 = arith.constant dense<0.000000e+00> : vector<32x128xf32>
    %138 = tpu.matmul %21, %137, %cst_59 {dimension_numbers = #tpu.dot_dimension_numbers<[1], [0], [0], [1], [0, 0, 1, 1], [], []>} : vector<32x128xbf16>, vector<128x128xbf16>, vector<32x128xf32> -> vector<32x128xf32>
    %139 = arith.addf %136, %138 : vector<32x128xf32>
    %c0_60 = arith.constant 0 : index
    %c0_61 = arith.constant 0 : index
    %140 = vector.load %arg13[%c0_60, %c0_61] : memref<1x128xf32, #tpu.memory_space<vmem>>, vector<1x128xf32>
    %141 = vector.broadcast %140 : vector<1x128xf32> to vector<32x128xf32>
    %142 = arith.addf %139, %141 : vector<32x128xf32>
    %cst_62 = arith.constant 0.000000e+00 : f32
    %143 = vector.broadcast %cst_62 : f32 to vector<32x128xf32>
    %144 = arith.maximumf %142, %143 : vector<32x128xf32>
    %c0_63 = arith.constant 0 : index
    %c0_64 = arith.constant 0 : index
    %145 = vector.load %arg14[%c0_63, %c0_64] : memref<1x128xf32, #tpu.memory_space<vmem>>, vector<1x128xf32>
    %146 = vector.broadcast %145 : vector<1x128xf32> to vector<32x128xf32>
    %147 = arith.mulf %144, %146 : vector<32x128xf32>
    %c0_65 = arith.constant 0 : index
    %c0_66 = arith.constant 0 : index
    %148 = vector.load %arg15[%c0_65, %c0_66] : memref<1x128xf32, #tpu.memory_space<vmem>>, vector<1x128xf32>
    %149 = vector.broadcast %148 : vector<1x128xf32> to vector<32x128xf32>
    %150 = arith.addf %147, %149 : vector<32x128xf32>
    %c0_67 = arith.constant 0 : index
    %c0_68 = arith.constant 0 : index
    %151 = vector.load %arg16[%c0_67, %c0_68] : memref<128x256xbf16, #tpu.memory_space<vmem>>, vector<128x256xbf16>
    %cst_69 = arith.constant dense<0.000000e+00> : vector<32x256xf32>
    %152 = tpu.matmul %21, %151, %cst_69 {dimension_numbers = #tpu.dot_dimension_numbers<[1], [0], [0], [1], [0, 0, 1, 1], [], []>} : vector<32x128xbf16>, vector<128x256xbf16>, vector<32x256xf32> -> vector<32x256xf32>
    %153 = arith.truncf %150 : vector<32x128xf32> to vector<32x128xbf16>
    %c0_70 = arith.constant 0 : index
    %c0_71 = arith.constant 0 : index
    %154 = vector.load %arg17[%c0_70, %c0_71] : memref<128x256xbf16, #tpu.memory_space<vmem>>, vector<128x256xbf16>
    %cst_72 = arith.constant dense<0.000000e+00> : vector<32x256xf32>
    %155 = tpu.matmul %153, %154, %cst_72 {dimension_numbers = #tpu.dot_dimension_numbers<[1], [0], [0], [1], [0, 0, 1, 1], [], []>} : vector<32x128xbf16>, vector<128x256xbf16>, vector<32x256xf32> -> vector<32x256xf32>
    %156 = arith.addf %152, %155 : vector<32x256xf32>
    %c0_73 = arith.constant 0 : index
    %c0_74 = arith.constant 0 : index
    %157 = vector.load %arg18[%c0_73, %c0_74] : memref<1x256xf32, #tpu.memory_space<vmem>>, vector<1x256xf32>
    %158 = vector.broadcast %157 : vector<1x256xf32> to vector<32x256xf32>
    %159 = arith.addf %156, %158 : vector<32x256xf32>
    %cst_75 = arith.constant 0.000000e+00 : f32
    %160 = vector.broadcast %cst_75 : f32 to vector<32x256xf32>
    %161 = arith.maximumf %159, %160 : vector<32x256xf32>
    %c0_76 = arith.constant 0 : index
    %c0_77 = arith.constant 0 : index
    %162 = vector.load %arg19[%c0_76, %c0_77] : memref<1x256xf32, #tpu.memory_space<vmem>>, vector<1x256xf32>
    %163 = vector.broadcast %162 : vector<1x256xf32> to vector<32x256xf32>
    %164 = arith.mulf %161, %163 : vector<32x256xf32>
    %c0_78 = arith.constant 0 : index
    %c0_79 = arith.constant 0 : index
    %165 = vector.load %arg20[%c0_78, %c0_79] : memref<1x256xf32, #tpu.memory_space<vmem>>, vector<1x256xf32>
    %166 = vector.broadcast %165 : vector<1x256xf32> to vector<32x256xf32>
    %167 = arith.addf %164, %166 : vector<32x256xf32>
    %c0_80 = arith.constant 0 : index
    %c0_81 = arith.constant 0 : index
    %168 = vector.load %arg5[%c0_80, %c0_81] : memref<32x2xf32, #tpu.memory_space<vmem>>, vector<32x2xf32>
    %169 = vector.extract_strided_slice %168 {offsets = [0, 0], sizes = [32, 1], strides = [1, 1]} : vector<32x2xf32> to vector<32x1xf32>
    %cst_82 = arith.constant 5.000000e-01 : f32
    %170 = vector.broadcast %cst_82 : f32 to vector<32x1xf32>
    %171 = arith.cmpf ogt, %169, %170 : vector<32x1xf32>
    %cst_83 = arith.constant -1.000000e+30 : f32
    %172 = vector.shape_cast %171 : vector<32x1xi1> to vector<32x1xi1>
    %173 = vector.broadcast %172 : vector<32x1xi1> to vector<32x256xi1>
    %174 = vector.broadcast %cst_83 : f32 to vector<32x256xf32>
    %175 = arith.select %173, %167, %174 : vector<32x256xi1>, vector<32x256xf32>
    %cst_84 = arith.constant dense<0xFF800000> : vector<256xf32>
    %176 = vector.multi_reduction <maximumf>, %175, %cst_84 [0] : vector<32x256xf32> to vector<256xf32>
    %177 = vector.shape_cast %176 : vector<256xf32> to vector<1x256xf32>
    %c0_85 = arith.constant 0 : index
    %c0_86 = arith.constant 0 : index
    %178 = vector.load %arg33[%c0_85, %c0_86] : memref<2x256xf32, #tpu.memory_space<vmem>>, vector<1x256xf32>
    tpu.vector_store %arg33[%c0_85, %c0_86], %177 {strides = array<i32>} : memref<2x256xf32, #tpu.memory_space<vmem>>, vector<1x256xf32>,
    %179 = vector.extract_strided_slice %168 {offsets = [0, 1], sizes = [32, 1], strides = [1, 1]} : vector<32x2xf32> to vector<32x1xf32>
    %cst_87 = arith.constant 5.000000e-01 : f32
    %180 = vector.broadcast %cst_87 : f32 to vector<32x1xf32>
    %181 = arith.cmpf ogt, %179, %180 : vector<32x1xf32>
    %cst_88 = arith.constant -1.000000e+30 : f32
    %182 = vector.shape_cast %181 : vector<32x1xi1> to vector<32x1xi1>
    %183 = vector.broadcast %182 : vector<32x1xi1> to vector<32x256xi1>
    %184 = vector.broadcast %cst_88 : f32 to vector<32x256xf32>
    %185 = arith.select %183, %167, %184 : vector<32x256xi1>, vector<32x256xf32>
    %cst_89 = arith.constant dense<0xFF800000> : vector<256xf32>
    %186 = vector.multi_reduction <maximumf>, %185, %cst_89 [0] : vector<32x256xf32> to vector<256xf32>
    %187 = vector.shape_cast %186 : vector<256xf32> to vector<1x256xf32>
    %c1 = arith.constant 1 : index
    %c0_90 = arith.constant 0 : index
    %188 = vector.load %arg33[%c1, %c0_90] : memref<2x256xf32, #tpu.memory_space<vmem>>, vector<1x256xf32>
    tpu.vector_store %arg33[%c1, %c0_90], %187 {strides = array<i32>} : memref<2x256xf32, #tpu.memory_space<vmem>>, vector<1x256xf32>,
    %c0_91 = arith.constant 0 : index
    %c0_92 = arith.constant 0 : index
    %189 = vector.load %arg33[%c0_91, %c0_92] : memref<2x256xf32, #tpu.memory_space<vmem>>, vector<2x256xf32>
    %190 = arith.truncf %189 : vector<2x256xf32> to vector<2x256xbf16>
    %c0_93 = arith.constant 0 : index
    %c0_94 = arith.constant 0 : index
    %191 = vector.load %arg21[%c0_93, %c0_94] : memref<256x256xbf16, #tpu.memory_space<vmem>>, vector<256x256xbf16>
    %cst_95 = arith.constant dense<0.000000e+00> : vector<2x256xf32>
    %192 = tpu.matmul %190, %191, %cst_95 {dimension_numbers = #tpu.dot_dimension_numbers<[1], [0], [0], [1], [0, 0, 1, 1], [], []>} : vector<2x256xbf16>, vector<256x256xbf16>, vector<2x256xf32> -> vector<2x256xf32>
    %c0_96 = arith.constant 0 : index
    %c0_97 = arith.constant 0 : index
    %193 = vector.load %arg22[%c0_96, %c0_97] : memref<1x256xf32, #tpu.memory_space<vmem>>, vector<1x256xf32>
    %194 = vector.broadcast %193 : vector<1x256xf32> to vector<2x256xf32>
    %195 = arith.addf %192, %194 : vector<2x256xf32>
    %cst_98 = arith.constant 0.000000e+00 : f32
    %196 = vector.broadcast %cst_98 : f32 to vector<2x256xf32>
    %197 = arith.maximumf %195, %196 : vector<2x256xf32>
    %c0_99 = arith.constant 0 : index
    %c0_100 = arith.constant 0 : index
    %198 = vector.load %arg23[%c0_99, %c0_100] : memref<1x256xf32, #tpu.memory_space<vmem>>, vector<1x256xf32>
    %199 = vector.broadcast %198 : vector<1x256xf32> to vector<2x256xf32>
    %200 = arith.mulf %197, %199 : vector<2x256xf32>
    %c0_101 = arith.constant 0 : index
    %c0_102 = arith.constant 0 : index
    %201 = vector.load %arg24[%c0_101, %c0_102] : memref<1x256xf32, #tpu.memory_space<vmem>>, vector<1x256xf32>
    %202 = vector.broadcast %201 : vector<1x256xf32> to vector<2x256xf32>
    %203 = arith.addf %200, %202 : vector<2x256xf32>
    %204 = arith.truncf %203 : vector<2x256xf32> to vector<2x256xbf16>
    %c0_103 = arith.constant 0 : index
    %c0_104 = arith.constant 0 : index
    %205 = vector.load %arg25[%c0_103, %c0_104] : memref<256x128xbf16, #tpu.memory_space<vmem>>, vector<256x128xbf16>
    %cst_105 = arith.constant dense<0.000000e+00> : vector<2x128xf32>
    %206 = tpu.matmul %204, %205, %cst_105 {dimension_numbers = #tpu.dot_dimension_numbers<[1], [0], [0], [1], [0, 0, 1, 1], [], []>} : vector<2x256xbf16>, vector<256x128xbf16>, vector<2x128xf32> -> vector<2x128xf32>
    %c0_106 = arith.constant 0 : index
    %c0_107 = arith.constant 0 : index
    %207 = vector.load %arg26[%c0_106, %c0_107] : memref<1x128xf32, #tpu.memory_space<vmem>>, vector<1x128xf32>
    %208 = vector.broadcast %207 : vector<1x128xf32> to vector<2x128xf32>
    %209 = arith.addf %206, %208 : vector<2x128xf32>
    %cst_108 = arith.constant 0.000000e+00 : f32
    %210 = vector.broadcast %cst_108 : f32 to vector<2x128xf32>
    %211 = arith.maximumf %209, %210 : vector<2x128xf32>
    %c0_109 = arith.constant 0 : index
    %c0_110 = arith.constant 0 : index
    %212 = vector.load %arg27[%c0_109, %c0_110] : memref<1x128xf32, #tpu.memory_space<vmem>>, vector<1x128xf32>
    %213 = vector.broadcast %212 : vector<1x128xf32> to vector<2x128xf32>
    %214 = arith.mulf %211, %213 : vector<2x128xf32>
    %c0_111 = arith.constant 0 : index
    %c0_112 = arith.constant 0 : index
    %215 = vector.load %arg28[%c0_111, %c0_112] : memref<1x128xf32, #tpu.memory_space<vmem>>, vector<1x128xf32>
    %216 = vector.broadcast %215 : vector<1x128xf32> to vector<2x128xf32>
    %217 = arith.addf %214, %216 : vector<2x128xf32>
    %218 = arith.truncf %217 : vector<2x128xf32> to vector<2x128xbf16>
    %c0_113 = arith.constant 0 : index
    %c0_114 = arith.constant 0 : index
    %219 = vector.load %arg29[%c0_113, %c0_114] : memref<128x8xbf16, #tpu.memory_space<vmem>>, vector<128x8xbf16>
    %cst_115 = arith.constant dense<0.000000e+00> : vector<2x8xf32>
    %220 = tpu.matmul %218, %219, %cst_115 {dimension_numbers = #tpu.dot_dimension_numbers<[1], [0], [0], [1], [0, 0, 1, 1], [], []>} : vector<2x128xbf16>, vector<128x8xbf16>, vector<2x8xf32> -> vector<2x8xf32>
    %c0_116 = arith.constant 0 : index
    %c0_117 = arith.constant 0 : index
    %221 = vector.load %arg30[%c0_116, %c0_117] : memref<1x8xf32, #tpu.memory_space<vmem>>, vector<1x8xf32>
    %222 = vector.broadcast %221 : vector<1x8xf32> to vector<2x8xf32>
    %223 = arith.addf %220, %222 : vector<2x8xf32>
    %cst_118 = arith.constant dense<0xFF800000> : vector<2xf32>
    %224 = vector.multi_reduction <maximumf>, %223, %cst_118 [1] : vector<2x8xf32> to vector<2xf32>
    %225 = vector.shape_cast %224 : vector<2xf32> to vector<2x1xf32>
    %226 = vector.broadcast %225 : vector<2x1xf32> to vector<2x8xf32>
    %227 = arith.subf %223, %226 : vector<2x8xf32>
    %228 = math.exp %227 : vector<2x8xf32>
    %cst_119 = arith.constant dense<0.000000e+00> : vector<2xf32>
    %229 = vector.multi_reduction <add>, %228, %cst_119 [1] : vector<2x8xf32> to vector<2xf32>
    %230 = vector.shape_cast %229 : vector<2xf32> to vector<2x1xf32>
    %231 = math.log %230 : vector<2x1xf32>
    %232 = vector.broadcast %231 : vector<2x1xf32> to vector<2x8xf32>
    %233 = arith.subf %227, %232 : vector<2x8xf32>
    %c0_120 = arith.constant 0 : index
    %c0_121 = arith.constant 0 : index
    %234 = vector.load %arg31[%c0_120, %c0_121] : memref<2x8xf32, #tpu.memory_space<vmem>>, vector<2x8xf32>
    tpu.vector_store %arg31[%c0_120, %c0_121], %233 {strides = array<i32>} : memref<2x8xf32, #tpu.memory_space<vmem>>, vector<2x8xf32>,
    return
  }
}

</mosaic_0001>

<llo_original>
// kernel: spline_conv_net.1
$region0: #{spline_conv_net.1}
  #allocation0 [shape = 'u32[]', space=smem, size = 0x4, offset = 0x4, fixed_abs, tag = 'smem constant byte address 0x4 - core index']
  #allocation1 [shape = 'u32[144,128]{1,0:T(1,128)}', space=vmem, size = 0x12000, scoped, tag = 'internal scratch']
  #allocation2 [shape = 'bf16[64,3456]{1,0:T(16,128)(2,1)}', space=vmem, size = 0x6c000, scoped, tag = 'scratch operand']
  #allocation3 [shape = 'f32[2,256]{1,0:T(2,128)}', space=vmem, size = 0x800, scoped, tag = 'scratch operand']
  %s0 = inlined_call_operand.smem [shape: u32[32], index: -1, kind: input, shape index: {}]
  %s1 = sld [smem:[%s0]]
  %s2 = scalar_lea.smem %s0, 1
  %s3 = sld [smem:[%s2]]
  %s4 = scalar_lea.smem %s0, 2
  %s5 = sld [smem:[%s4]]
  %s6 = scalar_lea.smem %s0, 3
  %s7 = sld [smem:[%s6]]
  %s8 = scalar_lea.smem %s0, 4
  %s9 = sld [smem:[%s8]]
  %s10 = scalar_lea.smem %s0, 5
  %s11 = sld [smem:[%s10]]
  %s12 = scalar_lea.smem %s0, 6
  %s13 = sld [smem:[%s12]]
  %s14 = scalar_lea.smem %s0, 7
  %s15 = sld [smem:[%s14]]
  %s16 = scalar_lea.smem %s0, 8
  %s17 = sld [smem:[%s16]]
  %s18 = scalar_lea.smem %s0, 9
  %s19 = sld [smem:[%s18]]
  %s20 = scalar_lea.smem %s0, 10
  %s21 = sld [smem:[%s20]]
  %s22 = scalar_lea.smem %s0, 11
  %s23 = sld [smem:[%s22]]
  %s24 = scalar_lea.smem %s0, 12
  %s25 = sld [smem:[%s24]]
  %s26 = scalar_lea.smem %s0, 13
  %s27 = sld [smem:[%s26]]
  %s28 = scalar_lea.smem %s0, 14
  %s29 = sld [smem:[%s28]]
  %s30 = scalar_lea.smem %s0, 15
  %s31 = sld [smem:[%s30]]
  %s32 = scalar_lea.smem %s0, 16
  %s33 = sld [smem:[%s32]]
  %s34 = scalar_lea.smem %s0, 17
  %s35 = sld [smem:[%s34]]
  %s36 = scalar_lea.smem %s0, 18
  %s37 = sld [smem:[%s36]]
  %s38 = scalar_lea.smem %s0, 19
  %s39 = sld [smem:[%s38]]
  %s40 = scalar_lea.smem %s0, 20
  %s41 = sld [smem:[%s40]]
  %s42 = scalar_lea.smem %s0, 21
  %s43 = sld [smem:[%s42]]
  %s44 = scalar_lea.smem %s0, 22
  %s45 = sld [smem:[%s44]]
  %s46 = scalar_lea.smem %s0, 23
  %s47 = sld [smem:[%s46]]
  %s48 = scalar_lea.smem %s0, 24
  %s49 = sld [smem:[%s48]]
  %s50 = scalar_lea.smem %s0, 25
  %s51 = sld [smem:[%s50]]
  %s52 = scalar_lea.smem %s0, 26
  %s53 = sld [smem:[%s52]]
  %s54 = scalar_lea.smem %s0, 27
  %s55 = sld [smem:[%s54]]
  %s56 = scalar_lea.smem %s0, 28
  %s57 = sld [smem:[%s56]]
  %s58 = scalar_lea.smem %s0, 29
  %s59 = sld [smem:[%s58]]
  %s60 = scalar_lea.smem %s0, 30
  %s61 = sld [smem:[%s60]]
  %s62 = scalar_lea.smem %s0, 31
  %s63 = sld [smem:[%s62]]
  %s64 = sld [smem:[#allocation0]]
  $region134: #{spline_conv_net.1} parent=0
    _
  %s66 = ssub.s32 1, %s64
  %s67 = scalar_select 0, %s66, %s64
  $region1: #{spline_conv_net.1} parent=0
    #allocation4 [shape = 'u8[1024]{0}', space=vmem, size = 0x400, scoped, tag = 'output window, operand 0, single buffered']
    #allocation5 [shape = 's32[1]{0}', space=sflag, size = 0x4, scoped, tag = 'scoped memory for spline_conv_net.1']
    %68 = vsyncpa [#allocation5], 0
    // Predicated region
    $region2: #{spline_conv_net.1} parent=1 // pred_check
      _
    $region3: #{spline_conv_net.1} parent=1 // pred_check_branch
      %70 = sbr.rel (0) target = $region5
    $region4: #{spline_conv_net.1} parent=1 // pred_region
      _
    $region5: #{spline_conv_net.1} parent=1 // pred_fallthru
      _
    // Predicated region
    $region6: #{spline_conv_net.1} parent=1 // pred_check
      _
    $region7: #{spline_conv_net.1} parent=1 // pred_check_branch
      %72 = sbr.rel (0) target = $region9
    $region8: #{spline_conv_net.1} parent=1 // pred_region
      _
    $region9: #{spline_conv_net.1} parent=1 // pred_fallthru
      _
    // Predicated region
    $region10: #{spline_conv_net.1} parent=1 // pred_check
      _
    $region11: #{spline_conv_net.1} parent=1 // pred_check_branch
      %74 = sbr.rel (0) target = $region13
    $region12: #{spline_conv_net.1} parent=1 // pred_region
      _
    $region13: #{spline_conv_net.1} parent=1 // pred_fallthru
      _
    // Predicated region
    $region14: #{spline_conv_net.1} parent=1 // pred_check
      _
    $region15: #{spline_conv_net.1} parent=1 // pred_check_branch
      %76 = sbr.rel (0) target = $region17
    $region16: #{spline_conv_net.1} parent=1 // pred_region
      _
    $region17: #{spline_conv_net.1} parent=1 // pred_fallthru
      _
    // Predicated region
    $region18: #{spline_conv_net.1} parent=1 // pred_check
      _
    $region19: #{spline_conv_net.1} parent=1 // pred_check_branch
      %78 = sbr.rel (0) target = $region21
    $region20: #{spline_conv_net.1} parent=1 // pred_region
      _
    $region21: #{spline_conv_net.1} parent=1 // pred_fallthru
      _
    // Predicated region
    $region22: #{spline_conv_net.1} parent=1 // pred_check
      _
    $region23: #{spline_conv_net.1} parent=1 // pred_check_branch
      %80 = sbr.rel (0) target = $region25
    $region24: #{spline_conv_net.1} parent=1 // pred_region
      _
    $region25: #{spline_conv_net.1} parent=1 // pred_fallthru
      _
    // Predicated region
    $region26: #{spline_conv_net.1} parent=1 // pred_check
      _
    $region27: #{spline_conv_net.1} parent=1 // pred_check_branch
      %82 = sbr.rel (0) target = $region29
    $region28: #{spline_conv_net.1} parent=1 // pred_region
      _
    $region29: #{spline_conv_net.1} parent=1 // pred_fallthru
      _
    // Predicated region
    $region30: #{spline_conv_net.1} parent=1 // pred_check
      _
    $region31: #{spline_conv_net.1} parent=1 // pred_check_branch
      %84 = sbr.rel (0) target = $region33
    $region32: #{spline_conv_net.1} parent=1 // pred_region
      _
    $region33: #{spline_conv_net.1} parent=1 // pred_fallthru
      _
    // Predicated region
    $region34: #{spline_conv_net.1} parent=1 // pred_check
      _
    $region35: #{spline_conv_net.1} parent=1 // pred_check_branch
      %86 = sbr.rel (0) target = $region37
    $region36: #{spline_conv_net.1} parent=1 // pred_region
      _
    $region37: #{spline_conv_net.1} parent=1 // pred_fallthru
      _
    // Predicated region
    $region38: #{spline_conv_net.1} parent=1 // pred_check
      _
    $region39: #{spline_conv_net.1} parent=1 // pred_check_branch
      %88 = sbr.rel (0) target = $region41
    $region40: #{spline_conv_net.1} parent=1 // pred_region
      _
    $region41: #{spline_conv_net.1} parent=1 // pred_fallthru
      _
    // Predicated region
    $region42: #{spline_conv_net.1} parent=1 // pred_check
      _
    $region43: #{spline_conv_net.1} parent=1 // pred_check_branch
      %90 = sbr.rel (0) target = $region45
    $region44: #{spline_conv_net.1} parent=1 // pred_region
      _
    $region45: #{spline_conv_net.1} parent=1 // pred_fallthru
      _
    // Predicated region
    $region46: #{spline_conv_net.1} parent=1 // pred_check
      _
    $region47: #{spline_conv_net.1} parent=1 // pred_check_branch
      %92 = sbr.rel (0) target = $region49
    $region48: #{spline_conv_net.1} parent=1 // pred_region
      _
    $region49: #{spline_conv_net.1} parent=1 // pred_fallthru
      _
    // Predicated region
    $region50: #{spline_conv_net.1} parent=1 // pred_check
      _
    $region51: #{spline_conv_net.1} parent=1 // pred_check_branch
      %94 = sbr.rel (0) target = $region53
    $region52: #{spline_conv_net.1} parent=1 // pred_region
      _
    $region53: #{spline_conv_net.1} parent=1 // pred_fallthru
      _
    // Predicated region
    $region54: #{spline_conv_net.1} parent=1 // pred_check
      _
    $region55: #{spline_conv_net.1} parent=1 // pred_check_branch
      %96 = sbr.rel (0) target = $region57
    $region56: #{spline_conv_net.1} parent=1 // pred_region
      _
    $region57: #{spline_conv_net.1} parent=1 // pred_fallthru
      _
    // Predicated region
    $region58: #{spline_conv_net.1} parent=1 // pred_check
      _
    $region59: #{spline_conv_net.1} parent=1 // pred_check_branch
      %98 = sbr.rel (0) target = $region61
    $region60: #{spline_conv_net.1} parent=1 // pred_region
      _
    $region61: #{spline_conv_net.1} parent=1 // pred_fallthru
      _
    // Predicated region
    $region62: #{spline_conv_net.1} parent=1 // pred_check
      _
    $region63: #{spline_conv_net.1} parent=1 // pred_check_branch
      %100 = sbr.rel (0) target = $region65
    $region64: #{spline_conv_net.1} parent=1 // pred_region
      _
    $region65: #{spline_conv_net.1} parent=1 // pred_fallthru
      _
    // Predicated region
    $region66: #{spline_conv_net.1} parent=1 // pred_check
      _
    $region67: #{spline_conv_net.1} parent=1 // pred_check_branch
      %102 = sbr.rel (0) target = $region69
    $region68: #{spline_conv_net.1} parent=1 // pred_region
      _
    $region69: #{spline_conv_net.1} parent=1 // pred_fallthru
      _
    // Predicated region
    $region70: #{spline_conv_net.1} parent=1 // pred_check
      _
    $region71: #{spline_conv_net.1} parent=1 // pred_check_branch
      %104 = sbr.rel (0) target = $region73
    $region72: #{spline_conv_net.1} parent=1 // pred_region
      _
    $region73: #{spline_conv_net.1} parent=1 // pred_fallthru
      _
    // Predicated region
    $region74: #{spline_conv_net.1} parent=1 // pred_check
      _
    $region75: #{spline_conv_net.1} parent=1 // pred_check_branch
      %106 = sbr.rel (0) target = $region77
    $region76: #{spline_conv_net.1} parent=1 // pred_region
      _
    $region77: #{spline_conv_net.1} parent=1 // pred_fallthru
      _
    // Predicated region
    $region78: #{spline_conv_net.1} parent=1 // pred_check
      _
    $region79: #{spline_conv_net.1} parent=1 // pred_check_branch
      %108 = sbr.rel (0) target = $region81
    $region80: #{spline_conv_net.1} parent=1 // pred_region
      _
    $region81: #{spline_conv_net.1} parent=1 // pred_fallthru
      _
    // Predicated region
    $region82: #{spline_conv_net.1} parent=1 // pred_check
      _
    $region83: #{spline_conv_net.1} parent=1 // pred_check_branch
      %110 = sbr.rel (0) target = $region85
    $region84: #{spline_conv_net.1} parent=1 // pred_region
      _
    $region85: #{spline_conv_net.1} parent=1 // pred_fallthru
      _
    // Predicated region
    $region86: #{spline_conv_net.1} parent=1 // pred_check
      _
    $region87: #{spline_conv_net.1} parent=1 // pred_check_branch
      %112 = sbr.rel (0) target = $region89
    $region88: #{spline_conv_net.1} parent=1 // pred_region
      _
    $region89: #{spline_conv_net.1} parent=1 // pred_fallthru
      _
    // Predicated region
    $region90: #{spline_conv_net.1} parent=1 // pred_check
      _
    $region91: #{spline_conv_net.1} parent=1 // pred_check_branch
      %114 = sbr.rel (0) target = $region93
    $region92: #{spline_conv_net.1} parent=1 // pred_region
      _
    $region93: #{spline_conv_net.1} parent=1 // pred_fallthru
      _
    // Predicated region
    $region94: #{spline_conv_net.1} parent=1 // pred_check
      _
    $region95: #{spline_conv_net.1} parent=1 // pred_check_branch
      %116 = sbr.rel (0) target = $region97
    $region96: #{spline_conv_net.1} parent=1 // pred_region
      _
    $region97: #{spline_conv_net.1} parent=1 // pred_fallthru
      _
    // Predicated region
    $region98: #{spline_conv_net.1} parent=1 // pred_check
      _
    $region99: #{spline_conv_net.1} parent=1 // pred_check_branch
      %118 = sbr.rel (0) target = $region101
    $region100: #{spline_conv_net.1} parent=1 // pred_region
      _
    $region101: #{spline_conv_net.1} parent=1 // pred_fallthru
      _
    // Predicated region
    $region102: #{spline_conv_net.1} parent=1 // pred_check
      _
    $region103: #{spline_conv_net.1} parent=1 // pred_check_branch
      %120 = sbr.rel (0) target = $region105
    $region104: #{spline_conv_net.1} parent=1 // pred_region
      _
    $region105: #{spline_conv_net.1} parent=1 // pred_fallthru
      _
    // Predicated region
    $region106: #{spline_conv_net.1} parent=1 // pred_check
      _
    $region107: #{spline_conv_net.1} parent=1 // pred_check_branch
      %122 = sbr.rel (0) target = $region109
    $region108: #{spline_conv_net.1} parent=1 // pred_region
      _
    $region109: #{spline_conv_net.1} parent=1 // pred_fallthru
      _
    // Predicated region
    $region110: #{spline_conv_net.1} parent=1 // pred_check
      _
    $region111: #{spline_conv_net.1} parent=1 // pred_check_branch
      %124 = sbr.rel (0) target = $region113
    $region112: #{spline_conv_net.1} parent=1 // pred_region
      _
    $region113: #{spline_conv_net.1} parent=1 // pred_fallthru
      _
    // Predicated region
    $region114: #{spline_conv_net.1} parent=1 // pred_check
      _
    $region115: #{spline_conv_net.1} parent=1 // pred_check_branch
      %126 = sbr.rel (0) target = $region117
    $region116: #{spline_conv_net.1} parent=1 // pred_region
      _
    $region117: #{spline_conv_net.1} parent=1 // pred_fallthru
      _
    // Predicated region
    $region118: #{spline_conv_net.1} parent=1 // pred_check
      _
    $region119: #{spline_conv_net.1} parent=1 // pred_check_branch
      %128 = sbr.rel (0) target = $region121
    $region120: #{spline_conv_net.1} parent=1 // pred_region
      _
    $region121: #{spline_conv_net.1} parent=1 // pred_fallthru
      _
    // Predicated region
    $region122: #{spline_conv_net.1} parent=1 // pred_check
      _
    $region123: #{spline_conv_net.1} parent=1 // pred_check_branch
      %130 = sbr.rel (0) target = $region125
    $region124: #{spline_conv_net.1} parent=1 // pred_region
      _
    $region125: #{spline_conv_net.1} parent=1 // pred_fallthru
      _
    %v132 = vld [vmem:[%s7] sm:$0xff]
    %v133 = vld [vmem:[%s7 + $0x8] sm:$0xff]
    %v134 = vld [vmem:[%s7 + $0x10] sm:$0xff]
    %v135 = vld [vmem:[%s7 + $0x18] sm:$0xff]
    %v136 = vld [vmem:[%s9] sm:$0xf]
    %v137 = vld [vmem:[%s9 + $0x4] sm:$0xf]
    %v138 = vld [vmem:[%s9 + $0x8] sm:$0xf]
    %v139 = vld [vmem:[%s9 + $0xc] sm:$0xf]
    %v140 = vld [vmem:[%s9 + $0x10] sm:$0xf]
    %v141 = vld [vmem:[%s9 + $0x14] sm:$0xf]
    %v142 = vld [vmem:[%s9 + $0x18] sm:$0xf]
    %v143 = vld [vmem:[%s9 + $0x1c] sm:$0xf]
    %v144 = vld [vmem:[%s1] sm:$0xff]
    %v145 = vld [vmem:[%s1 + $0x8] sm:$0xff]
    %v146 = vld [vmem:[%s1 + $0x10] sm:$0xff]
    %v147 = vld [vmem:[%s1 + $0x18] sm:$0xff]
    %v148 = vld [vmem:[%s1 + $0x20] sm:$0xff]
    %v149 = vld [vmem:[%s1 + $0x28] sm:$0xff]
    %v150 = vld [vmem:[%s1 + $0x30] sm:$0xff]
    %v151 = vld [vmem:[%s1 + $0x38] sm:$0xff]
    %v152 = vld [vmem:[%s1 + $0x40] sm:$0xff]
    %v153 = vld [vmem:[%s1 + $0x48] sm:$0xff]
    %v154 = vld [vmem:[%s1 + $0x50] sm:$0xff]
    %v155 = vld [vmem:[%s1 + $0x58] sm:$0xff]
    %v156 = vld [vmem:[%s1 + $0x60] sm:$0xff]
    %v157 = vld [vmem:[%s1 + $0x68] sm:$0xff]
    %v158 = vld [vmem:[%s1 + $0x70] sm:$0xff]
    %v159 = vld [vmem:[%s1 + $0x78] sm:$0xff]
    %v160 = vld [vmem:[%s13] sm:$0xf]
    %v161 = vld [vmem:[%s13 + $0x4] sm:$0xf]
    %v162 = vld [vmem:[%s13 + $0x8] sm:$0xf]
    %v163 = vld [vmem:[%s13 + $0xc] sm:$0xf]
    %v164 = vld [vmem:[%s13 + $0x10] sm:$0xf]
    %v165 = vld [vmem:[%s13 + $0x14] sm:$0xf]
    %v166 = vld [vmem:[%s13 + $0x18] sm:$0xf]
    %v167 = vld [vmem:[%s13 + $0x1c] sm:$0xf]
    %v168 = vld [vmem:[%s13 + $0x20] sm:$0xf]
    %v169 = vld [vmem:[%s13 + $0x24] sm:$0xf]
    %v170 = vld [vmem:[%s13 + $0x28] sm:$0xf]
    %v171 = vld [vmem:[%s13 + $0x2c] sm:$0xf]
    %v172 = vld [vmem:[%s13 + $0x30] sm:$0xf]
    %v173 = vld [vmem:[%s13 + $0x34] sm:$0xf]
    %v174 = vld [vmem:[%s13 + $0x38] sm:$0xf]
    %v175 = vld [vmem:[%s13 + $0x3c] sm:$0xf]
    %v176 = vld [vmem:[%s13 + $0x40] sm:$0xf]
    %v177 = vld [vmem:[%s13 + $0x44] sm:$0xf]
    %v178 = vld [vmem:[%s13 + $0x48] sm:$0xf]
    %v179 = vld [vmem:[%s13 + $0x4c] sm:$0xf]
    %v180 = vld [vmem:[%s13 + $0x50] sm:$0xf]
    %v181 = vld [vmem:[%s13 + $0x54] sm:$0xf]
    %v182 = vld [vmem:[%s13 + $0x58] sm:$0xf]
    %v183 = vld [vmem:[%s13 + $0x5c] sm:$0xf]
    %v184 = vld [vmem:[%s13 + $0x60] sm:$0xf]
    %v185 = vld [vmem:[%s13 + $0x64] sm:$0xf]
    %v186 = vld [vmem:[%s13 + $0x68] sm:$0xf]
    %v187 = vld [vmem:[%s13 + $0x6c] sm:$0xf]
    %v188 = vld [vmem:[%s13 + $0x70] sm:$0xf]
    %v189 = vld [vmem:[%s13 + $0x74] sm:$0xf]
    %v190 = vld [vmem:[%s13 + $0x78] sm:$0xf]
    %v191 = vld [vmem:[%s13 + $0x7c] sm:$0xf]
    %v192 = vld [vmem:[%s13 + $0x80] sm:$0xf]
    %v193 = vld [vmem:[%s13 + $0x84] sm:$0xf]
    %v194 = vld [vmem:[%s13 + $0x88] sm:$0xf]
    %v195 = vld [vmem:[%s13 + $0x8c] sm:$0xf]
    %v196 = vld [vmem:[%s13 + $0x90] sm:$0xf]
    %v197 = vld [vmem:[%s13 + $0x94] sm:$0xf]
    %v198 = vld [vmem:[%s13 + $0x98] sm:$0xf]
    %v199 = vld [vmem:[%s13 + $0x9c] sm:$0xf]
    %v200 = vld [vmem:[%s13 + $0xa0] sm:$0xf]
    %v201 = vld [vmem:[%s13 + $0xa4] sm:$0xf]
    %v202 = vld [vmem:[%s13 + $0xa8] sm:$0xf]
    %v203 = vld [vmem:[%s13 + $0xac] sm:$0xf]
    %v204 = vld [vmem:[%s13 + $0xb0] sm:$0xf]
    %v205 = vld [vmem:[%s13 + $0xb4] sm:$0xf]
    %v206 = vld [vmem:[%s13 + $0xb8] sm:$0xf]
    %v207 = vld [vmem:[%s13 + $0xbc] sm:$0xf]
    %v208 = vld [vmem:[%s13 + $0xc0] sm:$0xf]
    %v209 = vld [vmem:[%s13 + $0xc4] sm:$0xf]
    %v210 = vld [vmem:[%s13 + $0xc8] sm:$0xf]
    %v211 = vld [vmem:[%s13 + $0xcc] sm:$0xf]
    %v212 = vld [vmem:[%s13 + $0xd0] sm:$0xf]
    %v213 = vld [vmem:[%s13 + $0xd4] sm:$0xf]
    %v230 = vunpack.c.l.b16 %v144
    %v231 = vunpack.c.h.b16 %v144
    %v232 = vunpack.c.l.b16 %v145
    %v233 = vunpack.c.h.b16 %v145
    %v234 = vunpack.c.l.b16 %v146
    %v235 = vunpack.c.h.b16 %v146
    %v236 = vunpack.c.l.b16 %v147
    %v237 = vunpack.c.h.b16 %v147
    %v238 = vunpack.c.l.b16 %v148
    %v239 = vunpack.c.h.b16 %v148
    %v240 = vunpack.c.l.b16 %v149
    %v241 = vunpack.c.h.b16 %v149
    %v242 = vunpack.c.l.b16 %v150
    %v243 = vunpack.c.h.b16 %v150
    %v244 = vunpack.c.l.b16 %v151
    %v245 = vunpack.c.h.b16 %v151
    %v246 = vunpack.c.l.b16 %v152
    %v247 = vunpack.c.h.b16 %v152
    %v248 = vunpack.c.l.b16 %v153
    %v249 = vunpack.c.h.b16 %v153
    %v250 = vunpack.c.l.b16 %v154
    %v251 = vunpack.c.h.b16 %v154
    %v252 = vunpack.c.l.b16 %v155
    %v253 = vunpack.c.h.b16 %v155
    %v254 = vunpack.c.l.b16 %v156
    %v255 = vunpack.c.h.b16 %v156
    %v256 = vunpack.c.l.b16 %v157
    %v257 = vunpack.c.h.b16 %v157
    %v258 = vunpack.c.l.b16 %v158
    %v259 = vunpack.c.h.b16 %v158
    %v260 = vunpack.c.l.b16 %v159
    %v261 = vunpack.c.h.b16 %v159
    %v262 = vpack.c.b16 %v234, %v230
    %v263 = vpack.c.b16 %v235, %v231
    %v264 = vpack.c.b16 %v236, %v232
    %v265 = vpack.c.b16 %v237, %v233
    %v266 = vpack.c.b16 %v242, %v238
    %v267 = vpack.c.b16 %v243, %v239
    %v268 = vpack.c.b16 %v244, %v240
    %v269 = vpack.c.b16 %v245, %v241
    %v270 = vpack.c.b16 %v250, %v246
    %v271 = vpack.c.b16 %v251, %v247
    %v272 = vpack.c.b16 %v252, %v248
    %v273 = vpack.c.b16 %v253, %v249
    %v274 = vpack.c.b16 %v258, %v254
    %v275 = vpack.c.b16 %v259, %v255
    %v276 = vpack.c.b16 %v260, %v256
    %v277 = vpack.c.b16 %v261, %v257
    %v344 = vunpack.c.l.b16 %v160
    %v345 = vunpack.c.l.b16 %v161
    %v346 = vunpack.c.l.b16 %v162
    %v347 = vunpack.c.l.b16 %v163
    %v348 = vunpack.c.l.b16 %v164
    %v349 = vunpack.c.l.b16 %v165
    %v350 = vunpack.c.l.b16 %v166
    %v351 = vunpack.c.l.b16 %v167
    %v352 = vunpack.c.l.b16 %v168
    %v353 = vunpack.c.l.b16 %v169
    %v354 = vunpack.c.l.b16 %v170
    %v355 = vunpack.c.l.b16 %v171
    %v356 = vunpack.c.l.b16 %v172
    %v357 = vunpack.c.l.b16 %v173
    %v358 = vunpack.c.l.b16 %v174
    %v359 = vunpack.c.l.b16 %v175
    %v360 = vunpack.c.l.b16 %v176
    %v361 = vunpack.c.l.b16 %v177
    %v362 = vunpack.c.l.b16 %v178
    %v363 = vunpack.c.l.b16 %v179
    %v364 = vunpack.c.l.b16 %v180
    %v365 = vunpack.c.l.b16 %v181
    %v366 = vunpack.c.l.b16 %v182
    %v367 = vunpack.c.l.b16 %v183
    %v368 = vunpack.c.l.b16 %v184
    %v369 = vunpack.c.l.b16 %v185
    %v370 = vunpack.c.l.b16 %v186
    %v371 = vunpack.c.l.b16 %v187
    %v372 = vunpack.c.l.b16 %v188
    %v373 = vunpack.c.l.b16 %v189
    %v374 = vunpack.c.l.b16 %v190
    %v375 = vunpack.c.l.b16 %v191
    %v376 = vunpack.c.l.b16 %v192
    %v377 = vunpack.c.l.b16 %v193
    %v378 = vunpack.c.l.b16 %v194
    %v379 = vunpack.c.l.b16 %v195
    %v380 = vunpack.c.l.b16 %v196
    %v381 = vunpack.c.l.b16 %v197
    %v382 = vunpack.c.l.b16 %v198
    %v383 = vunpack.c.l.b16 %v199
    %v384 = vunpack.c.l.b16 %v200
    %v385 = vunpack.c.l.b16 %v201
    %v386 = vunpack.c.l.b16 %v202
    %v387 = vunpack.c.l.b16 %v203
    %v388 = vunpack.c.l.b16 %v204
    %v389 = vunpack.c.l.b16 %v205
    %v390 = vunpack.c.l.b16 %v206
    %v391 = vunpack.c.l.b16 %v207
    %v392 = vunpack.c.l.b16 %v208
    %v393 = vunpack.c.l.b16 %v209
    %v394 = vunpack.c.l.b16 %v210
    %v395 = vunpack.c.l.b16 %v211
    %v396 = vunpack.c.l.b16 %v212
    %v397 = vunpack.c.l.b16 %v213
    %v398 = vpack.c.b16 %v345, %v344
    %v399 = vpack.c.b16 %v347, %v346
    %v400 = vpack.c.b16 %v349, %v348
    %v401 = vpack.c.b16 %v351, %v350
    %v402 = vpack.c.b16 %v353, %v352
    %v403 = vpack.c.b16 %v355, %v354
    %v404 = vpack.c.b16 %v357, %v356
    %v405 = vpack.c.b16 %v359, %v358
    %v406 = vpack.c.b16 %v361, %v360
    %v407 = vpack.c.b16 %v363, %v362
    %v408 = vpack.c.b16 %v365, %v364
    %v409 = vpack.c.b16 %v367, %v366
    %v410 = vpack.c.b16 %v369, %v368
    %v411 = vpack.c.b16 %v371, %v370
    %v412 = vpack.c.b16 %v373, %v372
    %v413 = vpack.c.b16 %v375, %v374
    %v414 = vpack.c.b16 %v377, %v376
    %v415 = vpack.c.b16 %v379, %v378
    %v416 = vpack.c.b16 %v381, %v380
    %v417 = vpack.c.b16 %v383, %v382
    %v418 = vpack.c.b16 %v385, %v384
    %v419 = vpack.c.b16 %v387, %v386
    %v420 = vpack.c.b16 %v389, %v388
    %v421 = vpack.c.b16 %v391, %v390
    %v422 = vpack.c.b16 %v393, %v392
    %v423 = vpack.c.b16 %v395, %v394
    %v424 = vpack.c.b16 %v397, %v396
    %vm452 = vcmask 392192
    %v454 = vsel %vm452, %v265, 0
    %v457 = vsel %vm452, %v269, 0
    %v460 = vsel %vm452, %v273, 0
    %v463 = vsel %vm452, %v277, 0
    %465 = vmatprep.subr.bf16.mxu0 0
    %466 = vmatpush1.bf16.msra.mxu0 %v398
    %467 = vmatprep.subr.bf16.mxu0 0
    %468 = vmatpush1.bf16.msra.mxu0 %v399
    %469 = vmatprep.subr.bf16.mxu0 0
    %470 = vmatpush1.bf16.msra.mxu0 %v400
    %471 = vmatprep.subr.bf16.mxu0 0
    %472 = vmatpush1.bf16.msra.mxu0 %v401
    %473 = vmatprep.subr.bf16.mxu0 0
    %474 = vmatpush1.bf16.msra.mxu0 %v402
    %475 = vmatprep.subr.bf16.mxu0 0
    %476 = vmatpush1.bf16.msra.mxu0 %v403
    %477 = vmatprep.subr.bf16.mxu0 0
    %478 = vmatpush1.bf16.msra.mxu0 %v404
    %479 = vmatprep.subr.bf16.mxu0 0
    %480 = vmatpush1.bf16.msra.mxu0 %v405
    %481 = vmatprep.subr.bf16.mxu0 0
    %482 = vmatpush1.bf16.msra.mxu0 %v406
    %483 = vmatprep.subr.bf16.mxu0 0
    %484 = vmatpush1.bf16.msra.mxu0 %v407
    %485 = vmatprep.subr.bf16.mxu0 0
    %486 = vmatpush1.bf16.msra.mxu0 %v408
    %487 = vmatprep.subr.bf16.mxu0 0
    %488 = vmatpush1.bf16.msra.mxu0 %v409
    %489 = vmatprep.subr.bf16.mxu0 0
    %490 = vmatpush1.bf16.msra.mxu0 %v410
    %491 = vmatprep.subr.bf16.mxu0 0
    %492 = vmatpush1.bf16.msra.mxu0 %v411
    %493 = vmatprep.subr.bf16.mxu0 0
    %494 = vmatpush1.bf16.msra.mxu0 %v412
    %495 = vmatprep.subr.bf16.mxu0 0
    %496 = vmatpush1.bf16.msra.mxu0 %v413
    %497 = vmatprep.mubr.bf16.mxu0 %v263
    %498 = vmatmul.mubr.bf16.gmra.mrb[0].mxu0 %v262
    %v499 = vpop.f32.mrb[0].mxu0
    %v500 = vadd.f32 0.0, %v499
    %v501 = vpop.f32.mrb[0].mxu0
    %v502 = vpop.f32.mrb[0].mxu0
    %v503 = vadd.f32 0.0, %v502
    %v504 = vpop.f32.mrb[0].mxu0
    %505 = vmatprep.mubr.bf16.mxu0 %v267
    %506 = vmatmul.mubr.bf16.gmra.mrb[0].mxu0 %v266
    %v507 = vpop.f32.mrb[0].mxu0
    %v508 = vadd.f32 0.0, %v507
    %v509 = vpop.f32.mrb[0].mxu0
    %v510 = vpop.f32.mrb[0].mxu0
    %v511 = vadd.f32 0.0, %v510
    %v512 = vpop.f32.mrb[0].mxu0
    %513 = vmatprep.mubr.bf16.mxu0 %v271
    %514 = vmatmul.mubr.bf16.gmra.mrb[0].mxu0 %v270
    %v515 = vpop.f32.mrb[0].mxu0
    %v516 = vadd.f32 0.0, %v515
    %v517 = vpop.f32.mrb[0].mxu0
    %v518 = vpop.f32.mrb[0].mxu0
    %v519 = vadd.f32 0.0, %v518
    %v520 = vpop.f32.mrb[0].mxu0
    %521 = vmatprep.mubr.bf16.mxu0 %v275
    %522 = vmatmul.mubr.bf16.gmra.mrb[0].mxu0 %v274
    %v523 = vpop.f32.mrb[0].mxu0
    %v524 = vadd.f32 0.0, %v523
    %v525 = vpop.f32.mrb[0].mxu0
    %v526 = vpop.f32.mrb[0].mxu0
    %v527 = vadd.f32 0.0, %v526
    %v528 = vpop.f32.mrb[0].mxu0
    %529 = vdwg.mxu0
    %530 = vmatprep.subr.bf16.mxu0 0
    %531 = vmatpush1.bf16.msra.mxu0 %v414
    %532 = vmatprep.subr.bf16.mxu0 0
    %533 = vmatpush1.bf16.msra.mxu0 %v415
    %534 = vmatprep.subr.bf16.mxu0 0
    %535 = vmatpush1.bf16.msra.mxu0 %v416
    %536 = vmatprep.subr.bf16.mxu0 0
    %537 = vmatpush1.bf16.msra.mxu0 %v417
    %538 = vmatprep.subr.bf16.mxu0 0
    %539 = vmatpush1.bf16.msra.mxu0 %v418
    %540 = vmatprep.subr.bf16.mxu0 0
    %541 = vmatpush1.bf16.msra.mxu0 %v419
    %542 = vmatprep.subr.bf16.mxu0 0
    %543 = vmatpush1.bf16.msra.mxu0 %v420
    %544 = vmatprep.subr.bf16.mxu0 0
    %545 = vmatpush1.bf16.msra.mxu0 %v421
    %546 = vmatprep.subr.bf16.mxu0 0
    %547 = vmatpush1.bf16.msra.mxu0 %v422
    %548 = vmatprep.subr.bf16.mxu0 0
    %549 = vmatpush1.bf16.msra.mxu0 %v423
    %550 = vmatprep.subr.bf16.mxu0 0
    %551 = vmatpush1.bf16.msra.mxu0 %v424
    %552 = vmatprep.subr.bf16.mxu0 0
    %553 = vmatpush1.bf16.msra.mxu0 0
    %554 = vmatprep.subr.bf16.mxu0 0
    %555 = vmatpush1.bf16.msra.mxu0 0
    %556 = vmatprep.subr.bf16.mxu0 0
    %557 = vmatpush1.bf16.msra.mxu0 0
    %558 = vmatprep.subr.bf16.mxu0 0
    %559 = vmatpush1.bf16.msra.mxu0 0
    %560 = vmatprep.subr.bf16.mxu0 0
    %561 = vmatpush1.bf16.msra.mxu0 0
    %562 = vmatprep.mubr.bf16.mxu0 %v454
    %563 = vmatmul.mubr.bf16.gmra.mrb[0].mxu0 %v264
    %v564 = vpop.f32.mrb[0].mxu0
    %v565 = vadd.f32 %v500, %v564
    %v566 = vpop.f32.mrb[0].mxu0
    %v567 = vpop.f32.mrb[0].mxu0
    %v568 = vadd.f32 %v503, %v567
    %v569 = vpop.f32.mrb[0].mxu0
    %570 = vmatprep.mubr.bf16.mxu0 %v457
    %571 = vmatmul.mubr.bf16.gmra.mrb[0].mxu0 %v268
    %v572 = vpop.f32.mrb[0].mxu0
    %v573 = vadd.f32 %v508, %v572
    %v574 = vpop.f32.mrb[0].mxu0
    %v575 = vpop.f32.mrb[0].mxu0
    %v576 = vadd.f32 %v511, %v575
    %v577 = vpop.f32.mrb[0].mxu0
    %578 = vmatprep.mubr.bf16.mxu0 %v460
    %579 = vmatmul.mubr.bf16.gmra.mrb[0].mxu0 %v272
    %v580 = vpop.f32.mrb[0].mxu0
    %v581 = vadd.f32 %v516, %v580
    %v582 = vpop.f32.mrb[0].mxu0
    %v583 = vpop.f32.mrb[0].mxu0
    %v584 = vadd.f32 %v519, %v583
    %v585 = vpop.f32.mrb[0].mxu0
    %586 = vmatprep.mubr.bf16.mxu0 %v463
    %587 = vmatmul.mubr.bf16.gmra.mrb[0].mxu0 %v276
    %v588 = vpop.f32.mrb[0].mxu0
    %v589 = vadd.f32 %v524, %v588
    %v590 = vpop.f32.mrb[0].mxu0
    %v591 = vpop.f32.mrb[0].mxu0
    %v592 = vadd.f32 %v527, %v591
    %v593 = vpop.f32.mrb[0].mxu0
    %594 = vdwg.mxu0
    %v595 = vld [vmem:[%s3] sm:$0xf]
    %v596 = vld [vmem:[%s3 + $0x4] sm:$0xf]
    %v597 = vld [vmem:[%s3 + $0x8] sm:$0xf]
    %v598 = vld [vmem:[%s3 + $0xc] sm:$0xf]
    %v599 = vld [vmem:[%s15] sm:$0xf]
    %v600 = vld [vmem:[%s15 + $0x4] sm:$0xf]
    %v605 = vunpack.c.l.b16 %v595
    %v606 = vunpack.c.l.b16 %v596
    %v607 = vunpack.c.l.b16 %v597
    %v608 = vunpack.c.l.b16 %v598
    %v609 = vpack.c.b16 %v606, %v605
    %v610 = vpack.c.b16 %v608, %v607
    %v613 = vunpack.c.l.b16 %v599
    %v614 = vunpack.c.l.b16 %v600
    %v615 = vpack.c.b16 %v614, %v613
    %vm617 = vcmask 130048
    %v619 = vsel %vm617, %v609, 0
    %v622 = vsel %vm617, %v610, 0
    %624 = vmatprep.subr.bf16.mxu0 0
    %625 = vmatpush1.bf16.msra.mxu0 %v615
    %626 = vmatprep.subr.bf16.mxu0 0
    %627 = vmatpush1.bf16.msra.mxu0 0
    %628 = vmatprep.subr.bf16.mxu0 0
    %629 = vmatpush1.bf16.msra.mxu0 0
    %630 = vmatprep.subr.bf16.mxu0 0
    %631 = vmatpush1.bf16.msra.mxu0 0
    %632 = vmatprep.subr.bf16.mxu0 0
    %633 = vmatpush1.bf16.msra.mxu0 0
    %634 = vmatprep.subr.bf16.mxu0 0
    %635 = vmatpush1.bf16.msra.mxu0 0
    %636 = vmatprep.subr.bf16.mxu0 0
    %637 = vmatpush1.bf16.msra.mxu0 0
    %638 = vmatprep.subr.bf16.mxu0 0
    %639 = vmatpush1.bf16.msra.mxu0 0
    %640 = vmatprep.subr.bf16.mxu0 0
    %641 = vmatpush1.bf16.msra.mxu0 0
    %642 = vmatprep.subr.bf16.mxu0 0
    %643 = vmatpush1.bf16.msra.mxu0 0
    %644 = vmatprep.subr.bf16.mxu0 0
    %645 = vmatpush1.bf16.msra.mxu0 0
    %646 = vmatprep.subr.bf16.mxu0 0
    %647 = vmatpush1.bf16.msra.mxu0 0
    %648 = vmatprep.subr.bf16.mxu0 0
    %649 = vmatpush1.bf16.msra.mxu0 0
    %650 = vmatprep.subr.bf16.mxu0 0
    %651 = vmatpush1.bf16.msra.mxu0 0
    %652 = vmatprep.subr.bf16.mxu0 0
    %653 = vmatpush1.bf16.msra.mxu0 0
    %654 = vmatprep.subr.bf16.mxu0 0
    %655 = vmatpush1.bf16.msra.mxu0 0
    %656 = vmatprep.mubr.bf16.mxu0 0
    %657 = vmatmul.mubr.bf16.gmra.mrb[0].mxu0 %v619
    %v658 = vpop.f32.mrb[0].mxu0
    %v659 = vadd.f32 0.0, %v658
    %v660 = vpop.f32.mrb[0].mxu0
    %v661 = vpop.f32.mrb[0].mxu0
    %v662 = vadd.f32 0.0, %v661
    %v663 = vpop.f32.mrb[0].mxu0
    %664 = vmatprep.mubr.bf16.mxu0 0
    %665 = vmatmul.mubr.bf16.gmra.mrb[0].mxu0 %v622
    %v666 = vpop.f32.mrb[0].mxu0
    %v667 = vadd.f32 0.0, %v666
    %v668 = vpop.f32.mrb[0].mxu0
    %v669 = vpop.f32.mrb[0].mxu0
    %v670 = vadd.f32 0.0, %v669
    %v671 = vpop.f32.mrb[0].mxu0
    %672 = vdwg.mxu0
    %vm673 = vcmask 523264
    %v675 = vsel %vm673, %v132, 0
    %v678 = vsel %vm673, %v133, 0
    %v681 = vsel %vm673, %v134, 0
    %v684 = vsel %vm673, %v135, 0
    %686 = vmatprep.subr.mxu0 0.0
    %687 = vmatpush1.msra.mxu0 %v565
    %688 = vmatprep.subr.mxu0 0.0
    %689 = vmatpush1.msra.mxu0 %v568
    %690 = vmatprep.subr.mxu0 0.0
    %691 = vmatpush1.msra.mxu0 %v573
    %692 = vmatprep.subr.mxu0 0.0
    %693 = vmatpush1.msra.mxu0 %v576
    %694 = vmatprep.subr.mxu0 0.0
    %695 = vmatpush1.msra.mxu0 %v581
    %696 = vmatprep.subr.mxu0 0.0
    %697 = vmatpush1.msra.mxu0 %v584
    %698 = vmatprep.subr.mxu0 0.0
    %699 = vmatpush1.msra.mxu0 %v589
    %700 = vmatprep.subr.mxu0 0.0
    %701 = vmatpush1.msra.mxu0 %v592
    %702 = vmatprep.subr.mxu0 0.0
    %703 = vmatpush1.msra.mxu0 0.0
    %704 = vmatprep.subr.mxu0 0.0
    %705 = vmatpush1.msra.mxu0 0.0
    %706 = vmatprep.subr.mxu0 0.0
    %707 = vmatpush1.msra.mxu0 0.0
    %708 = vmatprep.subr.mxu0 0.0
    %709 = vmatpush1.msra.mxu0 0.0
    %710 = vmatprep.subr.mxu0 0.0
    %711 = vmatpush1.msra.mxu0 0.0
    %712 = vmatprep.subr.mxu0 0.0
    %713 = vmatpush1.msra.mxu0 0.0
    %714 = vmatprep.subr.mxu0 0.0
    %715 = vmatpush1.msra.mxu0 0.0
    %716 = vmatprep.subr.mxu0 0.0
    %717 = vmatpush1.msra.mxu0 0.0
    %718 = vmatprep.subr.mxu0 0.0
    %719 = vmatpush1.msra.mxu0 0.0
    %720 = vmatprep.subr.mxu0 0.0
    %721 = vmatpush1.msra.mxu0 0.0
    %722 = vmatprep.subr.mxu0 0.0
    %723 = vmatpush1.msra.mxu0 0.0
    %724 = vmatprep.subr.mxu0 0.0
    %725 = vmatpush1.msra.mxu0 0.0
    %726 = vmatprep.subr.mxu0 0.0
    %727 = vmatpush1.msra.mxu0 0.0
    %728 = vmatprep.subr.mxu0 0.0
    %729 = vmatpush1.msra.mxu0 0.0
    %730 = vmatprep.subr.mxu0 0.0
    %731 = vmatpush1.msra.mxu0 0.0
    %732 = vmatprep.subr.mxu0 0.0
    %733 = vmatpush1.msra.mxu0 0.0
    %734 = vmatprep.subr.mxu0 0.0
    %735 = vmatpush1.msra.mxu0 0.0
    %736 = vmatprep.subr.mxu0 0.0
    %737 = vmatpush1.msra.mxu0 0.0
    %738 = vmatprep.subr.mxu0 0.0
    %739 = vmatpush1.msra.mxu0 0.0
    %740 = vmatprep.subr.mxu0 0.0
    %741 = vmatpush1.msra.mxu0 0.0
    %742 = vmatprep.subr.mxu0 0.0
    %743 = vmatpush1.msra.mxu0 0.0
    %744 = vmatprep.subr.mxu0 0.0
    %745 = vmatpush1.msra.mxu0 0.0
    %746 = vmatprep.subr.mxu0 0.0
    %747 = vmatpush1.msra.mxu0 0.0
    %748 = vmatprep.subr.mxu0 0.0
    %749 = vmatpush1.msra.mxu0 0.0
    %750 = vmatprep.mubr.f32.mxu0 0.0
    %751 = vmatmul.mubr.f32.gmra.mrb[0].mxu0 %v675
    %v752 = vpop.f32.mrb[0].mxu0
    %v753 = vadd.f32 %v659, %v752
    %v754 = vpop.f32.mrb[0].mxu0
    %755 = vmatprep.mubr.f32.mxu0 0.0
    %756 = vmatmul.mubr.f32.gmra.mrb[0].mxu0 %v678
    %v757 = vpop.f32.mrb[0].mxu0
    %v758 = vadd.f32 %v662, %v757
    %v759 = vpop.f32.mrb[0].mxu0
    %760 = vmatprep.mubr.f32.mxu0 0.0
    %761 = vmatmul.mubr.f32.gmra.mrb[0].mxu0 %v681
    %v762 = vpop.f32.mrb[0].mxu0
    %v763 = vadd.f32 %v667, %v762
    %v764 = vpop.f32.mrb[0].mxu0
    %765 = vmatprep.mubr.f32.mxu0 0.0
    %766 = vmatmul.mubr.f32.gmra.mrb[0].mxu0 %v684
    %v767 = vpop.f32.mrb[0].mxu0
    %v768 = vadd.f32 %v670, %v767
    %v769 = vpop.f32.mrb[0].mxu0
    %770 = vdwg.mxu0
    %v771 = vld [vmem:[%s17] sm:$0x1]
    %v773 = vlaneseq
    %v774 = vshrl.u32 %v773, 7
    %v775 = vsub.s32 0, %v774
    %v776 = vrot.slane %v771, %v775
    %v778 = vadd.f32 %v753, %v776
    %v779 = vadd.f32 %v758, %v776
    %v780 = vadd.f32 %v763, %v776
    %v781 = vadd.f32 %v768, %v776
    %v782 = vmax.f32 %v778, 0.0
    %v783 = vmax.f32 %v779, 0.0
    %v784 = vmax.f32 %v780, 0.0
    %v785 = vmax.f32 %v781, 0.0
    %v786 = vld [vmem:[%s19] sm:$0x1]
    %v788 = vlaneseq
    %v789 = vshrl.u32 %v788, 7
    %v790 = vsub.s32 0, %v789
    %v791 = vrot.slane %v786, %v790
    %v793 = vmul.f32 %v782, %v791
    %v794 = vmul.f32 %v783, %v791
    %v795 = vmul.f32 %v784, %v791
    %v796 = vmul.f32 %v785, %v791
    %v797 = vld [vmem:[%s21] sm:$0x1]
    %v799 = vlaneseq
    %v800 = vshrl.u32 %v799, 7
    %v801 = vsub.s32 0, %v800
    %v802 = vrot.slane %v797, %v801
    %v804 = vadd.f32 %v793, %v802
    %v805 = vadd.f32 %v794, %v802
    %v806 = vadd.f32 %v795, %v802
    %v807 = vadd.f32 %v796, %v802
    %v808 = vpack.c.bf16 %v805, %v804
    %v809 = vpack.c.bf16 %v807, %v806
    %v810 = vld [vmem:[%s5] sm:$0xf]
    %v811 = vld [vmem:[%s5 + $0x4] sm:$0xf]
    %v812 = vld [vmem:[%s5 + $0x8] sm:$0xf]
    %v813 = vld [vmem:[%s5 + $0xc] sm:$0xf]
    %v814 = vld [vmem:[%s5 + $0x10] sm:$0xf]
    %v815 = vld [vmem:[%s5 + $0x14] sm:$0xf]
    %v816 = vld [vmem:[%s5 + $0x18] sm:$0xf]
    %v817 = vld [vmem:[%s5 + $0x1c] sm:$0xf]
    %v826 = vunpack.c.l.b16 %v810
    %v827 = vunpack.c.l.b16 %v811
    %v828 = vunpack.c.l.b16 %v812
    %v829 = vunpack.c.l.b16 %v813
    %v830 = vunpack.c.l.b16 %v814
    %v831 = vunpack.c.l.b16 %v815
    %v832 = vunpack.c.l.b16 %v816
    %v833 = vunpack.c.l.b16 %v817
    %v834 = vpack.c.b16 %v827, %v826
    %v835 = vpack.c.b16 %v829, %v828
    %v836 = vpack.c.b16 %v831, %v830
    %v837 = vpack.c.b16 %v833, %v832
    %vm838 = vcmask 261120
    %v840 = vsel %vm838, %v834, 0
    %v843 = vsel %vm838, %v835, 0
    %v846 = vsel %vm838, %v836, 0
    %v849 = vsel %vm838, %v837, 0
    %851 = vmatprep.subr.bf16.mxu0 0
    %852 = vmatpush1.bf16.msra.mxu0 %v808
    %853 = vmatprep.subr.bf16.mxu0 0
    %854 = vmatpush1.bf16.msra.mxu0 %v809
    %855 = vmatprep.subr.bf16.mxu0 0
    %856 = vmatpush1.bf16.msra.mxu0 0
    %857 = vmatprep.subr.bf16.mxu0 0
    %858 = vmatpush1.bf16.msra.mxu0 0
    %859 = vmatprep.subr.bf16.mxu0 0
    %860 = vmatpush1.bf16.msra.mxu0 0
    %861 = vmatprep.subr.bf16.mxu0 0
    %862 = vmatpush1.bf16.msra.mxu0 0
    %863 = vmatprep.subr.bf16.mxu0 0
    %864 = vmatpush1.bf16.msra.mxu0 0
    %865 = vmatprep.subr.bf16.mxu0 0
    %866 = vmatpush1.bf16.msra.mxu0 0
    %867 = vmatprep.subr.bf16.mxu0 0
    %868 = vmatpush1.bf16.msra.mxu0 0
    %869 = vmatprep.subr.bf16.mxu0 0
    %870 = vmatpush1.bf16.msra.mxu0 0
    %871 = vmatprep.subr.bf16.mxu0 0
    %872 = vmatpush1.bf16.msra.mxu0 0
    %873 = vmatprep.subr.bf16.mxu0 0
    %874 = vmatpush1.bf16.msra.mxu0 0
    %875 = vmatprep.subr.bf16.mxu0 0
    %876 = vmatpush1.bf16.msra.mxu0 0
    %877 = vmatprep.subr.bf16.mxu0 0
    %878 = vmatpush1.bf16.msra.mxu0 0
    %879 = vmatprep.subr.bf16.mxu0 0
    %880 = vmatpush1.bf16.msra.mxu0 0
    %881 = vmatprep.subr.bf16.mxu0 0
    %882 = vmatpush1.bf16.msra.mxu0 0
    %883 = vmatprep.mubr.bf16.mxu0 0
    %884 = vmatmul.mubr.bf16.gmra.mrb[0].mxu0 %v840
    %v885 = vpop.f32.mrb[0].mxu0
    %v886 = vadd.f32 0.0, %v885
    %v887 = vpop.f32.mrb[0].mxu0
    %v888 = vpop.f32.mrb[0].mxu0
    %v889 = vadd.f32 0.0, %v888
    %v890 = vpop.f32.mrb[0].mxu0
    %891 = vmatprep.mubr.bf16.mxu0 0
    %892 = vmatmul.mubr.bf16.gmra.mrb[0].mxu0 %v843
    %v893 = vpop.f32.mrb[0].mxu0
    %v894 = vadd.f32 0.0, %v893
    %v895 = vpop.f32.mrb[0].mxu0
    %v896 = vpop.f32.mrb[0].mxu0
    %v897 = vadd.f32 0.0, %v896
    %v898 = vpop.f32.mrb[0].mxu0
    %899 = vmatprep.mubr.bf16.mxu0 0
    %900 = vmatmul.mubr.bf16.gmra.mrb[0].mxu0 %v846
    %v901 = vpop.f32.mrb[0].mxu0
    %v902 = vadd.f32 0.0, %v901
    %v903 = vpop.f32.mrb[0].mxu0
    %v904 = vpop.f32.mrb[0].mxu0
    %v905 = vadd.f32 0.0, %v904
    %v906 = vpop.f32.mrb[0].mxu0
    %907 = vmatprep.mubr.bf16.mxu0 0
    %908 = vmatmul.mubr.bf16.gmra.mrb[0].mxu0 %v849
    %v909 = vpop.f32.mrb[0].mxu0
    %v910 = vadd.f32 0.0, %v909
    %v911 = vpop.f32.mrb[0].mxu0
    %v912 = vpop.f32.mrb[0].mxu0
    %v913 = vadd.f32 0.0, %v912
    %v914 = vpop.f32.mrb[0].mxu0
    %915 = vdwg.mxu0
    %v916 = vpack.c.bf16 %v889, %v886
    %v917 = vpack.c.bf16 %v897, %v894
    %v918 = vpack.c.bf16 %v905, %v902
    %v919 = vpack.c.bf16 %v913, %v910
    %921 = vset.pattern.permute.xlu0 0
    %922 = vperm.xlu0 %921, %v136
    %v923 = vpop.permute.xlu0 %922
    %v926 = vunpack.c.l.s4 839922192
    %v927 = vunpack.c.0.s8 %v926
    %v928 = vlaneseq
    %v929 = vshrl.u32 %v928, 7
    %v930 = vsub.s32 %v927, %v929
    %v931 = vrot.slane %v923, %v930
    %933 = vset.pattern.permute.xlu0 0
    %934 = vperm.xlu0 %933, %v137
    %v935 = vpop.permute.xlu0 %934
    %v938 = vunpack.c.l.s4 839922192
    %v939 = vunpack.c.0.s8 %v938
    %v940 = vlaneseq
    %v941 = vshrl.u32 %v940, 7
    %v942 = vsub.s32 %v939, %v941
    %v943 = vrot.slane %v935, %v942
    %945 = vset.pattern.permute.xlu0 0
    %946 = vperm.xlu0 %945, %v138
    %v947 = vpop.permute.xlu0 %946
    %v950 = vunpack.c.l.s4 839922192
    %v951 = vunpack.c.0.s8 %v950
    %v952 = vlaneseq
    %v953 = vshrl.u32 %v952, 7
    %v954 = vsub.s32 %v951, %v953
    %v955 = vrot.slane %v947, %v954
    %957 = vset.pattern.permute.xlu0 0
    %958 = vperm.xlu0 %957, %v139
    %v959 = vpop.permute.xlu0 %958
    %v962 = vunpack.c.l.s4 839922192
    %v963 = vunpack.c.0.s8 %v962
    %v964 = vlaneseq
    %v965 = vshrl.u32 %v964, 7
    %v966 = vsub.s32 %v963, %v965
    %v967 = vrot.slane %v959, %v966
    %969 = vset.pattern.permute.xlu0 0
    %970 = vperm.xlu0 %969, %v140
    %v971 = vpop.permute.xlu0 %970
    %v974 = vunpack.c.l.s4 839922192
    %v975 = vunpack.c.0.s8 %v974
    %v976 = vlaneseq
    %v977 = vshrl.u32 %v976, 7
    %v978 = vsub.s32 %v975, %v977
    %v979 = vrot.slane %v971, %v978
    %981 = vset.pattern.permute.xlu0 0
    %982 = vperm.xlu0 %981, %v141
    %v983 = vpop.permute.xlu0 %982
    %v986 = vunpack.c.l.s4 839922192
    %v987 = vunpack.c.0.s8 %v986
    %v988 = vlaneseq
    %v989 = vshrl.u32 %v988, 7
    %v990 = vsub.s32 %v987, %v989
    %v991 = vrot.slane %v983, %v990
    %993 = vset.pattern.permute.xlu0 0
    %994 = vperm.xlu0 %993, %v142
    %v995 = vpop.permute.xlu0 %994
    %v998 = vunpack.c.l.s4 839922192
    %v999 = vunpack.c.0.s8 %v998
    %v1000 = vlaneseq
    %v1001 = vshrl.u32 %v1000, 7
    %v1002 = vsub.s32 %v999, %v1001
    %v1003 = vrot.slane %v995, %v1002
    %1005 = vset.pattern.permute.xlu0 0
    %1006 = vperm.xlu0 %1005, %v143
    %v1007 = vpop.permute.xlu0 %1006
    %v1010 = vunpack.c.l.s4 839922192
    %v1011 = vunpack.c.0.s8 %v1010
    %v1012 = vlaneseq
    %v1013 = vshrl.u32 %v1012, 7
    %v1014 = vsub.s32 %v1011, %v1013
    %v1015 = vrot.slane %v1007, %v1014
    %v1020 = vunpack.c.l.b16 %v916
    %v1021 = vunpack.c.h.b16 %v916
    %v1022 = vunpack.c.l.b16 %v917
    %v1023 = vunpack.c.h.b16 %v917
    %v1024 = vunpack.c.l.b16 %v918
    %v1025 = vunpack.c.h.b16 %v918
    %v1026 = vunpack.c.l.b16 %v919
    %v1027 = vunpack.c.h.b16 %v919
    %v1028 = vpack.c.b16 %v1020, %v1020
    %v1029 = vpack.c.b16 %v1021, %v1021
    %v1030 = vpack.c.b16 %v1022, %v1022
    %v1031 = vpack.c.b16 %v1023, %v1023
    %v1032 = vpack.c.b16 %v1024, %v1024
    %v1033 = vpack.c.b16 %v1025, %v1025
    %v1034 = vpack.c.b16 %v1026, %v1026
    %v1035 = vpack.c.b16 %v1027, %v1027
    %v1044 = vmul.bf16 %v931, %v1028
    %v1045 = vmul.bf16 %v943, %v1029
    %v1046 = vmul.bf16 %v955, %v1030
    %v1047 = vmul.bf16 %v967, %v1031
    %v1048 = vmul.bf16 %v979, %v1032
    %v1049 = vmul.bf16 %v991, %v1033
    %v1050 = vmul.bf16 %v1003, %v1034
    %v1051 = vmul.bf16 %v1015, %v1035
    %v1060 = vunpack.c.l.b16 %v1044
    %v1061 = vunpack.c.l.b16 %v1045
    %v1062 = vunpack.c.l.b16 %v1046
    %v1063 = vunpack.c.l.b16 %v1047
    %v1064 = vunpack.c.l.b16 %v1048
    %v1065 = vunpack.c.l.b16 %v1049
    %v1066 = vunpack.c.l.b16 %v1050
    %v1067 = vunpack.c.l.b16 %v1051
    %v1068 = vpack.c.b16 %v1061, %v1060
    %v1069 = vpack.c.b16 %v1063, %v1062
    %v1070 = vpack.c.b16 %v1065, %v1064
    %v1071 = vpack.c.b16 %v1067, %v1066
    %1076 = vst [vmem:[#allocation2] sm:$0xff] %v1068
    %1077 = vst [vmem:[#allocation2 + $0xd8] sm:$0xff] %v1069
    %1078 = vst [vmem:[#allocation2 + $0x1b0] sm:$0xff] %v1070
    %1079 = vst [vmem:[#allocation2 + $0x288] sm:$0xff] %v1071
    %1080 = vset.pattern.permute.xlu0 1
    %1081 = vperm.xlu0 %1080, %v136
    %v1082 = vpop.permute.xlu0 %1081
    %v1085 = vunpack.c.l.s4 839922192
    %v1086 = vunpack.c.0.s8 %v1085
    %v1087 = vlaneseq
    %v1088 = vshrl.u32 %v1087, 7
    %v1089 = vsub.s32 %v1086, %v1088
    %v1090 = vrot.slane %v1082, %v1089
    %1091 = vset.pattern.permute.xlu0 1
    %1092 = vperm.xlu0 %1091, %v137
    %v1093 = vpop.permute.xlu0 %1092
    %v1096 = vunpack.c.l.s4 839922192
    %v1097 = vunpack.c.0.s8 %v1096
    %v1098 = vlaneseq
    %v1099 = vshrl.u32 %v1098, 7
    %v1100 = vsub.s32 %v1097, %v1099
    %v1101 = vrot.slane %v1093, %v1100
    %1102 = vset.pattern.permute.xlu0 1
    %1103 = vperm.xlu0 %1102, %v138
    %v1104 = vpop.permute.xlu0 %1103
    %v1107 = vunpack.c.l.s4 839922192
    %v1108 = vunpack.c.0.s8 %v1107
    %v1109 = vlaneseq
    %v1110 = vshrl.u32 %v1109, 7
    %v1111 = vsub.s32 %v1108, %v1110
    %v1112 = vrot.slane %v1104, %v1111
    %1113 = vset.pattern.permute.xlu0 1
    %1114 = vperm.xlu0 %1113, %v139
    %v1115 = vpop.permute.xlu0 %1114
    %v1118 = vunpack.c.l.s4 839922192
    %v1119 = vunpack.c.0.s8 %v1118
    %v1120 = vlaneseq
    %v1121 = vshrl.u32 %v1120, 7
    %v1122 = vsub.s32 %v1119, %v1121
    %v1123 = vrot.slane %v1115, %v1122
    %1124 = vset.pattern.permute.xlu0 1
    %1125 = vperm.xlu0 %1124, %v140
    %v1126 = vpop.permute.xlu0 %1125
    %v1129 = vunpack.c.l.s4 839922192
    %v1130 = vunpack.c.0.s8 %v1129
    %v1131 = vlaneseq
    %v1132 = vshrl.u32 %v1131, 7
    %v1133 = vsub.s32 %v1130, %v1132
    %v1134 = vrot.slane %v1126, %v1133
    %1135 = vset.pattern.permute.xlu0 1
    %1136 = vperm.xlu0 %1135, %v141
    %v1137 = vpop.permute.xlu0 %1136
    %v1140 = vunpack.c.l.s4 839922192
    %v1141 = vunpack.c.0.s8 %v1140
    %v1142 = vlaneseq
    %v1143 = vshrl.u32 %v1142, 7
    %v1144 = vsub.s32 %v1141, %v1143
    %v1145 = vrot.slane %v1137, %v1144
    %1146 = vset.pattern.permute.xlu0 1
    %1147 = vperm.xlu0 %1146, %v142
    %v1148 = vpop.permute.xlu0 %1147
    %v1151 = vunpack.c.l.s4 839922192
    %v1152 = vunpack.c.0.s8 %v1151
    %v1153 = vlaneseq
    %v1154 = vshrl.u32 %v1153, 7
    %v1155 = vsub.s32 %v1152, %v1154
    %v1156 = vrot.slane %v1148, %v1155
    %1157 = vset.pattern.permute.xlu0 1
    %1158 = vperm.xlu0 %1157, %v143
    %v1159 = vpop.permute.xlu0 %1158
    %v1162 = vunpack.c.l.s4 839922192
    %v1163 = vunpack.c.0.s8 %v1162
    %v1164 = vlaneseq
    %v1165 = vshrl.u32 %v1164, 7
    %v1166 = vsub.s32 %v1163, %v1165
    %v1167 = vrot.slane %v1159, %v1166
    %v1168 = vmul.bf16 %v1090, %v1028
    %v1169 = vmul.bf16 %v1101, %v1029
    %v1170 = vmul.bf16 %v1112, %v1030
    %v1171 = vmul.bf16 %v1123, %v1031
    %v1172 = vmul.bf16 %v1134, %v1032
    %v1173 = vmul.bf16 %v1145, %v1033
    %v1174 = vmul.bf16 %v1156, %v1034
    %v1175 = vmul.bf16 %v1167, %v1035
    %v1184 = vunpack.c.l.b16 %v1168
    %v1185 = vunpack.c.l.b16 %v1169
    %v1186 = vunpack.c.l.b16 %v1170
    %v1187 = vunpack.c.l.b16 %v1171
    %v1188 = vunpack.c.l.b16 %v1172
    %v1189 = vunpack.c.l.b16 %v1173
    %v1190 = vunpack.c.l.b16 %v1174
    %v1191 = vunpack.c.l.b16 %v1175
    %v1192 = vpack.c.b16 %v1185, %v1184
    %v1193 = vpack.c.b16 %v1187, %v1186
    %v1194 = vpack.c.b16 %v1189, %v1188
    %v1195 = vpack.c.b16 %v1191, %v1190
    %1200 = vst [vmem:[#allocation2 + $0x8] sm:$0xff] %v1192
    %1201 = vst [vmem:[#allocation2 + $0xe0] sm:$0xff] %v1193
    %1202 = vst [vmem:[#allocation2 + $0x1b8] sm:$0xff] %v1194
    %1203 = vst [vmem:[#allocation2 + $0x290] sm:$0xff] %v1195
    %1204 = vset.pattern.permute.xlu0 2
    %1205 = vperm.xlu0 %1204, %v136
    %v1206 = vpop.permute.xlu0 %1205
    %v1209 = vunpack.c.l.s4 839922192
    %v1210 = vunpack.c.0.s8 %v1209
    %v1211 = vlaneseq
    %v1212 = vshrl.u32 %v1211, 7
    %v1213 = vsub.s32 %v1210, %v1212
    %v1214 = vrot.slane %v1206, %v1213
    %1215 = vset.pattern.permute.xlu0 2
    %1216 = vperm.xlu0 %1215, %v137
    %v1217 = vpop.permute.xlu0 %1216
    %v1220 = vunpack.c.l.s4 839922192
    %v1221 = vunpack.c.0.s8 %v1220
    %v1222 = vlaneseq
    %v1223 = vshrl.u32 %v1222, 7
    %v1224 = vsub.s32 %v1221, %v1223
    %v1225 = vrot.slane %v1217, %v1224
    %1226 = vset.pattern.permute.xlu0 2
    %1227 = vperm.xlu0 %1226, %v138
    %v1228 = vpop.permute.xlu0 %1227
    %v1231 = vunpack.c.l.s4 839922192
    %v1232 = vunpack.c.0.s8 %v1231
    %v1233 = vlaneseq
    %v1234 = vshrl.u32 %v1233, 7
    %v1235 = vsub.s32 %v1232, %v1234
    %v1236 = vrot.slane %v1228, %v1235
    %1237 = vset.pattern.permute.xlu0 2
    %1238 = vperm.xlu0 %1237, %v139
    %v1239 = vpop.permute.xlu0 %1238
    %v1242 = vunpack.c.l.s4 839922192
    %v1243 = vunpack.c.0.s8 %v1242
    %v1244 = vlaneseq
    %v1245 = vshrl.u32 %v1244, 7
    %v1246 = vsub.s32 %v1243, %v1245
    %v1247 = vrot.slane %v1239, %v1246
    %1248 = vset.pattern.permute.xlu0 2
    %1249 = vperm.xlu0 %1248, %v140
    %v1250 = vpop.permute.xlu0 %1249
    %v1253 = vunpack.c.l.s4 839922192
    %v1254 = vunpack.c.0.s8 %v1253
    %v1255 = vlaneseq
    %v1256 = vshrl.u32 %v1255, 7
    %v1257 = vsub.s32 %v1254, %v1256
    %v1258 = vrot.slane %v1250, %v1257
    %1259 = vset.pattern.permute.xlu0 2
    %1260 = vperm.xlu0 %1259, %v141
    %v1261 = vpop.permute.xlu0 %1260
    %v1264 = vunpack.c.l.s4 839922192
    %v1265 = vunpack.c.0.s8 %v1264
    %v1266 = vlaneseq
    %v1267 = vshrl.u32 %v1266, 7
    %v1268 = vsub.s32 %v1265, %v1267
    %v1269 = vrot.slane %v1261, %v1268
    %1270 = vset.pattern.permute.xlu0 2
    %1271 = vperm.xlu0 %1270, %v142
    %v1272 = vpop.permute.xlu0 %1271
    %v1275 = vunpack.c.l.s4 839922192
    %v1276 = vunpack.c.0.s8 %v1275
    %v1277 = vlaneseq
    %v1278 = vshrl.u32 %v1277, 7
    %v1279 = vsub.s32 %v1276, %v1278
    %v1280 = vrot.slane %v1272, %v1279
    %1281 = vset.pattern.permute.xlu0 2
    %1282 = vperm.xlu0 %1281, %v143
    %v1283 = vpop.permute.xlu0 %1282
    %v1286 = vunpack.c.l.s4 839922192
    %v1287 = vunpack.c.0.s8 %v1286
    %v1288 = vlaneseq
    %v1289 = vshrl.u32 %v1288, 7
    %v1290 = vsub.s32 %v1287, %v1289
    %v1291 = vrot.slane %v1283, %v1290
    %v1292 = vmul.bf16 %v1214, %v1028
    %v1293 = vmul.bf16 %v1225, %v1029
    %v1294 = vmul.bf16 %v1236, %v1030
    %v1295 = vmul.bf16 %v1247, %v1031
    %v1296 = vmul.bf16 %v1258, %v1032
    %v1297 = vmul.bf16 %v1269, %v1033
    %v1298 = vmul.bf16 %v1280, %v1034
    %v1299 = vmul.bf16 %v1291, %v1035
    %v1308 = vunpack.c.l.b16 %v1292
    %v1309 = vunpack.c.l.b16 %v1293
    %v1310 = vunpack.c.l.b16 %v1294
    %v1311 = vunpack.c.l.b16 %v1295
    %v1312 = vunpack.c.l.b16 %v1296
    %v1313 = vunpack.c.l.b16 %v1297
    %v1314 = vunpack.c.l.b16 %v1298
    %v1315 = vunpack.c.l.b16 %v1299
    %v1316 = vpack.c.b16 %v1309, %v1308
    %v1317 = vpack.c.b16 %v1311, %v1310
    %v1318 = vpack.c.b16 %v1313, %v1312
    %v1319 = vpack.c.b16 %v1315, %v1314
    %1324 = vst [vmem:[#allocation2 + $0x10] sm:$0xff] %v1316
    %1325 = vst [vmem:[#allocation2 + $0xe8] sm:$0xff] %v1317
    %1326 = vst [vmem:[#allocation2 + $0x1c0] sm:$0xff] %v1318
    %1327 = vst [vmem:[#allocation2 + $0x298] sm:$0xff] %v1319
    %1328 = vset.pattern.permute.xlu0 3
    %1329 = vperm.xlu0 %1328, %v136
    %v1330 = vpop.permute.xlu0 %1329
    %v1333 = vunpack.c.l.s4 839922192
    %v1334 = vunpack.c.0.s8 %v1333
    %v1335 = vlaneseq
    %v1336 = vshrl.u32 %v1335, 7
    %v1337 = vsub.s32 %v1334, %v1336
    %v1338 = vrot.slane %v1330, %v1337
    %1339 = vset.pattern.permute.xlu0 3
    %1340 = vperm.xlu0 %1339, %v137
    %v1341 = vpop.permute.xlu0 %1340
    %v1344 = vunpack.c.l.s4 839922192
    %v1345 = vunpack.c.0.s8 %v1344
    %v1346 = vlaneseq
    %v1347 = vshrl.u32 %v1346, 7
    %v1348 = vsub.s32 %v1345, %v1347
    %v1349 = vrot.slane %v1341, %v1348
    %1350 = vset.pattern.permute.xlu0 3
    %1351 = vperm.xlu0 %1350, %v138
    %v1352 = vpop.permute.xlu0 %1351
    %v1355 = vunpack.c.l.s4 839922192
    %v1356 = vunpack.c.0.s8 %v1355
    %v1357 = vlaneseq
    %v1358 = vshrl.u32 %v1357, 7
    %v1359 = vsub.s32 %v1356, %v1358
    %v1360 = vrot.slane %v1352, %v1359
    %1361 = vset.pattern.permute.xlu0 3
    %1362 = vperm.xlu0 %1361, %v139
    %v1363 = vpop.permute.xlu0 %1362
    %v1366 = vunpack.c.l.s4 839922192
    %v1367 = vunpack.c.0.s8 %v1366
    %v1368 = vlaneseq
    %v1369 = vshrl.u32 %v1368, 7
    %v1370 = vsub.s32 %v1367, %v1369
    %v1371 = vrot.slane %v1363, %v1370
    %1372 = vset.pattern.permute.xlu0 3
    %1373 = vperm.xlu0 %1372, %v140
    %v1374 = vpop.permute.xlu0 %1373
    %v1377 = vunpack.c.l.s4 839922192
    %v1378 = vunpack.c.0.s8 %v1377
    %v1379 = vlaneseq
    %v1380 = vshrl.u32 %v1379, 7
    %v1381 = vsub.s32 %v1378, %v1380
    %v1382 = vrot.slane %v1374, %v1381
    %1383 = vset.pattern.permute.xlu0 3
    %1384 = vperm.xlu0 %1383, %v141
    %v1385 = vpop.permute.xlu0 %1384
    %v1388 = vunpack.c.l.s4 839922192
    %v1389 = vunpack.c.0.s8 %v1388
    %v1390 = vlaneseq
    %v1391 = vshrl.u32 %v1390, 7
    %v1392 = vsub.s32 %v1389, %v1391
    %v1393 = vrot.slane %v1385, %v1392
    %1394 = vset.pattern.permute.xlu0 3
    %1395 = vperm.xlu0 %1394, %v142
    %v1396 = vpop.permute.xlu0 %1395
    %v1399 = vunpack.c.l.s4 839922192
    %v1400 = vunpack.c.0.s8 %v1399
    %v1401 = vlaneseq
    %v1402 = vshrl.u32 %v1401, 7
    %v1403 = vsub.s32 %v1400, %v1402
    %v1404 = vrot.slane %v1396, %v1403
    %1405 = vset.pattern.permute.xlu0 3
    %1406 = vperm.xlu0 %1405, %v143
    %v1407 = vpop.permute.xlu0 %1406
    %v1410 = vunpack.c.l.s4 839922192
    %v1411 = vunpack.c.0.s8 %v1410
    %v1412 = vlaneseq
    %v1413 = vshrl.u32 %v1412, 7
    %v1414 = vsub.s32 %v1411, %v1413
    %v1415 = vrot.slane %v1407, %v1414
    %v1416 = vmul.bf16 %v1338, %v1028
    %v1417 = vmul.bf16 %v1349, %v1029
    %v1418 = vmul.bf16 %v1360, %v1030
    %v1419 = vmul.bf16 %v1371, %v1031
    %v1420 = vmul.bf16 %v1382, %v1032
    %v1421 = vmul.bf16 %v1393, %v1033
    %v1422 = vmul.bf16 %v1404, %v1034
    %v1423 = vmul.bf16 %v1415, %v1035
    %v1432 = vunpack.c.l.b16 %v1416
    %v1433 = vunpack.c.l.b16 %v1417
    %v1434 = vunpack.c.l.b16 %v1418
    %v1435 = vunpack.c.l.b16 %v1419
    %v1436 = vunpack.c.l.b16 %v1420
    %v1437 = vunpack.c.l.b16 %v1421
    %v1438 = vunpack.c.l.b16 %v1422
    %v1439 = vunpack.c.l.b16 %v1423
    %v1440 = vpack.c.b16 %v1433, %v1432
    %v1441 = vpack.c.b16 %v1435, %v1434
    %v1442 = vpack.c.b16 %v1437, %v1436
    %v1443 = vpack.c.b16 %v1439, %v1438
    %1448 = vst [vmem:[#allocation2 + $0x18] sm:$0xff] %v1440
    %1449 = vst [vmem:[#allocation2 + $0xf0] sm:$0xff] %v1441
    %1450 = vst [vmem:[#allocation2 + $0x1c8] sm:$0xff] %v1442
    %1451 = vst [vmem:[#allocation2 + $0x2a0] sm:$0xff] %v1443
    %1452 = vset.pattern.permute.xlu0 4
    %1453 = vperm.xlu0 %1452, %v136
    %v1454 = vpop.permute.xlu0 %1453
    %v1457 = vunpack.c.l.s4 839922192
    %v1458 = vunpack.c.0.s8 %v1457
    %v1459 = vlaneseq
    %v1460 = vshrl.u32 %v1459, 7
    %v1461 = vsub.s32 %v1458, %v1460
    %v1462 = vrot.slane %v1454, %v1461
    %1463 = vset.pattern.permute.xlu0 4
    %1464 = vperm.xlu0 %1463, %v137
    %v1465 = vpop.permute.xlu0 %1464
    %v1468 = vunpack.c.l.s4 839922192
    %v1469 = vunpack.c.0.s8 %v1468
    %v1470 = vlaneseq
    %v1471 = vshrl.u32 %v1470, 7
    %v1472 = vsub.s32 %v1469, %v1471
    %v1473 = vrot.slane %v1465, %v1472
    %1474 = vset.pattern.permute.xlu0 4
    %1475 = vperm.xlu0 %1474, %v138
    %v1476 = vpop.permute.xlu0 %1475
    %v1479 = vunpack.c.l.s4 839922192
    %v1480 = vunpack.c.0.s8 %v1479
    %v1481 = vlaneseq
    %v1482 = vshrl.u32 %v1481, 7
    %v1483 = vsub.s32 %v1480, %v1482
    %v1484 = vrot.slane %v1476, %v1483
    %1485 = vset.pattern.permute.xlu0 4
    %1486 = vperm.xlu0 %1485, %v139
    %v1487 = vpop.permute.xlu0 %1486
    %v1490 = vunpack.c.l.s4 839922192
    %v1491 = vunpack.c.0.s8 %v1490
    %v1492 = vlaneseq
    %v1493 = vshrl.u32 %v1492, 7
    %v1494 = vsub.s32 %v1491, %v1493
    %v1495 = vrot.slane %v1487, %v1494
    %1496 = vset.pattern.permute.xlu0 4
    %1497 = vperm.xlu0 %1496, %v140
    %v1498 = vpop.permute.xlu0 %1497
    %v1501 = vunpack.c.l.s4 839922192
    %v1502 = vunpack.c.0.s8 %v1501
    %v1503 = vlaneseq
    %v1504 = vshrl.u32 %v1503, 7
    %v1505 = vsub.s32 %v1502, %v1504
    %v1506 = vrot.slane %v1498, %v1505
    %1507 = vset.pattern.permute.xlu0 4
    %1508 = vperm.xlu0 %1507, %v141
    %v1509 = vpop.permute.xlu0 %1508
    %v1512 = vunpack.c.l.s4 839922192
    %v1513 = vunpack.c.0.s8 %v1512
    %v1514 = vlaneseq
    %v1515 = vshrl.u32 %v1514, 7
    %v1516 = vsub.s32 %v1513, %v1515
    %v1517 = vrot.slane %v1509, %v1516
    %1518 = vset.pattern.permute.xlu0 4
    %1519 = vperm.xlu0 %1518, %v142
    %v1520 = vpop.permute.xlu0 %1519
    %v1523 = vunpack.c.l.s4 839922192
    %v1524 = vunpack.c.0.s8 %v1523
    %v1525 = vlaneseq
    %v1526 = vshrl.u32 %v1525, 7
    %v1527 = vsub.s32 %v1524, %v1526
    %v1528 = vrot.slane %v1520, %v1527
    %1529 = vset.pattern.permute.xlu0 4
    %1530 = vperm.xlu0 %1529, %v143
    %v1531 = vpop.permute.xlu0 %1530
    %v1534 = vunpack.c.l.s4 839922192
    %v1535 = vunpack.c.0.s8 %v1534
    %v1536 = vlaneseq
    %v1537 = vshrl.u32 %v1536, 7
    %v1538 = vsub.s32 %v1535, %v1537
    %v1539 = vrot.slane %v1531, %v1538
    %v1540 = vmul.bf16 %v1462, %v1028
    %v1541 = vmul.bf16 %v1473, %v1029
    %v1542 = vmul.bf16 %v1484, %v1030
    %v1543 = vmul.bf16 %v1495, %v1031
    %v1544 = vmul.bf16 %v1506, %v1032
    %v1545 = vmul.bf16 %v1517, %v1033
    %v1546 = vmul.bf16 %v1528, %v1034
    %v1547 = vmul.bf16 %v1539, %v1035
    %v1556 = vunpack.c.l.b16 %v1540
    %v1557 = vunpack.c.l.b16 %v1541
    %v1558 = vunpack.c.l.b16 %v1542
    %v1559 = vunpack.c.l.b16 %v1543
    %v1560 = vunpack.c.l.b16 %v1544
    %v1561 = vunpack.c.l.b16 %v1545
    %v1562 = vunpack.c.l.b16 %v1546
    %v1563 = vunpack.c.l.b16 %v1547
    %v1564 = vpack.c.b16 %v1557, %v1556
    %v1565 = vpack.c.b16 %v1559, %v1558
    %v1566 = vpack.c.b16 %v1561, %v1560
    %v1567 = vpack.c.b16 %v1563, %v1562
    %1572 = vst [vmem:[#allocation2 + $0x20] sm:$0xff] %v1564
    %1573 = vst [vmem:[#allocation2 + $0xf8] sm:$0xff] %v1565
    %1574 = vst [vmem:[#allocation2 + $0x1d0] sm:$0xff] %v1566
    %1575 = vst [vmem:[#allocation2 + $0x2a8] sm:$0xff] %v1567
    %1576 = vset.pattern.permute.xlu0 5
    %1577 = vperm.xlu0 %1576, %v136
    %v1578 = vpop.permute.xlu0 %1577
    %v1581 = vunpack.c.l.s4 839922192
    %v1582 = vunpack.c.0.s8 %v1581
    %v1583 = vlaneseq
    %v1584 = vshrl.u32 %v1583, 7
    %v1585 = vsub.s32 %v1582, %v1584
    %v1586 = vrot.slane %v1578, %v1585
    %1587 = vset.pattern.permute.xlu0 5
    %1588 = vperm.xlu0 %1587, %v137
    %v1589 = vpop.permute.xlu0 %1588
    %v1592 = vunpack.c.l.s4 839922192
    %v1593 = vunpack.c.0.s8 %v1592
    %v1594 = vlaneseq
    %v1595 = vshrl.u32 %v1594, 7
    %v1596 = vsub.s32 %v1593, %v1595
    %v1597 = vrot.slane %v1589, %v1596
    %1598 = vset.pattern.permute.xlu0 5
    %1599 = vperm.xlu0 %1598, %v138
    %v1600 = vpop.permute.xlu0 %1599
    %v1603 = vunpack.c.l.s4 839922192
    %v1604 = vunpack.c.0.s8 %v1603
    %v1605 = vlaneseq
    %v1606 = vshrl.u32 %v1605, 7
    %v1607 = vsub.s32 %v1604, %v1606
    %v1608 = vrot.slane %v1600, %v1607
    %1609 = vset.pattern.permute.xlu0 5
    %1610 = vperm.xlu0 %1609, %v139
    %v1611 = vpop.permute.xlu0 %1610
    %v1614 = vunpack.c.l.s4 839922192
    %v1615 = vunpack.c.0.s8 %v1614
    %v1616 = vlaneseq
    %v1617 = vshrl.u32 %v1616, 7
    %v1618 = vsub.s32 %v1615, %v1617
    %v1619 = vrot.slane %v1611, %v1618
    %1620 = vset.pattern.permute.xlu0 5
    %1621 = vperm.xlu0 %1620, %v140
    %v1622 = vpop.permute.xlu0 %1621
    %v1625 = vunpack.c.l.s4 839922192
    %v1626 = vunpack.c.0.s8 %v1625
    %v1627 = vlaneseq
    %v1628 = vshrl.u32 %v1627, 7
    %v1629 = vsub.s32 %v1626, %v1628
    %v1630 = vrot.slane %v1622, %v1629
    %1631 = vset.pattern.permute.xlu0 5
    %1632 = vperm.xlu0 %1631, %v141
    %v1633 = vpop.permute.xlu0 %1632
    %v1636 = vunpack.c.l.s4 839922192
    %v1637 = vunpack.c.0.s8 %v1636
    %v1638 = vlaneseq
    %v1639 = vshrl.u32 %v1638, 7
    %v1640 = vsub.s32 %v1637, %v1639
    %v1641 = vrot.slane %v1633, %v1640
    %1642 = vset.pattern.permute.xlu0 5
    %1643 = vperm.xlu0 %1642, %v142
    %v1644 = vpop.permute.xlu0 %1643
    %v1647 = vunpack.c.l.s4 839922192
    %v1648 = vunpack.c.0.s8 %v1647
    %v1649 = vlaneseq
    %v1650 = vshrl.u32 %v1649, 7
    %v1651 = vsub.s32 %v1648, %v1650
    %v1652 = vrot.slane %v1644, %v1651
    %1653 = vset.pattern.permute.xlu0 5
    %1654 = vperm.xlu0 %1653, %v143
    %v1655 = vpop.permute.xlu0 %1654
    %v1658 = vunpack.c.l.s4 839922192
    %v1659 = vunpack.c.0.s8 %v1658
    %v1660 = vlaneseq
    %v1661 = vshrl.u32 %v1660, 7
    %v1662 = vsub.s32 %v1659, %v1661
    %v1663 = vrot.slane %v1655, %v1662
    %v1664 = vmul.bf16 %v1586, %v1028
    %v1665 = vmul.bf16 %v1597, %v1029
    %v1666 = vmul.bf16 %v1608, %v1030
    %v1667 = vmul.bf16 %v1619, %v1031
    %v1668 = vmul.bf16 %v1630, %v1032
    %v1669 = vmul.bf16 %v1641, %v1033
    %v1670 = vmul.bf16 %v1652, %v1034
    %v1671 = vmul.bf16 %v1663, %v1035
    %v1680 = vunpack.c.l.b16 %v1664
    %v1681 = vunpack.c.l.b16 %v1665
    %v1682 = vunpack.c.l.b16 %v1666
    %v1683 = vunpack.c.l.b16 %v1667
    %v1684 = vunpack.c.l.b16 %v1668
    %v1685 = vunpack.c.l.b16 %v1669
    %v1686 = vunpack.c.l.b16 %v1670
    %v1687 = vunpack.c.l.b16 %v1671
    %v1688 = vpack.c.b16 %v1681, %v1680
    %v1689 = vpack.c.b16 %v1683, %v1682
    %v1690 = vpack.c.b16 %v1685, %v1684
    %v1691 = vpack.c.b16 %v1687, %v1686
    %1696 = vst [vmem:[#allocation2 + $0x28] sm:$0xff] %v1688
    %1697 = vst [vmem:[#allocation2 + $0x100] sm:$0xff] %v1689
    %1698 = vst [vmem:[#allocation2 + $0x1d8] sm:$0xff] %v1690
    %1699 = vst [vmem:[#allocation2 + $0x2b0] sm:$0xff] %v1691
    %1700 = vset.pattern.permute.xlu0 6
    %1701 = vperm.xlu0 %1700, %v136
    %v1702 = vpop.permute.xlu0 %1701
    %v1705 = vunpack.c.l.s4 839922192
    %v1706 = vunpack.c.0.s8 %v1705
    %v1707 = vlaneseq
    %v1708 = vshrl.u32 %v1707, 7
    %v1709 = vsub.s32 %v1706, %v1708
    %v1710 = vrot.slane %v1702, %v1709
    %1711 = vset.pattern.permute.xlu0 6
    %1712 = vperm.xlu0 %1711, %v137
    %v1713 = vpop.permute.xlu0 %1712
    %v1716 = vunpack.c.l.s4 839922192
    %v1717 = vunpack.c.0.s8 %v1716
    %v1718 = vlaneseq
    %v1719 = vshrl.u32 %v1718, 7
    %v1720 = vsub.s32 %v1717, %v1719
    %v1721 = vrot.slane %v1713, %v1720
    %1722 = vset.pattern.permute.xlu0 6
    %1723 = vperm.xlu0 %1722, %v138
    %v1724 = vpop.permute.xlu0 %1723
    %v1727 = vunpack.c.l.s4 839922192
    %v1728 = vunpack.c.0.s8 %v1727
    %v1729 = vlaneseq
    %v1730 = vshrl.u32 %v1729, 7
    %v1731 = vsub.s32 %v1728, %v1730
    %v1732 = vrot.slane %v1724, %v1731
    %1733 = vset.pattern.permute.xlu0 6
    %1734 = vperm.xlu0 %1733, %v139
    %v1735 = vpop.permute.xlu0 %1734
    %v1738 = vunpack.c.l.s4 839922192
    %v1739 = vunpack.c.0.s8 %v1738
    %v1740 = vlaneseq
    %v1741 = vshrl.u32 %v1740, 7
    %v1742 = vsub.s32 %v1739, %v1741
    %v1743 = vrot.slane %v1735, %v1742
    %1744 = vset.pattern.permute.xlu0 6
    %1745 = vperm.xlu0 %1744, %v140
    %v1746 = vpop.permute.xlu0 %1745
    %v1749 = vunpack.c.l.s4 839922192
    %v1750 = vunpack.c.0.s8 %v1749
    %v1751 = vlaneseq
    %v1752 = vshrl.u32 %v1751, 7
    %v1753 = vsub.s32 %v1750, %v1752
    %v1754 = vrot.slane %v1746, %v1753
    %1755 = vset.pattern.permute.xlu0 6
    %1756 = vperm.xlu0 %1755, %v141
    %v1757 = vpop.permute.xlu0 %1756
    %v1760 = vunpack.c.l.s4 839922192
    %v1761 = vunpack.c.0.s8 %v1760
    %v1762 = vlaneseq
    %v1763 = vshrl.u32 %v1762, 7
    %v1764 = vsub.s32 %v1761, %v1763
    %v1765 = vrot.slane %v1757, %v1764
    %1766 = vset.pattern.permute.xlu0 6
    %1767 = vperm.xlu0 %1766, %v142
    %v1768 = vpop.permute.xlu0 %1767
    %v1771 = vunpack.c.l.s4 839922192
    %v1772 = vunpack.c.0.s8 %v1771
    %v1773 = vlaneseq
    %v1774 = vshrl.u32 %v1773, 7
    %v1775 = vsub.s32 %v1772, %v1774
    %v1776 = vrot.slane %v1768, %v1775
    %1777 = vset.pattern.permute.xlu0 6
    %1778 = vperm.xlu0 %1777, %v143
    %v1779 = vpop.permute.xlu0 %1778
    %v1782 = vunpack.c.l.s4 839922192
    %v1783 = vunpack.c.0.s8 %v1782
    %v1784 = vlaneseq
    %v1785 = vshrl.u32 %v1784, 7
    %v1786 = vsub.s32 %v1783, %v1785
    %v1787 = vrot.slane %v1779, %v1786
    %v1788 = vmul.bf16 %v1710, %v1028
    %v1789 = vmul.bf16 %v1721, %v1029
    %v1790 = vmul.bf16 %v1732, %v1030
    %v1791 = vmul.bf16 %v1743, %v1031
    %v1792 = vmul.bf16 %v1754, %v1032
    %v1793 = vmul.bf16 %v1765, %v1033
    %v1794 = vmul.bf16 %v1776, %v1034
    %v1795 = vmul.bf16 %v1787, %v1035
    %v1804 = vunpack.c.l.b16 %v1788
    %v1805 = vunpack.c.l.b16 %v1789
    %v1806 = vunpack.c.l.b16 %v1790
    %v1807 = vunpack.c.l.b16 %v1791
    %v1808 = vunpack.c.l.b16 %v1792
    %v1809 = vunpack.c.l.b16 %v1793
    %v1810 = vunpack.c.l.b16 %v1794
    %v1811 = vunpack.c.l.b16 %v1795
    %v1812 = vpack.c.b16 %v1805, %v1804
    %v1813 = vpack.c.b16 %v1807, %v1806
    %v1814 = vpack.c.b16 %v1809, %v1808
    %v1815 = vpack.c.b16 %v1811, %v1810
    %1820 = vst [vmem:[#allocation2 + $0x30] sm:$0xff] %v1812
    %1821 = vst [vmem:[#allocation2 + $0x108] sm:$0xff] %v1813
    %1822 = vst [vmem:[#allocation2 + $0x1e0] sm:$0xff] %v1814
    %1823 = vst [vmem:[#allocation2 + $0x2b8] sm:$0xff] %v1815
    %1824 = vset.pattern.permute.xlu0 7
    %1825 = vperm.xlu0 %1824, %v136
    %v1826 = vpop.permute.xlu0 %1825
    %v1829 = vunpack.c.l.s4 839922192
    %v1830 = vunpack.c.0.s8 %v1829
    %v1831 = vlaneseq
    %v1832 = vshrl.u32 %v1831, 7
    %v1833 = vsub.s32 %v1830, %v1832
    %v1834 = vrot.slane %v1826, %v1833
    %1835 = vset.pattern.permute.xlu0 7
    %1836 = vperm.xlu0 %1835, %v137
    %v1837 = vpop.permute.xlu0 %1836
    %v1840 = vunpack.c.l.s4 839922192
    %v1841 = vunpack.c.0.s8 %v1840
    %v1842 = vlaneseq
    %v1843 = vshrl.u32 %v1842, 7
    %v1844 = vsub.s32 %v1841, %v1843
    %v1845 = vrot.slane %v1837, %v1844
    %1846 = vset.pattern.permute.xlu0 7
    %1847 = vperm.xlu0 %1846, %v138
    %v1848 = vpop.permute.xlu0 %1847
    %v1851 = vunpack.c.l.s4 839922192
    %v1852 = vunpack.c.0.s8 %v1851
    %v1853 = vlaneseq
    %v1854 = vshrl.u32 %v1853, 7
    %v1855 = vsub.s32 %v1852, %v1854
    %v1856 = vrot.slane %v1848, %v1855
    %1857 = vset.pattern.permute.xlu0 7
    %1858 = vperm.xlu0 %1857, %v139
    %v1859 = vpop.permute.xlu0 %1858
    %v1862 = vunpack.c.l.s4 839922192
    %v1863 = vunpack.c.0.s8 %v1862
    %v1864 = vlaneseq
    %v1865 = vshrl.u32 %v1864, 7
    %v1866 = vsub.s32 %v1863, %v1865
    %v1867 = vrot.slane %v1859, %v1866
    %1868 = vset.pattern.permute.xlu0 7
    %1869 = vperm.xlu0 %1868, %v140
    %v1870 = vpop.permute.xlu0 %1869
    %v1873 = vunpack.c.l.s4 839922192
    %v1874 = vunpack.c.0.s8 %v1873
    %v1875 = vlaneseq
    %v1876 = vshrl.u32 %v1875, 7
    %v1877 = vsub.s32 %v1874, %v1876
    %v1878 = vrot.slane %v1870, %v1877
    %1879 = vset.pattern.permute.xlu0 7
    %1880 = vperm.xlu0 %1879, %v141
    %v1881 = vpop.permute.xlu0 %1880
    %v1884 = vunpack.c.l.s4 839922192
    %v1885 = vunpack.c.0.s8 %v1884
    %v1886 = vlaneseq
    %v1887 = vshrl.u32 %v1886, 7
    %v1888 = vsub.s32 %v1885, %v1887
    %v1889 = vrot.slane %v1881, %v1888
    %1890 = vset.pattern.permute.xlu0 7
    %1891 = vperm.xlu0 %1890, %v142
    %v1892 = vpop.permute.xlu0 %1891
    %v1895 = vunpack.c.l.s4 839922192
    %v1896 = vunpack.c.0.s8 %v1895
    %v1897 = vlaneseq
    %v1898 = vshrl.u32 %v1897, 7
    %v1899 = vsub.s32 %v1896, %v1898
    %v1900 = vrot.slane %v1892, %v1899
    %1901 = vset.pattern.permute.xlu0 7
    %1902 = vperm.xlu0 %1901, %v143
    %v1903 = vpop.permute.xlu0 %1902
    %v1906 = vunpack.c.l.s4 839922192
    %v1907 = vunpack.c.0.s8 %v1906
    %v1908 = vlaneseq
    %v1909 = vshrl.u32 %v1908, 7
    %v1910 = vsub.s32 %v1907, %v1909
    %v1911 = vrot.slane %v1903, %v1910
    %v1912 = vmul.bf16 %v1834, %v1028
    %v1913 = vmul.bf16 %v1845, %v1029
    %v1914 = vmul.bf16 %v1856, %v1030
    %v1915 = vmul.bf16 %v1867, %v1031
    %v1916 = vmul.bf16 %v1878, %v1032
    %v1917 = vmul.bf16 %v1889, %v1033
    %v1918 = vmul.bf16 %v1900, %v1034
    %v1919 = vmul.bf16 %v1911, %v1035
    %v1928 = vunpack.c.l.b16 %v1912
    %v1929 = vunpack.c.l.b16 %v1913
    %v1930 = vunpack.c.l.b16 %v1914
    %v1931 = vunpack.c.l.b16 %v1915
    %v1932 = vunpack.c.l.b16 %v1916
    %v1933 = vunpack.c.l.b16 %v1917
    %v1934 = vunpack.c.l.b16 %v1918
    %v1935 = vunpack.c.l.b16 %v1919
    %v1936 = vpack.c.b16 %v1929, %v1928
    %v1937 = vpack.c.b16 %v1931, %v1930
    %v1938 = vpack.c.b16 %v1933, %v1932
    %v1939 = vpack.c.b16 %v1935, %v1934
    %1944 = vst [vmem:[#allocation2 + $0x38] sm:$0xff] %v1936
    %1945 = vst [vmem:[#allocation2 + $0x110] sm:$0xff] %v1937
    %1946 = vst [vmem:[#allocation2 + $0x1e8] sm:$0xff] %v1938
    %1947 = vst [vmem:[#allocation2 + $0x2c0] sm:$0xff] %v1939
    %1948 = vset.pattern.permute.xlu0 8
    %1949 = vperm.xlu0 %1948, %v136
    %v1950 = vpop.permute.xlu0 %1949
    %v1953 = vunpack.c.l.s4 839922192
    %v1954 = vunpack.c.0.s8 %v1953
    %v1955 = vlaneseq
    %v1956 = vshrl.u32 %v1955, 7
    %v1957 = vsub.s32 %v1954, %v1956
    %v1958 = vrot.slane %v1950, %v1957
    %1959 = vset.pattern.permute.xlu0 8
    %1960 = vperm.xlu0 %1959, %v137
    %v1961 = vpop.permute.xlu0 %1960
    %v1964 = vunpack.c.l.s4 839922192
    %v1965 = vunpack.c.0.s8 %v1964
    %v1966 = vlaneseq
    %v1967 = vshrl.u32 %v1966, 7
    %v1968 = vsub.s32 %v1965, %v1967
    %v1969 = vrot.slane %v1961, %v1968
    %1970 = vset.pattern.permute.xlu0 8
    %1971 = vperm.xlu0 %1970, %v138
    %v1972 = vpop.permute.xlu0 %1971
    %v1975 = vunpack.c.l.s4 839922192
    %v1976 = vunpack.c.0.s8 %v1975
    %v1977 = vlaneseq
    %v1978 = vshrl.u32 %v1977, 7
    %v1979 = vsub.s32 %v1976, %v1978
    %v1980 = vrot.slane %v1972, %v1979
    %1981 = vset.pattern.permute.xlu0 8
    %1982 = vperm.xlu0 %1981, %v139
    %v1983 = vpop.permute.xlu0 %1982
    %v1986 = vunpack.c.l.s4 839922192
    %v1987 = vunpack.c.0.s8 %v1986
    %v1988 = vlaneseq
    %v1989 = vshrl.u32 %v1988, 7
    %v1990 = vsub.s32 %v1987, %v1989
    %v1991 = vrot.slane %v1983, %v1990
    %1992 = vset.pattern.permute.xlu0 8
    %1993 = vperm.xlu0 %1992, %v140
    %v1994 = vpop.permute.xlu0 %1993
    %v1997 = vunpack.c.l.s4 839922192
    %v1998 = vunpack.c.0.s8 %v1997
    %v1999 = vlaneseq
    %v2000 = vshrl.u32 %v1999, 7
    %v2001 = vsub.s32 %v1998, %v2000
    %v2002 = vrot.slane %v1994, %v2001
    %2003 = vset.pattern.permute.xlu0 8
    %2004 = vperm.xlu0 %2003, %v141
    %v2005 = vpop.permute.xlu0 %2004
    %v2008 = vunpack.c.l.s4 839922192
    %v2009 = vunpack.c.0.s8 %v2008
    %v2010 = vlaneseq
    %v2011 = vshrl.u32 %v2010, 7
    %v2012 = vsub.s32 %v2009, %v2011
    %v2013 = vrot.slane %v2005, %v2012
    %2014 = vset.pattern.permute.xlu0 8
    %2015 = vperm.xlu0 %2014, %v142
    %v2016 = vpop.permute.xlu0 %2015
    %v2019 = vunpack.c.l.s4 839922192
    %v2020 = vunpack.c.0.s8 %v2019
    %v2021 = vlaneseq
    %v2022 = vshrl.u32 %v2021, 7
    %v2023 = vsub.s32 %v2020, %v2022
    %v2024 = vrot.slane %v2016, %v2023
    %2025 = vset.pattern.permute.xlu0 8
    %2026 = vperm.xlu0 %2025, %v143
    %v2027 = vpop.permute.xlu0 %2026
    %v2030 = vunpack.c.l.s4 839922192
    %v2031 = vunpack.c.0.s8 %v2030
    %v2032 = vlaneseq
    %v2033 = vshrl.u32 %v2032, 7
    %v2034 = vsub.s32 %v2031, %v2033
    %v2035 = vrot.slane %v2027, %v2034
    %v2036 = vmul.bf16 %v1958, %v1028
    %v2037 = vmul.bf16 %v1969, %v1029
    %v2038 = vmul.bf16 %v1980, %v1030
    %v2039 = vmul.bf16 %v1991, %v1031
    %v2040 = vmul.bf16 %v2002, %v1032
    %v2041 = vmul.bf16 %v2013, %v1033
    %v2042 = vmul.bf16 %v2024, %v1034
    %v2043 = vmul.bf16 %v2035, %v1035
    %v2052 = vunpack.c.l.b16 %v2036
    %v2053 = vunpack.c.l.b16 %v2037
    %v2054 = vunpack.c.l.b16 %v2038
    %v2055 = vunpack.c.l.b16 %v2039
    %v2056 = vunpack.c.l.b16 %v2040
    %v2057 = vunpack.c.l.b16 %v2041
    %v2058 = vunpack.c.l.b16 %v2042
    %v2059 = vunpack.c.l.b16 %v2043
    %v2060 = vpack.c.b16 %v2053, %v2052
    %v2061 = vpack.c.b16 %v2055, %v2054
    %v2062 = vpack.c.b16 %v2057, %v2056
    %v2063 = vpack.c.b16 %v2059, %v2058
    %2068 = vst [vmem:[#allocation2 + $0x40] sm:$0xff] %v2060
    %2069 = vst [vmem:[#allocation2 + $0x118] sm:$0xff] %v2061
    %2070 = vst [vmem:[#allocation2 + $0x1f0] sm:$0xff] %v2062
    %2071 = vst [vmem:[#allocation2 + $0x2c8] sm:$0xff] %v2063
    %2072 = vset.pattern.permute.xlu0 9
    %2073 = vperm.xlu0 %2072, %v136
    %v2074 = vpop.permute.xlu0 %2073
    %v2077 = vunpack.c.l.s4 839922192
    %v2078 = vunpack.c.0.s8 %v2077
    %v2079 = vlaneseq
    %v2080 = vshrl.u32 %v2079, 7
    %v2081 = vsub.s32 %v2078, %v2080
    %v2082 = vrot.slane %v2074, %v2081
    %2083 = vset.pattern.permute.xlu0 9
    %2084 = vperm.xlu0 %2083, %v137
    %v2085 = vpop.permute.xlu0 %2084
    %v2088 = vunpack.c.l.s4 839922192
    %v2089 = vunpack.c.0.s8 %v2088
    %v2090 = vlaneseq
    %v2091 = vshrl.u32 %v2090, 7
    %v2092 = vsub.s32 %v2089, %v2091
    %v2093 = vrot.slane %v2085, %v2092
    %2094 = vset.pattern.permute.xlu0 9
    %2095 = vperm.xlu0 %2094, %v138
    %v2096 = vpop.permute.xlu0 %2095
    %v2099 = vunpack.c.l.s4 839922192
    %v2100 = vunpack.c.0.s8 %v2099
    %v2101 = vlaneseq
    %v2102 = vshrl.u32 %v2101, 7
    %v2103 = vsub.s32 %v2100, %v2102
    %v2104 = vrot.slane %v2096, %v2103
    %2105 = vset.pattern.permute.xlu0 9
    %2106 = vperm.xlu0 %2105, %v139
    %v2107 = vpop.permute.xlu0 %2106
    %v2110 = vunpack.c.l.s4 839922192
    %v2111 = vunpack.c.0.s8 %v2110
    %v2112 = vlaneseq
    %v2113 = vshrl.u32 %v2112, 7
    %v2114 = vsub.s32 %v2111, %v2113
    %v2115 = vrot.slane %v2107, %v2114
    %2116 = vset.pattern.permute.xlu0 9
    %2117 = vperm.xlu0 %2116, %v140
    %v2118 = vpop.permute.xlu0 %2117
    %v2121 = vunpack.c.l.s4 839922192
    %v2122 = vunpack.c.0.s8 %v2121
    %v2123 = vlaneseq
    %v2124 = vshrl.u32 %v2123, 7
    %v2125 = vsub.s32 %v2122, %v2124
    %v2126 = vrot.slane %v2118, %v2125
    %2127 = vset.pattern.permute.xlu0 9
    %2128 = vperm.xlu0 %2127, %v141
    %v2129 = vpop.permute.xlu0 %2128
    %v2132 = vunpack.c.l.s4 839922192
    %v2133 = vunpack.c.0.s8 %v2132
    %v2134 = vlaneseq
    %v2135 = vshrl.u32 %v2134, 7
    %v2136 = vsub.s32 %v2133, %v2135
    %v2137 = vrot.slane %v2129, %v2136
    %2138 = vset.pattern.permute.xlu0 9
    %2139 = vperm.xlu0 %2138, %v142
    %v2140 = vpop.permute.xlu0 %2139
    %v2143 = vunpack.c.l.s4 839922192
    %v2144 = vunpack.c.0.s8 %v2143
    %v2145 = vlaneseq
    %v2146 = vshrl.u32 %v2145, 7
    %v2147 = vsub.s32 %v2144, %v2146
    %v2148 = vrot.slane %v2140, %v2147
    %2149 = vset.pattern.permute.xlu0 9
    %2150 = vperm.xlu0 %2149, %v143
    %v2151 = vpop.permute.xlu0 %2150
    %v2154 = vunpack.c.l.s4 839922192
    %v2155 = vunpack.c.0.s8 %v2154
    %v2156 = vlaneseq
    %v2157 = vshrl.u32 %v2156, 7
    %v2158 = vsub.s32 %v2155, %v2157
    %v2159 = vrot.slane %v2151, %v2158
    %v2160 = vmul.bf16 %v2082, %v1028
    %v2161 = vmul.bf16 %v2093, %v1029
    %v2162 = vmul.bf16 %v2104, %v1030
    %v2163 = vmul.bf16 %v2115, %v1031
    %v2164 = vmul.bf16 %v2126, %v1032
    %v2165 = vmul.bf16 %v2137, %v1033
    %v2166 = vmul.bf16 %v2148, %v1034
    %v2167 = vmul.bf16 %v2159, %v1035
    %v2176 = vunpack.c.l.b16 %v2160
    %v2177 = vunpack.c.l.b16 %v2161
    %v2178 = vunpack.c.l.b16 %v2162
    %v2179 = vunpack.c.l.b16 %v2163
    %v2180 = vunpack.c.l.b16 %v2164
    %v2181 = vunpack.c.l.b16 %v2165
    %v2182 = vunpack.c.l.b16 %v2166
    %v2183 = vunpack.c.l.b16 %v2167
    %v2184 = vpack.c.b16 %v2177, %v2176
    %v2185 = vpack.c.b16 %v2179, %v2178
    %v2186 = vpack.c.b16 %v2181, %v2180
    %v2187 = vpack.c.b16 %v2183, %v2182
    %2192 = vst [vmem:[#allocation2 + $0x48] sm:$0xff] %v2184
    %2193 = vst [vmem:[#allocation2 + $0x120] sm:$0xff] %v2185
    %2194 = vst [vmem:[#allocation2 + $0x1f8] sm:$0xff] %v2186
    %2195 = vst [vmem:[#allocation2 + $0x2d0] sm:$0xff] %v2187
    %2196 = vset.pattern.permute.xlu0 10
    %2197 = vperm.xlu0 %2196, %v136
    %v2198 = vpop.permute.xlu0 %2197
    %v2201 = vunpack.c.l.s4 839922192
    %v2202 = vunpack.c.0.s8 %v2201
    %v2203 = vlaneseq
    %v2204 = vshrl.u32 %v2203, 7
    %v2205 = vsub.s32 %v2202, %v2204
    %v2206 = vrot.slane %v2198, %v2205
    %2207 = vset.pattern.permute.xlu0 10
    %2208 = vperm.xlu0 %2207, %v137
    %v2209 = vpop.permute.xlu0 %2208
    %v2212 = vunpack.c.l.s4 839922192
    %v2213 = vunpack.c.0.s8 %v2212
    %v2214 = vlaneseq
    %v2215 = vshrl.u32 %v2214, 7
    %v2216 = vsub.s32 %v2213, %v2215
    %v2217 = vrot.slane %v2209, %v2216
    %2218 = vset.pattern.permute.xlu0 10
    %2219 = vperm.xlu0 %2218, %v138
    %v2220 = vpop.permute.xlu0 %2219
    %v2223 = vunpack.c.l.s4 839922192
    %v2224 = vunpack.c.0.s8 %v2223
    %v2225 = vlaneseq
    %v2226 = vshrl.u32 %v2225, 7
    %v2227 = vsub.s32 %v2224, %v2226
    %v2228 = vrot.slane %v2220, %v2227
    %2229 = vset.pattern.permute.xlu0 10
    %2230 = vperm.xlu0 %2229, %v139
    %v2231 = vpop.permute.xlu0 %2230
    %v2234 = vunpack.c.l.s4 839922192
    %v2235 = vunpack.c.0.s8 %v2234
    %v2236 = vlaneseq
    %v2237 = vshrl.u32 %v2236, 7
    %v2238 = vsub.s32 %v2235, %v2237
    %v2239 = vrot.slane %v2231, %v2238
    %2240 = vset.pattern.permute.xlu0 10
    %2241 = vperm.xlu0 %2240, %v140
    %v2242 = vpop.permute.xlu0 %2241
    %v2245 = vunpack.c.l.s4 839922192
    %v2246 = vunpack.c.0.s8 %v2245
    %v2247 = vlaneseq
    %v2248 = vshrl.u32 %v2247, 7
    %v2249 = vsub.s32 %v2246, %v2248
    %v2250 = vrot.slane %v2242, %v2249
    %2251 = vset.pattern.permute.xlu0 10
    %2252 = vperm.xlu0 %2251, %v141
    %v2253 = vpop.permute.xlu0 %2252
    %v2256 = vunpack.c.l.s4 839922192
    %v2257 = vunpack.c.0.s8 %v2256
    %v2258 = vlaneseq
    %v2259 = vshrl.u32 %v2258, 7
    %v2260 = vsub.s32 %v2257, %v2259
    %v2261 = vrot.slane %v2253, %v2260
    %2262 = vset.pattern.permute.xlu0 10
    %2263 = vperm.xlu0 %2262, %v142
    %v2264 = vpop.permute.xlu0 %2263
    %v2267 = vunpack.c.l.s4 839922192
    %v2268 = vunpack.c.0.s8 %v2267
    %v2269 = vlaneseq
    %v2270 = vshrl.u32 %v2269, 7
    %v2271 = vsub.s32 %v2268, %v2270
    %v2272 = vrot.slane %v2264, %v2271
    %2273 = vset.pattern.permute.xlu0 10
    %2274 = vperm.xlu0 %2273, %v143
    %v2275 = vpop.permute.xlu0 %2274
    %v2278 = vunpack.c.l.s4 839922192
    %v2279 = vunpack.c.0.s8 %v2278
    %v2280 = vlaneseq
    %v2281 = vshrl.u32 %v2280, 7
    %v2282 = vsub.s32 %v2279, %v2281
    %v2283 = vrot.slane %v2275, %v2282
    %v2284 = vmul.bf16 %v2206, %v1028
    %v2285 = vmul.bf16 %v2217, %v1029
    %v2286 = vmul.bf16 %v2228, %v1030
    %v2287 = vmul.bf16 %v2239, %v1031
    %v2288 = vmul.bf16 %v2250, %v1032
    %v2289 = vmul.bf16 %v2261, %v1033
    %v2290 = vmul.bf16 %v2272, %v1034
    %v2291 = vmul.bf16 %v2283, %v1035
    %v2300 = vunpack.c.l.b16 %v2284
    %v2301 = vunpack.c.l.b16 %v2285
    %v2302 = vunpack.c.l.b16 %v2286
    %v2303 = vunpack.c.l.b16 %v2287
    %v2304 = vunpack.c.l.b16 %v2288
    %v2305 = vunpack.c.l.b16 %v2289
    %v2306 = vunpack.c.l.b16 %v2290
    %v2307 = vunpack.c.l.b16 %v2291
    %v2308 = vpack.c.b16 %v2301, %v2300
    %v2309 = vpack.c.b16 %v2303, %v2302
    %v2310 = vpack.c.b16 %v2305, %v2304
    %v2311 = vpack.c.b16 %v2307, %v2306
    %2316 = vst [vmem:[#allocation2 + $0x50] sm:$0xff] %v2308
    %2317 = vst [vmem:[#allocation2 + $0x128] sm:$0xff] %v2309
    %2318 = vst [vmem:[#allocation2 + $0x200] sm:$0xff] %v2310
    %2319 = vst [vmem:[#allocation2 + $0x2d8] sm:$0xff] %v2311
    %2320 = vset.pattern.permute.xlu0 11
    %2321 = vperm.xlu0 %2320, %v136
    %v2322 = vpop.permute.xlu0 %2321
    %v2325 = vunpack.c.l.s4 839922192
    %v2326 = vunpack.c.0.s8 %v2325
    %v2327 = vlaneseq
    %v2328 = vshrl.u32 %v2327, 7
    %v2329 = vsub.s32 %v2326, %v2328
    %v2330 = vrot.slane %v2322, %v2329
    %2331 = vset.pattern.permute.xlu0 11
    %2332 = vperm.xlu0 %2331, %v137
    %v2333 = vpop.permute.xlu0 %2332
    %v2336 = vunpack.c.l.s4 839922192
    %v2337 = vunpack.c.0.s8 %v2336
    %v2338 = vlaneseq
    %v2339 = vshrl.u32 %v2338, 7
    %v2340 = vsub.s32 %v2337, %v2339
    %v2341 = vrot.slane %v2333, %v2340
    %2342 = vset.pattern.permute.xlu0 11
    %2343 = vperm.xlu0 %2342, %v138
    %v2344 = vpop.permute.xlu0 %2343
    %v2347 = vunpack.c.l.s4 839922192
    %v2348 = vunpack.c.0.s8 %v2347
    %v2349 = vlaneseq
    %v2350 = vshrl.u32 %v2349, 7
    %v2351 = vsub.s32 %v2348, %v2350
    %v2352 = vrot.slane %v2344, %v2351
    %2353 = vset.pattern.permute.xlu0 11
    %2354 = vperm.xlu0 %2353, %v139
    %v2355 = vpop.permute.xlu0 %2354
    %v2358 = vunpack.c.l.s4 839922192
    %v2359 = vunpack.c.0.s8 %v2358
    %v2360 = vlaneseq
    %v2361 = vshrl.u32 %v2360, 7
    %v2362 = vsub.s32 %v2359, %v2361
    %v2363 = vrot.slane %v2355, %v2362
    %2364 = vset.pattern.permute.xlu0 11
    %2365 = vperm.xlu0 %2364, %v140
    %v2366 = vpop.permute.xlu0 %2365
    %v2369 = vunpack.c.l.s4 839922192
    %v2370 = vunpack.c.0.s8 %v2369
    %v2371 = vlaneseq
    %v2372 = vshrl.u32 %v2371, 7
    %v2373 = vsub.s32 %v2370, %v2372
    %v2374 = vrot.slane %v2366, %v2373
    %2375 = vset.pattern.permute.xlu0 11
    %2376 = vperm.xlu0 %2375, %v141
    %v2377 = vpop.permute.xlu0 %2376
    %v2380 = vunpack.c.l.s4 839922192
    %v2381 = vunpack.c.0.s8 %v2380
    %v2382 = vlaneseq
    %v2383 = vshrl.u32 %v2382, 7
    %v2384 = vsub.s32 %v2381, %v2383
    %v2385 = vrot.slane %v2377, %v2384
    %2386 = vset.pattern.permute.xlu0 11
    %2387 = vperm.xlu0 %2386, %v142
    %v2388 = vpop.permute.xlu0 %2387
    %v2391 = vunpack.c.l.s4 839922192
    %v2392 = vunpack.c.0.s8 %v2391
    %v2393 = vlaneseq
    %v2394 = vshrl.u32 %v2393, 7
    %v2395 = vsub.s32 %v2392, %v2394
    %v2396 = vrot.slane %v2388, %v2395
    %2397 = vset.pattern.permute.xlu0 11
    %2398 = vperm.xlu0 %2397, %v143
    %v2399 = vpop.permute.xlu0 %2398
    %v2402 = vunpack.c.l.s4 839922192
    %v2403 = vunpack.c.0.s8 %v2402
    %v2404 = vlaneseq
    %v2405 = vshrl.u32 %v2404, 7
    %v2406 = vsub.s32 %v2403, %v2405
    %v2407 = vrot.slane %v2399, %v2406
    %v2408 = vmul.bf16 %v2330, %v1028
    %v2409 = vmul.bf16 %v2341, %v1029
    %v2410 = vmul.bf16 %v2352, %v1030
    %v2411 = vmul.bf16 %v2363, %v1031
    %v2412 = vmul.bf16 %v2374, %v1032
    %v2413 = vmul.bf16 %v2385, %v1033
    %v2414 = vmul.bf16 %v2396, %v1034
    %v2415 = vmul.bf16 %v2407, %v1035
    %v2424 = vunpack.c.l.b16 %v2408
    %v2425 = vunpack.c.l.b16 %v2409
    %v2426 = vunpack.c.l.b16 %v2410
    %v2427 = vunpack.c.l.b16 %v2411
    %v2428 = vunpack.c.l.b16 %v2412
    %v2429 = vunpack.c.l.b16 %v2413
    %v2430 = vunpack.c.l.b16 %v2414
    %v2431 = vunpack.c.l.b16 %v2415
    %v2432 = vpack.c.b16 %v2425, %v2424
    %v2433 = vpack.c.b16 %v2427, %v2426
    %v2434 = vpack.c.b16 %v2429, %v2428
    %v2435 = vpack.c.b16 %v2431, %v2430
    %2440 = vst [vmem:[#allocation2 + $0x58] sm:$0xff] %v2432
    %2441 = vst [vmem:[#allocation2 + $0x130] sm:$0xff] %v2433
    %2442 = vst [vmem:[#allocation2 + $0x208] sm:$0xff] %v2434
    %2443 = vst [vmem:[#allocation2 + $0x2e0] sm:$0xff] %v2435
    %2444 = vset.pattern.permute.xlu0 12
    %2445 = vperm.xlu0 %2444, %v136
    %v2446 = vpop.permute.xlu0 %2445
    %v2449 = vunpack.c.l.s4 839922192
    %v2450 = vunpack.c.0.s8 %v2449
    %v2451 = vlaneseq
    %v2452 = vshrl.u32 %v2451, 7
    %v2453 = vsub.s32 %v2450, %v2452
    %v2454 = vrot.slane %v2446, %v2453
    %2455 = vset.pattern.permute.xlu0 12
    %2456 = vperm.xlu0 %2455, %v137
    %v2457 = vpop.permute.xlu0 %2456
    %v2460 = vunpack.c.l.s4 839922192
    %v2461 = vunpack.c.0.s8 %v2460
    %v2462 = vlaneseq
    %v2463 = vshrl.u32 %v2462, 7
    %v2464 = vsub.s32 %v2461, %v2463
    %v2465 = vrot.slane %v2457, %v2464
    %2466 = vset.pattern.permute.xlu0 12
    %2467 = vperm.xlu0 %2466, %v138
    %v2468 = vpop.permute.xlu0 %2467
    %v2471 = vunpack.c.l.s4 839922192
    %v2472 = vunpack.c.0.s8 %v2471
    %v2473 = vlaneseq
    %v2474 = vshrl.u32 %v2473, 7
    %v2475 = vsub.s32 %v2472, %v2474
    %v2476 = vrot.slane %v2468, %v2475
    %2477 = vset.pattern.permute.xlu0 12
    %2478 = vperm.xlu0 %2477, %v139
    %v2479 = vpop.permute.xlu0 %2478
    %v2482 = vunpack.c.l.s4 839922192
    %v2483 = vunpack.c.0.s8 %v2482
    %v2484 = vlaneseq
    %v2485 = vshrl.u32 %v2484, 7
    %v2486 = vsub.s32 %v2483, %v2485
    %v2487 = vrot.slane %v2479, %v2486
    %2488 = vset.pattern.permute.xlu0 12
    %2489 = vperm.xlu0 %2488, %v140
    %v2490 = vpop.permute.xlu0 %2489
    %v2493 = vunpack.c.l.s4 839922192
    %v2494 = vunpack.c.0.s8 %v2493
    %v2495 = vlaneseq
    %v2496 = vshrl.u32 %v2495, 7
    %v2497 = vsub.s32 %v2494, %v2496
    %v2498 = vrot.slane %v2490, %v2497
    %2499 = vset.pattern.permute.xlu0 12
    %2500 = vperm.xlu0 %2499, %v141
    %v2501 = vpop.permute.xlu0 %2500
    %v2504 = vunpack.c.l.s4 839922192
    %v2505 = vunpack.c.0.s8 %v2504
    %v2506 = vlaneseq
    %v2507 = vshrl.u32 %v2506, 7
    %v2508 = vsub.s32 %v2505, %v2507
    %v2509 = vrot.slane %v2501, %v2508
    %2510 = vset.pattern.permute.xlu0 12
    %2511 = vperm.xlu0 %2510, %v142
    %v2512 = vpop.permute.xlu0 %2511
    %v2515 = vunpack.c.l.s4 839922192
    %v2516 = vunpack.c.0.s8 %v2515
    %v2517 = vlaneseq
    %v2518 = vshrl.u32 %v2517, 7
    %v2519 = vsub.s32 %v2516, %v2518
    %v2520 = vrot.slane %v2512, %v2519
    %2521 = vset.pattern.permute.xlu0 12
    %2522 = vperm.xlu0 %2521, %v143
    %v2523 = vpop.permute.xlu0 %2522
    %v2526 = vunpack.c.l.s4 839922192
    %v2527 = vunpack.c.0.s8 %v2526
    %v2528 = vlaneseq
    %v2529 = vshrl.u32 %v2528, 7
    %v2530 = vsub.s32 %v2527, %v2529
    %v2531 = vrot.slane %v2523, %v2530
    %v2532 = vmul.bf16 %v2454, %v1028
    %v2533 = vmul.bf16 %v2465, %v1029
    %v2534 = vmul.bf16 %v2476, %v1030
    %v2535 = vmul.bf16 %v2487, %v1031
    %v2536 = vmul.bf16 %v2498, %v1032
    %v2537 = vmul.bf16 %v2509, %v1033
    %v2538 = vmul.bf16 %v2520, %v1034
    %v2539 = vmul.bf16 %v2531, %v1035
    %v2548 = vunpack.c.l.b16 %v2532
    %v2549 = vunpack.c.l.b16 %v2533
    %v2550 = vunpack.c.l.b16 %v2534
    %v2551 = vunpack.c.l.b16 %v2535
    %v2552 = vunpack.c.l.b16 %v2536
    %v2553 = vunpack.c.l.b16 %v2537
    %v2554 = vunpack.c.l.b16 %v2538
    %v2555 = vunpack.c.l.b16 %v2539
    %v2556 = vpack.c.b16 %v2549, %v2548
    %v2557 = vpack.c.b16 %v2551, %v2550
    %v2558 = vpack.c.b16 %v2553, %v2552
    %v2559 = vpack.c.b16 %v2555, %v2554
    %2564 = vst [vmem:[#allocation2 + $0x60] sm:$0xff] %v2556
    %2565 = vst [vmem:[#allocation2 + $0x138] sm:$0xff] %v2557
    %2566 = vst [vmem:[#allocation2 + $0x210] sm:$0xff] %v2558
    %2567 = vst [vmem:[#allocation2 + $0x2e8] sm:$0xff] %v2559
    %2568 = vset.pattern.permute.xlu0 13
    %2569 = vperm.xlu0 %2568, %v136
    %v2570 = vpop.permute.xlu0 %2569
    %v2573 = vunpack.c.l.s4 839922192
    %v2574 = vunpack.c.0.s8 %v2573
    %v2575 = vlaneseq
    %v2576 = vshrl.u32 %v2575, 7
    %v2577 = vsub.s32 %v2574, %v2576
    %v2578 = vrot.slane %v2570, %v2577
    %2579 = vset.pattern.permute.xlu0 13
    %2580 = vperm.xlu0 %2579, %v137
    %v2581 = vpop.permute.xlu0 %2580
    %v2584 = vunpack.c.l.s4 839922192
    %v2585 = vunpack.c.0.s8 %v2584
    %v2586 = vlaneseq
    %v2587 = vshrl.u32 %v2586, 7
    %v2588 = vsub.s32 %v2585, %v2587
    %v2589 = vrot.slane %v2581, %v2588
    %2590 = vset.pattern.permute.xlu0 13
    %2591 = vperm.xlu0 %2590, %v138
    %v2592 = vpop.permute.xlu0 %2591
    %v2595 = vunpack.c.l.s4 839922192
    %v2596 = vunpack.c.0.s8 %v2595
    %v2597 = vlaneseq
    %v2598 = vshrl.u32 %v2597, 7
    %v2599 = vsub.s32 %v2596, %v2598
    %v2600 = vrot.slane %v2592, %v2599
    %2601 = vset.pattern.permute.xlu0 13
    %2602 = vperm.xlu0 %2601, %v139
    %v2603 = vpop.permute.xlu0 %2602
    %v2606 = vunpack.c.l.s4 839922192
    %v2607 = vunpack.c.0.s8 %v2606
    %v2608 = vlaneseq
    %v2609 = vshrl.u32 %v2608, 7
    %v2610 = vsub.s32 %v2607, %v2609
    %v2611 = vrot.slane %v2603, %v2610
    %2612 = vset.pattern.permute.xlu0 13
    %2613 = vperm.xlu0 %2612, %v140
    %v2614 = vpop.permute.xlu0 %2613
    %v2617 = vunpack.c.l.s4 839922192
    %v2618 = vunpack.c.0.s8 %v2617
    %v2619 = vlaneseq
    %v2620 = vshrl.u32 %v2619, 7
    %v2621 = vsub.s32 %v2618, %v2620
    %v2622 = vrot.slane %v2614, %v2621
    %2623 = vset.pattern.permute.xlu0 13
    %2624 = vperm.xlu0 %2623, %v141
    %v2625 = vpop.permute.xlu0 %2624
    %v2628 = vunpack.c.l.s4 839922192
    %v2629 = vunpack.c.0.s8 %v2628
    %v2630 = vlaneseq
    %v2631 = vshrl.u32 %v2630, 7
    %v2632 = vsub.s32 %v2629, %v2631
    %v2633 = vrot.slane %v2625, %v2632
    %2634 = vset.pattern.permute.xlu0 13
    %2635 = vperm.xlu0 %2634, %v142
    %v2636 = vpop.permute.xlu0 %2635
    %v2639 = vunpack.c.l.s4 839922192
    %v2640 = vunpack.c.0.s8 %v2639
    %v2641 = vlaneseq
    %v2642 = vshrl.u32 %v2641, 7
    %v2643 = vsub.s32 %v2640, %v2642
    %v2644 = vrot.slane %v2636, %v2643
    %2645 = vset.pattern.permute.xlu0 13
    %2646 = vperm.xlu0 %2645, %v143
    %v2647 = vpop.permute.xlu0 %2646
    %v2650 = vunpack.c.l.s4 839922192
    %v2651 = vunpack.c.0.s8 %v2650
    %v2652 = vlaneseq
    %v2653 = vshrl.u32 %v2652, 7
    %v2654 = vsub.s32 %v2651, %v2653
    %v2655 = vrot.slane %v2647, %v2654
    %v2656 = vmul.bf16 %v2578, %v1028
    %v2657 = vmul.bf16 %v2589, %v1029
    %v2658 = vmul.bf16 %v2600, %v1030
    %v2659 = vmul.bf16 %v2611, %v1031
    %v2660 = vmul.bf16 %v2622, %v1032
    %v2661 = vmul.bf16 %v2633, %v1033
    %v2662 = vmul.bf16 %v2644, %v1034
    %v2663 = vmul.bf16 %v2655, %v1035
    %v2672 = vunpack.c.l.b16 %v2656
    %v2673 = vunpack.c.l.b16 %v2657
    %v2674 = vunpack.c.l.b16 %v2658
    %v2675 = vunpack.c.l.b16 %v2659
    %v2676 = vunpack.c.l.b16 %v2660
    %v2677 = vunpack.c.l.b16 %v2661
    %v2678 = vunpack.c.l.b16 %v2662
    %v2679 = vunpack.c.l.b16 %v2663
    %v2680 = vpack.c.b16 %v2673, %v2672
    %v2681 = vpack.c.b16 %v2675, %v2674
    %v2682 = vpack.c.b16 %v2677, %v2676
    %v2683 = vpack.c.b16 %v2679, %v2678
    %2688 = vst [vmem:[#allocation2 + $0x68] sm:$0xff] %v2680
    %2689 = vst [vmem:[#allocation2 + $0x140] sm:$0xff] %v2681
    %2690 = vst [vmem:[#allocation2 + $0x218] sm:$0xff] %v2682
    %2691 = vst [vmem:[#allocation2 + $0x2f0] sm:$0xff] %v2683
    %2692 = vset.pattern.permute.xlu0 14
    %2693 = vperm.xlu0 %2692, %v136
    %v2694 = vpop.permute.xlu0 %2693
    %v2697 = vunpack.c.l.s4 839922192
    %v2698 = vunpack.c.0.s8 %v2697
    %v2699 = vlaneseq
    %v2700 = vshrl.u32 %v2699, 7
    %v2701 = vsub.s32 %v2698, %v2700
    %v2702 = vrot.slane %v2694, %v2701
    %2703 = vset.pattern.permute.xlu0 14
    %2704 = vperm.xlu0 %2703, %v137
    %v2705 = vpop.permute.xlu0 %2704
    %v2708 = vunpack.c.l.s4 839922192
    %v2709 = vunpack.c.0.s8 %v2708
    %v2710 = vlaneseq
    %v2711 = vshrl.u32 %v2710, 7
    %v2712 = vsub.s32 %v2709, %v2711
    %v2713 = vrot.slane %v2705, %v2712
    %2714 = vset.pattern.permute.xlu0 14
    %2715 = vperm.xlu0 %2714, %v138
    %v2716 = vpop.permute.xlu0 %2715
    %v2719 = vunpack.c.l.s4 839922192
    %v2720 = vunpack.c.0.s8 %v2719
    %v2721 = vlaneseq
    %v2722 = vshrl.u32 %v2721, 7
    %v2723 = vsub.s32 %v2720, %v2722
    %v2724 = vrot.slane %v2716, %v2723
    %2725 = vset.pattern.permute.xlu0 14
    %2726 = vperm.xlu0 %2725, %v139
    %v2727 = vpop.permute.xlu0 %2726
    %v2730 = vunpack.c.l.s4 839922192
    %v2731 = vunpack.c.0.s8 %v2730
    %v2732 = vlaneseq
    %v2733 = vshrl.u32 %v2732, 7
    %v2734 = vsub.s32 %v2731, %v2733
    %v2735 = vrot.slane %v2727, %v2734
    %2736 = vset.pattern.permute.xlu0 14
    %2737 = vperm.xlu0 %2736, %v140
    %v2738 = vpop.permute.xlu0 %2737
    %v2741 = vunpack.c.l.s4 839922192
    %v2742 = vunpack.c.0.s8 %v2741
    %v2743 = vlaneseq
    %v2744 = vshrl.u32 %v2743, 7
    %v2745 = vsub.s32 %v2742, %v2744
    %v2746 = vrot.slane %v2738, %v2745
    %2747 = vset.pattern.permute.xlu0 14
    %2748 = vperm.xlu0 %2747, %v141
    %v2749 = vpop.permute.xlu0 %2748
    %v2752 = vunpack.c.l.s4 839922192
    %v2753 = vunpack.c.0.s8 %v2752
    %v2754 = vlaneseq
    %v2755 = vshrl.u32 %v2754, 7
    %v2756 = vsub.s32 %v2753, %v2755
    %v2757 = vrot.slane %v2749, %v2756
    %2758 = vset.pattern.permute.xlu0 14
    %2759 = vperm.xlu0 %2758, %v142
    %v2760 = vpop.permute.xlu0 %2759
    %v2763 = vunpack.c.l.s4 839922192
    %v2764 = vunpack.c.0.s8 %v2763
    %v2765 = vlaneseq
    %v2766 = vshrl.u32 %v2765, 7
    %v2767 = vsub.s32 %v2764, %v2766
    %v2768 = vrot.slane %v2760, %v2767
    %2769 = vset.pattern.permute.xlu0 14
    %2770 = vperm.xlu0 %2769, %v143
    %v2771 = vpop.permute.xlu0 %2770
    %v2774 = vunpack.c.l.s4 839922192
    %v2775 = vunpack.c.0.s8 %v2774
    %v2776 = vlaneseq
    %v2777 = vshrl.u32 %v2776, 7
    %v2778 = vsub.s32 %v2775, %v2777
    %v2779 = vrot.slane %v2771, %v2778
    %v2780 = vmul.bf16 %v2702, %v1028
    %v2781 = vmul.bf16 %v2713, %v1029
    %v2782 = vmul.bf16 %v2724, %v1030
    %v2783 = vmul.bf16 %v2735, %v1031
    %v2784 = vmul.bf16 %v2746, %v1032
    %v2785 = vmul.bf16 %v2757, %v1033
    %v2786 = vmul.bf16 %v2768, %v1034
    %v2787 = vmul.bf16 %v2779, %v1035
    %v2796 = vunpack.c.l.b16 %v2780
    %v2797 = vunpack.c.l.b16 %v2781
    %v2798 = vunpack.c.l.b16 %v2782
    %v2799 = vunpack.c.l.b16 %v2783
    %v2800 = vunpack.c.l.b16 %v2784
    %v2801 = vunpack.c.l.b16 %v2785
    %v2802 = vunpack.c.l.b16 %v2786
    %v2803 = vunpack.c.l.b16 %v2787
    %v2804 = vpack.c.b16 %v2797, %v2796
    %v2805 = vpack.c.b16 %v2799, %v2798
    %v2806 = vpack.c.b16 %v2801, %v2800
    %v2807 = vpack.c.b16 %v2803, %v2802
    %2812 = vst [vmem:[#allocation2 + $0x70] sm:$0xff] %v2804
    %2813 = vst [vmem:[#allocation2 + $0x148] sm:$0xff] %v2805
    %2814 = vst [vmem:[#allocation2 + $0x220] sm:$0xff] %v2806
    %2815 = vst [vmem:[#allocation2 + $0x2f8] sm:$0xff] %v2807
    %2816 = vset.pattern.permute.xlu0 15
    %2817 = vperm.xlu0 %2816, %v136
    %v2818 = vpop.permute.xlu0 %2817
    %v2821 = vunpack.c.l.s4 839922192
    %v2822 = vunpack.c.0.s8 %v2821
    %v2823 = vlaneseq
    %v2824 = vshrl.u32 %v2823, 7
    %v2825 = vsub.s32 %v2822, %v2824
    %v2826 = vrot.slane %v2818, %v2825
    %2827 = vset.pattern.permute.xlu0 15
    %2828 = vperm.xlu0 %2827, %v137
    %v2829 = vpop.permute.xlu0 %2828
    %v2832 = vunpack.c.l.s4 839922192
    %v2833 = vunpack.c.0.s8 %v2832
    %v2834 = vlaneseq
    %v2835 = vshrl.u32 %v2834, 7
    %v2836 = vsub.s32 %v2833, %v2835
    %v2837 = vrot.slane %v2829, %v2836
    %2838 = vset.pattern.permute.xlu0 15
    %2839 = vperm.xlu0 %2838, %v138
    %v2840 = vpop.permute.xlu0 %2839
    %v2843 = vunpack.c.l.s4 839922192
    %v2844 = vunpack.c.0.s8 %v2843
    %v2845 = vlaneseq
    %v2846 = vshrl.u32 %v2845, 7
    %v2847 = vsub.s32 %v2844, %v2846
    %v2848 = vrot.slane %v2840, %v2847
    %2849 = vset.pattern.permute.xlu0 15
    %2850 = vperm.xlu0 %2849, %v139
    %v2851 = vpop.permute.xlu0 %2850
    %v2854 = vunpack.c.l.s4 839922192
    %v2855 = vunpack.c.0.s8 %v2854
    %v2856 = vlaneseq
    %v2857 = vshrl.u32 %v2856, 7
    %v2858 = vsub.s32 %v2855, %v2857
    %v2859 = vrot.slane %v2851, %v2858
    %2860 = vset.pattern.permute.xlu0 15
    %2861 = vperm.xlu0 %2860, %v140
    %v2862 = vpop.permute.xlu0 %2861
    %v2865 = vunpack.c.l.s4 839922192
    %v2866 = vunpack.c.0.s8 %v2865
    %v2867 = vlaneseq
    %v2868 = vshrl.u32 %v2867, 7
    %v2869 = vsub.s32 %v2866, %v2868
    %v2870 = vrot.slane %v2862, %v2869
    %2871 = vset.pattern.permute.xlu0 15
    %2872 = vperm.xlu0 %2871, %v141
    %v2873 = vpop.permute.xlu0 %2872
    %v2876 = vunpack.c.l.s4 839922192
    %v2877 = vunpack.c.0.s8 %v2876
    %v2878 = vlaneseq
    %v2879 = vshrl.u32 %v2878, 7
    %v2880 = vsub.s32 %v2877, %v2879
    %v2881 = vrot.slane %v2873, %v2880
    %2882 = vset.pattern.permute.xlu0 15
    %2883 = vperm.xlu0 %2882, %v142
    %v2884 = vpop.permute.xlu0 %2883
    %v2887 = vunpack.c.l.s4 839922192
    %v2888 = vunpack.c.0.s8 %v2887
    %v2889 = vlaneseq
    %v2890 = vshrl.u32 %v2889, 7
    %v2891 = vsub.s32 %v2888, %v2890
    %v2892 = vrot.slane %v2884, %v2891
    %2893 = vset.pattern.permute.xlu0 15
    %2894 = vperm.xlu0 %2893, %v143
    %v2895 = vpop.permute.xlu0 %2894
    %v2898 = vunpack.c.l.s4 839922192
    %v2899 = vunpack.c.0.s8 %v2898
    %v2900 = vlaneseq
    %v2901 = vshrl.u32 %v2900, 7
    %v2902 = vsub.s32 %v2899, %v2901
    %v2903 = vrot.slane %v2895, %v2902
    %v2904 = vmul.bf16 %v2826, %v1028
    %v2905 = vmul.bf16 %v2837, %v1029
    %v2906 = vmul.bf16 %v2848, %v1030
    %v2907 = vmul.bf16 %v2859, %v1031
    %v2908 = vmul.bf16 %v2870, %v1032
    %v2909 = vmul.bf16 %v2881, %v1033
    %v2910 = vmul.bf16 %v2892, %v1034
    %v2911 = vmul.bf16 %v2903, %v1035
    %v2920 = vunpack.c.l.b16 %v2904
    %v2921 = vunpack.c.l.b16 %v2905
    %v2922 = vunpack.c.l.b16 %v2906
    %v2923 = vunpack.c.l.b16 %v2907
    %v2924 = vunpack.c.l.b16 %v2908
    %v2925 = vunpack.c.l.b16 %v2909
    %v2926 = vunpack.c.l.b16 %v2910
    %v2927 = vunpack.c.l.b16 %v2911
    %v2928 = vpack.c.b16 %v2921, %v2920
    %v2929 = vpack.c.b16 %v2923, %v2922
    %v2930 = vpack.c.b16 %v2925, %v2924
    %v2931 = vpack.c.b16 %v2927, %v2926
    %2936 = vst [vmem:[#allocation2 + $0x78] sm:$0xff] %v2928
    %2937 = vst [vmem:[#allocation2 + $0x150] sm:$0xff] %v2929
    %2938 = vst [vmem:[#allocation2 + $0x228] sm:$0xff] %v2930
    %2939 = vst [vmem:[#allocation2 + $0x300] sm:$0xff] %v2931
    %2940 = vset.pattern.permute.xlu0 16
    %2941 = vperm.xlu0 %2940, %v136
    %v2942 = vpop.permute.xlu0 %2941
    %v2945 = vunpack.c.l.s4 839922192
    %v2946 = vunpack.c.0.s8 %v2945
    %v2947 = vlaneseq
    %v2948 = vshrl.u32 %v2947, 7
    %v2949 = vsub.s32 %v2946, %v2948
    %v2950 = vrot.slane %v2942, %v2949
    %2951 = vset.pattern.permute.xlu0 16
    %2952 = vperm.xlu0 %2951, %v137
    %v2953 = vpop.permute.xlu0 %2952
    %v2956 = vunpack.c.l.s4 839922192
    %v2957 = vunpack.c.0.s8 %v2956
    %v2958 = vlaneseq
    %v2959 = vshrl.u32 %v2958, 7
    %v2960 = vsub.s32 %v2957, %v2959
    %v2961 = vrot.slane %v2953, %v2960
    %2962 = vset.pattern.permute.xlu0 16
    %2963 = vperm.xlu0 %2962, %v138
    %v2964 = vpop.permute.xlu0 %2963
    %v2967 = vunpack.c.l.s4 839922192
    %v2968 = vunpack.c.0.s8 %v2967
    %v2969 = vlaneseq
    %v2970 = vshrl.u32 %v2969, 7
    %v2971 = vsub.s32 %v2968, %v2970
    %v2972 = vrot.slane %v2964, %v2971
    %2973 = vset.pattern.permute.xlu0 16
    %2974 = vperm.xlu0 %2973, %v139
    %v2975 = vpop.permute.xlu0 %2974
    %v2978 = vunpack.c.l.s4 839922192
    %v2979 = vunpack.c.0.s8 %v2978
    %v2980 = vlaneseq
    %v2981 = vshrl.u32 %v2980, 7
    %v2982 = vsub.s32 %v2979, %v2981
    %v2983 = vrot.slane %v2975, %v2982
    %2984 = vset.pattern.permute.xlu0 16
    %2985 = vperm.xlu0 %2984, %v140
    %v2986 = vpop.permute.xlu0 %2985
    %v2989 = vunpack.c.l.s4 839922192
    %v2990 = vunpack.c.0.s8 %v2989
    %v2991 = vlaneseq
    %v2992 = vshrl.u32 %v2991, 7
    %v2993 = vsub.s32 %v2990, %v2992
    %v2994 = vrot.slane %v2986, %v2993
    %2995 = vset.pattern.permute.xlu0 16
    %2996 = vperm.xlu0 %2995, %v141
    %v2997 = vpop.permute.xlu0 %2996
    %v3000 = vunpack.c.l.s4 839922192
    %v3001 = vunpack.c.0.s8 %v3000
    %v3002 = vlaneseq
    %v3003 = vshrl.u32 %v3002, 7
    %v3004 = vsub.s32 %v3001, %v3003
    %v3005 = vrot.slane %v2997, %v3004
    %3006 = vset.pattern.permute.xlu0 16
    %3007 = vperm.xlu0 %3006, %v142
    %v3008 = vpop.permute.xlu0 %3007
    %v3011 = vunpack.c.l.s4 839922192
    %v3012 = vunpack.c.0.s8 %v3011
    %v3013 = vlaneseq
    %v3014 = vshrl.u32 %v3013, 7
    %v3015 = vsub.s32 %v3012, %v3014
    %v3016 = vrot.slane %v3008, %v3015
    %3017 = vset.pattern.permute.xlu0 16
    %3018 = vperm.xlu0 %3017, %v143
    %v3019 = vpop.permute.xlu0 %3018
    %v3022 = vunpack.c.l.s4 839922192
    %v3023 = vunpack.c.0.s8 %v3022
    %v3024 = vlaneseq
    %v3025 = vshrl.u32 %v3024, 7
    %v3026 = vsub.s32 %v3023, %v3025
    %v3027 = vrot.slane %v3019, %v3026
    %v3028 = vmul.bf16 %v2950, %v1028
    %v3029 = vmul.bf16 %v2961, %v1029
    %v3030 = vmul.bf16 %v2972, %v1030
    %v3031 = vmul.bf16 %v2983, %v1031
    %v3032 = vmul.bf16 %v2994, %v1032
    %v3033 = vmul.bf16 %v3005, %v1033
    %v3034 = vmul.bf16 %v3016, %v1034
    %v3035 = vmul.bf16 %v3027, %v1035
    %v3044 = vunpack.c.l.b16 %v3028
    %v3045 = vunpack.c.l.b16 %v3029
    %v3046 = vunpack.c.l.b16 %v3030
    %v3047 = vunpack.c.l.b16 %v3031
    %v3048 = vunpack.c.l.b16 %v3032
    %v3049 = vunpack.c.l.b16 %v3033
    %v3050 = vunpack.c.l.b16 %v3034
    %v3051 = vunpack.c.l.b16 %v3035
    %v3052 = vpack.c.b16 %v3045, %v3044
    %v3053 = vpack.c.b16 %v3047, %v3046
    %v3054 = vpack.c.b16 %v3049, %v3048
    %v3055 = vpack.c.b16 %v3051, %v3050
    %3060 = vst [vmem:[#allocation2 + $0x80] sm:$0xff] %v3052
    %3061 = vst [vmem:[#allocation2 + $0x158] sm:$0xff] %v3053
    %3062 = vst [vmem:[#allocation2 + $0x230] sm:$0xff] %v3054
    %3063 = vst [vmem:[#allocation2 + $0x308] sm:$0xff] %v3055
    %3064 = vset.pattern.permute.xlu0 17
    %3065 = vperm.xlu0 %3064, %v136
    %v3066 = vpop.permute.xlu0 %3065
    %v3069 = vunpack.c.l.s4 839922192
    %v3070 = vunpack.c.0.s8 %v3069
    %v3071 = vlaneseq
    %v3072 = vshrl.u32 %v3071, 7
    %v3073 = vsub.s32 %v3070, %v3072
    %v3074 = vrot.slane %v3066, %v3073
    %3075 = vset.pattern.permute.xlu0 17
    %3076 = vperm.xlu0 %3075, %v137
    %v3077 = vpop.permute.xlu0 %3076
    %v3080 = vunpack.c.l.s4 839922192
    %v3081 = vunpack.c.0.s8 %v3080
    %v3082 = vlaneseq
    %v3083 = vshrl.u32 %v3082, 7
    %v3084 = vsub.s32 %v3081, %v3083
    %v3085 = vrot.slane %v3077, %v3084
    %3086 = vset.pattern.permute.xlu0 17
    %3087 = vperm.xlu0 %3086, %v138
    %v3088 = vpop.permute.xlu0 %3087
    %v3091 = vunpack.c.l.s4 839922192
    %v3092 = vunpack.c.0.s8 %v3091
    %v3093 = vlaneseq
    %v3094 = vshrl.u32 %v3093, 7
    %v3095 = vsub.s32 %v3092, %v3094
    %v3096 = vrot.slane %v3088, %v3095
    %3097 = vset.pattern.permute.xlu0 17
    %3098 = vperm.xlu0 %3097, %v139
    %v3099 = vpop.permute.xlu0 %3098
    %v3102 = vunpack.c.l.s4 839922192
    %v3103 = vunpack.c.0.s8 %v3102
    %v3104 = vlaneseq
    %v3105 = vshrl.u32 %v3104, 7
    %v3106 = vsub.s32 %v3103, %v3105
    %v3107 = vrot.slane %v3099, %v3106
    %3108 = vset.pattern.permute.xlu0 17
    %3109 = vperm.xlu0 %3108, %v140
    %v3110 = vpop.permute.xlu0 %3109
    %v3113 = vunpack.c.l.s4 839922192
    %v3114 = vunpack.c.0.s8 %v3113
    %v3115 = vlaneseq
    %v3116 = vshrl.u32 %v3115, 7
    %v3117 = vsub.s32 %v3114, %v3116
    %v3118 = vrot.slane %v3110, %v3117
    %3119 = vset.pattern.permute.xlu0 17
    %3120 = vperm.xlu0 %3119, %v141
    %v3121 = vpop.permute.xlu0 %3120
    %v3124 = vunpack.c.l.s4 839922192
    %v3125 = vunpack.c.0.s8 %v3124
    %v3126 = vlaneseq
    %v3127 = vshrl.u32 %v3126, 7
    %v3128 = vsub.s32 %v3125, %v3127
    %v3129 = vrot.slane %v3121, %v3128
    %3130 = vset.pattern.permute.xlu0 17
    %3131 = vperm.xlu0 %3130, %v142
    %v3132 = vpop.permute.xlu0 %3131
    %v3135 = vunpack.c.l.s4 839922192
    %v3136 = vunpack.c.0.s8 %v3135
    %v3137 = vlaneseq
    %v3138 = vshrl.u32 %v3137, 7
    %v3139 = vsub.s32 %v3136, %v3138
    %v3140 = vrot.slane %v3132, %v3139
    %3141 = vset.pattern.permute.xlu0 17
    %3142 = vperm.xlu0 %3141, %v143
    %v3143 = vpop.permute.xlu0 %3142
    %v3146 = vunpack.c.l.s4 839922192
    %v3147 = vunpack.c.0.s8 %v3146
    %v3148 = vlaneseq
    %v3149 = vshrl.u32 %v3148, 7
    %v3150 = vsub.s32 %v3147, %v3149
    %v3151 = vrot.slane %v3143, %v3150
    %v3152 = vmul.bf16 %v3074, %v1028
    %v3153 = vmul.bf16 %v3085, %v1029
    %v3154 = vmul.bf16 %v3096, %v1030
    %v3155 = vmul.bf16 %v3107, %v1031
    %v3156 = vmul.bf16 %v3118, %v1032
    %v3157 = vmul.bf16 %v3129, %v1033
    %v3158 = vmul.bf16 %v3140, %v1034
    %v3159 = vmul.bf16 %v3151, %v1035
    %v3168 = vunpack.c.l.b16 %v3152
    %v3169 = vunpack.c.l.b16 %v3153
    %v3170 = vunpack.c.l.b16 %v3154
    %v3171 = vunpack.c.l.b16 %v3155
    %v3172 = vunpack.c.l.b16 %v3156
    %v3173 = vunpack.c.l.b16 %v3157
    %v3174 = vunpack.c.l.b16 %v3158
    %v3175 = vunpack.c.l.b16 %v3159
    %v3176 = vpack.c.b16 %v3169, %v3168
    %v3177 = vpack.c.b16 %v3171, %v3170
    %v3178 = vpack.c.b16 %v3173, %v3172
    %v3179 = vpack.c.b16 %v3175, %v3174
    %3184 = vst [vmem:[#allocation2 + $0x88] sm:$0xff] %v3176
    %3185 = vst [vmem:[#allocation2 + $0x160] sm:$0xff] %v3177
    %3186 = vst [vmem:[#allocation2 + $0x238] sm:$0xff] %v3178
    %3187 = vst [vmem:[#allocation2 + $0x310] sm:$0xff] %v3179
    %3188 = vset.pattern.permute.xlu0 18
    %3189 = vperm.xlu0 %3188, %v136
    %v3190 = vpop.permute.xlu0 %3189
    %v3193 = vunpack.c.l.s4 839922192
    %v3194 = vunpack.c.0.s8 %v3193
    %v3195 = vlaneseq
    %v3196 = vshrl.u32 %v3195, 7
    %v3197 = vsub.s32 %v3194, %v3196
    %v3198 = vrot.slane %v3190, %v3197
    %3199 = vset.pattern.permute.xlu0 18
    %3200 = vperm.xlu0 %3199, %v137
    %v3201 = vpop.permute.xlu0 %3200
    %v3204 = vunpack.c.l.s4 839922192
    %v3205 = vunpack.c.0.s8 %v3204
    %v3206 = vlaneseq
    %v3207 = vshrl.u32 %v3206, 7
    %v3208 = vsub.s32 %v3205, %v3207
    %v3209 = vrot.slane %v3201, %v3208
    %3210 = vset.pattern.permute.xlu0 18
    %3211 = vperm.xlu0 %3210, %v138
    %v3212 = vpop.permute.xlu0 %3211
    %v3215 = vunpack.c.l.s4 839922192
    %v3216 = vunpack.c.0.s8 %v3215
    %v3217 = vlaneseq
    %v3218 = vshrl.u32 %v3217, 7
    %v3219 = vsub.s32 %v3216, %v3218
    %v3220 = vrot.slane %v3212, %v3219
    %3221 = vset.pattern.permute.xlu0 18
    %3222 = vperm.xlu0 %3221, %v139
    %v3223 = vpop.permute.xlu0 %3222
    %v3226 = vunpack.c.l.s4 839922192
    %v3227 = vunpack.c.0.s8 %v3226
    %v3228 = vlaneseq
    %v3229 = vshrl.u32 %v3228, 7
    %v3230 = vsub.s32 %v3227, %v3229
    %v3231 = vrot.slane %v3223, %v3230
    %3232 = vset.pattern.permute.xlu0 18
    %3233 = vperm.xlu0 %3232, %v140
    %v3234 = vpop.permute.xlu0 %3233
    %v3237 = vunpack.c.l.s4 839922192
    %v3238 = vunpack.c.0.s8 %v3237
    %v3239 = vlaneseq
    %v3240 = vshrl.u32 %v3239, 7
    %v3241 = vsub.s32 %v3238, %v3240
    %v3242 = vrot.slane %v3234, %v3241
    %3243 = vset.pattern.permute.xlu0 18
    %3244 = vperm.xlu0 %3243, %v141
    %v3245 = vpop.permute.xlu0 %3244
    %v3248 = vunpack.c.l.s4 839922192
    %v3249 = vunpack.c.0.s8 %v3248
    %v3250 = vlaneseq
    %v3251 = vshrl.u32 %v3250, 7
    %v3252 = vsub.s32 %v3249, %v3251
    %v3253 = vrot.slane %v3245, %v3252
    %3254 = vset.pattern.permute.xlu0 18
    %3255 = vperm.xlu0 %3254, %v142
    %v3256 = vpop.permute.xlu0 %3255
    %v3259 = vunpack.c.l.s4 839922192
    %v3260 = vunpack.c.0.s8 %v3259
    %v3261 = vlaneseq
    %v3262 = vshrl.u32 %v3261, 7
    %v3263 = vsub.s32 %v3260, %v3262
    %v3264 = vrot.slane %v3256, %v3263
    %3265 = vset.pattern.permute.xlu0 18
    %3266 = vperm.xlu0 %3265, %v143
    %v3267 = vpop.permute.xlu0 %3266
    %v3270 = vunpack.c.l.s4 839922192
    %v3271 = vunpack.c.0.s8 %v3270
    %v3272 = vlaneseq
    %v3273 = vshrl.u32 %v3272, 7
    %v3274 = vsub.s32 %v3271, %v3273
    %v3275 = vrot.slane %v3267, %v3274
    %v3276 = vmul.bf16 %v3198, %v1028
    %v3277 = vmul.bf16 %v3209, %v1029
    %v3278 = vmul.bf16 %v3220, %v1030
    %v3279 = vmul.bf16 %v3231, %v1031
    %v3280 = vmul.bf16 %v3242, %v1032
    %v3281 = vmul.bf16 %v3253, %v1033
    %v3282 = vmul.bf16 %v3264, %v1034
    %v3283 = vmul.bf16 %v3275, %v1035
    %v3292 = vunpack.c.l.b16 %v3276
    %v3293 = vunpack.c.l.b16 %v3277
    %v3294 = vunpack.c.l.b16 %v3278
    %v3295 = vunpack.c.l.b16 %v3279
    %v3296 = vunpack.c.l.b16 %v3280
    %v3297 = vunpack.c.l.b16 %v3281
    %v3298 = vunpack.c.l.b16 %v3282
    %v3299 = vunpack.c.l.b16 %v3283
    %v3300 = vpack.c.b16 %v3293, %v3292
    %v3301 = vpack.c.b16 %v3295, %v3294
    %v3302 = vpack.c.b16 %v3297, %v3296
    %v3303 = vpack.c.b16 %v3299, %v3298
    %3308 = vst [vmem:[#allocation2 + $0x90] sm:$0xff] %v3300
    %3309 = vst [vmem:[#allocation2 + $0x168] sm:$0xff] %v3301
    %3310 = vst [vmem:[#allocation2 + $0x240] sm:$0xff] %v3302
    %3311 = vst [vmem:[#allocation2 + $0x318] sm:$0xff] %v3303
    %3312 = vset.pattern.permute.xlu0 19
    %3313 = vperm.xlu0 %3312, %v136
    %v3314 = vpop.permute.xlu0 %3313
    %v3317 = vunpack.c.l.s4 839922192
    %v3318 = vunpack.c.0.s8 %v3317
    %v3319 = vlaneseq
    %v3320 = vshrl.u32 %v3319, 7
    %v3321 = vsub.s32 %v3318, %v3320
    %v3322 = vrot.slane %v3314, %v3321
    %3323 = vset.pattern.permute.xlu0 19
    %3324 = vperm.xlu0 %3323, %v137
    %v3325 = vpop.permute.xlu0 %3324
    %v3328 = vunpack.c.l.s4 839922192
    %v3329 = vunpack.c.0.s8 %v3328
    %v3330 = vlaneseq
    %v3331 = vshrl.u32 %v3330, 7
    %v3332 = vsub.s32 %v3329, %v3331
    %v3333 = vrot.slane %v3325, %v3332
    %3334 = vset.pattern.permute.xlu0 19
    %3335 = vperm.xlu0 %3334, %v138
    %v3336 = vpop.permute.xlu0 %3335
    %v3339 = vunpack.c.l.s4 839922192
    %v3340 = vunpack.c.0.s8 %v3339
    %v3341 = vlaneseq
    %v3342 = vshrl.u32 %v3341, 7
    %v3343 = vsub.s32 %v3340, %v3342
    %v3344 = vrot.slane %v3336, %v3343
    %3345 = vset.pattern.permute.xlu0 19
    %3346 = vperm.xlu0 %3345, %v139
    %v3347 = vpop.permute.xlu0 %3346
    %v3350 = vunpack.c.l.s4 839922192
    %v3351 = vunpack.c.0.s8 %v3350
    %v3352 = vlaneseq
    %v3353 = vshrl.u32 %v3352, 7
    %v3354 = vsub.s32 %v3351, %v3353
    %v3355 = vrot.slane %v3347, %v3354
    %3356 = vset.pattern.permute.xlu0 19
    %3357 = vperm.xlu0 %3356, %v140
    %v3358 = vpop.permute.xlu0 %3357
    %v3361 = vunpack.c.l.s4 839922192
    %v3362 = vunpack.c.0.s8 %v3361
    %v3363 = vlaneseq
    %v3364 = vshrl.u32 %v3363, 7
    %v3365 = vsub.s32 %v3362, %v3364
    %v3366 = vrot.slane %v3358, %v3365
    %3367 = vset.pattern.permute.xlu0 19
    %3368 = vperm.xlu0 %3367, %v141
    %v3369 = vpop.permute.xlu0 %3368
    %v3372 = vunpack.c.l.s4 839922192
    %v3373 = vunpack.c.0.s8 %v3372
    %v3374 = vlaneseq
    %v3375 = vshrl.u32 %v3374, 7
    %v3376 = vsub.s32 %v3373, %v3375
    %v3377 = vrot.slane %v3369, %v3376
    %3378 = vset.pattern.permute.xlu0 19
    %3379 = vperm.xlu0 %3378, %v142
    %v3380 = vpop.permute.xlu0 %3379
    %v3383 = vunpack.c.l.s4 839922192
    %v3384 = vunpack.c.0.s8 %v3383
    %v3385 = vlaneseq
    %v3386 = vshrl.u32 %v3385, 7
    %v3387 = vsub.s32 %v3384, %v3386
    %v3388 = vrot.slane %v3380, %v3387
    %3389 = vset.pattern.permute.xlu0 19
    %3390 = vperm.xlu0 %3389, %v143
    %v3391 = vpop.permute.xlu0 %3390
    %v3394 = vunpack.c.l.s4 839922192
    %v3395 = vunpack.c.0.s8 %v3394
    %v3396 = vlaneseq
    %v3397 = vshrl.u32 %v3396, 7
    %v3398 = vsub.s32 %v3395, %v3397
    %v3399 = vrot.slane %v3391, %v3398
    %v3400 = vmul.bf16 %v3322, %v1028
    %v3401 = vmul.bf16 %v3333, %v1029
    %v3402 = vmul.bf16 %v3344, %v1030
    %v3403 = vmul.bf16 %v3355, %v1031
    %v3404 = vmul.bf16 %v3366, %v1032
    %v3405 = vmul.bf16 %v3377, %v1033
    %v3406 = vmul.bf16 %v3388, %v1034
    %v3407 = vmul.bf16 %v3399, %v1035
    %v3416 = vunpack.c.l.b16 %v3400
    %v3417 = vunpack.c.l.b16 %v3401
    %v3418 = vunpack.c.l.b16 %v3402
    %v3419 = vunpack.c.l.b16 %v3403
    %v3420 = vunpack.c.l.b16 %v3404
    %v3421 = vunpack.c.l.b16 %v3405
    %v3422 = vunpack.c.l.b16 %v3406
    %v3423 = vunpack.c.l.b16 %v3407
    %v3424 = vpack.c.b16 %v3417, %v3416
    %v3425 = vpack.c.b16 %v3419, %v3418
    %v3426 = vpack.c.b16 %v3421, %v3420
    %v3427 = vpack.c.b16 %v3423, %v3422
    %3432 = vst [vmem:[#allocation2 + $0x98] sm:$0xff] %v3424
    %3433 = vst [vmem:[#allocation2 + $0x170] sm:$0xff] %v3425
    %3434 = vst [vmem:[#allocation2 + $0x248] sm:$0xff] %v3426
    %3435 = vst [vmem:[#allocation2 + $0x320] sm:$0xff] %v3427
    %3436 = vset.pattern.permute.xlu0 20
    %3437 = vperm.xlu0 %3436, %v136
    %v3438 = vpop.permute.xlu0 %3437
    %v3441 = vunpack.c.l.s4 839922192
    %v3442 = vunpack.c.0.s8 %v3441
    %v3443 = vlaneseq
    %v3444 = vshrl.u32 %v3443, 7
    %v3445 = vsub.s32 %v3442, %v3444
    %v3446 = vrot.slane %v3438, %v3445
    %3447 = vset.pattern.permute.xlu0 20
    %3448 = vperm.xlu0 %3447, %v137
    %v3449 = vpop.permute.xlu0 %3448
    %v3452 = vunpack.c.l.s4 839922192
    %v3453 = vunpack.c.0.s8 %v3452
    %v3454 = vlaneseq
    %v3455 = vshrl.u32 %v3454, 7
    %v3456 = vsub.s32 %v3453, %v3455
    %v3457 = vrot.slane %v3449, %v3456
    %3458 = vset.pattern.permute.xlu0 20
    %3459 = vperm.xlu0 %3458, %v138
    %v3460 = vpop.permute.xlu0 %3459
    %v3463 = vunpack.c.l.s4 839922192
    %v3464 = vunpack.c.0.s8 %v3463
    %v3465 = vlaneseq
    %v3466 = vshrl.u32 %v3465, 7
    %v3467 = vsub.s32 %v3464, %v3466
    %v3468 = vrot.slane %v3460, %v3467
    %3469 = vset.pattern.permute.xlu0 20
    %3470 = vperm.xlu0 %3469, %v139
    %v3471 = vpop.permute.xlu0 %3470
    %v3474 = vunpack.c.l.s4 839922192
    %v3475 = vunpack.c.0.s8 %v3474
    %v3476 = vlaneseq
    %v3477 = vshrl.u32 %v3476, 7
    %v3478 = vsub.s32 %v3475, %v3477
    %v3479 = vrot.slane %v3471, %v3478
    %3480 = vset.pattern.permute.xlu0 20
    %3481 = vperm.xlu0 %3480, %v140
    %v3482 = vpop.permute.xlu0 %3481
    %v3485 = vunpack.c.l.s4 839922192
    %v3486 = vunpack.c.0.s8 %v3485
    %v3487 = vlaneseq
    %v3488 = vshrl.u32 %v3487, 7
    %v3489 = vsub.s32 %v3486, %v3488
    %v3490 = vrot.slane %v3482, %v3489
    %3491 = vset.pattern.permute.xlu0 20
    %3492 = vperm.xlu0 %3491, %v141
    %v3493 = vpop.permute.xlu0 %3492
    %v3496 = vunpack.c.l.s4 839922192
    %v3497 = vunpack.c.0.s8 %v3496
    %v3498 = vlaneseq
    %v3499 = vshrl.u32 %v3498, 7
    %v3500 = vsub.s32 %v3497, %v3499
    %v3501 = vrot.slane %v3493, %v3500
    %3502 = vset.pattern.permute.xlu0 20
    %3503 = vperm.xlu0 %3502, %v142
    %v3504 = vpop.permute.xlu0 %3503
    %v3507 = vunpack.c.l.s4 839922192
    %v3508 = vunpack.c.0.s8 %v3507
    %v3509 = vlaneseq
    %v3510 = vshrl.u32 %v3509, 7
    %v3511 = vsub.s32 %v3508, %v3510
    %v3512 = vrot.slane %v3504, %v3511
    %3513 = vset.pattern.permute.xlu0 20
    %3514 = vperm.xlu0 %3513, %v143
    %v3515 = vpop.permute.xlu0 %3514
    %v3518 = vunpack.c.l.s4 839922192
    %v3519 = vunpack.c.0.s8 %v3518
    %v3520 = vlaneseq
    %v3521 = vshrl.u32 %v3520, 7
    %v3522 = vsub.s32 %v3519, %v3521
    %v3523 = vrot.slane %v3515, %v3522
    %v3524 = vmul.bf16 %v3446, %v1028
    %v3525 = vmul.bf16 %v3457, %v1029
    %v3526 = vmul.bf16 %v3468, %v1030
    %v3527 = vmul.bf16 %v3479, %v1031
    %v3528 = vmul.bf16 %v3490, %v1032
    %v3529 = vmul.bf16 %v3501, %v1033
    %v3530 = vmul.bf16 %v3512, %v1034
    %v3531 = vmul.bf16 %v3523, %v1035
    %v3540 = vunpack.c.l.b16 %v3524
    %v3541 = vunpack.c.l.b16 %v3525
    %v3542 = vunpack.c.l.b16 %v3526
    %v3543 = vunpack.c.l.b16 %v3527
    %v3544 = vunpack.c.l.b16 %v3528
    %v3545 = vunpack.c.l.b16 %v3529
    %v3546 = vunpack.c.l.b16 %v3530
    %v3547 = vunpack.c.l.b16 %v3531
    %v3548 = vpack.c.b16 %v3541, %v3540
    %v3549 = vpack.c.b16 %v3543, %v3542
    %v3550 = vpack.c.b16 %v3545, %v3544
    %v3551 = vpack.c.b16 %v3547, %v3546
    %3556 = vst [vmem:[#allocation2 + $0xa0] sm:$0xff] %v3548
    %3557 = vst [vmem:[#allocation2 + $0x178] sm:$0xff] %v3549
    %3558 = vst [vmem:[#allocation2 + $0x250] sm:$0xff] %v3550
    %3559 = vst [vmem:[#allocation2 + $0x328] sm:$0xff] %v3551
    %3560 = vset.pattern.permute.xlu0 21
    %3561 = vperm.xlu0 %3560, %v136
    %v3562 = vpop.permute.xlu0 %3561
    %v3565 = vunpack.c.l.s4 839922192
    %v3566 = vunpack.c.0.s8 %v3565
    %v3567 = vlaneseq
    %v3568 = vshrl.u32 %v3567, 7
    %v3569 = vsub.s32 %v3566, %v3568
    %v3570 = vrot.slane %v3562, %v3569
    %3571 = vset.pattern.permute.xlu0 21
    %3572 = vperm.xlu0 %3571, %v137
    %v3573 = vpop.permute.xlu0 %3572
    %v3576 = vunpack.c.l.s4 839922192
    %v3577 = vunpack.c.0.s8 %v3576
    %v3578 = vlaneseq
    %v3579 = vshrl.u32 %v3578, 7
    %v3580 = vsub.s32 %v3577, %v3579
    %v3581 = vrot.slane %v3573, %v3580
    %3582 = vset.pattern.permute.xlu0 21
    %3583 = vperm.xlu0 %3582, %v138
    %v3584 = vpop.permute.xlu0 %3583
    %v3587 = vunpack.c.l.s4 839922192
    %v3588 = vunpack.c.0.s8 %v3587
    %v3589 = vlaneseq
    %v3590 = vshrl.u32 %v3589, 7
    %v3591 = vsub.s32 %v3588, %v3590
    %v3592 = vrot.slane %v3584, %v3591
    %3593 = vset.pattern.permute.xlu0 21
    %3594 = vperm.xlu0 %3593, %v139
    %v3595 = vpop.permute.xlu0 %3594
    %v3598 = vunpack.c.l.s4 839922192
    %v3599 = vunpack.c.0.s8 %v3598
    %v3600 = vlaneseq
    %v3601 = vshrl.u32 %v3600, 7
    %v3602 = vsub.s32 %v3599, %v3601
    %v3603 = vrot.slane %v3595, %v3602
    %3604 = vset.pattern.permute.xlu0 21
    %3605 = vperm.xlu0 %3604, %v140
    %v3606 = vpop.permute.xlu0 %3605
    %v3609 = vunpack.c.l.s4 839922192
    %v3610 = vunpack.c.0.s8 %v3609
    %v3611 = vlaneseq
    %v3612 = vshrl.u32 %v3611, 7
    %v3613 = vsub.s32 %v3610, %v3612
    %v3614 = vrot.slane %v3606, %v3613
    %3615 = vset.pattern.permute.xlu0 21
    %3616 = vperm.xlu0 %3615, %v141
    %v3617 = vpop.permute.xlu0 %3616
    %v3620 = vunpack.c.l.s4 839922192
    %v3621 = vunpack.c.0.s8 %v3620
    %v3622 = vlaneseq
    %v3623 = vshrl.u32 %v3622, 7
    %v3624 = vsub.s32 %v3621, %v3623
    %v3625 = vrot.slane %v3617, %v3624
    %3626 = vset.pattern.permute.xlu0 21
    %3627 = vperm.xlu0 %3626, %v142
    %v3628 = vpop.permute.xlu0 %3627
    %v3631 = vunpack.c.l.s4 839922192
    %v3632 = vunpack.c.0.s8 %v3631
    %v3633 = vlaneseq
    %v3634 = vshrl.u32 %v3633, 7
    %v3635 = vsub.s32 %v3632, %v3634
    %v3636 = vrot.slane %v3628, %v3635
    %3637 = vset.pattern.permute.xlu0 21
    %3638 = vperm.xlu0 %3637, %v143
    %v3639 = vpop.permute.xlu0 %3638
    %v3642 = vunpack.c.l.s4 839922192
    %v3643 = vunpack.c.0.s8 %v3642
    %v3644 = vlaneseq
    %v3645 = vshrl.u32 %v3644, 7
    %v3646 = vsub.s32 %v3643, %v3645
    %v3647 = vrot.slane %v3639, %v3646
    %v3648 = vmul.bf16 %v3570, %v1028
    %v3649 = vmul.bf16 %v3581, %v1029
    %v3650 = vmul.bf16 %v3592, %v1030
    %v3651 = vmul.bf16 %v3603, %v1031
    %v3652 = vmul.bf16 %v3614, %v1032
    %v3653 = vmul.bf16 %v3625, %v1033
    %v3654 = vmul.bf16 %v3636, %v1034
    %v3655 = vmul.bf16 %v3647, %v1035
    %v3664 = vunpack.c.l.b16 %v3648
    %v3665 = vunpack.c.l.b16 %v3649
    %v3666 = vunpack.c.l.b16 %v3650
    %v3667 = vunpack.c.l.b16 %v3651
    %v3668 = vunpack.c.l.b16 %v3652
    %v3669 = vunpack.c.l.b16 %v3653
    %v3670 = vunpack.c.l.b16 %v3654
    %v3671 = vunpack.c.l.b16 %v3655
    %v3672 = vpack.c.b16 %v3665, %v3664
    %v3673 = vpack.c.b16 %v3667, %v3666
    %v3674 = vpack.c.b16 %v3669, %v3668
    %v3675 = vpack.c.b16 %v3671, %v3670
    %3680 = vst [vmem:[#allocation2 + $0xa8] sm:$0xff] %v3672
    %3681 = vst [vmem:[#allocation2 + $0x180] sm:$0xff] %v3673
    %3682 = vst [vmem:[#allocation2 + $0x258] sm:$0xff] %v3674
    %3683 = vst [vmem:[#allocation2 + $0x330] sm:$0xff] %v3675
    %3684 = vset.pattern.permute.xlu0 22
    %3685 = vperm.xlu0 %3684, %v136
    %v3686 = vpop.permute.xlu0 %3685
    %v3689 = vunpack.c.l.s4 839922192
    %v3690 = vunpack.c.0.s8 %v3689
    %v3691 = vlaneseq
    %v3692 = vshrl.u32 %v3691, 7
    %v3693 = vsub.s32 %v3690, %v3692
    %v3694 = vrot.slane %v3686, %v3693
    %3695 = vset.pattern.permute.xlu0 22
    %3696 = vperm.xlu0 %3695, %v137
    %v3697 = vpop.permute.xlu0 %3696
    %v3700 = vunpack.c.l.s4 839922192
    %v3701 = vunpack.c.0.s8 %v3700
    %v3702 = vlaneseq
    %v3703 = vshrl.u32 %v3702, 7
    %v3704 = vsub.s32 %v3701, %v3703
    %v3705 = vrot.slane %v3697, %v3704
    %3706 = vset.pattern.permute.xlu0 22
    %3707 = vperm.xlu0 %3706, %v138
    %v3708 = vpop.permute.xlu0 %3707
    %v3711 = vunpack.c.l.s4 839922192
    %v3712 = vunpack.c.0.s8 %v3711
    %v3713 = vlaneseq
    %v3714 = vshrl.u32 %v3713, 7
    %v3715 = vsub.s32 %v3712, %v3714
    %v3716 = vrot.slane %v3708, %v3715
    %3717 = vset.pattern.permute.xlu0 22
    %3718 = vperm.xlu0 %3717, %v139
    %v3719 = vpop.permute.xlu0 %3718
    %v3722 = vunpack.c.l.s4 839922192
    %v3723 = vunpack.c.0.s8 %v3722
    %v3724 = vlaneseq
    %v3725 = vshrl.u32 %v3724, 7
    %v3726 = vsub.s32 %v3723, %v3725
    %v3727 = vrot.slane %v3719, %v3726
    %3728 = vset.pattern.permute.xlu0 22
    %3729 = vperm.xlu0 %3728, %v140
    %v3730 = vpop.permute.xlu0 %3729
    %v3733 = vunpack.c.l.s4 839922192
    %v3734 = vunpack.c.0.s8 %v3733
    %v3735 = vlaneseq
    %v3736 = vshrl.u32 %v3735, 7
    %v3737 = vsub.s32 %v3734, %v3736
    %v3738 = vrot.slane %v3730, %v3737
    %3739 = vset.pattern.permute.xlu0 22
    %3740 = vperm.xlu0 %3739, %v141
    %v3741 = vpop.permute.xlu0 %3740
    %v3744 = vunpack.c.l.s4 839922192
    %v3745 = vunpack.c.0.s8 %v3744
    %v3746 = vlaneseq
    %v3747 = vshrl.u32 %v3746, 7
    %v3748 = vsub.s32 %v3745, %v3747
    %v3749 = vrot.slane %v3741, %v3748
    %3750 = vset.pattern.permute.xlu0 22
    %3751 = vperm.xlu0 %3750, %v142
    %v3752 = vpop.permute.xlu0 %3751
    %v3755 = vunpack.c.l.s4 839922192
    %v3756 = vunpack.c.0.s8 %v3755
    %v3757 = vlaneseq
    %v3758 = vshrl.u32 %v3757, 7
    %v3759 = vsub.s32 %v3756, %v3758
    %v3760 = vrot.slane %v3752, %v3759
    %3761 = vset.pattern.permute.xlu0 22
    %3762 = vperm.xlu0 %3761, %v143
    %v3763 = vpop.permute.xlu0 %3762
    %v3766 = vunpack.c.l.s4 839922192
    %v3767 = vunpack.c.0.s8 %v3766
    %v3768 = vlaneseq
    %v3769 = vshrl.u32 %v3768, 7
    %v3770 = vsub.s32 %v3767, %v3769
    %v3771 = vrot.slane %v3763, %v3770
    %v3772 = vmul.bf16 %v3694, %v1028
    %v3773 = vmul.bf16 %v3705, %v1029
    %v3774 = vmul.bf16 %v3716, %v1030
    %v3775 = vmul.bf16 %v3727, %v1031
    %v3776 = vmul.bf16 %v3738, %v1032
    %v3777 = vmul.bf16 %v3749, %v1033
    %v3778 = vmul.bf16 %v3760, %v1034
    %v3779 = vmul.bf16 %v3771, %v1035
    %v3788 = vunpack.c.l.b16 %v3772
    %v3789 = vunpack.c.l.b16 %v3773
    %v3790 = vunpack.c.l.b16 %v3774
    %v3791 = vunpack.c.l.b16 %v3775
    %v3792 = vunpack.c.l.b16 %v3776
    %v3793 = vunpack.c.l.b16 %v3777
    %v3794 = vunpack.c.l.b16 %v3778
    %v3795 = vunpack.c.l.b16 %v3779
    %v3796 = vpack.c.b16 %v3789, %v3788
    %v3797 = vpack.c.b16 %v3791, %v3790
    %v3798 = vpack.c.b16 %v3793, %v3792
    %v3799 = vpack.c.b16 %v3795, %v3794
    %3804 = vst [vmem:[#allocation2 + $0xb0] sm:$0xff] %v3796
    %3805 = vst [vmem:[#allocation2 + $0x188] sm:$0xff] %v3797
    %3806 = vst [vmem:[#allocation2 + $0x260] sm:$0xff] %v3798
    %3807 = vst [vmem:[#allocation2 + $0x338] sm:$0xff] %v3799
    %3808 = vset.pattern.permute.xlu0 23
    %3809 = vperm.xlu0 %3808, %v136
    %v3810 = vpop.permute.xlu0 %3809
    %v3813 = vunpack.c.l.s4 839922192
    %v3814 = vunpack.c.0.s8 %v3813
    %v3815 = vlaneseq
    %v3816 = vshrl.u32 %v3815, 7
    %v3817 = vsub.s32 %v3814, %v3816
    %v3818 = vrot.slane %v3810, %v3817
    %3819 = vset.pattern.permute.xlu0 23
    %3820 = vperm.xlu0 %3819, %v137
    %v3821 = vpop.permute.xlu0 %3820
    %v3824 = vunpack.c.l.s4 839922192
    %v3825 = vunpack.c.0.s8 %v3824
    %v3826 = vlaneseq
    %v3827 = vshrl.u32 %v3826, 7
    %v3828 = vsub.s32 %v3825, %v3827
    %v3829 = vrot.slane %v3821, %v3828
    %3830 = vset.pattern.permute.xlu0 23
    %3831 = vperm.xlu0 %3830, %v138
    %v3832 = vpop.permute.xlu0 %3831
    %v3835 = vunpack.c.l.s4 839922192
    %v3836 = vunpack.c.0.s8 %v3835
    %v3837 = vlaneseq
    %v3838 = vshrl.u32 %v3837, 7
    %v3839 = vsub.s32 %v3836, %v3838
    %v3840 = vrot.slane %v3832, %v3839
    %3841 = vset.pattern.permute.xlu0 23
    %3842 = vperm.xlu0 %3841, %v139
    %v3843 = vpop.permute.xlu0 %3842
    %v3846 = vunpack.c.l.s4 839922192
    %v3847 = vunpack.c.0.s8 %v3846
    %v3848 = vlaneseq
    %v3849 = vshrl.u32 %v3848, 7
    %v3850 = vsub.s32 %v3847, %v3849
    %v3851 = vrot.slane %v3843, %v3850
    %3852 = vset.pattern.permute.xlu0 23
    %3853 = vperm.xlu0 %3852, %v140
    %v3854 = vpop.permute.xlu0 %3853
    %v3857 = vunpack.c.l.s4 839922192
    %v3858 = vunpack.c.0.s8 %v3857
    %v3859 = vlaneseq
    %v3860 = vshrl.u32 %v3859, 7
    %v3861 = vsub.s32 %v3858, %v3860
    %v3862 = vrot.slane %v3854, %v3861
    %3863 = vset.pattern.permute.xlu0 23
    %3864 = vperm.xlu0 %3863, %v141
    %v3865 = vpop.permute.xlu0 %3864
    %v3868 = vunpack.c.l.s4 839922192
    %v3869 = vunpack.c.0.s8 %v3868
    %v3870 = vlaneseq
    %v3871 = vshrl.u32 %v3870, 7
    %v3872 = vsub.s32 %v3869, %v3871
    %v3873 = vrot.slane %v3865, %v3872
    %3874 = vset.pattern.permute.xlu0 23
    %3875 = vperm.xlu0 %3874, %v142
    %v3876 = vpop.permute.xlu0 %3875
    %v3879 = vunpack.c.l.s4 839922192
    %v3880 = vunpack.c.0.s8 %v3879
    %v3881 = vlaneseq
    %v3882 = vshrl.u32 %v3881, 7
    %v3883 = vsub.s32 %v3880, %v3882
    %v3884 = vrot.slane %v3876, %v3883
    %3885 = vset.pattern.permute.xlu0 23
    %3886 = vperm.xlu0 %3885, %v143
    %v3887 = vpop.permute.xlu0 %3886
    %v3890 = vunpack.c.l.s4 839922192
    %v3891 = vunpack.c.0.s8 %v3890
    %v3892 = vlaneseq
    %v3893 = vshrl.u32 %v3892, 7
    %v3894 = vsub.s32 %v3891, %v3893
    %v3895 = vrot.slane %v3887, %v3894
    %v3896 = vmul.bf16 %v3818, %v1028
    %v3897 = vmul.bf16 %v3829, %v1029
    %v3898 = vmul.bf16 %v3840, %v1030
    %v3899 = vmul.bf16 %v3851, %v1031
    %v3900 = vmul.bf16 %v3862, %v1032
    %v3901 = vmul.bf16 %v3873, %v1033
    %v3902 = vmul.bf16 %v3884, %v1034
    %v3903 = vmul.bf16 %v3895, %v1035
    %v3912 = vunpack.c.l.b16 %v3896
    %v3913 = vunpack.c.l.b16 %v3897
    %v3914 = vunpack.c.l.b16 %v3898
    %v3915 = vunpack.c.l.b16 %v3899
    %v3916 = vunpack.c.l.b16 %v3900
    %v3917 = vunpack.c.l.b16 %v3901
    %v3918 = vunpack.c.l.b16 %v3902
    %v3919 = vunpack.c.l.b16 %v3903
    %v3920 = vpack.c.b16 %v3913, %v3912
    %v3921 = vpack.c.b16 %v3915, %v3914
    %v3922 = vpack.c.b16 %v3917, %v3916
    %v3923 = vpack.c.b16 %v3919, %v3918
    %3928 = vst [vmem:[#allocation2 + $0xb8] sm:$0xff] %v3920
    %3929 = vst [vmem:[#allocation2 + $0x190] sm:$0xff] %v3921
    %3930 = vst [vmem:[#allocation2 + $0x268] sm:$0xff] %v3922
    %3931 = vst [vmem:[#allocation2 + $0x340] sm:$0xff] %v3923
    %3932 = vset.pattern.permute.xlu0 24
    %3933 = vperm.xlu0 %3932, %v136
    %v3934 = vpop.permute.xlu0 %3933
    %v3937 = vunpack.c.l.s4 839922192
    %v3938 = vunpack.c.0.s8 %v3937
    %v3939 = vlaneseq
    %v3940 = vshrl.u32 %v3939, 7
    %v3941 = vsub.s32 %v3938, %v3940
    %v3942 = vrot.slane %v3934, %v3941
    %3943 = vset.pattern.permute.xlu0 24
    %3944 = vperm.xlu0 %3943, %v137
    %v3945 = vpop.permute.xlu0 %3944
    %v3948 = vunpack.c.l.s4 839922192
    %v3949 = vunpack.c.0.s8 %v3948
    %v3950 = vlaneseq
    %v3951 = vshrl.u32 %v3950, 7
    %v3952 = vsub.s32 %v3949, %v3951
    %v3953 = vrot.slane %v3945, %v3952
    %3954 = vset.pattern.permute.xlu0 24
    %3955 = vperm.xlu0 %3954, %v138
    %v3956 = vpop.permute.xlu0 %3955
    %v3959 = vunpack.c.l.s4 839922192
    %v3960 = vunpack.c.0.s8 %v3959
    %v3961 = vlaneseq
    %v3962 = vshrl.u32 %v3961, 7
    %v3963 = vsub.s32 %v3960, %v3962
    %v3964 = vrot.slane %v3956, %v3963
    %3965 = vset.pattern.permute.xlu0 24
    %3966 = vperm.xlu0 %3965, %v139
    %v3967 = vpop.permute.xlu0 %3966
    %v3970 = vunpack.c.l.s4 839922192
    %v3971 = vunpack.c.0.s8 %v3970
    %v3972 = vlaneseq
    %v3973 = vshrl.u32 %v3972, 7
    %v3974 = vsub.s32 %v3971, %v3973
    %v3975 = vrot.slane %v3967, %v3974
    %3976 = vset.pattern.permute.xlu0 24
    %3977 = vperm.xlu0 %3976, %v140
    %v3978 = vpop.permute.xlu0 %3977
    %v3981 = vunpack.c.l.s4 839922192
    %v3982 = vunpack.c.0.s8 %v3981
    %v3983 = vlaneseq
    %v3984 = vshrl.u32 %v3983, 7
    %v3985 = vsub.s32 %v3982, %v3984
    %v3986 = vrot.slane %v3978, %v3985
    %3987 = vset.pattern.permute.xlu0 24
    %3988 = vperm.xlu0 %3987, %v141
    %v3989 = vpop.permute.xlu0 %3988
    %v3992 = vunpack.c.l.s4 839922192
    %v3993 = vunpack.c.0.s8 %v3992
    %v3994 = vlaneseq
    %v3995 = vshrl.u32 %v3994, 7
    %v3996 = vsub.s32 %v3993, %v3995
    %v3997 = vrot.slane %v3989, %v3996
    %3998 = vset.pattern.permute.xlu0 24
    %3999 = vperm.xlu0 %3998, %v142
    %v4000 = vpop.permute.xlu0 %3999
    %v4003 = vunpack.c.l.s4 839922192
    %v4004 = vunpack.c.0.s8 %v4003
    %v4005 = vlaneseq
    %v4006 = vshrl.u32 %v4005, 7
    %v4007 = vsub.s32 %v4004, %v4006
    %v4008 = vrot.slane %v4000, %v4007
    %4009 = vset.pattern.permute.xlu0 24
    %4010 = vperm.xlu0 %4009, %v143
    %v4011 = vpop.permute.xlu0 %4010
    %v4014 = vunpack.c.l.s4 839922192
    %v4015 = vunpack.c.0.s8 %v4014
    %v4016 = vlaneseq
    %v4017 = vshrl.u32 %v4016, 7
    %v4018 = vsub.s32 %v4015, %v4017
    %v4019 = vrot.slane %v4011, %v4018
    %v4020 = vmul.bf16 %v3942, %v1028
    %v4021 = vmul.bf16 %v3953, %v1029
    %v4022 = vmul.bf16 %v3964, %v1030
    %v4023 = vmul.bf16 %v3975, %v1031
    %v4024 = vmul.bf16 %v3986, %v1032
    %v4025 = vmul.bf16 %v3997, %v1033
    %v4026 = vmul.bf16 %v4008, %v1034
    %v4027 = vmul.bf16 %v4019, %v1035
    %v4036 = vunpack.c.l.b16 %v4020
    %v4037 = vunpack.c.l.b16 %v4021
    %v4038 = vunpack.c.l.b16 %v4022
    %v4039 = vunpack.c.l.b16 %v4023
    %v4040 = vunpack.c.l.b16 %v4024
    %v4041 = vunpack.c.l.b16 %v4025
    %v4042 = vunpack.c.l.b16 %v4026
    %v4043 = vunpack.c.l.b16 %v4027
    %v4044 = vpack.c.b16 %v4037, %v4036
    %v4045 = vpack.c.b16 %v4039, %v4038
    %v4046 = vpack.c.b16 %v4041, %v4040
    %v4047 = vpack.c.b16 %v4043, %v4042
    %4052 = vst [vmem:[#allocation2 + $0xc0] sm:$0xff] %v4044
    %4053 = vst [vmem:[#allocation2 + $0x198] sm:$0xff] %v4045
    %4054 = vst [vmem:[#allocation2 + $0x270] sm:$0xff] %v4046
    %4055 = vst [vmem:[#allocation2 + $0x348] sm:$0xff] %v4047
    %4056 = vset.pattern.permute.xlu0 25
    %4057 = vperm.xlu0 %4056, %v136
    %v4058 = vpop.permute.xlu0 %4057
    %v4061 = vunpack.c.l.s4 839922192
    %v4062 = vunpack.c.0.s8 %v4061
    %v4063 = vlaneseq
    %v4064 = vshrl.u32 %v4063, 7
    %v4065 = vsub.s32 %v4062, %v4064
    %v4066 = vrot.slane %v4058, %v4065
    %4067 = vset.pattern.permute.xlu0 25
    %4068 = vperm.xlu0 %4067, %v137
    %v4069 = vpop.permute.xlu0 %4068
    %v4072 = vunpack.c.l.s4 839922192
    %v4073 = vunpack.c.0.s8 %v4072
    %v4074 = vlaneseq
    %v4075 = vshrl.u32 %v4074, 7
    %v4076 = vsub.s32 %v4073, %v4075
    %v4077 = vrot.slane %v4069, %v4076
    %4078 = vset.pattern.permute.xlu0 25
    %4079 = vperm.xlu0 %4078, %v138
    %v4080 = vpop.permute.xlu0 %4079
    %v4083 = vunpack.c.l.s4 839922192
    %v4084 = vunpack.c.0.s8 %v4083
    %v4085 = vlaneseq
    %v4086 = vshrl.u32 %v4085, 7
    %v4087 = vsub.s32 %v4084, %v4086
    %v4088 = vrot.slane %v4080, %v4087
    %4089 = vset.pattern.permute.xlu0 25
    %4090 = vperm.xlu0 %4089, %v139
    %v4091 = vpop.permute.xlu0 %4090
    %v4094 = vunpack.c.l.s4 839922192
    %v4095 = vunpack.c.0.s8 %v4094
    %v4096 = vlaneseq
    %v4097 = vshrl.u32 %v4096, 7
    %v4098 = vsub.s32 %v4095, %v4097
    %v4099 = vrot.slane %v4091, %v4098
    %4100 = vset.pattern.permute.xlu0 25
    %4101 = vperm.xlu0 %4100, %v140
    %v4102 = vpop.permute.xlu0 %4101
    %v4105 = vunpack.c.l.s4 839922192
    %v4106 = vunpack.c.0.s8 %v4105
    %v4107 = vlaneseq
    %v4108 = vshrl.u32 %v4107, 7
    %v4109 = vsub.s32 %v4106, %v4108
    %v4110 = vrot.slane %v4102, %v4109
    %4111 = vset.pattern.permute.xlu0 25
    %4112 = vperm.xlu0 %4111, %v141
    %v4113 = vpop.permute.xlu0 %4112
    %v4116 = vunpack.c.l.s4 839922192
    %v4117 = vunpack.c.0.s8 %v4116
    %v4118 = vlaneseq
    %v4119 = vshrl.u32 %v4118, 7
    %v4120 = vsub.s32 %v4117, %v4119
    %v4121 = vrot.slane %v4113, %v4120
    %4122 = vset.pattern.permute.xlu0 25
    %4123 = vperm.xlu0 %4122, %v142
    %v4124 = vpop.permute.xlu0 %4123
    %v4127 = vunpack.c.l.s4 839922192
    %v4128 = vunpack.c.0.s8 %v4127
    %v4129 = vlaneseq
    %v4130 = vshrl.u32 %v4129, 7
    %v4131 = vsub.s32 %v4128, %v4130
    %v4132 = vrot.slane %v4124, %v4131
    %4133 = vset.pattern.permute.xlu0 25
    %4134 = vperm.xlu0 %4133, %v143
    %v4135 = vpop.permute.xlu0 %4134
    %v4138 = vunpack.c.l.s4 839922192
    %v4139 = vunpack.c.0.s8 %v4138
    %v4140 = vlaneseq
    %v4141 = vshrl.u32 %v4140, 7
    %v4142 = vsub.s32 %v4139, %v4141
    %v4143 = vrot.slane %v4135, %v4142
    %v4144 = vmul.bf16 %v4066, %v1028
    %v4145 = vmul.bf16 %v4077, %v1029
    %v4146 = vmul.bf16 %v4088, %v1030
    %v4147 = vmul.bf16 %v4099, %v1031
    %v4148 = vmul.bf16 %v4110, %v1032
    %v4149 = vmul.bf16 %v4121, %v1033
    %v4150 = vmul.bf16 %v4132, %v1034
    %v4151 = vmul.bf16 %v4143, %v1035
    %v4160 = vunpack.c.l.b16 %v4144
    %v4161 = vunpack.c.l.b16 %v4145
    %v4162 = vunpack.c.l.b16 %v4146
    %v4163 = vunpack.c.l.b16 %v4147
    %v4164 = vunpack.c.l.b16 %v4148
    %v4165 = vunpack.c.l.b16 %v4149
    %v4166 = vunpack.c.l.b16 %v4150
    %v4167 = vunpack.c.l.b16 %v4151
    %v4168 = vpack.c.b16 %v4161, %v4160
    %v4169 = vpack.c.b16 %v4163, %v4162
    %v4170 = vpack.c.b16 %v4165, %v4164
    %v4171 = vpack.c.b16 %v4167, %v4166
    %4176 = vst [vmem:[#allocation2 + $0xc8] sm:$0xff] %v4168
    %4177 = vst [vmem:[#allocation2 + $0x1a0] sm:$0xff] %v4169
    %4178 = vst [vmem:[#allocation2 + $0x278] sm:$0xff] %v4170
    %4179 = vst [vmem:[#allocation2 + $0x350] sm:$0xff] %v4171
    %4180 = vset.pattern.permute.xlu0 26
    %4181 = vperm.xlu0 %4180, %v136
    %v4182 = vpop.permute.xlu0 %4181
    %v4185 = vunpack.c.l.s4 839922192
    %v4186 = vunpack.c.0.s8 %v4185
    %v4187 = vlaneseq
    %v4188 = vshrl.u32 %v4187, 7
    %v4189 = vsub.s32 %v4186, %v4188
    %v4190 = vrot.slane %v4182, %v4189
    %4191 = vset.pattern.permute.xlu0 26
    %4192 = vperm.xlu0 %4191, %v137
    %v4193 = vpop.permute.xlu0 %4192
    %v4196 = vunpack.c.l.s4 839922192
    %v4197 = vunpack.c.0.s8 %v4196
    %v4198 = vlaneseq
    %v4199 = vshrl.u32 %v4198, 7
    %v4200 = vsub.s32 %v4197, %v4199
    %v4201 = vrot.slane %v4193, %v4200
    %4202 = vset.pattern.permute.xlu0 26
    %4203 = vperm.xlu0 %4202, %v138
    %v4204 = vpop.permute.xlu0 %4203
    %v4207 = vunpack.c.l.s4 839922192
    %v4208 = vunpack.c.0.s8 %v4207
    %v4209 = vlaneseq
    %v4210 = vshrl.u32 %v4209, 7
    %v4211 = vsub.s32 %v4208, %v4210
    %v4212 = vrot.slane %v4204, %v4211
    %4213 = vset.pattern.permute.xlu0 26
    %4214 = vperm.xlu0 %4213, %v139
    %v4215 = vpop.permute.xlu0 %4214
    %v4218 = vunpack.c.l.s4 839922192
    %v4219 = vunpack.c.0.s8 %v4218
    %v4220 = vlaneseq
    %v4221 = vshrl.u32 %v4220, 7
    %v4222 = vsub.s32 %v4219, %v4221
    %v4223 = vrot.slane %v4215, %v4222
    %4224 = vset.pattern.permute.xlu0 26
    %4225 = vperm.xlu0 %4224, %v140
    %v4226 = vpop.permute.xlu0 %4225
    %v4229 = vunpack.c.l.s4 839922192
    %v4230 = vunpack.c.0.s8 %v4229
    %v4231 = vlaneseq
    %v4232 = vshrl.u32 %v4231, 7
    %v4233 = vsub.s32 %v4230, %v4232
    %v4234 = vrot.slane %v4226, %v4233
    %4235 = vset.pattern.permute.xlu0 26
    %4236 = vperm.xlu0 %4235, %v141
    %v4237 = vpop.permute.xlu0 %4236
    %v4240 = vunpack.c.l.s4 839922192
    %v4241 = vunpack.c.0.s8 %v4240
    %v4242 = vlaneseq
    %v4243 = vshrl.u32 %v4242, 7
    %v4244 = vsub.s32 %v4241, %v4243
    %v4245 = vrot.slane %v4237, %v4244
    %4246 = vset.pattern.permute.xlu0 26
    %4247 = vperm.xlu0 %4246, %v142
    %v4248 = vpop.permute.xlu0 %4247
    %v4251 = vunpack.c.l.s4 839922192
    %v4252 = vunpack.c.0.s8 %v4251
    %v4253 = vlaneseq
    %v4254 = vshrl.u32 %v4253, 7
    %v4255 = vsub.s32 %v4252, %v4254
    %v4256 = vrot.slane %v4248, %v4255
    %4257 = vset.pattern.permute.xlu0 26
    %4258 = vperm.xlu0 %4257, %v143
    %v4259 = vpop.permute.xlu0 %4258
    %v4262 = vunpack.c.l.s4 839922192
    %v4263 = vunpack.c.0.s8 %v4262
    %v4264 = vlaneseq
    %v4265 = vshrl.u32 %v4264, 7
    %v4266 = vsub.s32 %v4263, %v4265
    %v4267 = vrot.slane %v4259, %v4266
    %v4268 = vmul.bf16 %v4190, %v1028
    %v4269 = vmul.bf16 %v4201, %v1029
    %v4270 = vmul.bf16 %v4212, %v1030
    %v4271 = vmul.bf16 %v4223, %v1031
    %v4272 = vmul.bf16 %v4234, %v1032
    %v4273 = vmul.bf16 %v4245, %v1033
    %v4274 = vmul.bf16 %v4256, %v1034
    %v4275 = vmul.bf16 %v4267, %v1035
    %v4284 = vunpack.c.l.b16 %v4268
    %v4285 = vunpack.c.l.b16 %v4269
    %v4286 = vunpack.c.l.b16 %v4270
    %v4287 = vunpack.c.l.b16 %v4271
    %v4288 = vunpack.c.l.b16 %v4272
    %v4289 = vunpack.c.l.b16 %v4273
    %v4290 = vunpack.c.l.b16 %v4274
    %v4291 = vunpack.c.l.b16 %v4275
    %v4292 = vpack.c.b16 %v4285, %v4284
    %v4293 = vpack.c.b16 %v4287, %v4286
    %v4294 = vpack.c.b16 %v4289, %v4288
    %v4295 = vpack.c.b16 %v4291, %v4290
    %4300 = vst [vmem:[#allocation2 + $0xd0] sm:$0xff] %v4292
    %4301 = vst [vmem:[#allocation2 + $0x1a8] sm:$0xff] %v4293
    %4302 = vst [vmem:[#allocation2 + $0x280] sm:$0xff] %v4294
    %4303 = vst [vmem:[#allocation2 + $0x358] sm:$0xff] %v4295
    %v4304 = vld [vmem:[#allocation2] sm:$0xff]
    %v4305 = vld [vmem:[#allocation2 + $0x8] sm:$0xff]
    %v4306 = vld [vmem:[#allocation2 + $0x10] sm:$0xff]
    %v4307 = vld [vmem:[#allocation2 + $0x18] sm:$0xff]
    %v4308 = vld [vmem:[#allocation2 + $0x20] sm:$0xff]
    %v4309 = vld [vmem:[#allocation2 + $0x28] sm:$0xff]
    %v4310 = vld [vmem:[#allocation2 + $0x30] sm:$0xff]
    %v4311 = vld [vmem:[#allocation2 + $0x38] sm:$0xff]
    %v4312 = vld [vmem:[#allocation2 + $0x40] sm:$0xff]
    %v4313 = vld [vmem:[#allocation2 + $0x48] sm:$0xff]
    %v4314 = vld [vmem:[#allocation2 + $0x50] sm:$0xff]
    %v4315 = vld [vmem:[#allocation2 + $0x58] sm:$0xff]
    %v4316 = vld [vmem:[#allocation2 + $0x60] sm:$0xff]
    %v4317 = vld [vmem:[#allocation2 + $0x68] sm:$0xff]
    %v4318 = vld [vmem:[#allocation2 + $0x70] sm:$0xff]
    %v4319 = vld [vmem:[#allocation2 + $0x78] sm:$0xff]
    %v4320 = vld [vmem:[#allocation2 + $0x80] sm:$0xff]
    %v4321 = vld [vmem:[#allocation2 + $0x88] sm:$0xff]
    %v4322 = vld [vmem:[#allocation2 + $0x90] sm:$0xff]
    %v4323 = vld [vmem:[#allocation2 + $0x98] sm:$0xff]
    %v4324 = vld [vmem:[#allocation2 + $0xa0] sm:$0xff]
    %v4325 = vld [vmem:[#allocation2 + $0xa8] sm:$0xff]
    %v4326 = vld [vmem:[#allocation2 + $0xb0] sm:$0xff]
    %v4327 = vld [vmem:[#allocation2 + $0xb8] sm:$0xff]
    %v4328 = vld [vmem:[#allocation2 + $0xc0] sm:$0xff]
    %v4329 = vld [vmem:[#allocation2 + $0xc8] sm:$0xff]
    %v4330 = vld [vmem:[#allocation2 + $0xd0] sm:$0xff]
    %v4331 = vld [vmem:[#allocation2 + $0xd8] sm:$0xff]
    %v4332 = vld [vmem:[#allocation2 + $0xe0] sm:$0xff]
    %v4333 = vld [vmem:[#allocation2 + $0xe8] sm:$0xff]
    %v4334 = vld [vmem:[#allocation2 + $0xf0] sm:$0xff]
    %v4335 = vld [vmem:[#allocation2 + $0xf8] sm:$0xff]
    %v4336 = vld [vmem:[#allocation2 + $0x100] sm:$0xff]
    %v4337 = vld [vmem:[#allocation2 + $0x108] sm:$0xff]
    %v4338 = vld [vmem:[#allocation2 + $0x110] sm:$0xff]
    %v4339 = vld [vmem:[#allocation2 + $0x118] sm:$0xff]
    %v4340 = vld [vmem:[#allocation2 + $0x120] sm:$0xff]
    %v4341 = vld [vmem:[#allocation2 + $0x128] sm:$0xff]
    %v4342 = vld [vmem:[#allocation2 + $0x130] sm:$0xff]
    %v4343 = vld [vmem:[#allocation2 + $0x138] sm:$0xff]
    %v4344 = vld [vmem:[#allocation2 + $0x140] sm:$0xff]
    %v4345 = vld [vmem:[#allocation2 + $0x148] sm:$0xff]
    %v4346 = vld [vmem:[#allocation2 + $0x150] sm:$0xff]
    %v4347 = vld [vmem:[#allocation2 + $0x158] sm:$0xff]
    %v4348 = vld [vmem:[#allocation2 + $0x160] sm:$0xff]
    %v4349 = vld [vmem:[#allocation2 + $0x168] sm:$0xff]
    %v4350 = vld [vmem:[#allocation2 + $0x170] sm:$0xff]
    %v4351 = vld [vmem:[#allocation2 + $0x178] sm:$0xff]
    %v4352 = vld [vmem:[#allocation2 + $0x180] sm:$0xff]
    %v4353 = vld [vmem:[#allocation2 + $0x188] sm:$0xff]
    %v4354 = vld [vmem:[#allocation2 + $0x190] sm:$0xff]
    %v4355 = vld [vmem:[#allocation2 + $0x198] sm:$0xff]
    %v4356 = vld [vmem:[#allocation2 + $0x1a0] sm:$0xff]
    %v4357 = vld [vmem:[#allocation2 + $0x1a8] sm:$0xff]
    %v4358 = vld [vmem:[#allocation2 + $0x1b0] sm:$0xff]
    %v4359 = vld [vmem:[#allocation2 + $0x1b8] sm:$0xff]
    %v4360 = vld [vmem:[#allocation2 + $0x1c0] sm:$0xff]
    %v4361 = vld [vmem:[#allocation2 + $0x1c8] sm:$0xff]
    %v4362 = vld [vmem:[#allocation2 + $0x1d0] sm:$0xff]
    %v4363 = vld [vmem:[#allocation2 + $0x1d8] sm:$0xff]
    %v4364 = vld [vmem:[#allocation2 + $0x1e0] sm:$0xff]
    %v4365 = vld [vmem:[#allocation2 + $0x1e8] sm:$0xff]
    %v4366 = vld [vmem:[#allocation2 + $0x1f0] sm:$0xff]
    %v4367 = vld [vmem:[#allocation2 + $0x1f8] sm:$0xff]
    %v4368 = vld [vmem:[#allocation2 + $0x200] sm:$0xff]
    %v4369 = vld [vmem:[#allocation2 + $0x208] sm:$0xff]
    %v4370 = vld [vmem:[#allocation2 + $0x210] sm:$0xff]
    %v4371 = vld [vmem:[#allocation2 + $0x218] sm:$0xff]
    %v4372 = vld [vmem:[#allocation2 + $0x220] sm:$0xff]
    %v4373 = vld [vmem:[#allocation2 + $0x228] sm:$0xff]
    %v4374 = vld [vmem:[#allocation2 + $0x230] sm:$0xff]
    %v4375 = vld [vmem:[#allocation2 + $0x238] sm:$0xff]
    %v4376 = vld [vmem:[#allocation2 + $0x240] sm:$0xff]
    %v4377 = vld [vmem:[#allocation2 + $0x248] sm:$0xff]
    %v4378 = vld [vmem:[#allocation2 + $0x250] sm:$0xff]
    %v4379 = vld [vmem:[#allocation2 + $0x258] sm:$0xff]
    %v4380 = vld [vmem:[#allocation2 + $0x260] sm:$0xff]
    %v4381 = vld [vmem:[#allocation2 + $0x268] sm:$0xff]
    %v4382 = vld [vmem:[#allocation2 + $0x270] sm:$0xff]
    %v4383 = vld [vmem:[#allocation2 + $0x278] sm:$0xff]
    %v4384 = vld [vmem:[#allocation2 + $0x280] sm:$0xff]
    %v4385 = vld [vmem:[#allocation2 + $0x288] sm:$0xff]
    %v4386 = vld [vmem:[#allocation2 + $0x290] sm:$0xff]
    %v4387 = vld [vmem:[#allocation2 + $0x298] sm:$0xff]
    %v4388 = vld [vmem:[#allocation2 + $0x2a0] sm:$0xff]
    %v4389 = vld [vmem:[#allocation2 + $0x2a8] sm:$0xff]
    %v4390 = vld [vmem:[#allocation2 + $0x2b0] sm:$0xff]
    %v4391 = vld [vmem:[#allocation2 + $0x2b8] sm:$0xff]
    %v4392 = vld [vmem:[#allocation2 + $0x2c0] sm:$0xff]
    %v4393 = vld [vmem:[#allocation2 + $0x2c8] sm:$0xff]
    %v4394 = vld [vmem:[#allocation2 + $0x2d0] sm:$0xff]
    %v4395 = vld [vmem:[#allocation2 + $0x2d8] sm:$0xff]
    %v4396 = vld [vmem:[#allocation2 + $0x2e0] sm:$0xff]
    %v4397 = vld [vmem:[#allocation2 + $0x2e8] sm:$0xff]
    %v4398 = vld [vmem:[#allocation2 + $0x2f0] sm:$0xff]
    %v4399 = vld [vmem:[#allocation2 + $0x2f8] sm:$0xff]
    %v4400 = vld [vmem:[#allocation2 + $0x300] sm:$0xff]
    %v4401 = vld [vmem:[#allocation2 + $0x308] sm:$0xff]
    %v4402 = vld [vmem:[#allocation2 + $0x310] sm:$0xff]
    %v4403 = vld [vmem:[#allocation2 + $0x318] sm:$0xff]
    %v4404 = vld [vmem:[#allocation2 + $0x320] sm:$0xff]
    %v4405 = vld [vmem:[#allocation2 + $0x328] sm:$0xff]
    %v4406 = vld [vmem:[#allocation2 + $0x330] sm:$0xff]
    %v4407 = vld [vmem:[#allocation2 + $0x338] sm:$0xff]
    %v4408 = vld [vmem:[#allocation2 + $0x340] sm:$0xff]
    %v4409 = vld [vmem:[#allocation2 + $0x348] sm:$0xff]
    %v4410 = vld [vmem:[#allocation2 + $0x350] sm:$0xff]
    %v4411 = vld [vmem:[#allocation2 + $0x358] sm:$0xff]
    %v4412 = vld [vmem:[%s23] sm:$0xf]
    %v4413 = vld [vmem:[%s23 + $0x4] sm:$0xf]
    %v4414 = vld [vmem:[%s23 + $0x8] sm:$0xf]
    %v4415 = vld [vmem:[%s23 + $0xc] sm:$0xf]
    %v4416 = vld [vmem:[%s23 + $0x10] sm:$0xf]
    %v4417 = vld [vmem:[%s23 + $0x14] sm:$0xf]
    %v4418 = vld [vmem:[%s23 + $0x18] sm:$0xf]
    %v4419 = vld [vmem:[%s23 + $0x1c] sm:$0xf]
    %v4420 = vld [vmem:[%s23 + $0x20] sm:$0xf]
    %v4421 = vld [vmem:[%s23 + $0x24] sm:$0xf]
    %v4422 = vld [vmem:[%s23 + $0x28] sm:$0xf]
    %v4423 = vld [vmem:[%s23 + $0x2c] sm:$0xf]
    %v4424 = vld [vmem:[%s23 + $0x30] sm:$0xf]
    %v4425 = vld [vmem:[%s23 + $0x34] sm:$0xf]
    %v4426 = vld [vmem:[%s23 + $0x38] sm:$0xf]
    %v4427 = vld [vmem:[%s23 + $0x3c] sm:$0xf]
    %v4428 = vld [vmem:[%s23 + $0x40] sm:$0xf]
    %v4429 = vld [vmem:[%s23 + $0x44] sm:$0xf]
    %v4430 = vld [vmem:[%s23 + $0x48] sm:$0xf]
    %v4431 = vld [vmem:[%s23 + $0x4c] sm:$0xf]
    %v4432 = vld [vmem:[%s23 + $0x50] sm:$0xf]
    %v4433 = vld [vmem:[%s23 + $0x54] sm:$0xf]
    %v4434 = vld [vmem:[%s23 + $0x58] sm:$0xf]
    %v4435 = vld [vmem:[%s23 + $0x5c] sm:$0xf]
    %v4436 = vld [vmem:[%s23 + $0x60] sm:$0xf]
    %v4437 = vld [vmem:[%s23 + $0x64] sm:$0xf]
    %v4438 = vld [vmem:[%s23 + $0x68] sm:$0xf]
    %v4439 = vld [vmem:[%s23 + $0x6c] sm:$0xf]
    %v4440 = vld [vmem:[%s23 + $0x70] sm:$0xf]
    %v4441 = vld [vmem:[%s23 + $0x74] sm:$0xf]
    %v4442 = vld [vmem:[%s23 + $0x78] sm:$0xf]
    %v4443 = vld [vmem:[%s23 + $0x7c] sm:$0xf]
    %v4444 = vld [vmem:[%s23 + $0x80] sm:$0xf]
    %v4445 = vld [vmem:[%s23 + $0x84] sm:$0xf]
    %v4446 = vld [vmem:[%s23 + $0x88] sm:$0xf]
    %v4447 = vld [vmem:[%s23 + $0x8c] sm:$0xf]
    %v4448 = vld [vmem:[%s23 + $0x90] sm:$0xf]
    %v4449 = vld [vmem:[%s23 + $0x94] sm:$0xf]
    %v4450 = vld [vmem:[%s23 + $0x98] sm:$0xf]
    %v4451 = vld [vmem:[%s23 + $0x9c] sm:$0xf]
    %v4452 = vld [vmem:[%s23 + $0xa0] sm:$0xf]
    %v4453 = vld [vmem:[%s23 + $0xa4] sm:$0xf]
    %v4454 = vld [vmem:[%s23 + $0xa8] sm:$0xf]
    %v4455 = vld [vmem:[%s23 + $0xac] sm:$0xf]
    %v4456 = vld [vmem:[%s23 + $0xb0] sm:$0xf]
    %v4457 = vld [vmem:[%s23 + $0xb4] sm:$0xf]
    %v4458 = vld [vmem:[%s23 + $0xb8] sm:$0xf]
    %v4459 = vld [vmem:[%s23 + $0xbc] sm:$0xf]
    %v4460 = vld [vmem:[%s23 + $0xc0] sm:$0xf]
    %v4461 = vld [vmem:[%s23 + $0xc4] sm:$0xf]
    %v4462 = vld [vmem:[%s23 + $0xc8] sm:$0xf]
    %v4463 = vld [vmem:[%s23 + $0xcc] sm:$0xf]
    %v4464 = vld [vmem:[%s23 + $0xd0] sm:$0xf]
    %v4465 = vld [vmem:[%s23 + $0xd4] sm:$0xf]
    %v4466 = vld [vmem:[%s23 + $0xd8] sm:$0xf]
    %v4467 = vld [vmem:[%s23 + $0xdc] sm:$0xf]
    %v4468 = vld [vmem:[%s23 + $0xe0] sm:$0xf]
    %v4469 = vld [vmem:[%s23 + $0xe4] sm:$0xf]
    %v4470 = vld [vmem:[%s23 + $0xe8] sm:$0xf]
    %v4471 = vld [vmem:[%s23 + $0xec] sm:$0xf]
    %v4472 = vld [vmem:[%s23 + $0xf0] sm:$0xf]
    %v4473 = vld [vmem:[%s23 + $0xf4] sm:$0xf]
    %v4474 = vld [vmem:[%s23 + $0xf8] sm:$0xf]
    %v4475 = vld [vmem:[%s23 + $0xfc] sm:$0xf]
    %v4476 = vld [vmem:[%s23 + $0x100] sm:$0xf]
    %v4477 = vld [vmem:[%s23 + $0x104] sm:$0xf]
    %v4478 = vld [vmem:[%s23 + $0x108] sm:$0xf]
    %v4479 = vld [vmem:[%s23 + $0x10c] sm:$0xf]
    %v4480 = vld [vmem:[%s23 + $0x110] sm:$0xf]
    %v4481 = vld [vmem:[%s23 + $0x114] sm:$0xf]
    %v4482 = vld [vmem:[%s23 + $0x118] sm:$0xf]
    %v4483 = vld [vmem:[%s23 + $0x11c] sm:$0xf]
    %v4484 = vld [vmem:[%s23 + $0x120] sm:$0xf]
    %v4485 = vld [vmem:[%s23 + $0x124] sm:$0xf]
    %v4486 = vld [vmem:[%s23 + $0x128] sm:$0xf]
    %v4487 = vld [vmem:[%s23 + $0x12c] sm:$0xf]
    %v4488 = vld [vmem:[%s23 + $0x130] sm:$0xf]
    %v4489 = vld [vmem:[%s23 + $0x134] sm:$0xf]
    %v4490 = vld [vmem:[%s23 + $0x138] sm:$0xf]
    %v4491 = vld [vmem:[%s23 + $0x13c] sm:$0xf]
    %v4492 = vld [vmem:[%s23 + $0x140] sm:$0xf]
    %v4493 = vld [vmem:[%s23 + $0x144] sm:$0xf]
    %v4494 = vld [vmem:[%s23 + $0x148] sm:$0xf]
    %v4495 = vld [vmem:[%s23 + $0x14c] sm:$0xf]
    %v4496 = vld [vmem:[%s23 + $0x150] sm:$0xf]
    %v4497 = vld [vmem:[%s23 + $0x154] sm:$0xf]
    %v4498 = vld [vmem:[%s23 + $0x158] sm:$0xf]
    %v4499 = vld [vmem:[%s23 + $0x15c] sm:$0xf]
    %v4500 = vld [vmem:[%s23 + $0x160] sm:$0xf]
    %v4501 = vld [vmem:[%s23 + $0x164] sm:$0xf]
    %v4502 = vld [vmem:[%s23 + $0x168] sm:$0xf]
    %v4503 = vld [vmem:[%s23 + $0x16c] sm:$0xf]
    %v4504 = vld [vmem:[%s23 + $0x170] sm:$0xf]
    %v4505 = vld [vmem:[%s23 + $0x174] sm:$0xf]
    %v4506 = vld [vmem:[%s23 + $0x178] sm:$0xf]
    %v4507 = vld [vmem:[%s23 + $0x17c] sm:$0xf]
    %v4508 = vld [vmem:[%s23 + $0x180] sm:$0xf]
    %v4509 = vld [vmem:[%s23 + $0x184] sm:$0xf]
    %v4510 = vld [vmem:[%s23 + $0x188] sm:$0xf]
    %v4511 = vld [vmem:[%s23 + $0x18c] sm:$0xf]
    %v4512 = vld [vmem:[%s23 + $0x190] sm:$0xf]
    %v4513 = vld [vmem:[%s23 + $0x194] sm:$0xf]
    %v4514 = vld [vmem:[%s23 + $0x198] sm:$0xf]
    %v4515 = vld [vmem:[%s23 + $0x19c] sm:$0xf]
    %v4516 = vld [vmem:[%s23 + $0x1a0] sm:$0xf]
    %v4517 = vld [vmem:[%s23 + $0x1a4] sm:$0xf]
    %v4518 = vld [vmem:[%s23 + $0x1a8] sm:$0xf]
    %v4519 = vld [vmem:[%s23 + $0x1ac] sm:$0xf]
    %v4520 = vld [vmem:[%s23 + $0x1b0] sm:$0xf]
    %v4521 = vld [vmem:[%s23 + $0x1b4] sm:$0xf]
    %v4522 = vld [vmem:[%s23 + $0x1b8] sm:$0xf]
    %v4523 = vld [vmem:[%s23 + $0x1bc] sm:$0xf]
    %v4524 = vld [vmem:[%s23 + $0x1c0] sm:$0xf]
    %v4525 = vld [vmem:[%s23 + $0x1c4] sm:$0xf]
    %v4526 = vld [vmem:[%s23 + $0x1c8] sm:$0xf]
    %v4527 = vld [vmem:[%s23 + $0x1cc] sm:$0xf]
    %v4528 = vld [vmem:[%s23 + $0x1d0] sm:$0xf]
    %v4529 = vld [vmem:[%s23 + $0x1d4] sm:$0xf]
    %v4530 = vld [vmem:[%s23 + $0x1d8] sm:$0xf]
    %v4531 = vld [vmem:[%s23 + $0x1dc] sm:$0xf]
    %v4532 = vld [vmem:[%s23 + $0x1e0] sm:$0xf]
    %v4533 = vld [vmem:[%s23 + $0x1e4] sm:$0xf]
    %v4534 = vld [vmem:[%s23 + $0x1e8] sm:$0xf]
    %v4535 = vld [vmem:[%s23 + $0x1ec] sm:$0xf]
    %v4536 = vld [vmem:[%s23 + $0x1f0] sm:$0xf]
    %v4537 = vld [vmem:[%s23 + $0x1f4] sm:$0xf]
    %v4538 = vld [vmem:[%s23 + $0x1f8] sm:$0xf]
    %v4539 = vld [vmem:[%s23 + $0x1fc] sm:$0xf]
    %v4540 = vld [vmem:[%s23 + $0x200] sm:$0xf]
    %v4541 = vld [vmem:[%s23 + $0x204] sm:$0xf]
    %v4542 = vld [vmem:[%s23 + $0x208] sm:$0xf]
    %v4543 = vld [vmem:[%s23 + $0x20c] sm:$0xf]
    %v4544 = vld [vmem:[%s23 + $0x210] sm:$0xf]
    %v4545 = vld [vmem:[%s23 + $0x214] sm:$0xf]
    %v4546 = vld [vmem:[%s23 + $0x218] sm:$0xf]
    %v4547 = vld [vmem:[%s23 + $0x21c] sm:$0xf]
    %v4548 = vld [vmem:[%s23 + $0x220] sm:$0xf]
    %v4549 = vld [vmem:[%s23 + $0x224] sm:$0xf]
    %v4550 = vld [vmem:[%s23 + $0x228] sm:$0xf]
    %v4551 = vld [vmem:[%s23 + $0x22c] sm:$0xf]
    %v4552 = vld [vmem:[%s23 + $0x230] sm:$0xf]
    %v4553 = vld [vmem:[%s23 + $0x234] sm:$0xf]
    %v4554 = vld [vmem:[%s23 + $0x238] sm:$0xf]
    %v4555 = vld [vmem:[%s23 + $0x23c] sm:$0xf]
    %v4556 = vld [vmem:[%s23 + $0x240] sm:$0xf]
    %v4557 = vld [vmem:[%s23 + $0x244] sm:$0xf]
    %v4558 = vld [vmem:[%s23 + $0x248] sm:$0xf]
    %v4559 = vld [vmem:[%s23 + $0x24c] sm:$0xf]
    %v4560 = vld [vmem:[%s23 + $0x250] sm:$0xf]
    %v4561 = vld [vmem:[%s23 + $0x254] sm:$0xf]
    %v4562 = vld [vmem:[%s23 + $0x258] sm:$0xf]
    %v4563 = vld [vmem:[%s23 + $0x25c] sm:$0xf]
    %v4564 = vld [vmem:[%s23 + $0x260] sm:$0xf]
    %v4565 = vld [vmem:[%s23 + $0x264] sm:$0xf]
    %v4566 = vld [vmem:[%s23 + $0x268] sm:$0xf]
    %v4567 = vld [vmem:[%s23 + $0x26c] sm:$0xf]
    %v4568 = vld [vmem:[%s23 + $0x270] sm:$0xf]
    %v4569 = vld [vmem:[%s23 + $0x274] sm:$0xf]
    %v4570 = vld [vmem:[%s23 + $0x278] sm:$0xf]
    %v4571 = vld [vmem:[%s23 + $0x27c] sm:$0xf]
    %v4572 = vld [vmem:[%s23 + $0x280] sm:$0xf]
    %v4573 = vld [vmem:[%s23 + $0x284] sm:$0xf]
    %v4574 = vld [vmem:[%s23 + $0x288] sm:$0xf]
    %v4575 = vld [vmem:[%s23 + $0x28c] sm:$0xf]
    %v4576 = vld [vmem:[%s23 + $0x290] sm:$0xf]
    %v4577 = vld [vmem:[%s23 + $0x294] sm:$0xf]
    %v4578 = vld [vmem:[%s23 + $0x298] sm:$0xf]
    %v4579 = vld [vmem:[%s23 + $0x29c] sm:$0xf]
    %v4580 = vld [vmem:[%s23 + $0x2a0] sm:$0xf]
    %v4581 = vld [vmem:[%s23 + $0x2a4] sm:$0xf]
    %v4582 = vld [vmem:[%s23 + $0x2a8] sm:$0xf]
    %v4583 = vld [vmem:[%s23 + $0x2ac] sm:$0xf]
    %v4584 = vld [vmem:[%s23 + $0x2b0] sm:$0xf]
    %v4585 = vld [vmem:[%s23 + $0x2b4] sm:$0xf]
    %v4586 = vld [vmem:[%s23 + $0x2b8] sm:$0xf]
    %v4587 = vld [vmem:[%s23 + $0x2bc] sm:$0xf]
    %v4588 = vld [vmem:[%s23 + $0x2c0] sm:$0xf]
    %v4589 = vld [vmem:[%s23 + $0x2c4] sm:$0xf]
    %v4590 = vld [vmem:[%s23 + $0x2c8] sm:$0xf]
    %v4591 = vld [vmem:[%s23 + $0x2cc] sm:$0xf]
    %v4592 = vld [vmem:[%s23 + $0x2d0] sm:$0xf]
    %v4593 = vld [vmem:[%s23 + $0x2d4] sm:$0xf]
    %v4594 = vld [vmem:[%s23 + $0x2d8] sm:$0xf]
    %v4595 = vld [vmem:[%s23 + $0x2dc] sm:$0xf]
    %v4596 = vld [vmem:[%s23 + $0x2e0] sm:$0xf]
    %v4597 = vld [vmem:[%s23 + $0x2e4] sm:$0xf]
    %v4598 = vld [vmem:[%s23 + $0x2e8] sm:$0xf]
    %v4599 = vld [vmem:[%s23 + $0x2ec] sm:$0xf]
    %v4600 = vld [vmem:[%s23 + $0x2f0] sm:$0xf]
    %v4601 = vld [vmem:[%s23 + $0x2f4] sm:$0xf]
    %v4602 = vld [vmem:[%s23 + $0x2f8] sm:$0xf]
    %v4603 = vld [vmem:[%s23 + $0x2fc] sm:$0xf]
    %v4604 = vld [vmem:[%s23 + $0x300] sm:$0xf]
    %v4605 = vld [vmem:[%s23 + $0x304] sm:$0xf]
    %v4606 = vld [vmem:[%s23 + $0x308] sm:$0xf]
    %v4607 = vld [vmem:[%s23 + $0x30c] sm:$0xf]
    %v4608 = vld [vmem:[%s23 + $0x310] sm:$0xf]
    %v4609 = vld [vmem:[%s23 + $0x314] sm:$0xf]
    %v4610 = vld [vmem:[%s23 + $0x318] sm:$0xf]
    %v4611 = vld [vmem:[%s23 + $0x31c] sm:$0xf]
    %v4612 = vld [vmem:[%s23 + $0x320] sm:$0xf]
    %v4613 = vld [vmem:[%s23 + $0x324] sm:$0xf]
    %v4614 = vld [vmem:[%s23 + $0x328] sm:$0xf]
    %v4615 = vld [vmem:[%s23 + $0x32c] sm:$0xf]
    %v4616 = vld [vmem:[%s23 + $0x330] sm:$0xf]
    %v4617 = vld [vmem:[%s23 + $0x334] sm:$0xf]
    %v4618 = vld [vmem:[%s23 + $0x338] sm:$0xf]
    %v4619 = vld [vmem:[%s23 + $0x33c] sm:$0xf]
    %v4620 = vld [vmem:[%s23 + $0x340] sm:$0xf]
    %v4621 = vld [vmem:[%s23 + $0x344] sm:$0xf]
    %v4622 = vld [vmem:[%s23 + $0x348] sm:$0xf]
    %v4623 = vld [vmem:[%s23 + $0x34c] sm:$0xf]
    %v4624 = vld [vmem:[%s23 + $0x350] sm:$0xf]
    %v4625 = vld [vmem:[%s23 + $0x354] sm:$0xf]
    %v4626 = vld [vmem:[%s23 + $0x358] sm:$0xf]
    %v4627 = vld [vmem:[%s23 + $0x35c] sm:$0xf]
    %v4628 = vld [vmem:[%s23 + $0x360] sm:$0xf]
    %v4629 = vld [vmem:[%s23 + $0x364] sm:$0xf]
    %v4630 = vld [vmem:[%s23 + $0x368] sm:$0xf]
    %v4631 = vld [vmem:[%s23 + $0x36c] sm:$0xf]
    %v4632 = vld [vmem:[%s23 + $0x370] sm:$0xf]
    %v4633 = vld [vmem:[%s23 + $0x374] sm:$0xf]
    %v4634 = vld [vmem:[%s23 + $0x378] sm:$0xf]
    %v4635 = vld [vmem:[%s23 + $0x37c] sm:$0xf]
    %v4636 = vld [vmem:[%s23 + $0x380] sm:$0xf]
    %v4637 = vld [vmem:[%s23 + $0x384] sm:$0xf]
    %v4638 = vld [vmem:[%s23 + $0x388] sm:$0xf]
    %v4639 = vld [vmem:[%s23 + $0x38c] sm:$0xf]
    %v4640 = vld [vmem:[%s23 + $0x390] sm:$0xf]
    %v4641 = vld [vmem:[%s23 + $0x394] sm:$0xf]
    %v4642 = vld [vmem:[%s23 + $0x398] sm:$0xf]
    %v4643 = vld [vmem:[%s23 + $0x39c] sm:$0xf]
    %v4644 = vld [vmem:[%s23 + $0x3a0] sm:$0xf]
    %v4645 = vld [vmem:[%s23 + $0x3a4] sm:$0xf]
    %v4646 = vld [vmem:[%s23 + $0x3a8] sm:$0xf]
    %v4647 = vld [vmem:[%s23 + $0x3ac] sm:$0xf]
    %v4648 = vld [vmem:[%s23 + $0x3b0] sm:$0xf]
    %v4649 = vld [vmem:[%s23 + $0x3b4] sm:$0xf]
    %v4650 = vld [vmem:[%s23 + $0x3b8] sm:$0xf]
    %v4651 = vld [vmem:[%s23 + $0x3bc] sm:$0xf]
    %v4652 = vld [vmem:[%s23 + $0x3c0] sm:$0xf]
    %v4653 = vld [vmem:[%s23 + $0x3c4] sm:$0xf]
    %v4654 = vld [vmem:[%s23 + $0x3c8] sm:$0xf]
    %v4655 = vld [vmem:[%s23 + $0x3cc] sm:$0xf]
    %v4656 = vld [vmem:[%s23 + $0x3d0] sm:$0xf]
    %v4657 = vld [vmem:[%s23 + $0x3d4] sm:$0xf]
    %v4658 = vld [vmem:[%s23 + $0x3d8] sm:$0xf]
    %v4659 = vld [vmem:[%s23 + $0x3dc] sm:$0xf]
    %v4660 = vld [vmem:[%s23 + $0x3e0] sm:$0xf]
    %v4661 = vld [vmem:[%s23 + $0x3e4] sm:$0xf]
    %v4662 = vld [vmem:[%s23 + $0x3e8] sm:$0xf]
    %v4663 = vld [vmem:[%s23 + $0x3ec] sm:$0xf]
    %v4664 = vld [vmem:[%s23 + $0x3f0] sm:$0xf]
    %v4665 = vld [vmem:[%s23 + $0x3f4] sm:$0xf]
    %v4666 = vld [vmem:[%s23 + $0x3f8] sm:$0xf]
    %v4667 = vld [vmem:[%s23 + $0x3fc] sm:$0xf]
    %v4668 = vld [vmem:[%s23 + $0x400] sm:$0xf]
    %v4669 = vld [vmem:[%s23 + $0x404] sm:$0xf]
    %v4670 = vld [vmem:[%s23 + $0x408] sm:$0xf]
    %v4671 = vld [vmem:[%s23 + $0x40c] sm:$0xf]
    %v4672 = vld [vmem:[%s23 + $0x410] sm:$0xf]
    %v4673 = vld [vmem:[%s23 + $0x414] sm:$0xf]
    %v4674 = vld [vmem:[%s23 + $0x418] sm:$0xf]
    %v4675 = vld [vmem:[%s23 + $0x41c] sm:$0xf]
    %v4676 = vld [vmem:[%s23 + $0x420] sm:$0xf]
    %v4677 = vld [vmem:[%s23 + $0x424] sm:$0xf]
    %v4678 = vld [vmem:[%s23 + $0x428] sm:$0xf]
    %v4679 = vld [vmem:[%s23 + $0x42c] sm:$0xf]
    %v4680 = vld [vmem:[%s23 + $0x430] sm:$0xf]
    %v4681 = vld [vmem:[%s23 + $0x434] sm:$0xf]
    %v4682 = vld [vmem:[%s23 + $0x438] sm:$0xf]
    %v4683 = vld [vmem:[%s23 + $0x43c] sm:$0xf]
    %v4684 = vld [vmem:[%s23 + $0x440] sm:$0xf]
    %v4685 = vld [vmem:[%s23 + $0x444] sm:$0xf]
    %v4686 = vld [vmem:[%s23 + $0x448] sm:$0xf]
    %v4687 = vld [vmem:[%s23 + $0x44c] sm:$0xf]
    %v4688 = vld [vmem:[%s23 + $0x450] sm:$0xf]
    %v4689 = vld [vmem:[%s23 + $0x454] sm:$0xf]
    %v4690 = vld [vmem:[%s23 + $0x458] sm:$0xf]
    %v4691 = vld [vmem:[%s23 + $0x45c] sm:$0xf]
    %v4692 = vld [vmem:[%s23 + $0x460] sm:$0xf]
    %v4693 = vld [vmem:[%s23 + $0x464] sm:$0xf]
    %v4694 = vld [vmem:[%s23 + $0x468] sm:$0xf]
    %v4695 = vld [vmem:[%s23 + $0x46c] sm:$0xf]
    %v4696 = vld [vmem:[%s23 + $0x470] sm:$0xf]
    %v4697 = vld [vmem:[%s23 + $0x474] sm:$0xf]
    %v4698 = vld [vmem:[%s23 + $0x478] sm:$0xf]
    %v4699 = vld [vmem:[%s23 + $0x47c] sm:$0xf]
    %v4700 = vld [vmem:[%s23 + $0x480] sm:$0xf]
    %v4701 = vld [vmem:[%s23 + $0x484] sm:$0xf]
    %v4702 = vld [vmem:[%s23 + $0x488] sm:$0xf]
    %v4703 = vld [vmem:[%s23 + $0x48c] sm:$0xf]
    %v4704 = vld [vmem:[%s23 + $0x490] sm:$0xf]
    %v4705 = vld [vmem:[%s23 + $0x494] sm:$0xf]
    %v4706 = vld [vmem:[%s23 + $0x498] sm:$0xf]
    %v4707 = vld [vmem:[%s23 + $0x49c] sm:$0xf]
    %v4708 = vld [vmem:[%s23 + $0x4a0] sm:$0xf]
    %v4709 = vld [vmem:[%s23 + $0x4a4] sm:$0xf]
    %v4710 = vld [vmem:[%s23 + $0x4a8] sm:$0xf]
    %v4711 = vld [vmem:[%s23 + $0x4ac] sm:$0xf]
    %v4712 = vld [vmem:[%s23 + $0x4b0] sm:$0xf]
    %v4713 = vld [vmem:[%s23 + $0x4b4] sm:$0xf]
    %v4714 = vld [vmem:[%s23 + $0x4b8] sm:$0xf]
    %v4715 = vld [vmem:[%s23 + $0x4bc] sm:$0xf]
    %v4716 = vld [vmem:[%s23 + $0x4c0] sm:$0xf]
    %v4717 = vld [vmem:[%s23 + $0x4c4] sm:$0xf]
    %v4718 = vld [vmem:[%s23 + $0x4c8] sm:$0xf]
    %v4719 = vld [vmem:[%s23 + $0x4cc] sm:$0xf]
    %v4720 = vld [vmem:[%s23 + $0x4d0] sm:$0xf]
    %v4721 = vld [vmem:[%s23 + $0x4d4] sm:$0xf]
    %v4722 = vld [vmem:[%s23 + $0x4d8] sm:$0xf]
    %v4723 = vld [vmem:[%s23 + $0x4dc] sm:$0xf]
    %v4724 = vld [vmem:[%s23 + $0x4e0] sm:$0xf]
    %v4725 = vld [vmem:[%s23 + $0x4e4] sm:$0xf]
    %v4726 = vld [vmem:[%s23 + $0x4e8] sm:$0xf]
    %v4727 = vld [vmem:[%s23 + $0x4ec] sm:$0xf]
    %v4728 = vld [vmem:[%s23 + $0x4f0] sm:$0xf]
    %v4729 = vld [vmem:[%s23 + $0x4f4] sm:$0xf]
    %v4730 = vld [vmem:[%s23 + $0x4f8] sm:$0xf]
    %v4731 = vld [vmem:[%s23 + $0x4fc] sm:$0xf]
    %v4732 = vld [vmem:[%s23 + $0x500] sm:$0xf]
    %v4733 = vld [vmem:[%s23 + $0x504] sm:$0xf]
    %v4734 = vld [vmem:[%s23 + $0x508] sm:$0xf]
    %v4735 = vld [vmem:[%s23 + $0x50c] sm:$0xf]
    %v4736 = vld [vmem:[%s23 + $0x510] sm:$0xf]
    %v4737 = vld [vmem:[%s23 + $0x514] sm:$0xf]
    %v4738 = vld [vmem:[%s23 + $0x518] sm:$0xf]
    %v4739 = vld [vmem:[%s23 + $0x51c] sm:$0xf]
    %v4740 = vld [vmem:[%s23 + $0x520] sm:$0xf]
    %v4741 = vld [vmem:[%s23 + $0x524] sm:$0xf]
    %v4742 = vld [vmem:[%s23 + $0x528] sm:$0xf]
    %v4743 = vld [vmem:[%s23 + $0x52c] sm:$0xf]
    %v4744 = vld [vmem:[%s23 + $0x530] sm:$0xf]
    %v4745 = vld [vmem:[%s23 + $0x534] sm:$0xf]
    %v4746 = vld [vmem:[%s23 + $0x538] sm:$0xf]
    %v4747 = vld [vmem:[%s23 + $0x53c] sm:$0xf]
    %v4748 = vld [vmem:[%s23 + $0x540] sm:$0xf]
    %v4749 = vld [vmem:[%s23 + $0x544] sm:$0xf]
    %v4750 = vld [vmem:[%s23 + $0x548] sm:$0xf]
    %v4751 = vld [vmem:[%s23 + $0x54c] sm:$0xf]
    %v4752 = vld [vmem:[%s23 + $0x550] sm:$0xf]
    %v4753 = vld [vmem:[%s23 + $0x554] sm:$0xf]
    %v4754 = vld [vmem:[%s23 + $0x558] sm:$0xf]
    %v4755 = vld [vmem:[%s23 + $0x55c] sm:$0xf]
    %v4756 = vld [vmem:[%s23 + $0x560] sm:$0xf]
    %v4757 = vld [vmem:[%s23 + $0x564] sm:$0xf]
    %v4758 = vld [vmem:[%s23 + $0x568] sm:$0xf]
    %v4759 = vld [vmem:[%s23 + $0x56c] sm:$0xf]
    %v4760 = vld [vmem:[%s23 + $0x570] sm:$0xf]
    %v4761 = vld [vmem:[%s23 + $0x574] sm:$0xf]
    %v4762 = vld [vmem:[%s23 + $0x578] sm:$0xf]
    %v4763 = vld [vmem:[%s23 + $0x57c] sm:$0xf]
    %v4764 = vld [vmem:[%s23 + $0x580] sm:$0xf]
    %v4765 = vld [vmem:[%s23 + $0x584] sm:$0xf]
    %v4766 = vld [vmem:[%s23 + $0x588] sm:$0xf]
    %v4767 = vld [vmem:[%s23 + $0x58c] sm:$0xf]
    %v4768 = vld [vmem:[%s23 + $0x590] sm:$0xf]
    %v4769 = vld [vmem:[%s23 + $0x594] sm:$0xf]
    %v4770 = vld [vmem:[%s23 + $0x598] sm:$0xf]
    %v4771 = vld [vmem:[%s23 + $0x59c] sm:$0xf]
    %v4772 = vld [vmem:[%s23 + $0x5a0] sm:$0xf]
    %v4773 = vld [vmem:[%s23 + $0x5a4] sm:$0xf]
    %v4774 = vld [vmem:[%s23 + $0x5a8] sm:$0xf]
    %v4775 = vld [vmem:[%s23 + $0x5ac] sm:$0xf]
    %v4776 = vld [vmem:[%s23 + $0x5b0] sm:$0xf]
    %v4777 = vld [vmem:[%s23 + $0x5b4] sm:$0xf]
    %v4778 = vld [vmem:[%s23 + $0x5b8] sm:$0xf]
    %v4779 = vld [vmem:[%s23 + $0x5bc] sm:$0xf]
    %v4780 = vld [vmem:[%s23 + $0x5c0] sm:$0xf]
    %v4781 = vld [vmem:[%s23 + $0x5c4] sm:$0xf]
    %v4782 = vld [vmem:[%s23 + $0x5c8] sm:$0xf]
    %v4783 = vld [vmem:[%s23 + $0x5cc] sm:$0xf]
    %v4784 = vld [vmem:[%s23 + $0x5d0] sm:$0xf]
    %v4785 = vld [vmem:[%s23 + $0x5d4] sm:$0xf]
    %v4786 = vld [vmem:[%s23 + $0x5d8] sm:$0xf]
    %v4787 = vld [vmem:[%s23 + $0x5dc] sm:$0xf]
    %v4788 = vld [vmem:[%s23 + $0x5e0] sm:$0xf]
    %v4789 = vld [vmem:[%s23 + $0x5e4] sm:$0xf]
    %v4790 = vld [vmem:[%s23 + $0x5e8] sm:$0xf]
    %v4791 = vld [vmem:[%s23 + $0x5ec] sm:$0xf]
    %v4792 = vld [vmem:[%s23 + $0x5f0] sm:$0xf]
    %v4793 = vld [vmem:[%s23 + $0x5f4] sm:$0xf]
    %v4794 = vld [vmem:[%s23 + $0x5f8] sm:$0xf]
    %v4795 = vld [vmem:[%s23 + $0x5fc] sm:$0xf]
    %v4796 = vld [vmem:[%s23 + $0x600] sm:$0xf]
    %v4797 = vld [vmem:[%s23 + $0x604] sm:$0xf]
    %v4798 = vld [vmem:[%s23 + $0x608] sm:$0xf]
    %v4799 = vld [vmem:[%s23 + $0x60c] sm:$0xf]
    %v4800 = vld [vmem:[%s23 + $0x610] sm:$0xf]
    %v4801 = vld [vmem:[%s23 + $0x614] sm:$0xf]
    %v4802 = vld [vmem:[%s23 + $0x618] sm:$0xf]
    %v4803 = vld [vmem:[%s23 + $0x61c] sm:$0xf]
    %v4804 = vld [vmem:[%s23 + $0x620] sm:$0xf]
    %v4805 = vld [vmem:[%s23 + $0x624] sm:$0xf]
    %v4806 = vld [vmem:[%s23 + $0x628] sm:$0xf]
    %v4807 = vld [vmem:[%s23 + $0x62c] sm:$0xf]
    %v4808 = vld [vmem:[%s23 + $0x630] sm:$0xf]
    %v4809 = vld [vmem:[%s23 + $0x634] sm:$0xf]
    %v4810 = vld [vmem:[%s23 + $0x638] sm:$0xf]
    %v4811 = vld [vmem:[%s23 + $0x63c] sm:$0xf]
    %v4812 = vld [vmem:[%s23 + $0x640] sm:$0xf]
    %v4813 = vld [vmem:[%s23 + $0x644] sm:$0xf]
    %v4814 = vld [vmem:[%s23 + $0x648] sm:$0xf]
    %v4815 = vld [vmem:[%s23 + $0x64c] sm:$0xf]
    %v4816 = vld [vmem:[%s23 + $0x650] sm:$0xf]
    %v4817 = vld [vmem:[%s23 + $0x654] sm:$0xf]
    %v4818 = vld [vmem:[%s23 + $0x658] sm:$0xf]
    %v4819 = vld [vmem:[%s23 + $0x65c] sm:$0xf]
    %v4820 = vld [vmem:[%s23 + $0x660] sm:$0xf]
    %v4821 = vld [vmem:[%s23 + $0x664] sm:$0xf]
    %v4822 = vld [vmem:[%s23 + $0x668] sm:$0xf]
    %v4823 = vld [vmem:[%s23 + $0x66c] sm:$0xf]
    %v4824 = vld [vmem:[%s23 + $0x670] sm:$0xf]
    %v4825 = vld [vmem:[%s23 + $0x674] sm:$0xf]
    %v4826 = vld [vmem:[%s23 + $0x678] sm:$0xf]
    %v4827 = vld [vmem:[%s23 + $0x67c] sm:$0xf]
    %v4828 = vld [vmem:[%s23 + $0x680] sm:$0xf]
    %v4829 = vld [vmem:[%s23 + $0x684] sm:$0xf]
    %v4830 = vld [vmem:[%s23 + $0x688] sm:$0xf]
    %v4831 = vld [vmem:[%s23 + $0x68c] sm:$0xf]
    %v4832 = vld [vmem:[%s23 + $0x690] sm:$0xf]
    %v4833 = vld [vmem:[%s23 + $0x694] sm:$0xf]
    %v4834 = vld [vmem:[%s23 + $0x698] sm:$0xf]
    %v4835 = vld [vmem:[%s23 + $0x69c] sm:$0xf]
    %v4836 = vld [vmem:[%s23 + $0x6a0] sm:$0xf]
    %v4837 = vld [vmem:[%s23 + $0x6a4] sm:$0xf]
    %v4838 = vld [vmem:[%s23 + $0x6a8] sm:$0xf]
    %v4839 = vld [vmem:[%s23 + $0x6ac] sm:$0xf]
    %v4840 = vld [vmem:[%s23 + $0x6b0] sm:$0xf]
    %v4841 = vld [vmem:[%s23 + $0x6b4] sm:$0xf]
    %v4842 = vld [vmem:[%s23 + $0x6b8] sm:$0xf]
    %v4843 = vld [vmem:[%s23 + $0x6bc] sm:$0xf]
    %v5276 = vunpack.c.l.b16 %v4412
    %v5277 = vunpack.c.l.b16 %v4413
    %v5278 = vunpack.c.l.b16 %v4414
    %v5279 = vunpack.c.l.b16 %v4415
    %v5280 = vunpack.c.l.b16 %v4416
    %v5281 = vunpack.c.l.b16 %v4417
    %v5282 = vunpack.c.l.b16 %v4418
    %v5283 = vunpack.c.l.b16 %v4419
    %v5284 = vunpack.c.l.b16 %v4420
    %v5285 = vunpack.c.l.b16 %v4421
    %v5286 = vunpack.c.l.b16 %v4422
    %v5287 = vunpack.c.l.b16 %v4423
    %v5288 = vunpack.c.l.b16 %v4424
    %v5289 = vunpack.c.l.b16 %v4425
    %v5290 = vunpack.c.l.b16 %v4426
    %v5291 = vunpack.c.l.b16 %v4427
    %v5292 = vunpack.c.l.b16 %v4428
    %v5293 = vunpack.c.l.b16 %v4429
    %v5294 = vunpack.c.l.b16 %v4430
    %v5295 = vunpack.c.l.b16 %v4431
    %v5296 = vunpack.c.l.b16 %v4432
    %v5297 = vunpack.c.l.b16 %v4433
    %v5298 = vunpack.c.l.b16 %v4434
    %v5299 = vunpack.c.l.b16 %v4435
    %v5300 = vunpack.c.l.b16 %v4436
    %v5301 = vunpack.c.l.b16 %v4437
    %v5302 = vunpack.c.l.b16 %v4438
    %v5303 = vunpack.c.l.b16 %v4439
    %v5304 = vunpack.c.l.b16 %v4440
    %v5305 = vunpack.c.l.b16 %v4441
    %v5306 = vunpack.c.l.b16 %v4442
    %v5307 = vunpack.c.l.b16 %v4443
    %v5308 = vunpack.c.l.b16 %v4444
    %v5309 = vunpack.c.l.b16 %v4445
    %v5310 = vunpack.c.l.b16 %v4446
    %v5311 = vunpack.c.l.b16 %v4447
    %v5312 = vunpack.c.l.b16 %v4448
    %v5313 = vunpack.c.l.b16 %v4449
    %v5314 = vunpack.c.l.b16 %v4450
    %v5315 = vunpack.c.l.b16 %v4451
    %v5316 = vunpack.c.l.b16 %v4452
    %v5317 = vunpack.c.l.b16 %v4453
    %v5318 = vunpack.c.l.b16 %v4454
    %v5319 = vunpack.c.l.b16 %v4455
    %v5320 = vunpack.c.l.b16 %v4456
    %v5321 = vunpack.c.l.b16 %v4457
    %v5322 = vunpack.c.l.b16 %v4458
    %v5323 = vunpack.c.l.b16 %v4459
    %v5324 = vunpack.c.l.b16 %v4460
    %v5325 = vunpack.c.l.b16 %v4461
    %v5326 = vunpack.c.l.b16 %v4462
    %v5327 = vunpack.c.l.b16 %v4463
    %v5328 = vunpack.c.l.b16 %v4464
    %v5329 = vunpack.c.l.b16 %v4465
    %v5330 = vunpack.c.l.b16 %v4466
    %v5331 = vunpack.c.l.b16 %v4467
    %v5332 = vunpack.c.l.b16 %v4468
    %v5333 = vunpack.c.l.b16 %v4469
    %v5334 = vunpack.c.l.b16 %v4470
    %v5335 = vunpack.c.l.b16 %v4471
    %v5336 = vunpack.c.l.b16 %v4472
    %v5337 = vunpack.c.l.b16 %v4473
    %v5338 = vunpack.c.l.b16 %v4474
    %v5339 = vunpack.c.l.b16 %v4475
    %v5340 = vunpack.c.l.b16 %v4476
    %v5341 = vunpack.c.l.b16 %v4477
    %v5342 = vunpack.c.l.b16 %v4478
    %v5343 = vunpack.c.l.b16 %v4479
    %v5344 = vunpack.c.l.b16 %v4480
    %v5345 = vunpack.c.l.b16 %v4481
    %v5346 = vunpack.c.l.b16 %v4482
    %v5347 = vunpack.c.l.b16 %v4483
    %v5348 = vunpack.c.l.b16 %v4484
    %v5349 = vunpack.c.l.b16 %v4485
    %v5350 = vunpack.c.l.b16 %v4486
    %v5351 = vunpack.c.l.b16 %v4487
    %v5352 = vunpack.c.l.b16 %v4488
    %v5353 = vunpack.c.l.b16 %v4489
    %v5354 = vunpack.c.l.b16 %v4490
    %v5355 = vunpack.c.l.b16 %v4491
    %v5356 = vunpack.c.l.b16 %v4492
    %v5357 = vunpack.c.l.b16 %v4493
    %v5358 = vunpack.c.l.b16 %v4494
    %v5359 = vunpack.c.l.b16 %v4495
    %v5360 = vunpack.c.l.b16 %v4496
    %v5361 = vunpack.c.l.b16 %v4497
    %v5362 = vunpack.c.l.b16 %v4498
    %v5363 = vunpack.c.l.b16 %v4499
    %v5364 = vunpack.c.l.b16 %v4500
    %v5365 = vunpack.c.l.b16 %v4501
    %v5366 = vunpack.c.l.b16 %v4502
    %v5367 = vunpack.c.l.b16 %v4503
    %v5368 = vunpack.c.l.b16 %v4504
    %v5369 = vunpack.c.l.b16 %v4505
    %v5370 = vunpack.c.l.b16 %v4506
    %v5371 = vunpack.c.l.b16 %v4507
    %v5372 = vunpack.c.l.b16 %v4508
    %v5373 = vunpack.c.l.b16 %v4509
    %v5374 = vunpack.c.l.b16 %v4510
    %v5375 = vunpack.c.l.b16 %v4511
    %v5376 = vunpack.c.l.b16 %v4512
    %v5377 = vunpack.c.l.b16 %v4513
    %v5378 = vunpack.c.l.b16 %v4514
    %v5379 = vunpack.c.l.b16 %v4515
    %v5380 = vunpack.c.l.b16 %v4516
    %v5381 = vunpack.c.l.b16 %v4517
    %v5382 = vunpack.c.l.b16 %v4518
    %v5383 = vunpack.c.l.b16 %v4519
    %v5384 = vunpack.c.l.b16 %v4520
    %v5385 = vunpack.c.l.b16 %v4521
    %v5386 = vunpack.c.l.b16 %v4522
    %v5387 = vunpack.c.l.b16 %v4523
    %v5388 = vunpack.c.l.b16 %v4524
    %v5389 = vunpack.c.l.b16 %v4525
    %v5390 = vunpack.c.l.b16 %v4526
    %v5391 = vunpack.c.l.b16 %v4527
    %v5392 = vunpack.c.l.b16 %v4528
    %v5393 = vunpack.c.l.b16 %v4529
    %v5394 = vunpack.c.l.b16 %v4530
    %v5395 = vunpack.c.l.b16 %v4531
    %v5396 = vunpack.c.l.b16 %v4532
    %v5397 = vunpack.c.l.b16 %v4533
    %v5398 = vunpack.c.l.b16 %v4534
    %v5399 = vunpack.c.l.b16 %v4535
    %v5400 = vunpack.c.l.b16 %v4536
    %v5401 = vunpack.c.l.b16 %v4537
    %v5402 = vunpack.c.l.b16 %v4538
    %v5403 = vunpack.c.l.b16 %v4539
    %v5404 = vunpack.c.l.b16 %v4540
    %v5405 = vunpack.c.l.b16 %v4541
    %v5406 = vunpack.c.l.b16 %v4542
    %v5407 = vunpack.c.l.b16 %v4543
    %v5408 = vunpack.c.l.b16 %v4544
    %v5409 = vunpack.c.l.b16 %v4545
    %v5410 = vunpack.c.l.b16 %v4546
    %v5411 = vunpack.c.l.b16 %v4547
    %v5412 = vunpack.c.l.b16 %v4548
    %v5413 = vunpack.c.l.b16 %v4549
    %v5414 = vunpack.c.l.b16 %v4550
    %v5415 = vunpack.c.l.b16 %v4551
    %v5416 = vunpack.c.l.b16 %v4552
    %v5417 = vunpack.c.l.b16 %v4553
    %v5418 = vunpack.c.l.b16 %v4554
    %v5419 = vunpack.c.l.b16 %v4555
    %v5420 = vunpack.c.l.b16 %v4556
    %v5421 = vunpack.c.l.b16 %v4557
    %v5422 = vunpack.c.l.b16 %v4558
    %v5423 = vunpack.c.l.b16 %v4559
    %v5424 = vunpack.c.l.b16 %v4560
    %v5425 = vunpack.c.l.b16 %v4561
    %v5426 = vunpack.c.l.b16 %v4562
    %v5427 = vunpack.c.l.b16 %v4563
    %v5428 = vunpack.c.l.b16 %v4564
    %v5429 = vunpack.c.l.b16 %v4565
    %v5430 = vunpack.c.l.b16 %v4566
    %v5431 = vunpack.c.l.b16 %v4567
    %v5432 = vunpack.c.l.b16 %v4568
    %v5433 = vunpack.c.l.b16 %v4569
    %v5434 = vunpack.c.l.b16 %v4570
    %v5435 = vunpack.c.l.b16 %v4571
    %v5436 = vunpack.c.l.b16 %v4572
    %v5437 = vunpack.c.l.b16 %v4573
    %v5438 = vunpack.c.l.b16 %v4574
    %v5439 = vunpack.c.l.b16 %v4575
    %v5440 = vunpack.c.l.b16 %v4576
    %v5441 = vunpack.c.l.b16 %v4577
    %v5442 = vunpack.c.l.b16 %v4578
    %v5443 = vunpack.c.l.b16 %v4579
    %v5444 = vunpack.c.l.b16 %v4580
    %v5445 = vunpack.c.l.b16 %v4581
    %v5446 = vunpack.c.l.b16 %v4582
    %v5447 = vunpack.c.l.b16 %v4583
    %v5448 = vunpack.c.l.b16 %v4584
    %v5449 = vunpack.c.l.b16 %v4585
    %v5450 = vunpack.c.l.b16 %v4586
    %v5451 = vunpack.c.l.b16 %v4587
    %v5452 = vunpack.c.l.b16 %v4588
    %v5453 = vunpack.c.l.b16 %v4589
    %v5454 = vunpack.c.l.b16 %v4590
    %v5455 = vunpack.c.l.b16 %v4591
    %v5456 = vunpack.c.l.b16 %v4592
    %v5457 = vunpack.c.l.b16 %v4593
    %v5458 = vunpack.c.l.b16 %v4594
    %v5459 = vunpack.c.l.b16 %v4595
    %v5460 = vunpack.c.l.b16 %v4596
    %v5461 = vunpack.c.l.b16 %v4597
    %v5462 = vunpack.c.l.b16 %v4598
    %v5463 = vunpack.c.l.b16 %v4599
    %v5464 = vunpack.c.l.b16 %v4600
    %v5465 = vunpack.c.l.b16 %v4601
    %v5466 = vunpack.c.l.b16 %v4602
    %v5467 = vunpack.c.l.b16 %v4603
    %v5468 = vunpack.c.l.b16 %v4604
    %v5469 = vunpack.c.l.b16 %v4605
    %v5470 = vunpack.c.l.b16 %v4606
    %v5471 = vunpack.c.l.b16 %v4607
    %v5472 = vunpack.c.l.b16 %v4608
    %v5473 = vunpack.c.l.b16 %v4609
    %v5474 = vunpack.c.l.b16 %v4610
    %v5475 = vunpack.c.l.b16 %v4611
    %v5476 = vunpack.c.l.b16 %v4612
    %v5477 = vunpack.c.l.b16 %v4613
    %v5478 = vunpack.c.l.b16 %v4614
    %v5479 = vunpack.c.l.b16 %v4615
    %v5480 = vunpack.c.l.b16 %v4616
    %v5481 = vunpack.c.l.b16 %v4617
    %v5482 = vunpack.c.l.b16 %v4618
    %v5483 = vunpack.c.l.b16 %v4619
    %v5484 = vunpack.c.l.b16 %v4620
    %v5485 = vunpack.c.l.b16 %v4621
    %v5486 = vunpack.c.l.b16 %v4622
    %v5487 = vunpack.c.l.b16 %v4623
    %v5488 = vunpack.c.l.b16 %v4624
    %v5489 = vunpack.c.l.b16 %v4625
    %v5490 = vunpack.c.l.b16 %v4626
    %v5491 = vunpack.c.l.b16 %v4627
    %v5492 = vunpack.c.l.b16 %v4628
    %v5493 = vunpack.c.l.b16 %v4629
    %v5494 = vunpack.c.l.b16 %v4630
    %v5495 = vunpack.c.l.b16 %v4631
    %v5496 = vunpack.c.l.b16 %v4632
    %v5497 = vunpack.c.l.b16 %v4633
    %v5498 = vunpack.c.l.b16 %v4634
    %v5499 = vunpack.c.l.b16 %v4635
    %v5500 = vunpack.c.l.b16 %v4636
    %v5501 = vunpack.c.l.b16 %v4637
    %v5502 = vunpack.c.l.b16 %v4638
    %v5503 = vunpack.c.l.b16 %v4639
    %v5504 = vunpack.c.l.b16 %v4640
    %v5505 = vunpack.c.l.b16 %v4641
    %v5506 = vunpack.c.l.b16 %v4642
    %v5507 = vunpack.c.l.b16 %v4643
    %v5508 = vunpack.c.l.b16 %v4644
    %v5509 = vunpack.c.l.b16 %v4645
    %v5510 = vunpack.c.l.b16 %v4646
    %v5511 = vunpack.c.l.b16 %v4647
    %v5512 = vunpack.c.l.b16 %v4648
    %v5513 = vunpack.c.l.b16 %v4649
    %v5514 = vunpack.c.l.b16 %v4650
    %v5515 = vunpack.c.l.b16 %v4651
    %v5516 = vunpack.c.l.b16 %v4652
    %v5517 = vunpack.c.l.b16 %v4653
    %v5518 = vunpack.c.l.b16 %v4654
    %v5519 = vunpack.c.l.b16 %v4655
    %v5520 = vunpack.c.l.b16 %v4656
    %v5521 = vunpack.c.l.b16 %v4657
    %v5522 = vunpack.c.l.b16 %v4658
    %v5523 = vunpack.c.l.b16 %v4659
    %v5524 = vunpack.c.l.b16 %v4660
    %v5525 = vunpack.c.l.b16 %v4661
    %v5526 = vunpack.c.l.b16 %v4662
    %v5527 = vunpack.c.l.b16 %v4663
    %v5528 = vunpack.c.l.b16 %v4664
    %v5529 = vunpack.c.l.b16 %v4665
    %v5530 = vunpack.c.l.b16 %v4666
    %v5531 = vunpack.c.l.b16 %v4667
    %v5532 = vunpack.c.l.b16 %v4668
    %v5533 = vunpack.c.l.b16 %v4669
    %v5534 = vunpack.c.l.b16 %v4670
    %v5535 = vunpack.c.l.b16 %v4671
    %v5536 = vunpack.c.l.b16 %v4672
    %v5537 = vunpack.c.l.b16 %v4673
    %v5538 = vunpack.c.l.b16 %v4674
    %v5539 = vunpack.c.l.b16 %v4675
    %v5540 = vunpack.c.l.b16 %v4676
    %v5541 = vunpack.c.l.b16 %v4677
    %v5542 = vunpack.c.l.b16 %v4678
    %v5543 = vunpack.c.l.b16 %v4679
    %v5544 = vunpack.c.l.b16 %v4680
    %v5545 = vunpack.c.l.b16 %v4681
    %v5546 = vunpack.c.l.b16 %v4682
    %v5547 = vunpack.c.l.b16 %v4683
    %v5548 = vunpack.c.l.b16 %v4684
    %v5549 = vunpack.c.l.b16 %v4685
    %v5550 = vunpack.c.l.b16 %v4686
    %v5551 = vunpack.c.l.b16 %v4687
    %v5552 = vunpack.c.l.b16 %v4688
    %v5553 = vunpack.c.l.b16 %v4689
    %v5554 = vunpack.c.l.b16 %v4690
    %v5555 = vunpack.c.l.b16 %v4691
    %v5556 = vunpack.c.l.b16 %v4692
    %v5557 = vunpack.c.l.b16 %v4693
    %v5558 = vunpack.c.l.b16 %v4694
    %v5559 = vunpack.c.l.b16 %v4695
    %v5560 = vunpack.c.l.b16 %v4696
    %v5561 = vunpack.c.l.b16 %v4697
    %v5562 = vunpack.c.l.b16 %v4698
    %v5563 = vunpack.c.l.b16 %v4699
    %v5564 = vunpack.c.l.b16 %v4700
    %v5565 = vunpack.c.l.b16 %v4701
    %v5566 = vunpack.c.l.b16 %v4702
    %v5567 = vunpack.c.l.b16 %v4703
    %v5568 = vunpack.c.l.b16 %v4704
    %v5569 = vunpack.c.l.b16 %v4705
    %v5570 = vunpack.c.l.b16 %v4706
    %v5571 = vunpack.c.l.b16 %v4707
    %v5572 = vunpack.c.l.b16 %v4708
    %v5573 = vunpack.c.l.b16 %v4709
    %v5574 = vunpack.c.l.b16 %v4710
    %v5575 = vunpack.c.l.b16 %v4711
    %v5576 = vunpack.c.l.b16 %v4712
    %v5577 = vunpack.c.l.b16 %v4713
    %v5578 = vunpack.c.l.b16 %v4714
    %v5579 = vunpack.c.l.b16 %v4715
    %v5580 = vunpack.c.l.b16 %v4716
    %v5581 = vunpack.c.l.b16 %v4717
    %v5582 = vunpack.c.l.b16 %v4718
    %v5583 = vunpack.c.l.b16 %v4719
    %v5584 = vunpack.c.l.b16 %v4720
    %v5585 = vunpack.c.l.b16 %v4721
    %v5586 = vunpack.c.l.b16 %v4722
    %v5587 = vunpack.c.l.b16 %v4723
    %v5588 = vunpack.c.l.b16 %v4724
    %v5589 = vunpack.c.l.b16 %v4725
    %v5590 = vunpack.c.l.b16 %v4726
    %v5591 = vunpack.c.l.b16 %v4727
    %v5592 = vunpack.c.l.b16 %v4728
    %v5593 = vunpack.c.l.b16 %v4729
    %v5594 = vunpack.c.l.b16 %v4730
    %v5595 = vunpack.c.l.b16 %v4731
    %v5596 = vunpack.c.l.b16 %v4732
    %v5597 = vunpack.c.l.b16 %v4733
    %v5598 = vunpack.c.l.b16 %v4734
    %v5599 = vunpack.c.l.b16 %v4735
    %v5600 = vunpack.c.l.b16 %v4736
    %v5601 = vunpack.c.l.b16 %v4737
    %v5602 = vunpack.c.l.b16 %v4738
    %v5603 = vunpack.c.l.b16 %v4739
    %v5604 = vunpack.c.l.b16 %v4740
    %v5605 = vunpack.c.l.b16 %v4741
    %v5606 = vunpack.c.l.b16 %v4742
    %v5607 = vunpack.c.l.b16 %v4743
    %v5608 = vunpack.c.l.b16 %v4744
    %v5609 = vunpack.c.l.b16 %v4745
    %v5610 = vunpack.c.l.b16 %v4746
    %v5611 = vunpack.c.l.b16 %v4747
    %v5612 = vunpack.c.l.b16 %v4748
    %v5613 = vunpack.c.l.b16 %v4749
    %v5614 = vunpack.c.l.b16 %v4750
    %v5615 = vunpack.c.l.b16 %v4751
    %v5616 = vunpack.c.l.b16 %v4752
    %v5617 = vunpack.c.l.b16 %v4753
    %v5618 = vunpack.c.l.b16 %v4754
    %v5619 = vunpack.c.l.b16 %v4755
    %v5620 = vunpack.c.l.b16 %v4756
    %v5621 = vunpack.c.l.b16 %v4757
    %v5622 = vunpack.c.l.b16 %v4758
    %v5623 = vunpack.c.l.b16 %v4759
    %v5624 = vunpack.c.l.b16 %v4760
    %v5625 = vunpack.c.l.b16 %v4761
    %v5626 = vunpack.c.l.b16 %v4762
    %v5627 = vunpack.c.l.b16 %v4763
    %v5628 = vunpack.c.l.b16 %v4764
    %v5629 = vunpack.c.l.b16 %v4765
    %v5630 = vunpack.c.l.b16 %v4766
    %v5631 = vunpack.c.l.b16 %v4767
    %v5632 = vunpack.c.l.b16 %v4768
    %v5633 = vunpack.c.l.b16 %v4769
    %v5634 = vunpack.c.l.b16 %v4770
    %v5635 = vunpack.c.l.b16 %v4771
    %v5636 = vunpack.c.l.b16 %v4772
    %v5637 = vunpack.c.l.b16 %v4773
    %v5638 = vunpack.c.l.b16 %v4774
    %v5639 = vunpack.c.l.b16 %v4775
    %v5640 = vunpack.c.l.b16 %v4776
    %v5641 = vunpack.c.l.b16 %v4777
    %v5642 = vunpack.c.l.b16 %v4778
    %v5643 = vunpack.c.l.b16 %v4779
    %v5644 = vunpack.c.l.b16 %v4780
    %v5645 = vunpack.c.l.b16 %v4781
    %v5646 = vunpack.c.l.b16 %v4782
    %v5647 = vunpack.c.l.b16 %v4783
    %v5648 = vunpack.c.l.b16 %v4784
    %v5649 = vunpack.c.l.b16 %v4785
    %v5650 = vunpack.c.l.b16 %v4786
    %v5651 = vunpack.c.l.b16 %v4787
    %v5652 = vunpack.c.l.b16 %v4788
    %v5653 = vunpack.c.l.b16 %v4789
    %v5654 = vunpack.c.l.b16 %v4790
    %v5655 = vunpack.c.l.b16 %v4791
    %v5656 = vunpack.c.l.b16 %v4792
    %v5657 = vunpack.c.l.b16 %v4793
    %v5658 = vunpack.c.l.b16 %v4794
    %v5659 = vunpack.c.l.b16 %v4795
    %v5660 = vunpack.c.l.b16 %v4796
    %v5661 = vunpack.c.l.b16 %v4797
    %v5662 = vunpack.c.l.b16 %v4798
    %v5663 = vunpack.c.l.b16 %v4799
    %v5664 = vunpack.c.l.b16 %v4800
    %v5665 = vunpack.c.l.b16 %v4801
    %v5666 = vunpack.c.l.b16 %v4802
    %v5667 = vunpack.c.l.b16 %v4803
    %v5668 = vunpack.c.l.b16 %v4804
    %v5669 = vunpack.c.l.b16 %v4805
    %v5670 = vunpack.c.l.b16 %v4806
    %v5671 = vunpack.c.l.b16 %v4807
    %v5672 = vunpack.c.l.b16 %v4808
    %v5673 = vunpack.c.l.b16 %v4809
    %v5674 = vunpack.c.l.b16 %v4810
    %v5675 = vunpack.c.l.b16 %v4811
    %v5676 = vunpack.c.l.b16 %v4812
    %v5677 = vunpack.c.l.b16 %v4813
    %v5678 = vunpack.c.l.b16 %v4814
    %v5679 = vunpack.c.l.b16 %v4815
    %v5680 = vunpack.c.l.b16 %v4816
    %v5681 = vunpack.c.l.b16 %v4817
    %v5682 = vunpack.c.l.b16 %v4818
    %v5683 = vunpack.c.l.b16 %v4819
    %v5684 = vunpack.c.l.b16 %v4820
    %v5685 = vunpack.c.l.b16 %v4821
    %v5686 = vunpack.c.l.b16 %v4822
    %v5687 = vunpack.c.l.b16 %v4823
    %v5688 = vunpack.c.l.b16 %v4824
    %v5689 = vunpack.c.l.b16 %v4825
    %v5690 = vunpack.c.l.b16 %v4826
    %v5691 = vunpack.c.l.b16 %v4827
    %v5692 = vunpack.c.l.b16 %v4828
    %v5693 = vunpack.c.l.b16 %v4829
    %v5694 = vunpack.c.l.b16 %v4830
    %v5695 = vunpack.c.l.b16 %v4831
    %v5696 = vunpack.c.l.b16 %v4832
    %v5697 = vunpack.c.l.b16 %v4833
    %v5698 = vunpack.c.l.b16 %v4834
    %v5699 = vunpack.c.l.b16 %v4835
    %v5700 = vunpack.c.l.b16 %v4836
    %v5701 = vunpack.c.l.b16 %v4837
    %v5702 = vunpack.c.l.b16 %v4838
    %v5703 = vunpack.c.l.b16 %v4839
    %v5704 = vunpack.c.l.b16 %v4840
    %v5705 = vunpack.c.l.b16 %v4841
    %v5706 = vunpack.c.l.b16 %v4842
    %v5707 = vunpack.c.l.b16 %v4843
    %v5708 = vpack.c.b16 %v5277, %v5276
    %v5709 = vpack.c.b16 %v5279, %v5278
    %v5710 = vpack.c.b16 %v5281, %v5280
    %v5711 = vpack.c.b16 %v5283, %v5282
    %v5712 = vpack.c.b16 %v5285, %v5284
    %v5713 = vpack.c.b16 %v5287, %v5286
    %v5714 = vpack.c.b16 %v5289, %v5288
    %v5715 = vpack.c.b16 %v5291, %v5290
    %v5716 = vpack.c.b16 %v5293, %v5292
    %v5717 = vpack.c.b16 %v5295, %v5294
    %v5718 = vpack.c.b16 %v5297, %v5296
    %v5719 = vpack.c.b16 %v5299, %v5298
    %v5720 = vpack.c.b16 %v5301, %v5300
    %v5721 = vpack.c.b16 %v5303, %v5302
    %v5722 = vpack.c.b16 %v5305, %v5304
    %v5723 = vpack.c.b16 %v5307, %v5306
    %v5724 = vpack.c.b16 %v5309, %v5308
    %v5725 = vpack.c.b16 %v5311, %v5310
    %v5726 = vpack.c.b16 %v5313, %v5312
    %v5727 = vpack.c.b16 %v5315, %v5314
    %v5728 = vpack.c.b16 %v5317, %v5316
    %v5729 = vpack.c.b16 %v5319, %v5318
    %v5730 = vpack.c.b16 %v5321, %v5320
    %v5731 = vpack.c.b16 %v5323, %v5322
    %v5732 = vpack.c.b16 %v5325, %v5324
    %v5733 = vpack.c.b16 %v5327, %v5326
    %v5734 = vpack.c.b16 %v5329, %v5328
    %v5735 = vpack.c.b16 %v5331, %v5330
    %v5736 = vpack.c.b16 %v5333, %v5332
    %v5737 = vpack.c.b16 %v5335, %v5334
    %v5738 = vpack.c.b16 %v5337, %v5336
    %v5739 = vpack.c.b16 %v5339, %v5338
    %v5740 = vpack.c.b16 %v5341, %v5340
    %v5741 = vpack.c.b16 %v5343, %v5342
    %v5742 = vpack.c.b16 %v5345, %v5344
    %v5743 = vpack.c.b16 %v5347, %v5346
    %v5744 = vpack.c.b16 %v5349, %v5348
    %v5745 = vpack.c.b16 %v5351, %v5350
    %v5746 = vpack.c.b16 %v5353, %v5352
    %v5747 = vpack.c.b16 %v5355, %v5354
    %v5748 = vpack.c.b16 %v5357, %v5356
    %v5749 = vpack.c.b16 %v5359, %v5358
    %v5750 = vpack.c.b16 %v5361, %v5360
    %v5751 = vpack.c.b16 %v5363, %v5362
    %v5752 = vpack.c.b16 %v5365, %v5364
    %v5753 = vpack.c.b16 %v5367, %v5366
    %v5754 = vpack.c.b16 %v5369, %v5368
    %v5755 = vpack.c.b16 %v5371, %v5370
    %v5756 = vpack.c.b16 %v5373, %v5372
    %v5757 = vpack.c.b16 %v5375, %v5374
    %v5758 = vpack.c.b16 %v5377, %v5376
    %v5759 = vpack.c.b16 %v5379, %v5378
    %v5760 = vpack.c.b16 %v5381, %v5380
    %v5761 = vpack.c.b16 %v5383, %v5382
    %v5762 = vpack.c.b16 %v5385, %v5384
    %v5763 = vpack.c.b16 %v5387, %v5386
    %v5764 = vpack.c.b16 %v5389, %v5388
    %v5765 = vpack.c.b16 %v5391, %v5390
    %v5766 = vpack.c.b16 %v5393, %v5392
    %v5767 = vpack.c.b16 %v5395, %v5394
    %v5768 = vpack.c.b16 %v5397, %v5396
    %v5769 = vpack.c.b16 %v5399, %v5398
    %v5770 = vpack.c.b16 %v5401, %v5400
    %v5771 = vpack.c.b16 %v5403, %v5402
    %v5772 = vpack.c.b16 %v5405, %v5404
    %v5773 = vpack.c.b16 %v5407, %v5406
    %v5774 = vpack.c.b16 %v5409, %v5408
    %v5775 = vpack.c.b16 %v5411, %v5410
    %v5776 = vpack.c.b16 %v5413, %v5412
    %v5777 = vpack.c.b16 %v5415, %v5414
    %v5778 = vpack.c.b16 %v5417, %v5416
    %v5779 = vpack.c.b16 %v5419, %v5418
    %v5780 = vpack.c.b16 %v5421, %v5420
    %v5781 = vpack.c.b16 %v5423, %v5422
    %v5782 = vpack.c.b16 %v5425, %v5424
    %v5783 = vpack.c.b16 %v5427, %v5426
    %v5784 = vpack.c.b16 %v5429, %v5428
    %v5785 = vpack.c.b16 %v5431, %v5430
    %v5786 = vpack.c.b16 %v5433, %v5432
    %v5787 = vpack.c.b16 %v5435, %v5434
    %v5788 = vpack.c.b16 %v5437, %v5436
    %v5789 = vpack.c.b16 %v5439, %v5438
    %v5790 = vpack.c.b16 %v5441, %v5440
    %v5791 = vpack.c.b16 %v5443, %v5442
    %v5792 = vpack.c.b16 %v5445, %v5444
    %v5793 = vpack.c.b16 %v5447, %v5446
    %v5794 = vpack.c.b16 %v5449, %v5448
    %v5795 = vpack.c.b16 %v5451, %v5450
    %v5796 = vpack.c.b16 %v5453, %v5452
    %v5797 = vpack.c.b16 %v5455, %v5454
    %v5798 = vpack.c.b16 %v5457, %v5456
    %v5799 = vpack.c.b16 %v5459, %v5458
    %v5800 = vpack.c.b16 %v5461, %v5460
    %v5801 = vpack.c.b16 %v5463, %v5462
    %v5802 = vpack.c.b16 %v5465, %v5464
    %v5803 = vpack.c.b16 %v5467, %v5466
    %v5804 = vpack.c.b16 %v5469, %v5468
    %v5805 = vpack.c.b16 %v5471, %v5470
    %v5806 = vpack.c.b16 %v5473, %v5472
    %v5807 = vpack.c.b16 %v5475, %v5474
    %v5808 = vpack.c.b16 %v5477, %v5476
    %v5809 = vpack.c.b16 %v5479, %v5478
    %v5810 = vpack.c.b16 %v5481, %v5480
    %v5811 = vpack.c.b16 %v5483, %v5482
    %v5812 = vpack.c.b16 %v5485, %v5484
    %v5813 = vpack.c.b16 %v5487, %v5486
    %v5814 = vpack.c.b16 %v5489, %v5488
    %v5815 = vpack.c.b16 %v5491, %v5490
    %v5816 = vpack.c.b16 %v5493, %v5492
    %v5817 = vpack.c.b16 %v5495, %v5494
    %v5818 = vpack.c.b16 %v5497, %v5496
    %v5819 = vpack.c.b16 %v5499, %v5498
    %v5820 = vpack.c.b16 %v5501, %v5500
    %v5821 = vpack.c.b16 %v5503, %v5502
    %v5822 = vpack.c.b16 %v5505, %v5504
    %v5823 = vpack.c.b16 %v5507, %v5506
    %v5824 = vpack.c.b16 %v5509, %v5508
    %v5825 = vpack.c.b16 %v5511, %v5510
    %v5826 = vpack.c.b16 %v5513, %v5512
    %v5827 = vpack.c.b16 %v5515, %v5514
    %v5828 = vpack.c.b16 %v5517, %v5516
    %v5829 = vpack.c.b16 %v5519, %v5518
    %v5830 = vpack.c.b16 %v5521, %v5520
    %v5831 = vpack.c.b16 %v5523, %v5522
    %v5832 = vpack.c.b16 %v5525, %v5524
    %v5833 = vpack.c.b16 %v5527, %v5526
    %v5834 = vpack.c.b16 %v5529, %v5528
    %v5835 = vpack.c.b16 %v5531, %v5530
    %v5836 = vpack.c.b16 %v5533, %v5532
    %v5837 = vpack.c.b16 %v5535, %v5534
    %v5838 = vpack.c.b16 %v5537, %v5536
    %v5839 = vpack.c.b16 %v5539, %v5538
    %v5840 = vpack.c.b16 %v5541, %v5540
    %v5841 = vpack.c.b16 %v5543, %v5542
    %v5842 = vpack.c.b16 %v5545, %v5544
    %v5843 = vpack.c.b16 %v5547, %v5546
    %v5844 = vpack.c.b16 %v5549, %v5548
    %v5845 = vpack.c.b16 %v5551, %v5550
    %v5846 = vpack.c.b16 %v5553, %v5552
    %v5847 = vpack.c.b16 %v5555, %v5554
    %v5848 = vpack.c.b16 %v5557, %v5556
    %v5849 = vpack.c.b16 %v5559, %v5558
    %v5850 = vpack.c.b16 %v5561, %v5560
    %v5851 = vpack.c.b16 %v5563, %v5562
    %v5852 = vpack.c.b16 %v5565, %v5564
    %v5853 = vpack.c.b16 %v5567, %v5566
    %v5854 = vpack.c.b16 %v5569, %v5568
    %v5855 = vpack.c.b16 %v5571, %v5570
    %v5856 = vpack.c.b16 %v5573, %v5572
    %v5857 = vpack.c.b16 %v5575, %v5574
    %v5858 = vpack.c.b16 %v5577, %v5576
    %v5859 = vpack.c.b16 %v5579, %v5578
    %v5860 = vpack.c.b16 %v5581, %v5580
    %v5861 = vpack.c.b16 %v5583, %v5582
    %v5862 = vpack.c.b16 %v5585, %v5584
    %v5863 = vpack.c.b16 %v5587, %v5586
    %v5864 = vpack.c.b16 %v5589, %v5588
    %v5865 = vpack.c.b16 %v5591, %v5590
    %v5866 = vpack.c.b16 %v5593, %v5592
    %v5867 = vpack.c.b16 %v5595, %v5594
    %v5868 = vpack.c.b16 %v5597, %v5596
    %v5869 = vpack.c.b16 %v5599, %v5598
    %v5870 = vpack.c.b16 %v5601, %v5600
    %v5871 = vpack.c.b16 %v5603, %v5602
    %v5872 = vpack.c.b16 %v5605, %v5604
    %v5873 = vpack.c.b16 %v5607, %v5606
    %v5874 = vpack.c.b16 %v5609, %v5608
    %v5875 = vpack.c.b16 %v5611, %v5610
    %v5876 = vpack.c.b16 %v5613, %v5612
    %v5877 = vpack.c.b16 %v5615, %v5614
    %v5878 = vpack.c.b16 %v5617, %v5616
    %v5879 = vpack.c.b16 %v5619, %v5618
    %v5880 = vpack.c.b16 %v5621, %v5620
    %v5881 = vpack.c.b16 %v5623, %v5622
    %v5882 = vpack.c.b16 %v5625, %v5624
    %v5883 = vpack.c.b16 %v5627, %v5626
    %v5884 = vpack.c.b16 %v5629, %v5628
    %v5885 = vpack.c.b16 %v5631, %v5630
    %v5886 = vpack.c.b16 %v5633, %v5632
    %v5887 = vpack.c.b16 %v5635, %v5634
    %v5888 = vpack.c.b16 %v5637, %v5636
    %v5889 = vpack.c.b16 %v5639, %v5638
    %v5890 = vpack.c.b16 %v5641, %v5640
    %v5891 = vpack.c.b16 %v5643, %v5642
    %v5892 = vpack.c.b16 %v5645, %v5644
    %v5893 = vpack.c.b16 %v5647, %v5646
    %v5894 = vpack.c.b16 %v5649, %v5648
    %v5895 = vpack.c.b16 %v5651, %v5650
    %v5896 = vpack.c.b16 %v5653, %v5652
    %v5897 = vpack.c.b16 %v5655, %v5654
    %v5898 = vpack.c.b16 %v5657, %v5656
    %v5899 = vpack.c.b16 %v5659, %v5658
    %v5900 = vpack.c.b16 %v5661, %v5660
    %v5901 = vpack.c.b16 %v5663, %v5662
    %v5902 = vpack.c.b16 %v5665, %v5664
    %v5903 = vpack.c.b16 %v5667, %v5666
    %v5904 = vpack.c.b16 %v5669, %v5668
    %v5905 = vpack.c.b16 %v5671, %v5670
    %v5906 = vpack.c.b16 %v5673, %v5672
    %v5907 = vpack.c.b16 %v5675, %v5674
    %v5908 = vpack.c.b16 %v5677, %v5676
    %v5909 = vpack.c.b16 %v5679, %v5678
    %v5910 = vpack.c.b16 %v5681, %v5680
    %v5911 = vpack.c.b16 %v5683, %v5682
    %v5912 = vpack.c.b16 %v5685, %v5684
    %v5913 = vpack.c.b16 %v5687, %v5686
    %v5914 = vpack.c.b16 %v5689, %v5688
    %v5915 = vpack.c.b16 %v5691, %v5690
    %v5916 = vpack.c.b16 %v5693, %v5692
    %v5917 = vpack.c.b16 %v5695, %v5694
    %v5918 = vpack.c.b16 %v5697, %v5696
    %v5919 = vpack.c.b16 %v5699, %v5698
    %v5920 = vpack.c.b16 %v5701, %v5700
    %v5921 = vpack.c.b16 %v5703, %v5702
    %v5922 = vpack.c.b16 %v5705, %v5704
    %v5923 = vpack.c.b16 %v5707, %v5706
    %6140 = vmatprep.subr.bf16.mxu0 0
    %6141 = vmatpush1.bf16.msra.mxu0 %v5708
    %6142 = vmatprep.subr.bf16.mxu0 0
    %6143 = vmatpush1.bf16.msra.mxu0 %v5709
    %6144 = vmatprep.subr.bf16.mxu0 0
    %6145 = vmatpush1.bf16.msra.mxu0 %v5710
    %6146 = vmatprep.subr.bf16.mxu0 0
    %6147 = vmatpush1.bf16.msra.mxu0 %v5711
    %6148 = vmatprep.subr.bf16.mxu0 0
    %6149 = vmatpush1.bf16.msra.mxu0 %v5712
    %6150 = vmatprep.subr.bf16.mxu0 0
    %6151 = vmatpush1.bf16.msra.mxu0 %v5713
    %6152 = vmatprep.subr.bf16.mxu0 0
    %6153 = vmatpush1.bf16.msra.mxu0 %v5714
    %6154 = vmatprep.subr.bf16.mxu0 0
    %6155 = vmatpush1.bf16.msra.mxu0 %v5715
    %6156 = vmatprep.subr.bf16.mxu0 0
    %6157 = vmatpush1.bf16.msra.mxu0 %v5716
    %6158 = vmatprep.subr.bf16.mxu0 0
    %6159 = vmatpush1.bf16.msra.mxu0 %v5717
    %6160 = vmatprep.subr.bf16.mxu0 0
    %6161 = vmatpush1.bf16.msra.mxu0 %v5718
    %6162 = vmatprep.subr.bf16.mxu0 0
    %6163 = vmatpush1.bf16.msra.mxu0 %v5719
    %6164 = vmatprep.subr.bf16.mxu0 0
    %6165 = vmatpush1.bf16.msra.mxu0 %v5720
    %6166 = vmatprep.subr.bf16.mxu0 0
    %6167 = vmatpush1.bf16.msra.mxu0 %v5721
    %6168 = vmatprep.subr.bf16.mxu0 0
    %6169 = vmatpush1.bf16.msra.mxu0 %v5722
    %6170 = vmatprep.subr.bf16.mxu0 0
    %6171 = vmatpush1.bf16.msra.mxu0 %v5723
    %6172 = vmatprep.mubr.bf16.mxu0 %v4305
    %6173 = vmatmul.mubr.bf16.gmra.mrb[0].mxu0 %v4304
    %v6174 = vpop.f32.mrb[0].mxu0
    %v6175 = vadd.f32 0.0, %v6174
    %v6176 = vpop.f32.mrb[0].mxu0
    %v6177 = vpop.f32.mrb[0].mxu0
    %v6178 = vadd.f32 0.0, %v6177
    %v6179 = vpop.f32.mrb[0].mxu0
    %6180 = vmatprep.mubr.bf16.mxu0 %v4332
    %6181 = vmatmul.mubr.bf16.gmra.mrb[0].mxu0 %v4331
    %v6182 = vpop.f32.mrb[0].mxu0
    %v6183 = vadd.f32 0.0, %v6182
    %v6184 = vpop.f32.mrb[0].mxu0
    %v6185 = vpop.f32.mrb[0].mxu0
    %v6186 = vadd.f32 0.0, %v6185
    %v6187 = vpop.f32.mrb[0].mxu0
    %6188 = vmatprep.mubr.bf16.mxu0 %v4359
    %6189 = vmatmul.mubr.bf16.gmra.mrb[0].mxu0 %v4358
    %v6190 = vpop.f32.mrb[0].mxu0
    %v6191 = vadd.f32 0.0, %v6190
    %v6192 = vpop.f32.mrb[0].mxu0
    %v6193 = vpop.f32.mrb[0].mxu0
    %v6194 = vadd.f32 0.0, %v6193
    %v6195 = vpop.f32.mrb[0].mxu0
    %6196 = vmatprep.mubr.bf16.mxu0 %v4386
    %6197 = vmatmul.mubr.bf16.gmra.mrb[0].mxu0 %v4385
    %v6198 = vpop.f32.mrb[0].mxu0
    %v6199 = vadd.f32 0.0, %v6198
    %v6200 = vpop.f32.mrb[0].mxu0
    %v6201 = vpop.f32.mrb[0].mxu0
    %v6202 = vadd.f32 0.0, %v6201
    %v6203 = vpop.f32.mrb[0].mxu0
    %6204 = vdwg.mxu0
    %6205 = vmatprep.subr.bf16.mxu0 0
    %6206 = vmatpush1.bf16.msra.mxu0 %v5724
    %6207 = vmatprep.subr.bf16.mxu0 0
    %6208 = vmatpush1.bf16.msra.mxu0 %v5725
    %6209 = vmatprep.subr.bf16.mxu0 0
    %6210 = vmatpush1.bf16.msra.mxu0 %v5726
    %6211 = vmatprep.subr.bf16.mxu0 0
    %6212 = vmatpush1.bf16.msra.mxu0 %v5727
    %6213 = vmatprep.subr.bf16.mxu0 0
    %6214 = vmatpush1.bf16.msra.mxu0 %v5728
    %6215 = vmatprep.subr.bf16.mxu0 0
    %6216 = vmatpush1.bf16.msra.mxu0 %v5729
    %6217 = vmatprep.subr.bf16.mxu0 0
    %6218 = vmatpush1.bf16.msra.mxu0 %v5730
    %6219 = vmatprep.subr.bf16.mxu0 0
    %6220 = vmatpush1.bf16.msra.mxu0 %v5731
    %6221 = vmatprep.subr.bf16.mxu0 0
    %6222 = vmatpush1.bf16.msra.mxu0 %v5732
    %6223 = vmatprep.subr.bf16.mxu0 0
    %6224 = vmatpush1.bf16.msra.mxu0 %v5733
    %6225 = vmatprep.subr.bf16.mxu0 0
    %6226 = vmatpush1.bf16.msra.mxu0 %v5734
    %6227 = vmatprep.subr.bf16.mxu0 0
    %6228 = vmatpush1.bf16.msra.mxu0 %v5735
    %6229 = vmatprep.subr.bf16.mxu0 0
    %6230 = vmatpush1.bf16.msra.mxu0 %v5736
    %6231 = vmatprep.subr.bf16.mxu0 0
    %6232 = vmatpush1.bf16.msra.mxu0 %v5737
    %6233 = vmatprep.subr.bf16.mxu0 0
    %6234 = vmatpush1.bf16.msra.mxu0 %v5738
    %6235 = vmatprep.subr.bf16.mxu0 0
    %6236 = vmatpush1.bf16.msra.mxu0 %v5739
    %6237 = vmatprep.mubr.bf16.mxu0 %v4307
    %6238 = vmatmul.mubr.bf16.gmra.mrb[0].mxu0 %v4306
    %v6239 = vpop.f32.mrb[0].mxu0
    %v6240 = vadd.f32 %v6175, %v6239
    %v6241 = vpop.f32.mrb[0].mxu0
    %v6242 = vpop.f32.mrb[0].mxu0
    %v6243 = vadd.f32 %v6178, %v6242
    %v6244 = vpop.f32.mrb[0].mxu0
    %6245 = vmatprep.mubr.bf16.mxu0 %v4334
    %6246 = vmatmul.mubr.bf16.gmra.mrb[0].mxu0 %v4333
    %v6247 = vpop.f32.mrb[0].mxu0
    %v6248 = vadd.f32 %v6183, %v6247
    %v6249 = vpop.f32.mrb[0].mxu0
    %v6250 = vpop.f32.mrb[0].mxu0
    %v6251 = vadd.f32 %v6186, %v6250
    %v6252 = vpop.f32.mrb[0].mxu0
    %6253 = vmatprep.mubr.bf16.mxu0 %v4361
    %6254 = vmatmul.mubr.bf16.gmra.mrb[0].mxu0 %v4360
    %v6255 = vpop.f32.mrb[0].mxu0
    %v6256 = vadd.f32 %v6191, %v6255
    %v6257 = vpop.f32.mrb[0].mxu0
    %v6258 = vpop.f32.mrb[0].mxu0
    %v6259 = vadd.f32 %v6194, %v6258
    %v6260 = vpop.f32.mrb[0].mxu0
    %6261 = vmatprep.mubr.bf16.mxu0 %v4388
    %6262 = vmatmul.mubr.bf16.gmra.mrb[0].mxu0 %v4387
    %v6263 = vpop.f32.mrb[0].mxu0
    %v6264 = vadd.f32 %v6199, %v6263
    %v6265 = vpop.f32.mrb[0].mxu0
    %v6266 = vpop.f32.mrb[0].mxu0
    %v6267 = vadd.f32 %v6202, %v6266
    %v6268 = vpop.f32.mrb[0].mxu0
    %6269 = vdwg.mxu0
    %6270 = vmatprep.subr.bf16.mxu0 0
    %6271 = vmatpush1.bf16.msra.mxu0 %v5740
    %6272 = vmatprep.subr.bf16.mxu0 0
    %6273 = vmatpush1.bf16.msra.mxu0 %v5741
    %6274 = vmatprep.subr.bf16.mxu0 0
    %6275 = vmatpush1.bf16.msra.mxu0 %v5742
    %6276 = vmatprep.subr.bf16.mxu0 0
    %6277 = vmatpush1.bf16.msra.mxu0 %v5743
    %6278 = vmatprep.subr.bf16.mxu0 0
    %6279 = vmatpush1.bf16.msra.mxu0 %v5744
    %6280 = vmatprep.subr.bf16.mxu0 0
    %6281 = vmatpush1.bf16.msra.mxu0 %v5745
    %6282 = vmatprep.subr.bf16.mxu0 0
    %6283 = vmatpush1.bf16.msra.mxu0 %v5746
    %6284 = vmatprep.subr.bf16.mxu0 0
    %6285 = vmatpush1.bf16.msra.mxu0 %v5747
    %6286 = vmatprep.subr.bf16.mxu0 0
    %6287 = vmatpush1.bf16.msra.mxu0 %v5748
    %6288 = vmatprep.subr.bf16.mxu0 0
    %6289 = vmatpush1.bf16.msra.mxu0 %v5749
    %6290 = vmatprep.subr.bf16.mxu0 0
    %6291 = vmatpush1.bf16.msra.mxu0 %v5750
    %6292 = vmatprep.subr.bf16.mxu0 0
    %6293 = vmatpush1.bf16.msra.mxu0 %v5751
    %6294 = vmatprep.subr.bf16.mxu0 0
    %6295 = vmatpush1.bf16.msra.mxu0 %v5752
    %6296 = vmatprep.subr.bf16.mxu0 0
    %6297 = vmatpush1.bf16.msra.mxu0 %v5753
    %6298 = vmatprep.subr.bf16.mxu0 0
    %6299 = vmatpush1.bf16.msra.mxu0 %v5754
    %6300 = vmatprep.subr.bf16.mxu0 0
    %6301 = vmatpush1.bf16.msra.mxu0 %v5755
    %6302 = vmatprep.mubr.bf16.mxu0 %v4309
    %6303 = vmatmul.mubr.bf16.gmra.mrb[0].mxu0 %v4308
    %v6304 = vpop.f32.mrb[0].mxu0
    %v6305 = vadd.f32 %v6240, %v6304
    %v6306 = vpop.f32.mrb[0].mxu0
    %v6307 = vpop.f32.mrb[0].mxu0
    %v6308 = vadd.f32 %v6243, %v6307
    %v6309 = vpop.f32.mrb[0].mxu0
    %6310 = vmatprep.mubr.bf16.mxu0 %v4336
    %6311 = vmatmul.mubr.bf16.gmra.mrb[0].mxu0 %v4335
    %v6312 = vpop.f32.mrb[0].mxu0
    %v6313 = vadd.f32 %v6248, %v6312
    %v6314 = vpop.f32.mrb[0].mxu0
    %v6315 = vpop.f32.mrb[0].mxu0
    %v6316 = vadd.f32 %v6251, %v6315
    %v6317 = vpop.f32.mrb[0].mxu0
    %6318 = vmatprep.mubr.bf16.mxu0 %v4363
    %6319 = vmatmul.mubr.bf16.gmra.mrb[0].mxu0 %v4362
    %v6320 = vpop.f32.mrb[0].mxu0
    %v6321 = vadd.f32 %v6256, %v6320
    %v6322 = vpop.f32.mrb[0].mxu0
    %v6323 = vpop.f32.mrb[0].mxu0
    %v6324 = vadd.f32 %v6259, %v6323
    %v6325 = vpop.f32.mrb[0].mxu0
    %6326 = vmatprep.mubr.bf16.mxu0 %v4390
    %6327 = vmatmul.mubr.bf16.gmra.mrb[0].mxu0 %v4389
    %v6328 = vpop.f32.mrb[0].mxu0
    %v6329 = vadd.f32 %v6264, %v6328
    %v6330 = vpop.f32.mrb[0].mxu0
    %v6331 = vpop.f32.mrb[0].mxu0
    %v6332 = vadd.f32 %v6267, %v6331
    %v6333 = vpop.f32.mrb[0].mxu0
    %6334 = vdwg.mxu0
    %6335 = vmatprep.subr.bf16.mxu0 0
    %6336 = vmatpush1.bf16.msra.mxu0 %v5756
    %6337 = vmatprep.subr.bf16.mxu0 0
    %6338 = vmatpush1.bf16.msra.mxu0 %v5757
    %6339 = vmatprep.subr.bf16.mxu0 0
    %6340 = vmatpush1.bf16.msra.mxu0 %v5758
    %6341 = vmatprep.subr.bf16.mxu0 0
    %6342 = vmatpush1.bf16.msra.mxu0 %v5759
    %6343 = vmatprep.subr.bf16.mxu0 0
    %6344 = vmatpush1.bf16.msra.mxu0 %v5760
    %6345 = vmatprep.subr.bf16.mxu0 0
    %6346 = vmatpush1.bf16.msra.mxu0 %v5761
    %6347 = vmatprep.subr.bf16.mxu0 0
    %6348 = vmatpush1.bf16.msra.mxu0 %v5762
    %6349 = vmatprep.subr.bf16.mxu0 0
    %6350 = vmatpush1.bf16.msra.mxu0 %v5763
    %6351 = vmatprep.subr.bf16.mxu0 0
    %6352 = vmatpush1.bf16.msra.mxu0 %v5764
    %6353 = vmatprep.subr.bf16.mxu0 0
    %6354 = vmatpush1.bf16.msra.mxu0 %v5765
    %6355 = vmatprep.subr.bf16.mxu0 0
    %6356 = vmatpush1.bf16.msra.mxu0 %v5766
    %6357 = vmatprep.subr.bf16.mxu0 0
    %6358 = vmatpush1.bf16.msra.mxu0 %v5767
    %6359 = vmatprep.subr.bf16.mxu0 0
    %6360 = vmatpush1.bf16.msra.mxu0 %v5768
    %6361 = vmatprep.subr.bf16.mxu0 0
    %6362 = vmatpush1.bf16.msra.mxu0 %v5769
    %6363 = vmatprep.subr.bf16.mxu0 0
    %6364 = vmatpush1.bf16.msra.mxu0 %v5770
    %6365 = vmatprep.subr.bf16.mxu0 0
    %6366 = vmatpush1.bf16.msra.mxu0 %v5771
    %6367 = vmatprep.mubr.bf16.mxu0 %v4311
    %6368 = vmatmul.mubr.bf16.gmra.mrb[0].mxu0 %v4310
    %v6369 = vpop.f32.mrb[0].mxu0
    %v6370 = vadd.f32 %v6305, %v6369
    %v6371 = vpop.f32.mrb[0].mxu0
    %v6372 = vpop.f32.mrb[0].mxu0
    %v6373 = vadd.f32 %v6308, %v6372
    %v6374 = vpop.f32.mrb[0].mxu0
    %6375 = vmatprep.mubr.bf16.mxu0 %v4338
    %6376 = vmatmul.mubr.bf16.gmra.mrb[0].mxu0 %v4337
    %v6377 = vpop.f32.mrb[0].mxu0
    %v6378 = vadd.f32 %v6313, %v6377
    %v6379 = vpop.f32.mrb[0].mxu0
    %v6380 = vpop.f32.mrb[0].mxu0
    %v6381 = vadd.f32 %v6316, %v6380
    %v6382 = vpop.f32.mrb[0].mxu0
    %6383 = vmatprep.mubr.bf16.mxu0 %v4365
    %6384 = vmatmul.mubr.bf16.gmra.mrb[0].mxu0 %v4364
    %v6385 = vpop.f32.mrb[0].mxu0
    %v6386 = vadd.f32 %v6321, %v6385
    %v6387 = vpop.f32.mrb[0].mxu0
    %v6388 = vpop.f32.mrb[0].mxu0
    %v6389 = vadd.f32 %v6324, %v6388
    %v6390 = vpop.f32.mrb[0].mxu0
    %6391 = vmatprep.mubr.bf16.mxu0 %v4392
    %6392 = vmatmul.mubr.bf16.gmra.mrb[0].mxu0 %v4391
    %v6393 = vpop.f32.mrb[0].mxu0
    %v6394 = vadd.f32 %v6329, %v6393
    %v6395 = vpop.f32.mrb[0].mxu0
    %v6396 = vpop.f32.mrb[0].mxu0
    %v6397 = vadd.f32 %v6332, %v6396
    %v6398 = vpop.f32.mrb[0].mxu0
    %6399 = vdwg.mxu0
    %6400 = vmatprep.subr.bf16.mxu0 0
    %6401 = vmatpush1.bf16.msra.mxu0 %v5772
    %6402 = vmatprep.subr.bf16.mxu0 0
    %6403 = vmatpush1.bf16.msra.mxu0 %v5773
    %6404 = vmatprep.subr.bf16.mxu0 0
    %6405 = vmatpush1.bf16.msra.mxu0 %v5774
    %6406 = vmatprep.subr.bf16.mxu0 0
    %6407 = vmatpush1.bf16.msra.mxu0 %v5775
    %6408 = vmatprep.subr.bf16.mxu0 0
    %6409 = vmatpush1.bf16.msra.mxu0 %v5776
    %6410 = vmatprep.subr.bf16.mxu0 0
    %6411 = vmatpush1.bf16.msra.mxu0 %v5777
    %6412 = vmatprep.subr.bf16.mxu0 0
    %6413 = vmatpush1.bf16.msra.mxu0 %v5778
    %6414 = vmatprep.subr.bf16.mxu0 0
    %6415 = vmatpush1.bf16.msra.mxu0 %v5779
    %6416 = vmatprep.subr.bf16.mxu0 0
    %6417 = vmatpush1.bf16.msra.mxu0 %v5780
    %6418 = vmatprep.subr.bf16.mxu0 0
    %6419 = vmatpush1.bf16.msra.mxu0 %v5781
    %6420 = vmatprep.subr.bf16.mxu0 0
    %6421 = vmatpush1.bf16.msra.mxu0 %v5782
    %6422 = vmatprep.subr.bf16.mxu0 0
    %6423 = vmatpush1.bf16.msra.mxu0 %v5783
    %6424 = vmatprep.subr.bf16.mxu0 0
    %6425 = vmatpush1.bf16.msra.mxu0 %v5784
    %6426 = vmatprep.subr.bf16.mxu0 0
    %6427 = vmatpush1.bf16.msra.mxu0 %v5785
    %6428 = vmatprep.subr.bf16.mxu0 0
    %6429 = vmatpush1.bf16.msra.mxu0 %v5786
    %6430 = vmatprep.subr.bf16.mxu0 0
    %6431 = vmatpush1.bf16.msra.mxu0 %v5787
    %6432 = vmatprep.mubr.bf16.mxu0 %v4313
    %6433 = vmatmul.mubr.bf16.gmra.mrb[0].mxu0 %v4312
    %v6434 = vpop.f32.mrb[0].mxu0
    %v6435 = vadd.f32 %v6370, %v6434
    %v6436 = vpop.f32.mrb[0].mxu0
    %v6437 = vpop.f32.mrb[0].mxu0
    %v6438 = vadd.f32 %v6373, %v6437
    %v6439 = vpop.f32.mrb[0].mxu0
    %6440 = vmatprep.mubr.bf16.mxu0 %v4340
    %6441 = vmatmul.mubr.bf16.gmra.mrb[0].mxu0 %v4339
    %v6442 = vpop.f32.mrb[0].mxu0
    %v6443 = vadd.f32 %v6378, %v6442
    %v6444 = vpop.f32.mrb[0].mxu0
    %v6445 = vpop.f32.mrb[0].mxu0
    %v6446 = vadd.f32 %v6381, %v6445
    %v6447 = vpop.f32.mrb[0].mxu0
    %6448 = vmatprep.mubr.bf16.mxu0 %v4367
    %6449 = vmatmul.mubr.bf16.gmra.mrb[0].mxu0 %v4366
    %v6450 = vpop.f32.mrb[0].mxu0
    %v6451 = vadd.f32 %v6386, %v6450
    %v6452 = vpop.f32.mrb[0].mxu0
    %v6453 = vpop.f32.mrb[0].mxu0
    %v6454 = vadd.f32 %v6389, %v6453
    %v6455 = vpop.f32.mrb[0].mxu0
    %6456 = vmatprep.mubr.bf16.mxu0 %v4394
    %6457 = vmatmul.mubr.bf16.gmra.mrb[0].mxu0 %v4393
    %v6458 = vpop.f32.mrb[0].mxu0
    %v6459 = vadd.f32 %v6394, %v6458
    %v6460 = vpop.f32.mrb[0].mxu0
    %v6461 = vpop.f32.mrb[0].mxu0
    %v6462 = vadd.f32 %v6397, %v6461
    %v6463 = vpop.f32.mrb[0].mxu0
    %6464 = vdwg.mxu0
    %6465 = vmatprep.subr.bf16.mxu0 0
    %6466 = vmatpush1.bf16.msra.mxu0 %v5788
    %6467 = vmatprep.subr.bf16.mxu0 0
    %6468 = vmatpush1.bf16.msra.mxu0 %v5789
    %6469 = vmatprep.subr.bf16.mxu0 0
    %6470 = vmatpush1.bf16.msra.mxu0 %v5790
    %6471 = vmatprep.subr.bf16.mxu0 0
    %6472 = vmatpush1.bf16.msra.mxu0 %v5791
    %6473 = vmatprep.subr.bf16.mxu0 0
    %6474 = vmatpush1.bf16.msra.mxu0 %v5792
    %6475 = vmatprep.subr.bf16.mxu0 0
    %6476 = vmatpush1.bf16.msra.mxu0 %v5793
    %6477 = vmatprep.subr.bf16.mxu0 0
    %6478 = vmatpush1.bf16.msra.mxu0 %v5794
    %6479 = vmatprep.subr.bf16.mxu0 0
    %6480 = vmatpush1.bf16.msra.mxu0 %v5795
    %6481 = vmatprep.subr.bf16.mxu0 0
    %6482 = vmatpush1.bf16.msra.mxu0 %v5796
    %6483 = vmatprep.subr.bf16.mxu0 0
    %6484 = vmatpush1.bf16.msra.mxu0 %v5797
    %6485 = vmatprep.subr.bf16.mxu0 0
    %6486 = vmatpush1.bf16.msra.mxu0 %v5798
    %6487 = vmatprep.subr.bf16.mxu0 0
    %6488 = vmatpush1.bf16.msra.mxu0 %v5799
    %6489 = vmatprep.subr.bf16.mxu0 0
    %6490 = vmatpush1.bf16.msra.mxu0 %v5800
    %6491 = vmatprep.subr.bf16.mxu0 0
    %6492 = vmatpush1.bf16.msra.mxu0 %v5801
    %6493 = vmatprep.subr.bf16.mxu0 0
    %6494 = vmatpush1.bf16.msra.mxu0 %v5802
    %6495 = vmatprep.subr.bf16.mxu0 0
    %6496 = vmatpush1.bf16.msra.mxu0 %v5803
    %6497 = vmatprep.mubr.bf16.mxu0 %v4315
    %6498 = vmatmul.mubr.bf16.gmra.mrb[0].mxu0 %v4314
    %v6499 = vpop.f32.mrb[0].mxu0
    %v6500 = vadd.f32 %v6435, %v6499
    %v6501 = vpop.f32.mrb[0].mxu0
    %v6502 = vpop.f32.mrb[0].mxu0
    %v6503 = vadd.f32 %v6438, %v6502
    %v6504 = vpop.f32.mrb[0].mxu0
    %6505 = vmatprep.mubr.bf16.mxu0 %v4342
    %6506 = vmatmul.mubr.bf16.gmra.mrb[0].mxu0 %v4341
    %v6507 = vpop.f32.mrb[0].mxu0
    %v6508 = vadd.f32 %v6443, %v6507
    %v6509 = vpop.f32.mrb[0].mxu0
    %v6510 = vpop.f32.mrb[0].mxu0
    %v6511 = vadd.f32 %v6446, %v6510
    %v6512 = vpop.f32.mrb[0].mxu0
    %6513 = vmatprep.mubr.bf16.mxu0 %v4369
    %6514 = vmatmul.mubr.bf16.gmra.mrb[0].mxu0 %v4368
    %v6515 = vpop.f32.mrb[0].mxu0
    %v6516 = vadd.f32 %v6451, %v6515
    %v6517 = vpop.f32.mrb[0].mxu0
    %v6518 = vpop.f32.mrb[0].mxu0
    %v6519 = vadd.f32 %v6454, %v6518
    %v6520 = vpop.f32.mrb[0].mxu0
    %6521 = vmatprep.mubr.bf16.mxu0 %v4396
    %6522 = vmatmul.mubr.bf16.gmra.mrb[0].mxu0 %v4395
    %v6523 = vpop.f32.mrb[0].mxu0
    %v6524 = vadd.f32 %v6459, %v6523
    %v6525 = vpop.f32.mrb[0].mxu0
    %v6526 = vpop.f32.mrb[0].mxu0
    %v6527 = vadd.f32 %v6462, %v6526
    %v6528 = vpop.f32.mrb[0].mxu0
    %6529 = vdwg.mxu0
    %6530 = vmatprep.subr.bf16.mxu0 0
    %6531 = vmatpush1.bf16.msra.mxu0 %v5804
    %6532 = vmatprep.subr.bf16.mxu0 0
    %6533 = vmatpush1.bf16.msra.mxu0 %v5805
    %6534 = vmatprep.subr.bf16.mxu0 0
    %6535 = vmatpush1.bf16.msra.mxu0 %v5806
    %6536 = vmatprep.subr.bf16.mxu0 0
    %6537 = vmatpush1.bf16.msra.mxu0 %v5807
    %6538 = vmatprep.subr.bf16.mxu0 0
    %6539 = vmatpush1.bf16.msra.mxu0 %v5808
    %6540 = vmatprep.subr.bf16.mxu0 0
    %6541 = vmatpush1.bf16.msra.mxu0 %v5809
    %6542 = vmatprep.subr.bf16.mxu0 0
    %6543 = vmatpush1.bf16.msra.mxu0 %v5810
    %6544 = vmatprep.subr.bf16.mxu0 0
    %6545 = vmatpush1.bf16.msra.mxu0 %v5811
    %6546 = vmatprep.subr.bf16.mxu0 0
    %6547 = vmatpush1.bf16.msra.mxu0 %v5812
    %6548 = vmatprep.subr.bf16.mxu0 0
    %6549 = vmatpush1.bf16.msra.mxu0 %v5813
    %6550 = vmatprep.subr.bf16.mxu0 0
    %6551 = vmatpush1.bf16.msra.mxu0 %v5814
    %6552 = vmatprep.subr.bf16.mxu0 0
    %6553 = vmatpush1.bf16.msra.mxu0 %v5815
    %6554 = vmatprep.subr.bf16.mxu0 0
    %6555 = vmatpush1.bf16.msra.mxu0 %v5816
    %6556 = vmatprep.subr.bf16.mxu0 0
    %6557 = vmatpush1.bf16.msra.mxu0 %v5817
    %6558 = vmatprep.subr.bf16.mxu0 0
    %6559 = vmatpush1.bf16.msra.mxu0 %v5818
    %6560 = vmatprep.subr.bf16.mxu0 0
    %6561 = vmatpush1.bf16.msra.mxu0 %v5819
    %6562 = vmatprep.mubr.bf16.mxu0 %v4317
    %6563 = vmatmul.mubr.bf16.gmra.mrb[0].mxu0 %v4316
    %v6564 = vpop.f32.mrb[0].mxu0
    %v6565 = vadd.f32 %v6500, %v6564
    %v6566 = vpop.f32.mrb[0].mxu0
    %v6567 = vpop.f32.mrb[0].mxu0
    %v6568 = vadd.f32 %v6503, %v6567
    %v6569 = vpop.f32.mrb[0].mxu0
    %6570 = vmatprep.mubr.bf16.mxu0 %v4344
    %6571 = vmatmul.mubr.bf16.gmra.mrb[0].mxu0 %v4343
    %v6572 = vpop.f32.mrb[0].mxu0
    %v6573 = vadd.f32 %v6508, %v6572
    %v6574 = vpop.f32.mrb[0].mxu0
    %v6575 = vpop.f32.mrb[0].mxu0
    %v6576 = vadd.f32 %v6511, %v6575
    %v6577 = vpop.f32.mrb[0].mxu0
    %6578 = vmatprep.mubr.bf16.mxu0 %v4371
    %6579 = vmatmul.mubr.bf16.gmra.mrb[0].mxu0 %v4370
    %v6580 = vpop.f32.mrb[0].mxu0
    %v6581 = vadd.f32 %v6516, %v6580
    %v6582 = vpop.f32.mrb[0].mxu0
    %v6583 = vpop.f32.mrb[0].mxu0
    %v6584 = vadd.f32 %v6519, %v6583
    %v6585 = vpop.f32.mrb[0].mxu0
    %6586 = vmatprep.mubr.bf16.mxu0 %v4398
    %6587 = vmatmul.mubr.bf16.gmra.mrb[0].mxu0 %v4397
    %v6588 = vpop.f32.mrb[0].mxu0
    %v6589 = vadd.f32 %v6524, %v6588
    %v6590 = vpop.f32.mrb[0].mxu0
    %v6591 = vpop.f32.mrb[0].mxu0
    %v6592 = vadd.f32 %v6527, %v6591
    %v6593 = vpop.f32.mrb[0].mxu0
    %6594 = vdwg.mxu0
    %6595 = vmatprep.subr.bf16.mxu0 0
    %6596 = vmatpush1.bf16.msra.mxu0 %v5820
    %6597 = vmatprep.subr.bf16.mxu0 0
    %6598 = vmatpush1.bf16.msra.mxu0 %v5821
    %6599 = vmatprep.subr.bf16.mxu0 0
    %6600 = vmatpush1.bf16.msra.mxu0 %v5822
    %6601 = vmatprep.subr.bf16.mxu0 0
    %6602 = vmatpush1.bf16.msra.mxu0 %v5823
    %6603 = vmatprep.subr.bf16.mxu0 0
    %6604 = vmatpush1.bf16.msra.mxu0 %v5824
    %6605 = vmatprep.subr.bf16.mxu0 0
    %6606 = vmatpush1.bf16.msra.mxu0 %v5825
    %6607 = vmatprep.subr.bf16.mxu0 0
    %6608 = vmatpush1.bf16.msra.mxu0 %v5826
    %6609 = vmatprep.subr.bf16.mxu0 0
    %6610 = vmatpush1.bf16.msra.mxu0 %v5827
    %6611 = vmatprep.subr.bf16.mxu0 0
    %6612 = vmatpush1.bf16.msra.mxu0 %v5828
    %6613 = vmatprep.subr.bf16.mxu0 0
    %6614 = vmatpush1.bf16.msra.mxu0 %v5829
    %6615 = vmatprep.subr.bf16.mxu0 0
    %6616 = vmatpush1.bf16.msra.mxu0 %v5830
    %6617 = vmatprep.subr.bf16.mxu0 0
    %6618 = vmatpush1.bf16.msra.mxu0 %v5831
    %6619 = vmatprep.subr.bf16.mxu0 0
    %6620 = vmatpush1.bf16.msra.mxu0 %v5832
    %6621 = vmatprep.subr.bf16.mxu0 0
    %6622 = vmatpush1.bf16.msra.mxu0 %v5833
    %6623 = vmatprep.subr.bf16.mxu0 0
    %6624 = vmatpush1.bf16.msra.mxu0 %v5834
    %6625 = vmatprep.subr.bf16.mxu0 0
    %6626 = vmatpush1.bf16.msra.mxu0 %v5835
    %6627 = vmatprep.mubr.bf16.mxu0 %v4319
    %6628 = vmatmul.mubr.bf16.gmra.mrb[0].mxu0 %v4318
    %v6629 = vpop.f32.mrb[0].mxu0
    %v6630 = vadd.f32 %v6565, %v6629
    %v6631 = vpop.f32.mrb[0].mxu0
    %v6632 = vpop.f32.mrb[0].mxu0
    %v6633 = vadd.f32 %v6568, %v6632
    %v6634 = vpop.f32.mrb[0].mxu0
    %6635 = vmatprep.mubr.bf16.mxu0 %v4346
    %6636 = vmatmul.mubr.bf16.gmra.mrb[0].mxu0 %v4345
    %v6637 = vpop.f32.mrb[0].mxu0
    %v6638 = vadd.f32 %v6573, %v6637
    %v6639 = vpop.f32.mrb[0].mxu0
    %v6640 = vpop.f32.mrb[0].mxu0
    %v6641 = vadd.f32 %v6576, %v6640
    %v6642 = vpop.f32.mrb[0].mxu0
    %6643 = vmatprep.mubr.bf16.mxu0 %v4373
    %6644 = vmatmul.mubr.bf16.gmra.mrb[0].mxu0 %v4372
    %v6645 = vpop.f32.mrb[0].mxu0
    %v6646 = vadd.f32 %v6581, %v6645
    %v6647 = vpop.f32.mrb[0].mxu0
    %v6648 = vpop.f32.mrb[0].mxu0
    %v6649 = vadd.f32 %v6584, %v6648
    %v6650 = vpop.f32.mrb[0].mxu0
    %6651 = vmatprep.mubr.bf16.mxu0 %v4400
    %6652 = vmatmul.mubr.bf16.gmra.mrb[0].mxu0 %v4399
    %v6653 = vpop.f32.mrb[0].mxu0
    %v6654 = vadd.f32 %v6589, %v6653
    %v6655 = vpop.f32.mrb[0].mxu0
    %v6656 = vpop.f32.mrb[0].mxu0
    %v6657 = vadd.f32 %v6592, %v6656
    %v6658 = vpop.f32.mrb[0].mxu0
    %6659 = vdwg.mxu0
    %6660 = vmatprep.subr.bf16.mxu0 0
    %6661 = vmatpush1.bf16.msra.mxu0 %v5836
    %6662 = vmatprep.subr.bf16.mxu0 0
    %6663 = vmatpush1.bf16.msra.mxu0 %v5837
    %6664 = vmatprep.subr.bf16.mxu0 0
    %6665 = vmatpush1.bf16.msra.mxu0 %v5838
    %6666 = vmatprep.subr.bf16.mxu0 0
    %6667 = vmatpush1.bf16.msra.mxu0 %v5839
    %6668 = vmatprep.subr.bf16.mxu0 0
    %6669 = vmatpush1.bf16.msra.mxu0 %v5840
    %6670 = vmatprep.subr.bf16.mxu0 0
    %6671 = vmatpush1.bf16.msra.mxu0 %v5841
    %6672 = vmatprep.subr.bf16.mxu0 0
    %6673 = vmatpush1.bf16.msra.mxu0 %v5842
    %6674 = vmatprep.subr.bf16.mxu0 0
    %6675 = vmatpush1.bf16.msra.mxu0 %v5843
    %6676 = vmatprep.subr.bf16.mxu0 0
    %6677 = vmatpush1.bf16.msra.mxu0 %v5844
    %6678 = vmatprep.subr.bf16.mxu0 0
    %6679 = vmatpush1.bf16.msra.mxu0 %v5845
    %6680 = vmatprep.subr.bf16.mxu0 0
    %6681 = vmatpush1.bf16.msra.mxu0 %v5846
    %6682 = vmatprep.subr.bf16.mxu0 0
    %6683 = vmatpush1.bf16.msra.mxu0 %v5847
    %6684 = vmatprep.subr.bf16.mxu0 0
    %6685 = vmatpush1.bf16.msra.mxu0 %v5848
    %6686 = vmatprep.subr.bf16.mxu0 0
    %6687 = vmatpush1.bf16.msra.mxu0 %v5849
    %6688 = vmatprep.subr.bf16.mxu0 0
    %6689 = vmatpush1.bf16.msra.mxu0 %v5850
    %6690 = vmatprep.subr.bf16.mxu0 0
    %6691 = vmatpush1.bf16.msra.mxu0 %v5851
    %6692 = vmatprep.mubr.bf16.mxu0 %v4321
    %6693 = vmatmul.mubr.bf16.gmra.mrb[0].mxu0 %v4320
    %v6694 = vpop.f32.mrb[0].mxu0
    %v6695 = vadd.f32 %v6630, %v6694
    %v6696 = vpop.f32.mrb[0].mxu0
    %v6697 = vpop.f32.mrb[0].mxu0
    %v6698 = vadd.f32 %v6633, %v6697
    %v6699 = vpop.f32.mrb[0].mxu0
    %6700 = vmatprep.mubr.bf16.mxu0 %v4348
    %6701 = vmatmul.mubr.bf16.gmra.mrb[0].mxu0 %v4347
    %v6702 = vpop.f32.mrb[0].mxu0
    %v6703 = vadd.f32 %v6638, %v6702
    %v6704 = vpop.f32.mrb[0].mxu0
    %v6705 = vpop.f32.mrb[0].mxu0
    %v6706 = vadd.f32 %v6641, %v6705
    %v6707 = vpop.f32.mrb[0].mxu0
    %6708 = vmatprep.mubr.bf16.mxu0 %v4375
    %6709 = vmatmul.mubr.bf16.gmra.mrb[0].mxu0 %v4374
    %v6710 = vpop.f32.mrb[0].mxu0
    %v6711 = vadd.f32 %v6646, %v6710
    %v6712 = vpop.f32.mrb[0].mxu0
    %v6713 = vpop.f32.mrb[0].mxu0
    %v6714 = vadd.f32 %v6649, %v6713
    %v6715 = vpop.f32.mrb[0].mxu0
    %6716 = vmatprep.mubr.bf16.mxu0 %v4402
    %6717 = vmatmul.mubr.bf16.gmra.mrb[0].mxu0 %v4401
    %v6718 = vpop.f32.mrb[0].mxu0
    %v6719 = vadd.f32 %v6654, %v6718
    %v6720 = vpop.f32.mrb[0].mxu0
    %v6721 = vpop.f32.mrb[0].mxu0
    %v6722 = vadd.f32 %v6657, %v6721
    %v6723 = vpop.f32.mrb[0].mxu0
    %6724 = vdwg.mxu0
    %6725 = vmatprep.subr.bf16.mxu0 0
    %6726 = vmatpush1.bf16.msra.mxu0 %v5852
    %6727 = vmatprep.subr.bf16.mxu0 0
    %6728 = vmatpush1.bf16.msra.mxu0 %v5853
    %6729 = vmatprep.subr.bf16.mxu0 0
    %6730 = vmatpush1.bf16.msra.mxu0 %v5854
    %6731 = vmatprep.subr.bf16.mxu0 0
    %6732 = vmatpush1.bf16.msra.mxu0 %v5855
    %6733 = vmatprep.subr.bf16.mxu0 0
    %6734 = vmatpush1.bf16.msra.mxu0 %v5856
    %6735 = vmatprep.subr.bf16.mxu0 0
    %6736 = vmatpush1.bf16.msra.mxu0 %v5857
    %6737 = vmatprep.subr.bf16.mxu0 0
    %6738 = vmatpush1.bf16.msra.mxu0 %v5858
    %6739 = vmatprep.subr.bf16.mxu0 0
    %6740 = vmatpush1.bf16.msra.mxu0 %v5859
    %6741 = vmatprep.subr.bf16.mxu0 0
    %6742 = vmatpush1.bf16.msra.mxu0 %v5860
    %6743 = vmatprep.subr.bf16.mxu0 0
    %6744 = vmatpush1.bf16.msra.mxu0 %v5861
    %6745 = vmatprep.subr.bf16.mxu0 0
    %6746 = vmatpush1.bf16.msra.mxu0 %v5862
    %6747 = vmatprep.subr.bf16.mxu0 0
    %6748 = vmatpush1.bf16.msra.mxu0 %v5863
    %6749 = vmatprep.subr.bf16.mxu0 0
    %6750 = vmatpush1.bf16.msra.mxu0 %v5864
    %6751 = vmatprep.subr.bf16.mxu0 0
    %6752 = vmatpush1.bf16.msra.mxu0 %v5865
    %6753 = vmatprep.subr.bf16.mxu0 0
    %6754 = vmatpush1.bf16.msra.mxu0 %v5866
    %6755 = vmatprep.subr.bf16.mxu0 0
    %6756 = vmatpush1.bf16.msra.mxu0 %v5867
    %6757 = vmatprep.mubr.bf16.mxu0 %v4323
    %6758 = vmatmul.mubr.bf16.gmra.mrb[0].mxu0 %v4322
    %v6759 = vpop.f32.mrb[0].mxu0
    %v6760 = vadd.f32 %v6695, %v6759
    %v6761 = vpop.f32.mrb[0].mxu0
    %v6762 = vpop.f32.mrb[0].mxu0
    %v6763 = vadd.f32 %v6698, %v6762
    %v6764 = vpop.f32.mrb[0].mxu0
    %6765 = vmatprep.mubr.bf16.mxu0 %v4350
    %6766 = vmatmul.mubr.bf16.gmra.mrb[0].mxu0 %v4349
    %v6767 = vpop.f32.mrb[0].mxu0
    %v6768 = vadd.f32 %v6703, %v6767
    %v6769 = vpop.f32.mrb[0].mxu0
    %v6770 = vpop.f32.mrb[0].mxu0
    %v6771 = vadd.f32 %v6706, %v6770
    %v6772 = vpop.f32.mrb[0].mxu0
    %6773 = vmatprep.mubr.bf16.mxu0 %v4377
    %6774 = vmatmul.mubr.bf16.gmra.mrb[0].mxu0 %v4376
    %v6775 = vpop.f32.mrb[0].mxu0
    %v6776 = vadd.f32 %v6711, %v6775
    %v6777 = vpop.f32.mrb[0].mxu0
    %v6778 = vpop.f32.mrb[0].mxu0
    %v6779 = vadd.f32 %v6714, %v6778
    %v6780 = vpop.f32.mrb[0].mxu0
    %6781 = vmatprep.mubr.bf16.mxu0 %v4404
    %6782 = vmatmul.mubr.bf16.gmra.mrb[0].mxu0 %v4403
    %v6783 = vpop.f32.mrb[0].mxu0
    %v6784 = vadd.f32 %v6719, %v6783
    %v6785 = vpop.f32.mrb[0].mxu0
    %v6786 = vpop.f32.mrb[0].mxu0
    %v6787 = vadd.f32 %v6722, %v6786
    %v6788 = vpop.f32.mrb[0].mxu0
    %6789 = vdwg.mxu0
    %6790 = vmatprep.subr.bf16.mxu0 0
    %6791 = vmatpush1.bf16.msra.mxu0 %v5868
    %6792 = vmatprep.subr.bf16.mxu0 0
    %6793 = vmatpush1.bf16.msra.mxu0 %v5869
    %6794 = vmatprep.subr.bf16.mxu0 0
    %6795 = vmatpush1.bf16.msra.mxu0 %v5870
    %6796 = vmatprep.subr.bf16.mxu0 0
    %6797 = vmatpush1.bf16.msra.mxu0 %v5871
    %6798 = vmatprep.subr.bf16.mxu0 0
    %6799 = vmatpush1.bf16.msra.mxu0 %v5872
    %6800 = vmatprep.subr.bf16.mxu0 0
    %6801 = vmatpush1.bf16.msra.mxu0 %v5873
    %6802 = vmatprep.subr.bf16.mxu0 0
    %6803 = vmatpush1.bf16.msra.mxu0 %v5874
    %6804 = vmatprep.subr.bf16.mxu0 0
    %6805 = vmatpush1.bf16.msra.mxu0 %v5875
    %6806 = vmatprep.subr.bf16.mxu0 0
    %6807 = vmatpush1.bf16.msra.mxu0 %v5876
    %6808 = vmatprep.subr.bf16.mxu0 0
    %6809 = vmatpush1.bf16.msra.mxu0 %v5877
    %6810 = vmatprep.subr.bf16.mxu0 0
    %6811 = vmatpush1.bf16.msra.mxu0 %v5878
    %6812 = vmatprep.subr.bf16.mxu0 0
    %6813 = vmatpush1.bf16.msra.mxu0 %v5879
    %6814 = vmatprep.subr.bf16.mxu0 0
    %6815 = vmatpush1.bf16.msra.mxu0 %v5880
    %6816 = vmatprep.subr.bf16.mxu0 0
    %6817 = vmatpush1.bf16.msra.mxu0 %v5881
    %6818 = vmatprep.subr.bf16.mxu0 0
    %6819 = vmatpush1.bf16.msra.mxu0 %v5882
    %6820 = vmatprep.subr.bf16.mxu0 0
    %6821 = vmatpush1.bf16.msra.mxu0 %v5883
    %6822 = vmatprep.mubr.bf16.mxu0 %v4325
    %6823 = vmatmul.mubr.bf16.gmra.mrb[0].mxu0 %v4324
    %v6824 = vpop.f32.mrb[0].mxu0
    %v6825 = vadd.f32 %v6760, %v6824
    %v6826 = vpop.f32.mrb[0].mxu0
    %v6827 = vpop.f32.mrb[0].mxu0
    %v6828 = vadd.f32 %v6763, %v6827
    %v6829 = vpop.f32.mrb[0].mxu0
    %6830 = vmatprep.mubr.bf16.mxu0 %v4352
    %6831 = vmatmul.mubr.bf16.gmra.mrb[0].mxu0 %v4351
    %v6832 = vpop.f32.mrb[0].mxu0
    %v6833 = vadd.f32 %v6768, %v6832
    %v6834 = vpop.f32.mrb[0].mxu0
    %v6835 = vpop.f32.mrb[0].mxu0
    %v6836 = vadd.f32 %v6771, %v6835
    %v6837 = vpop.f32.mrb[0].mxu0
    %6838 = vmatprep.mubr.bf16.mxu0 %v4379
    %6839 = vmatmul.mubr.bf16.gmra.mrb[0].mxu0 %v4378
    %v6840 = vpop.f32.mrb[0].mxu0
    %v6841 = vadd.f32 %v6776, %v6840
    %v6842 = vpop.f32.mrb[0].mxu0
    %v6843 = vpop.f32.mrb[0].mxu0
    %v6844 = vadd.f32 %v6779, %v6843
    %v6845 = vpop.f32.mrb[0].mxu0
    %6846 = vmatprep.mubr.bf16.mxu0 %v4406
    %6847 = vmatmul.mubr.bf16.gmra.mrb[0].mxu0 %v4405
    %v6848 = vpop.f32.mrb[0].mxu0
    %v6849 = vadd.f32 %v6784, %v6848
    %v6850 = vpop.f32.mrb[0].mxu0
    %v6851 = vpop.f32.mrb[0].mxu0
    %v6852 = vadd.f32 %v6787, %v6851
    %v6853 = vpop.f32.mrb[0].mxu0
    %6854 = vdwg.mxu0
    %6855 = vmatprep.subr.bf16.mxu0 0
    %6856 = vmatpush1.bf16.msra.mxu0 %v5884
    %6857 = vmatprep.subr.bf16.mxu0 0
    %6858 = vmatpush1.bf16.msra.mxu0 %v5885
    %6859 = vmatprep.subr.bf16.mxu0 0
    %6860 = vmatpush1.bf16.msra.mxu0 %v5886
    %6861 = vmatprep.subr.bf16.mxu0 0
    %6862 = vmatpush1.bf16.msra.mxu0 %v5887
    %6863 = vmatprep.subr.bf16.mxu0 0
    %6864 = vmatpush1.bf16.msra.mxu0 %v5888
    %6865 = vmatprep.subr.bf16.mxu0 0
    %6866 = vmatpush1.bf16.msra.mxu0 %v5889
    %6867 = vmatprep.subr.bf16.mxu0 0
    %6868 = vmatpush1.bf16.msra.mxu0 %v5890
    %6869 = vmatprep.subr.bf16.mxu0 0
    %6870 = vmatpush1.bf16.msra.mxu0 %v5891
    %6871 = vmatprep.subr.bf16.mxu0 0
    %6872 = vmatpush1.bf16.msra.mxu0 %v5892
    %6873 = vmatprep.subr.bf16.mxu0 0
    %6874 = vmatpush1.bf16.msra.mxu0 %v5893
    %6875 = vmatprep.subr.bf16.mxu0 0
    %6876 = vmatpush1.bf16.msra.mxu0 %v5894
    %6877 = vmatprep.subr.bf16.mxu0 0
    %6878 = vmatpush1.bf16.msra.mxu0 %v5895
    %6879 = vmatprep.subr.bf16.mxu0 0
    %6880 = vmatpush1.bf16.msra.mxu0 %v5896
    %6881 = vmatprep.subr.bf16.mxu0 0
    %6882 = vmatpush1.bf16.msra.mxu0 %v5897
    %6883 = vmatprep.subr.bf16.mxu0 0
    %6884 = vmatpush1.bf16.msra.mxu0 %v5898
    %6885 = vmatprep.subr.bf16.mxu0 0
    %6886 = vmatpush1.bf16.msra.mxu0 %v5899
    %6887 = vmatprep.mubr.bf16.mxu0 %v4327
    %6888 = vmatmul.mubr.bf16.gmra.mrb[0].mxu0 %v4326
    %v6889 = vpop.f32.mrb[0].mxu0
    %v6890 = vadd.f32 %v6825, %v6889
    %v6891 = vpop.f32.mrb[0].mxu0
    %v6892 = vpop.f32.mrb[0].mxu0
    %v6893 = vadd.f32 %v6828, %v6892
    %v6894 = vpop.f32.mrb[0].mxu0
    %6895 = vmatprep.mubr.bf16.mxu0 %v4354
    %6896 = vmatmul.mubr.bf16.gmra.mrb[0].mxu0 %v4353
    %v6897 = vpop.f32.mrb[0].mxu0
    %v6898 = vadd.f32 %v6833, %v6897
    %v6899 = vpop.f32.mrb[0].mxu0
    %v6900 = vpop.f32.mrb[0].mxu0
    %v6901 = vadd.f32 %v6836, %v6900
    %v6902 = vpop.f32.mrb[0].mxu0
    %6903 = vmatprep.mubr.bf16.mxu0 %v4381
    %6904 = vmatmul.mubr.bf16.gmra.mrb[0].mxu0 %v4380
    %v6905 = vpop.f32.mrb[0].mxu0
    %v6906 = vadd.f32 %v6841, %v6905
    %v6907 = vpop.f32.mrb[0].mxu0
    %v6908 = vpop.f32.mrb[0].mxu0
    %v6909 = vadd.f32 %v6844, %v6908
    %v6910 = vpop.f32.mrb[0].mxu0
    %6911 = vmatprep.mubr.bf16.mxu0 %v4408
    %6912 = vmatmul.mubr.bf16.gmra.mrb[0].mxu0 %v4407
    %v6913 = vpop.f32.mrb[0].mxu0
    %v6914 = vadd.f32 %v6849, %v6913
    %v6915 = vpop.f32.mrb[0].mxu0
    %v6916 = vpop.f32.mrb[0].mxu0
    %v6917 = vadd.f32 %v6852, %v6916
    %v6918 = vpop.f32.mrb[0].mxu0
    %6919 = vdwg.mxu0
    %6920 = vmatprep.subr.bf16.mxu0 0
    %6921 = vmatpush1.bf16.msra.mxu0 %v5900
    %6922 = vmatprep.subr.bf16.mxu0 0
    %6923 = vmatpush1.bf16.msra.mxu0 %v5901
    %6924 = vmatprep.subr.bf16.mxu0 0
    %6925 = vmatpush1.bf16.msra.mxu0 %v5902
    %6926 = vmatprep.subr.bf16.mxu0 0
    %6927 = vmatpush1.bf16.msra.mxu0 %v5903
    %6928 = vmatprep.subr.bf16.mxu0 0
    %6929 = vmatpush1.bf16.msra.mxu0 %v5904
    %6930 = vmatprep.subr.bf16.mxu0 0
    %6931 = vmatpush1.bf16.msra.mxu0 %v5905
    %6932 = vmatprep.subr.bf16.mxu0 0
    %6933 = vmatpush1.bf16.msra.mxu0 %v5906
    %6934 = vmatprep.subr.bf16.mxu0 0
    %6935 = vmatpush1.bf16.msra.mxu0 %v5907
    %6936 = vmatprep.subr.bf16.mxu0 0
    %6937 = vmatpush1.bf16.msra.mxu0 %v5908
    %6938 = vmatprep.subr.bf16.mxu0 0
    %6939 = vmatpush1.bf16.msra.mxu0 %v5909
    %6940 = vmatprep.subr.bf16.mxu0 0
    %6941 = vmatpush1.bf16.msra.mxu0 %v5910
    %6942 = vmatprep.subr.bf16.mxu0 0
    %6943 = vmatpush1.bf16.msra.mxu0 %v5911
    %6944 = vmatprep.subr.bf16.mxu0 0
    %6945 = vmatpush1.bf16.msra.mxu0 %v5912
    %6946 = vmatprep.subr.bf16.mxu0 0
    %6947 = vmatpush1.bf16.msra.mxu0 %v5913
    %6948 = vmatprep.subr.bf16.mxu0 0
    %6949 = vmatpush1.bf16.msra.mxu0 %v5914
    %6950 = vmatprep.subr.bf16.mxu0 0
    %6951 = vmatpush1.bf16.msra.mxu0 %v5915
    %6952 = vmatprep.mubr.bf16.mxu0 %v4329
    %6953 = vmatmul.mubr.bf16.gmra.mrb[0].mxu0 %v4328
    %v6954 = vpop.f32.mrb[0].mxu0
    %v6955 = vadd.f32 %v6890, %v6954
    %v6956 = vpop.f32.mrb[0].mxu0
    %v6957 = vpop.f32.mrb[0].mxu0
    %v6958 = vadd.f32 %v6893, %v6957
    %v6959 = vpop.f32.mrb[0].mxu0
    %6960 = vmatprep.mubr.bf16.mxu0 %v4356
    %6961 = vmatmul.mubr.bf16.gmra.mrb[0].mxu0 %v4355
    %v6962 = vpop.f32.mrb[0].mxu0
    %v6963 = vadd.f32 %v6898, %v6962
    %v6964 = vpop.f32.mrb[0].mxu0
    %v6965 = vpop.f32.mrb[0].mxu0
    %v6966 = vadd.f32 %v6901, %v6965
    %v6967 = vpop.f32.mrb[0].mxu0
    %6968 = vmatprep.mubr.bf16.mxu0 %v4383
    %6969 = vmatmul.mubr.bf16.gmra.mrb[0].mxu0 %v4382
    %v6970 = vpop.f32.mrb[0].mxu0
    %v6971 = vadd.f32 %v6906, %v6970
    %v6972 = vpop.f32.mrb[0].mxu0
    %v6973 = vpop.f32.mrb[0].mxu0
    %v6974 = vadd.f32 %v6909, %v6973
    %v6975 = vpop.f32.mrb[0].mxu0
    %6976 = vmatprep.mubr.bf16.mxu0 %v4410
    %6977 = vmatmul.mubr.bf16.gmra.mrb[0].mxu0 %v4409
    %v6978 = vpop.f32.mrb[0].mxu0
    %v6979 = vadd.f32 %v6914, %v6978
    %v6980 = vpop.f32.mrb[0].mxu0
    %v6981 = vpop.f32.mrb[0].mxu0
    %v6982 = vadd.f32 %v6917, %v6981
    %v6983 = vpop.f32.mrb[0].mxu0
    %6984 = vdwg.mxu0
    %6985 = vmatprep.subr.bf16.mxu0 0
    %6986 = vmatpush1.bf16.msra.mxu0 %v5916
    %6987 = vmatprep.subr.bf16.mxu0 0
    %6988 = vmatpush1.bf16.msra.mxu0 %v5917
    %6989 = vmatprep.subr.bf16.mxu0 0
    %6990 = vmatpush1.bf16.msra.mxu0 %v5918
    %6991 = vmatprep.subr.bf16.mxu0 0
    %6992 = vmatpush1.bf16.msra.mxu0 %v5919
    %6993 = vmatprep.subr.bf16.mxu0 0
    %6994 = vmatpush1.bf16.msra.mxu0 %v5920
    %6995 = vmatprep.subr.bf16.mxu0 0
    %6996 = vmatpush1.bf16.msra.mxu0 %v5921
    %6997 = vmatprep.subr.bf16.mxu0 0
    %6998 = vmatpush1.bf16.msra.mxu0 %v5922
    %6999 = vmatprep.subr.bf16.mxu0 0
    %7000 = vmatpush1.bf16.msra.mxu0 %v5923
    %7001 = vmatprep.subr.bf16.mxu0 0
    %7002 = vmatpush1.bf16.msra.mxu0 0
    %7003 = vmatprep.subr.bf16.mxu0 0
    %7004 = vmatpush1.bf16.msra.mxu0 0
    %7005 = vmatprep.subr.bf16.mxu0 0
    %7006 = vmatpush1.bf16.msra.mxu0 0
    %7007 = vmatprep.subr.bf16.mxu0 0
    %7008 = vmatpush1.bf16.msra.mxu0 0
    %7009 = vmatprep.subr.bf16.mxu0 0
    %7010 = vmatpush1.bf16.msra.mxu0 0
    %7011 = vmatprep.subr.bf16.mxu0 0
    %7012 = vmatpush1.bf16.msra.mxu0 0
    %7013 = vmatprep.subr.bf16.mxu0 0
    %7014 = vmatpush1.bf16.msra.mxu0 0
    %7015 = vmatprep.subr.bf16.mxu0 0
    %7016 = vmatpush1.bf16.msra.mxu0 0
    %7017 = vmatprep.mubr.bf16.mxu0 0
    %7018 = vmatmul.mubr.bf16.gmra.mrb[0].mxu0 %v4330
    %v7019 = vpop.f32.mrb[0].mxu0
    %v7020 = vadd.f32 %v6955, %v7019
    %v7021 = vpop.f32.mrb[0].mxu0
    %v7022 = vpop.f32.mrb[0].mxu0
    %v7023 = vadd.f32 %v6958, %v7022
    %v7024 = vpop.f32.mrb[0].mxu0
    %7025 = vmatprep.mubr.bf16.mxu0 0
    %7026 = vmatmul.mubr.bf16.gmra.mrb[0].mxu0 %v4357
    %v7027 = vpop.f32.mrb[0].mxu0
    %v7028 = vadd.f32 %v6963, %v7027
    %v7029 = vpop.f32.mrb[0].mxu0
    %v7030 = vpop.f32.mrb[0].mxu0
    %v7031 = vadd.f32 %v6966, %v7030
    %v7032 = vpop.f32.mrb[0].mxu0
    %7033 = vmatprep.mubr.bf16.mxu0 0
    %7034 = vmatmul.mubr.bf16.gmra.mrb[0].mxu0 %v4384
    %v7035 = vpop.f32.mrb[0].mxu0
    %v7036 = vadd.f32 %v6971, %v7035
    %v7037 = vpop.f32.mrb[0].mxu0
    %v7038 = vpop.f32.mrb[0].mxu0
    %v7039 = vadd.f32 %v6974, %v7038
    %v7040 = vpop.f32.mrb[0].mxu0
    %7041 = vmatprep.mubr.bf16.mxu0 0
    %7042 = vmatmul.mubr.bf16.gmra.mrb[0].mxu0 %v4411
    %v7043 = vpop.f32.mrb[0].mxu0
    %v7044 = vadd.f32 %v6979, %v7043
    %v7045 = vpop.f32.mrb[0].mxu0
    %v7046 = vpop.f32.mrb[0].mxu0
    %v7047 = vadd.f32 %v6982, %v7046
    %v7048 = vpop.f32.mrb[0].mxu0
    %7049 = vdwg.mxu0
    %v7050 = vld [vmem:[%s25] sm:$0xf]
    %v7051 = vld [vmem:[%s25 + $0x4] sm:$0xf]
    %v7052 = vld [vmem:[%s25 + $0x8] sm:$0xf]
    %v7053 = vld [vmem:[%s25 + $0xc] sm:$0xf]
    %v7054 = vld [vmem:[%s25 + $0x10] sm:$0xf]
    %v7055 = vld [vmem:[%s25 + $0x14] sm:$0xf]
    %v7056 = vld [vmem:[%s25 + $0x18] sm:$0xf]
    %v7057 = vld [vmem:[%s25 + $0x1c] sm:$0xf]
    %v7058 = vld [vmem:[%s25 + $0x20] sm:$0xf]
    %v7059 = vld [vmem:[%s25 + $0x24] sm:$0xf]
    %v7060 = vld [vmem:[%s25 + $0x28] sm:$0xf]
    %v7061 = vld [vmem:[%s25 + $0x2c] sm:$0xf]
    %v7062 = vld [vmem:[%s25 + $0x30] sm:$0xf]
    %v7063 = vld [vmem:[%s25 + $0x34] sm:$0xf]
    %v7064 = vld [vmem:[%s25 + $0x38] sm:$0xf]
    %v7065 = vld [vmem:[%s25 + $0x3c] sm:$0xf]
    %v7082 = vunpack.c.l.b16 %v7050
    %v7083 = vunpack.c.l.b16 %v7051
    %v7084 = vunpack.c.l.b16 %v7052
    %v7085 = vunpack.c.l.b16 %v7053
    %v7086 = vunpack.c.l.b16 %v7054
    %v7087 = vunpack.c.l.b16 %v7055
    %v7088 = vunpack.c.l.b16 %v7056
    %v7089 = vunpack.c.l.b16 %v7057
    %v7090 = vunpack.c.l.b16 %v7058
    %v7091 = vunpack.c.l.b16 %v7059
    %v7092 = vunpack.c.l.b16 %v7060
    %v7093 = vunpack.c.l.b16 %v7061
    %v7094 = vunpack.c.l.b16 %v7062
    %v7095 = vunpack.c.l.b16 %v7063
    %v7096 = vunpack.c.l.b16 %v7064
    %v7097 = vunpack.c.l.b16 %v7065
    %v7098 = vpack.c.b16 %v7083, %v7082
    %v7099 = vpack.c.b16 %v7085, %v7084
    %v7100 = vpack.c.b16 %v7087, %v7086
    %v7101 = vpack.c.b16 %v7089, %v7088
    %v7102 = vpack.c.b16 %v7091, %v7090
    %v7103 = vpack.c.b16 %v7093, %v7092
    %v7104 = vpack.c.b16 %v7095, %v7094
    %v7105 = vpack.c.b16 %v7097, %v7096
    %7114 = vmatprep.subr.bf16.mxu0 0
    %7115 = vmatpush1.bf16.msra.mxu0 %v7098
    %7116 = vmatprep.subr.bf16.mxu0 0
    %7117 = vmatpush1.bf16.msra.mxu0 %v7099
    %7118 = vmatprep.subr.bf16.mxu0 0
    %7119 = vmatpush1.bf16.msra.mxu0 %v7100
    %7120 = vmatprep.subr.bf16.mxu0 0
    %7121 = vmatpush1.bf16.msra.mxu0 %v7101
    %7122 = vmatprep.subr.bf16.mxu0 0
    %7123 = vmatpush1.bf16.msra.mxu0 %v7102
    %7124 = vmatprep.subr.bf16.mxu0 0
    %7125 = vmatpush1.bf16.msra.mxu0 %v7103
    %7126 = vmatprep.subr.bf16.mxu0 0
    %7127 = vmatpush1.bf16.msra.mxu0 %v7104
    %7128 = vmatprep.subr.bf16.mxu0 0
    %7129 = vmatpush1.bf16.msra.mxu0 %v7105
    %7130 = vmatprep.subr.bf16.mxu0 0
    %7131 = vmatpush1.bf16.msra.mxu0 0
    %7132 = vmatprep.subr.bf16.mxu0 0
    %7133 = vmatpush1.bf16.msra.mxu0 0
    %7134 = vmatprep.subr.bf16.mxu0 0
    %7135 = vmatpush1.bf16.msra.mxu0 0
    %7136 = vmatprep.subr.bf16.mxu0 0
    %7137 = vmatpush1.bf16.msra.mxu0 0
    %7138 = vmatprep.subr.bf16.mxu0 0
    %7139 = vmatpush1.bf16.msra.mxu0 0
    %7140 = vmatprep.subr.bf16.mxu0 0
    %7141 = vmatpush1.bf16.msra.mxu0 0
    %7142 = vmatprep.subr.bf16.mxu0 0
    %7143 = vmatpush1.bf16.msra.mxu0 0
    %7144 = vmatprep.subr.bf16.mxu0 0
    %7145 = vmatpush1.bf16.msra.mxu0 0
    %7146 = vmatprep.mubr.bf16.mxu0 0
    %7147 = vmatmul.mubr.bf16.gmra.mrb[0].mxu0 %v808
    %v7148 = vpop.f32.mrb[0].mxu0
    %v7149 = vadd.f32 0.0, %v7148
    %v7150 = vpop.f32.mrb[0].mxu0
    %v7151 = vpop.f32.mrb[0].mxu0
    %v7152 = vadd.f32 0.0, %v7151
    %v7153 = vpop.f32.mrb[0].mxu0
    %7154 = vmatprep.mubr.bf16.mxu0 0
    %7155 = vmatmul.mubr.bf16.gmra.mrb[0].mxu0 %v809
    %v7156 = vpop.f32.mrb[0].mxu0
    %v7157 = vadd.f32 0.0, %v7156
    %v7158 = vpop.f32.mrb[0].mxu0
    %v7159 = vpop.f32.mrb[0].mxu0
    %v7160 = vadd.f32 0.0, %v7159
    %v7161 = vpop.f32.mrb[0].mxu0
    %7162 = vdwg.mxu0
    %7163 = vmatprep.subr.mxu0 0.0
    %7164 = vmatpush1.msra.mxu0 %v7020
    %7165 = vmatprep.subr.mxu0 0.0
    %7166 = vmatpush1.msra.mxu0 %v7023
    %7167 = vmatprep.subr.mxu0 0.0
    %7168 = vmatpush1.msra.mxu0 %v7028
    %7169 = vmatprep.subr.mxu0 0.0
    %7170 = vmatpush1.msra.mxu0 %v7031
    %7171 = vmatprep.subr.mxu0 0.0
    %7172 = vmatpush1.msra.mxu0 %v7036
    %7173 = vmatprep.subr.mxu0 0.0
    %7174 = vmatpush1.msra.mxu0 %v7039
    %7175 = vmatprep.subr.mxu0 0.0
    %7176 = vmatpush1.msra.mxu0 %v7044
    %7177 = vmatprep.subr.mxu0 0.0
    %7178 = vmatpush1.msra.mxu0 %v7047
    %7179 = vmatprep.subr.mxu0 0.0
    %7180 = vmatpush1.msra.mxu0 0.0
    %7181 = vmatprep.subr.mxu0 0.0
    %7182 = vmatpush1.msra.mxu0 0.0
    %7183 = vmatprep.subr.mxu0 0.0
    %7184 = vmatpush1.msra.mxu0 0.0
    %7185 = vmatprep.subr.mxu0 0.0
    %7186 = vmatpush1.msra.mxu0 0.0
    %7187 = vmatprep.subr.mxu0 0.0
    %7188 = vmatpush1.msra.mxu0 0.0
    %7189 = vmatprep.subr.mxu0 0.0
    %7190 = vmatpush1.msra.mxu0 0.0
    %7191 = vmatprep.subr.mxu0 0.0
    %7192 = vmatpush1.msra.mxu0 0.0
    %7193 = vmatprep.subr.mxu0 0.0
    %7194 = vmatpush1.msra.mxu0 0.0
    %7195 = vmatprep.subr.mxu0 0.0
    %7196 = vmatpush1.msra.mxu0 0.0
    %7197 = vmatprep.subr.mxu0 0.0
    %7198 = vmatpush1.msra.mxu0 0.0
    %7199 = vmatprep.subr.mxu0 0.0
    %7200 = vmatpush1.msra.mxu0 0.0
    %7201 = vmatprep.subr.mxu0 0.0
    %7202 = vmatpush1.msra.mxu0 0.0
    %7203 = vmatprep.subr.mxu0 0.0
    %7204 = vmatpush1.msra.mxu0 0.0
    %7205 = vmatprep.subr.mxu0 0.0
    %7206 = vmatpush1.msra.mxu0 0.0
    %7207 = vmatprep.subr.mxu0 0.0
    %7208 = vmatpush1.msra.mxu0 0.0
    %7209 = vmatprep.subr.mxu0 0.0
    %7210 = vmatpush1.msra.mxu0 0.0
    %7211 = vmatprep.subr.mxu0 0.0
    %7212 = vmatpush1.msra.mxu0 0.0
    %7213 = vmatprep.subr.mxu0 0.0
    %7214 = vmatpush1.msra.mxu0 0.0
    %7215 = vmatprep.subr.mxu0 0.0
    %7216 = vmatpush1.msra.mxu0 0.0
    %7217 = vmatprep.subr.mxu0 0.0
    %7218 = vmatpush1.msra.mxu0 0.0
    %7219 = vmatprep.subr.mxu0 0.0
    %7220 = vmatpush1.msra.mxu0 0.0
    %7221 = vmatprep.subr.mxu0 0.0
    %7222 = vmatpush1.msra.mxu0 0.0
    %7223 = vmatprep.subr.mxu0 0.0
    %7224 = vmatpush1.msra.mxu0 0.0
    %7225 = vmatprep.subr.mxu0 0.0
    %7226 = vmatpush1.msra.mxu0 0.0
    %7227 = vmatprep.mubr.f32.mxu0 0.0
    %7228 = vmatmul.mubr.f32.gmra.mrb[0].mxu0 %v675
    %v7229 = vpop.f32.mrb[0].mxu0
    %v7230 = vadd.f32 %v7149, %v7229
    %v7231 = vpop.f32.mrb[0].mxu0
    %7232 = vmatprep.mubr.f32.mxu0 0.0
    %7233 = vmatmul.mubr.f32.gmra.mrb[0].mxu0 %v678
    %v7234 = vpop.f32.mrb[0].mxu0
    %v7235 = vadd.f32 %v7152, %v7234
    %v7236 = vpop.f32.mrb[0].mxu0
    %7237 = vmatprep.mubr.f32.mxu0 0.0
    %7238 = vmatmul.mubr.f32.gmra.mrb[0].mxu0 %v681
    %v7239 = vpop.f32.mrb[0].mxu0
    %v7240 = vadd.f32 %v7157, %v7239
    %v7241 = vpop.f32.mrb[0].mxu0
    %7242 = vmatprep.mubr.f32.mxu0 0.0
    %7243 = vmatmul.mubr.f32.gmra.mrb[0].mxu0 %v684
    %v7244 = vpop.f32.mrb[0].mxu0
    %v7245 = vadd.f32 %v7160, %v7244
    %v7246 = vpop.f32.mrb[0].mxu0
    %7247 = vdwg.mxu0
    %v7248 = vld [vmem:[%s27] sm:$0x1]
    %v7250 = vlaneseq
    %v7251 = vshrl.u32 %v7250, 7
    %v7252 = vsub.s32 0, %v7251
    %v7253 = vrot.slane %v7248, %v7252
    %v7255 = vadd.f32 %v7230, %v7253
    %v7256 = vadd.f32 %v7235, %v7253
    %v7257 = vadd.f32 %v7240, %v7253
    %v7258 = vadd.f32 %v7245, %v7253
    %v7259 = vmax.f32 %v7255, 0.0
    %v7260 = vmax.f32 %v7256, 0.0
    %v7261 = vmax.f32 %v7257, 0.0
    %v7262 = vmax.f32 %v7258, 0.0
    %v7263 = vld [vmem:[%s29] sm:$0x1]
    %v7265 = vlaneseq
    %v7266 = vshrl.u32 %v7265, 7
    %v7267 = vsub.s32 0, %v7266
    %v7268 = vrot.slane %v7263, %v7267
    %v7270 = vmul.f32 %v7259, %v7268
    %v7271 = vmul.f32 %v7260, %v7268
    %v7272 = vmul.f32 %v7261, %v7268
    %v7273 = vmul.f32 %v7262, %v7268
    %v7274 = vld [vmem:[%s31] sm:$0x1]
    %v7276 = vlaneseq
    %v7277 = vshrl.u32 %v7276, 7
    %v7278 = vsub.s32 0, %v7277
    %v7279 = vrot.slane %v7274, %v7278
    %v7281 = vadd.f32 %v7270, %v7279
    %v7282 = vadd.f32 %v7271, %v7279
    %v7283 = vadd.f32 %v7272, %v7279
    %v7284 = vadd.f32 %v7273, %v7279
    %v7285 = vld [vmem:[%s33] sm:$0xff]
    %v7286 = vld [vmem:[%s33 + $0x8] sm:$0xff]
    %v7287 = vld [vmem:[%s33 + $0x10] sm:$0xff]
    %v7288 = vld [vmem:[%s33 + $0x18] sm:$0xff]
    %v7289 = vld [vmem:[%s33 + $0x20] sm:$0xff]
    %v7290 = vld [vmem:[%s33 + $0x28] sm:$0xff]
    %v7291 = vld [vmem:[%s33 + $0x30] sm:$0xff]
    %v7292 = vld [vmem:[%s33 + $0x38] sm:$0xff]
    %v7293 = vld [vmem:[%s33 + $0x40] sm:$0xff]
    %v7294 = vld [vmem:[%s33 + $0x48] sm:$0xff]
    %v7295 = vld [vmem:[%s33 + $0x50] sm:$0xff]
    %v7296 = vld [vmem:[%s33 + $0x58] sm:$0xff]
    %v7297 = vld [vmem:[%s33 + $0x60] sm:$0xff]
    %v7298 = vld [vmem:[%s33 + $0x68] sm:$0xff]
    %v7299 = vld [vmem:[%s33 + $0x70] sm:$0xff]
    %v7300 = vld [vmem:[%s33 + $0x78] sm:$0xff]
    %v7301 = vpack.c.bf16 %v7282, %v7281
    %v7302 = vpack.c.bf16 %v7284, %v7283
    %v7303 = vld [vmem:[%s35] sm:$0xff]
    %v7304 = vld [vmem:[%s35 + $0x8] sm:$0xff]
    %v7305 = vld [vmem:[%s35 + $0x10] sm:$0xff]
    %v7306 = vld [vmem:[%s35 + $0x18] sm:$0xff]
    %v7307 = vld [vmem:[%s35 + $0x20] sm:$0xff]
    %v7308 = vld [vmem:[%s35 + $0x28] sm:$0xff]
    %v7309 = vld [vmem:[%s35 + $0x30] sm:$0xff]
    %v7310 = vld [vmem:[%s35 + $0x38] sm:$0xff]
    %v7311 = vld [vmem:[%s35 + $0x40] sm:$0xff]
    %v7312 = vld [vmem:[%s35 + $0x48] sm:$0xff]
    %v7313 = vld [vmem:[%s35 + $0x50] sm:$0xff]
    %v7314 = vld [vmem:[%s35 + $0x58] sm:$0xff]
    %v7315 = vld [vmem:[%s35 + $0x60] sm:$0xff]
    %v7316 = vld [vmem:[%s35 + $0x68] sm:$0xff]
    %v7317 = vld [vmem:[%s35 + $0x70] sm:$0xff]
    %v7318 = vld [vmem:[%s35 + $0x78] sm:$0xff]
    %v7335 = vunpack.c.l.b16 %v7303
    %v7336 = vunpack.c.h.b16 %v7303
    %v7337 = vunpack.c.l.b16 %v7304
    %v7338 = vunpack.c.h.b16 %v7304
    %v7339 = vunpack.c.l.b16 %v7305
    %v7340 = vunpack.c.h.b16 %v7305
    %v7341 = vunpack.c.l.b16 %v7306
    %v7342 = vunpack.c.h.b16 %v7306
    %v7343 = vunpack.c.l.b16 %v7307
    %v7344 = vunpack.c.h.b16 %v7307
    %v7345 = vunpack.c.l.b16 %v7308
    %v7346 = vunpack.c.h.b16 %v7308
    %v7347 = vunpack.c.l.b16 %v7309
    %v7348 = vunpack.c.h.b16 %v7309
    %v7349 = vunpack.c.l.b16 %v7310
    %v7350 = vunpack.c.h.b16 %v7310
    %v7351 = vunpack.c.l.b16 %v7311
    %v7352 = vunpack.c.h.b16 %v7311
    %v7353 = vunpack.c.l.b16 %v7312
    %v7354 = vunpack.c.h.b16 %v7312
    %v7355 = vunpack.c.l.b16 %v7313
    %v7356 = vunpack.c.h.b16 %v7313
    %v7357 = vunpack.c.l.b16 %v7314
    %v7358 = vunpack.c.h.b16 %v7314
    %v7359 = vunpack.c.l.b16 %v7315
    %v7360 = vunpack.c.h.b16 %v7315
    %v7361 = vunpack.c.l.b16 %v7316
    %v7362 = vunpack.c.h.b16 %v7316
    %v7363 = vunpack.c.l.b16 %v7317
    %v7364 = vunpack.c.h.b16 %v7317
    %v7365 = vunpack.c.l.b16 %v7318
    %v7366 = vunpack.c.h.b16 %v7318
    %v7367 = vpack.c.b16 %v7337, %v7335
    %v7368 = vpack.c.b16 %v7338, %v7336
    %v7369 = vpack.c.b16 %v7341, %v7339
    %v7370 = vpack.c.b16 %v7342, %v7340
    %v7371 = vpack.c.b16 %v7345, %v7343
    %v7372 = vpack.c.b16 %v7346, %v7344
    %v7373 = vpack.c.b16 %v7349, %v7347
    %v7374 = vpack.c.b16 %v7350, %v7348
    %v7375 = vpack.c.b16 %v7353, %v7351
    %v7376 = vpack.c.b16 %v7354, %v7352
    %v7377 = vpack.c.b16 %v7357, %v7355
    %v7378 = vpack.c.b16 %v7358, %v7356
    %v7379 = vpack.c.b16 %v7361, %v7359
    %v7380 = vpack.c.b16 %v7362, %v7360
    %v7381 = vpack.c.b16 %v7365, %v7363
    %v7382 = vpack.c.b16 %v7366, %v7364
    %7399 = vmatprep.subr.bf16.mxu0 %v7368
    %7400 = vmatpush1.bf16.msra.mxu0 %v7367
    %7401 = vmatprep.subr.bf16.mxu0 %v7370
    %7402 = vmatpush1.bf16.msra.mxu0 %v7369
    %7403 = vmatprep.subr.bf16.mxu0 %v7372
    %7404 = vmatpush1.bf16.msra.mxu0 %v7371
    %7405 = vmatprep.subr.bf16.mxu0 %v7374
    %7406 = vmatpush1.bf16.msra.mxu0 %v7373
    %7407 = vmatprep.subr.bf16.mxu0 %v7376
    %7408 = vmatpush1.bf16.msra.mxu0 %v7375
    %7409 = vmatprep.subr.bf16.mxu0 %v7378
    %7410 = vmatpush1.bf16.msra.mxu0 %v7377
    %7411 = vmatprep.subr.bf16.mxu0 %v7380
    %7412 = vmatpush1.bf16.msra.mxu0 %v7379
    %7413 = vmatprep.subr.bf16.mxu0 %v7382
    %7414 = vmatpush1.bf16.msra.mxu0 %v7381
    %7415 = vmatprep.subr.bf16.mxu0 0
    %7416 = vmatpush1.bf16.msra.mxu0 0
    %7417 = vmatprep.subr.bf16.mxu0 0
    %7418 = vmatpush1.bf16.msra.mxu0 0
    %7419 = vmatprep.subr.bf16.mxu0 0
    %7420 = vmatpush1.bf16.msra.mxu0 0
    %7421 = vmatprep.subr.bf16.mxu0 0
    %7422 = vmatpush1.bf16.msra.mxu0 0
    %7423 = vmatprep.subr.bf16.mxu0 0
    %7424 = vmatpush1.bf16.msra.mxu0 0
    %7425 = vmatprep.subr.bf16.mxu0 0
    %7426 = vmatpush1.bf16.msra.mxu0 0
    %7427 = vmatprep.subr.bf16.mxu0 0
    %7428 = vmatpush1.bf16.msra.mxu0 0
    %7429 = vmatprep.subr.bf16.mxu0 0
    %7430 = vmatpush1.bf16.msra.mxu0 0
    %7431 = vmatprep.mubr.bf16.mxu0 0
    %7432 = vmatmul.mubr.bf16.gmra.mrb[0].mxu0 %v7301
    %v7433 = vpop.f32.mrb[0].mxu0
    %v7434 = vadd.f32 0.0, %v7433
    %v7435 = vpop.f32.mrb[0].mxu0
    %v7436 = vadd.f32 0.0, %v7435
    %v7437 = vpop.f32.mrb[0].mxu0
    %v7438 = vadd.f32 0.0, %v7437
    %v7439 = vpop.f32.mrb[0].mxu0
    %v7440 = vadd.f32 0.0, %v7439
    %7441 = vmatprep.mubr.bf16.mxu0 0
    %7442 = vmatmul.mubr.bf16.gmra.mrb[0].mxu0 %v7302
    %v7443 = vpop.f32.mrb[0].mxu0
    %v7444 = vadd.f32 0.0, %v7443
    %v7445 = vpop.f32.mrb[0].mxu0
    %v7446 = vadd.f32 0.0, %v7445
    %v7447 = vpop.f32.mrb[0].mxu0
    %v7448 = vadd.f32 0.0, %v7447
    %v7449 = vpop.f32.mrb[0].mxu0
    %v7450 = vadd.f32 0.0, %v7449
    %7451 = vdwg.mxu0
    %v7468 = vunpack.c.l.b16 %v7285
    %v7469 = vunpack.c.h.b16 %v7285
    %v7470 = vunpack.c.l.b16 %v7286
    %v7471 = vunpack.c.h.b16 %v7286
    %v7472 = vunpack.c.l.b16 %v7287
    %v7473 = vunpack.c.h.b16 %v7287
    %v7474 = vunpack.c.l.b16 %v7288
    %v7475 = vunpack.c.h.b16 %v7288
    %v7476 = vunpack.c.l.b16 %v7289
    %v7477 = vunpack.c.h.b16 %v7289
    %v7478 = vunpack.c.l.b16 %v7290
    %v7479 = vunpack.c.h.b16 %v7290
    %v7480 = vunpack.c.l.b16 %v7291
    %v7481 = vunpack.c.h.b16 %v7291
    %v7482 = vunpack.c.l.b16 %v7292
    %v7483 = vunpack.c.h.b16 %v7292
    %v7484 = vunpack.c.l.b16 %v7293
    %v7485 = vunpack.c.h.b16 %v7293
    %v7486 = vunpack.c.l.b16 %v7294
    %v7487 = vunpack.c.h.b16 %v7294
    %v7488 = vunpack.c.l.b16 %v7295
    %v7489 = vunpack.c.h.b16 %v7295
    %v7490 = vunpack.c.l.b16 %v7296
    %v7491 = vunpack.c.h.b16 %v7296
    %v7492 = vunpack.c.l.b16 %v7297
    %v7493 = vunpack.c.h.b16 %v7297
    %v7494 = vunpack.c.l.b16 %v7298
    %v7495 = vunpack.c.h.b16 %v7298
    %v7496 = vunpack.c.l.b16 %v7299
    %v7497 = vunpack.c.h.b16 %v7299
    %v7498 = vunpack.c.l.b16 %v7300
    %v7499 = vunpack.c.h.b16 %v7300
    %v7500 = vpack.c.b16 %v7470, %v7468
    %v7501 = vpack.c.b16 %v7471, %v7469
    %v7502 = vpack.c.b16 %v7474, %v7472
    %v7503 = vpack.c.b16 %v7475, %v7473
    %v7504 = vpack.c.b16 %v7478, %v7476
    %v7505 = vpack.c.b16 %v7479, %v7477
    %v7506 = vpack.c.b16 %v7482, %v7480
    %v7507 = vpack.c.b16 %v7483, %v7481
    %v7508 = vpack.c.b16 %v7486, %v7484
    %v7509 = vpack.c.b16 %v7487, %v7485
    %v7510 = vpack.c.b16 %v7490, %v7488
    %v7511 = vpack.c.b16 %v7491, %v7489
    %v7512 = vpack.c.b16 %v7494, %v7492
    %v7513 = vpack.c.b16 %v7495, %v7493
    %v7514 = vpack.c.b16 %v7498, %v7496
    %v7515 = vpack.c.b16 %v7499, %v7497
    %7532 = vmatprep.subr.bf16.mxu0 %v7501
    %7533 = vmatpush1.bf16.msra.mxu0 %v7500
    %7534 = vmatprep.subr.bf16.mxu0 %v7503
    %7535 = vmatpush1.bf16.msra.mxu0 %v7502
    %7536 = vmatprep.subr.bf16.mxu0 %v7505
    %7537 = vmatpush1.bf16.msra.mxu0 %v7504
    %7538 = vmatprep.subr.bf16.mxu0 %v7507
    %7539 = vmatpush1.bf16.msra.mxu0 %v7506
    %7540 = vmatprep.subr.bf16.mxu0 %v7509
    %7541 = vmatpush1.bf16.msra.mxu0 %v7508
    %7542 = vmatprep.subr.bf16.mxu0 %v7511
    %7543 = vmatpush1.bf16.msra.mxu0 %v7510
    %7544 = vmatprep.subr.bf16.mxu0 %v7513
    %7545 = vmatpush1.bf16.msra.mxu0 %v7512
    %7546 = vmatprep.subr.bf16.mxu0 %v7515
    %7547 = vmatpush1.bf16.msra.mxu0 %v7514
    %7548 = vmatprep.subr.bf16.mxu0 0
    %7549 = vmatpush1.bf16.msra.mxu0 0
    %7550 = vmatprep.subr.bf16.mxu0 0
    %7551 = vmatpush1.bf16.msra.mxu0 0
    %7552 = vmatprep.subr.bf16.mxu0 0
    %7553 = vmatpush1.bf16.msra.mxu0 0
    %7554 = vmatprep.subr.bf16.mxu0 0
    %7555 = vmatpush1.bf16.msra.mxu0 0
    %7556 = vmatprep.subr.bf16.mxu0 0
    %7557 = vmatpush1.bf16.msra.mxu0 0
    %7558 = vmatprep.subr.bf16.mxu0 0
    %7559 = vmatpush1.bf16.msra.mxu0 0
    %7560 = vmatprep.subr.bf16.mxu0 0
    %7561 = vmatpush1.bf16.msra.mxu0 0
    %7562 = vmatprep.subr.bf16.mxu0 0
    %7563 = vmatpush1.bf16.msra.mxu0 0
    %7564 = vmatprep.mubr.bf16.mxu0 0
    %7565 = vmatmul.mubr.bf16.gmra.mrb[0].mxu0 %v808
    %v7566 = vpop.f32.mrb[0].mxu0
    %v7567 = vadd.f32 %v7434, %v7566
    %v7568 = vpop.f32.mrb[0].mxu0
    %v7569 = vadd.f32 %v7436, %v7568
    %v7570 = vpop.f32.mrb[0].mxu0
    %v7571 = vadd.f32 %v7438, %v7570
    %v7572 = vpop.f32.mrb[0].mxu0
    %v7573 = vadd.f32 %v7440, %v7572
    %7574 = vmatprep.mubr.bf16.mxu0 0
    %7575 = vmatmul.mubr.bf16.gmra.mrb[0].mxu0 %v809
    %v7576 = vpop.f32.mrb[0].mxu0
    %v7577 = vadd.f32 %v7444, %v7576
    %v7578 = vpop.f32.mrb[0].mxu0
    %v7579 = vadd.f32 %v7446, %v7578
    %v7580 = vpop.f32.mrb[0].mxu0
    %v7581 = vadd.f32 %v7448, %v7580
    %v7582 = vpop.f32.mrb[0].mxu0
    %v7583 = vadd.f32 %v7450, %v7582
    %7584 = vdwg.mxu0
    %v7585 = vld [vmem:[%s37] sm:$0x3]
    %v7587 = vlaneseq
    %v7588 = vshrl.u32 %v7587, 7
    %v7589 = vsub.s32 0, %v7588
    %v7590 = vrot.slane %v7585, %v7589
    %v7591 = vlaneseq
    %v7592 = vshrl.u32 %v7591, 7
    %v7593 = vsub.s32 1, %v7592
    %v7594 = vrot.slane %v7585, %v7593
    %v7597 = vadd.f32 %v7567, %v7590
    %v7598 = vadd.f32 %v7569, %v7594
    %v7599 = vadd.f32 %v7571, %v7590
    %v7600 = vadd.f32 %v7573, %v7594
    %v7601 = vadd.f32 %v7577, %v7590
    %v7602 = vadd.f32 %v7579, %v7594
    %v7603 = vadd.f32 %v7581, %v7590
    %v7604 = vadd.f32 %v7583, %v7594
    %v7605 = vmax.f32 %v7597, 0.0
    %v7606 = vmax.f32 %v7598, 0.0
    %v7607 = vmax.f32 %v7599, 0.0
    %v7608 = vmax.f32 %v7600, 0.0
    %v7609 = vmax.f32 %v7601, 0.0
    %v7610 = vmax.f32 %v7602, 0.0
    %v7611 = vmax.f32 %v7603, 0.0
    %v7612 = vmax.f32 %v7604, 0.0
    %v7613 = vld [vmem:[%s39] sm:$0x3]
    %v7615 = vlaneseq
    %v7616 = vshrl.u32 %v7615, 7
    %v7617 = vsub.s32 0, %v7616
    %v7618 = vrot.slane %v7613, %v7617
    %v7619 = vlaneseq
    %v7620 = vshrl.u32 %v7619, 7
    %v7621 = vsub.s32 1, %v7620
    %v7622 = vrot.slane %v7613, %v7621
    %v7625 = vmul.f32 %v7605, %v7618
    %v7626 = vmul.f32 %v7606, %v7622
    %v7627 = vmul.f32 %v7607, %v7618
    %v7628 = vmul.f32 %v7608, %v7622
    %v7629 = vmul.f32 %v7609, %v7618
    %v7630 = vmul.f32 %v7610, %v7622
    %v7631 = vmul.f32 %v7611, %v7618
    %v7632 = vmul.f32 %v7612, %v7622
    %v7633 = vld [vmem:[%s41] sm:$0x3]
    %v7635 = vlaneseq
    %v7636 = vshrl.u32 %v7635, 7
    %v7637 = vsub.s32 0, %v7636
    %v7638 = vrot.slane %v7633, %v7637
    %v7639 = vlaneseq
    %v7640 = vshrl.u32 %v7639, 7
    %v7641 = vsub.s32 1, %v7640
    %v7642 = vrot.slane %v7633, %v7641
    %v7645 = vadd.f32 %v7625, %v7638
    %v7646 = vadd.f32 %v7626, %v7642
    %v7647 = vadd.f32 %v7627, %v7638
    %v7648 = vadd.f32 %v7628, %v7642
    %v7649 = vadd.f32 %v7629, %v7638
    %v7650 = vadd.f32 %v7630, %v7642
    %v7651 = vadd.f32 %v7631, %v7638
    %v7652 = vadd.f32 %v7632, %v7642
    %v7653 = vld [vmem:[%s11] sm:$0xff]
    %v7654 = vld [vmem:[%s11 + $0x8] sm:$0xff]
    %v7655 = vld [vmem:[%s11 + $0x10] sm:$0xff]
    %v7656 = vld [vmem:[%s11 + $0x18] sm:$0xff]
    %vm7657 = vcmp.gt.f32.partialorder %v7653, 0.5
    %vm7658 = vcmp.gt.f32.partialorder %v7654, 0.5
    %vm7659 = vcmp.gt.f32.partialorder %v7655, 0.5
    %vm7660 = vcmp.gt.f32.partialorder %v7656, 0.5
    %v7661 = vsel %vm7657, 1, 0
    %v7662 = vsel %vm7658, 1, 0
    %v7663 = vsel %vm7659, 1, 0
    %v7664 = vsel %vm7660, 1, 0
    %7665 = vset.pattern.permute.xlu0 0
    %7666 = vperm.xlu0 %7665, %v7661
    %v7667 = vpop.permute.xlu0 %7666
    %7668 = vset.pattern.permute.xlu0 0
    %7669 = vperm.xlu0 %7668, %v7662
    %v7670 = vpop.permute.xlu0 %7669
    %7671 = vset.pattern.permute.xlu0 0
    %7672 = vperm.xlu0 %7671, %v7663
    %v7673 = vpop.permute.xlu0 %7672
    %7674 = vset.pattern.permute.xlu0 0
    %7675 = vperm.xlu0 %7674, %v7664
    %v7676 = vpop.permute.xlu0 %7675
    %vm7677 = vcmp.eq.s32.totalorder %v7667, 1
    %vm7678 = vcmp.eq.s32.totalorder %v7670, 1
    %vm7679 = vcmp.eq.s32.totalorder %v7673, 1
    %vm7680 = vcmp.eq.s32.totalorder %v7676, 1
    %v7681 = vsel %vm7677, %v7645, -1e+30
    %v7682 = vsel %vm7677, %v7646, -1e+30
    %v7683 = vsel %vm7678, %v7647, -1e+30
    %v7684 = vsel %vm7678, %v7648, -1e+30
    %v7685 = vsel %vm7679, %v7649, -1e+30
    %v7686 = vsel %vm7679, %v7650, -1e+30
    %v7687 = vsel %vm7680, %v7651, -1e+30
    %v7688 = vsel %vm7680, %v7652, -1e+30
    %v7689 = vmax.f32 %v7681, %v7685
    %v7690 = vmax.f32 %v7683, %v7687
    %v7691 = vmax.f32 %v7689, %v7690
    %v7692 = vrot.slane %v7691, 4
    %v7693 = vmax.f32 %v7691, %v7692
    %v7694 = vrot.slane %v7693, 2
    %v7695 = vmax.f32 %v7693, %v7694
    %v7696 = vrot.slane %v7695, 1
    %v7697 = vmax.f32 %v7695, %v7696
    %v7698 = vmax.f32 %v7682, %v7686
    %v7699 = vmax.f32 %v7684, %v7688
    %v7700 = vmax.f32 %v7698, %v7699
    %v7701 = vrot.slane %v7700, 4
    %v7702 = vmax.f32 %v7700, %v7701
    %v7703 = vrot.slane %v7702, 2
    %v7704 = vmax.f32 %v7702, %v7703
    %v7705 = vrot.slane %v7704, 1
    %v7706 = vmax.f32 %v7704, %v7705
    %v7709 = vcombine.low %v7697, %v7706
    %v7711 = vunpack.c.l.s4 1966171168
    %v7712 = vunpack.c.0.s8 %v7711
    %v7713 = vlaneseq
    %v7714 = vshrl.u32 %v7713, 7
    %v7715 = vsub.s32 %v7712, %v7714
    %v7716 = vrot.slane %v7709, %v7715
    %v7718 = vunpack.c.l.s4 1966171168
    %v7719 = vunpack.c.0.s8 %v7718
    %v7720 = vlaneseq
    %v7721 = vshrl.u32 %v7720, 7
    %v7722 = vsub.s32 %v7719, %v7721
    %v7723 = vrot.slane %v7716, %v7722
    %v7725 = vlaneseq
    %vm7726 = vcmp.ge.s32.totalorder %v7725, 0
    %vm7727 = vcmp.lt.s32.totalorder %v7725, 256
    %vm7728 = vmand %vm7726, %vm7727
    %7729 = vst.msk [vmem:[#allocation3] ss:$2 sm:$0x3] %vm7728, %v7723
    %7730 = vset.pattern.permute.xlu0 1
    %7731 = vperm.xlu0 %7730, %v7661
    %v7732 = vpop.permute.xlu0 %7731
    %7733 = vset.pattern.permute.xlu0 1
    %7734 = vperm.xlu0 %7733, %v7662
    %v7735 = vpop.permute.xlu0 %7734
    %7736 = vset.pattern.permute.xlu0 1
    %7737 = vperm.xlu0 %7736, %v7663
    %v7738 = vpop.permute.xlu0 %7737
    %7739 = vset.pattern.permute.xlu0 1
    %7740 = vperm.xlu0 %7739, %v7664
    %v7741 = vpop.permute.xlu0 %7740
    %vm7742 = vcmp.eq.s32.totalorder %v7732, 1
    %vm7743 = vcmp.eq.s32.totalorder %v7735, 1
    %vm7744 = vcmp.eq.s32.totalorder %v7738, 1
    %vm7745 = vcmp.eq.s32.totalorder %v7741, 1
    %v7746 = vsel %vm7742, %v7645, -1e+30
    %v7747 = vsel %vm7742, %v7646, -1e+30
    %v7748 = vsel %vm7743, %v7647, -1e+30
    %v7749 = vsel %vm7743, %v7648, -1e+30
    %v7750 = vsel %vm7744, %v7649, -1e+30
    %v7751 = vsel %vm7744, %v7650, -1e+30
    %v7752 = vsel %vm7745, %v7651, -1e+30
    %v7753 = vsel %vm7745, %v7652, -1e+30
    %v7754 = vmax.f32 %v7746, %v7750
    %v7755 = vmax.f32 %v7748, %v7752
    %v7756 = vmax.f32 %v7754, %v7755
    %v7757 = vrot.slane %v7756, 4
    %v7758 = vmax.f32 %v7756, %v7757
    %v7759 = vrot.slane %v7758, 2
    %v7760 = vmax.f32 %v7758, %v7759
    %v7761 = vrot.slane %v7760, 1
    %v7762 = vmax.f32 %v7760, %v7761
    %v7763 = vmax.f32 %v7747, %v7751
    %v7764 = vmax.f32 %v7749, %v7753
    %v7765 = vmax.f32 %v7763, %v7764
    %v7766 = vrot.slane %v7765, 4
    %v7767 = vmax.f32 %v7765, %v7766
    %v7768 = vrot.slane %v7767, 2
    %v7769 = vmax.f32 %v7767, %v7768
    %v7770 = vrot.slane %v7769, 1
    %v7771 = vmax.f32 %v7769, %v7770
    %v7774 = vcombine.low %v7762, %v7771
    %v7776 = vunpack.c.l.s4 1966171168
    %v7777 = vunpack.c.0.s8 %v7776
    %v7778 = vlaneseq
    %v7779 = vshrl.u32 %v7778, 7
    %v7780 = vsub.s32 %v7777, %v7779
    %v7781 = vrot.slane %v7774, %v7780
    %v7783 = vunpack.c.l.s4 1966171168
    %v7784 = vunpack.c.0.s8 %v7783
    %v7785 = vlaneseq
    %v7786 = vshrl.u32 %v7785, 7
    %v7787 = vsub.s32 %v7784, %v7786
    %v7788 = vrot.slane %v7781, %v7787
    %s7790 = scalar_lea.vmem [#allocation3], 1
    %7791 = vst.msk [vmem:[%s7790] ss:$2 sm:$0x3] %vm7728, %v7788
    %v7792 = vld [vmem:[#allocation3] sm:$0xf]
    %v7795 = vunpack.c.l.s4 1983009808
    %v7796 = vunpack.c.0.s8 %v7795
    %v7797 = vlaneseq
    %v7798 = vshrl.u32 %v7797, 7
    %v7799 = vsub.s32 %v7796, %v7798
    %v7800 = vrot.slane %v7792, %v7799
    %v7801 = vcombine.high %v7800, %v7800
    %v7804 = vpack.c.bf16 %v7800, %v7800
    %v7805 = vpack.c.bf16 %v7801, %v7801
    %v7806 = vld [vmem:[%s43] sm:$0xff]
    %v7807 = vld [vmem:[%s43 + $0x8] sm:$0xff]
    %v7808 = vld [vmem:[%s43 + $0x10] sm:$0xff]
    %v7809 = vld [vmem:[%s43 + $0x18] sm:$0xff]
    %v7810 = vld [vmem:[%s43 + $0x20] sm:$0xff]
    %v7811 = vld [vmem:[%s43 + $0x28] sm:$0xff]
    %v7812 = vld [vmem:[%s43 + $0x30] sm:$0xff]
    %v7813 = vld [vmem:[%s43 + $0x38] sm:$0xff]
    %v7814 = vld [vmem:[%s43 + $0x40] sm:$0xff]
    %v7815 = vld [vmem:[%s43 + $0x48] sm:$0xff]
    %v7816 = vld [vmem:[%s43 + $0x50] sm:$0xff]
    %v7817 = vld [vmem:[%s43 + $0x58] sm:$0xff]
    %v7818 = vld [vmem:[%s43 + $0x60] sm:$0xff]
    %v7819 = vld [vmem:[%s43 + $0x68] sm:$0xff]
    %v7820 = vld [vmem:[%s43 + $0x70] sm:$0xff]
    %v7821 = vld [vmem:[%s43 + $0x78] sm:$0xff]
    %v7822 = vld [vmem:[%s43 + $0x80] sm:$0xff]
    %v7823 = vld [vmem:[%s43 + $0x88] sm:$0xff]
    %v7824 = vld [vmem:[%s43 + $0x90] sm:$0xff]
    %v7825 = vld [vmem:[%s43 + $0x98] sm:$0xff]
    %v7826 = vld [vmem:[%s43 + $0xa0] sm:$0xff]
    %v7827 = vld [vmem:[%s43 + $0xa8] sm:$0xff]
    %v7828 = vld [vmem:[%s43 + $0xb0] sm:$0xff]
    %v7829 = vld [vmem:[%s43 + $0xb8] sm:$0xff]
    %v7830 = vld [vmem:[%s43 + $0xc0] sm:$0xff]
    %v7831 = vld [vmem:[%s43 + $0xc8] sm:$0xff]
    %v7832 = vld [vmem:[%s43 + $0xd0] sm:$0xff]
    %v7833 = vld [vmem:[%s43 + $0xd8] sm:$0xff]
    %v7834 = vld [vmem:[%s43 + $0xe0] sm:$0xff]
    %v7835 = vld [vmem:[%s43 + $0xe8] sm:$0xff]
    %v7836 = vld [vmem:[%s43 + $0xf0] sm:$0xff]
    %v7837 = vld [vmem:[%s43 + $0xf8] sm:$0xff]
    %v7838 = vld [vmem:[%s45] sm:$0x3]
    %v7840 = vlaneseq
    %v7841 = vshrl.u32 %v7840, 7
    %v7842 = vsub.s32 0, %v7841
    %v7843 = vrot.slane %v7838, %v7842
    %v7844 = vlaneseq
    %v7845 = vshrl.u32 %v7844, 7
    %v7846 = vsub.s32 1, %v7845
    %v7847 = vrot.slane %v7838, %v7846
    %v7882 = vunpack.c.l.b16 %v7806
    %v7883 = vunpack.c.h.b16 %v7806
    %v7884 = vunpack.c.l.b16 %v7807
    %v7885 = vunpack.c.h.b16 %v7807
    %v7886 = vunpack.c.l.b16 %v7808
    %v7887 = vunpack.c.h.b16 %v7808
    %v7888 = vunpack.c.l.b16 %v7809
    %v7889 = vunpack.c.h.b16 %v7809
    %v7890 = vunpack.c.l.b16 %v7810
    %v7891 = vunpack.c.h.b16 %v7810
    %v7892 = vunpack.c.l.b16 %v7811
    %v7893 = vunpack.c.h.b16 %v7811
    %v7894 = vunpack.c.l.b16 %v7812
    %v7895 = vunpack.c.h.b16 %v7812
    %v7896 = vunpack.c.l.b16 %v7813
    %v7897 = vunpack.c.h.b16 %v7813
    %v7898 = vunpack.c.l.b16 %v7814
    %v7899 = vunpack.c.h.b16 %v7814
    %v7900 = vunpack.c.l.b16 %v7815
    %v7901 = vunpack.c.h.b16 %v7815
    %v7902 = vunpack.c.l.b16 %v7816
    %v7903 = vunpack.c.h.b16 %v7816
    %v7904 = vunpack.c.l.b16 %v7817
    %v7905 = vunpack.c.h.b16 %v7817
    %v7906 = vunpack.c.l.b16 %v7818
    %v7907 = vunpack.c.h.b16 %v7818
    %v7908 = vunpack.c.l.b16 %v7819
    %v7909 = vunpack.c.h.b16 %v7819
    %v7910 = vunpack.c.l.b16 %v7820
    %v7911 = vunpack.c.h.b16 %v7820
    %v7912 = vunpack.c.l.b16 %v7821
    %v7913 = vunpack.c.h.b16 %v7821
    %v7914 = vunpack.c.l.b16 %v7822
    %v7915 = vunpack.c.h.b16 %v7822
    %v7916 = vunpack.c.l.b16 %v7823
    %v7917 = vunpack.c.h.b16 %v7823
    %v7918 = vunpack.c.l.b16 %v7824
    %v7919 = vunpack.c.h.b16 %v7824
    %v7920 = vunpack.c.l.b16 %v7825
    %v7921 = vunpack.c.h.b16 %v7825
    %v7922 = vunpack.c.l.b16 %v7826
    %v7923 = vunpack.c.h.b16 %v7826
    %v7924 = vunpack.c.l.b16 %v7827
    %v7925 = vunpack.c.h.b16 %v7827
    %v7926 = vunpack.c.l.b16 %v7828
    %v7927 = vunpack.c.h.b16 %v7828
    %v7928 = vunpack.c.l.b16 %v7829
    %v7929 = vunpack.c.h.b16 %v7829
    %v7930 = vunpack.c.l.b16 %v7830
    %v7931 = vunpack.c.h.b16 %v7830
    %v7932 = vunpack.c.l.b16 %v7831
    %v7933 = vunpack.c.h.b16 %v7831
    %v7934 = vunpack.c.l.b16 %v7832
    %v7935 = vunpack.c.h.b16 %v7832
    %v7936 = vunpack.c.l.b16 %v7833
    %v7937 = vunpack.c.h.b16 %v7833
    %v7938 = vunpack.c.l.b16 %v7834
    %v7939 = vunpack.c.h.b16 %v7834
    %v7940 = vunpack.c.l.b16 %v7835
    %v7941 = vunpack.c.h.b16 %v7835
    %v7942 = vunpack.c.l.b16 %v7836
    %v7943 = vunpack.c.h.b16 %v7836
    %v7944 = vunpack.c.l.b16 %v7837
    %v7945 = vunpack.c.h.b16 %v7837
    %v7946 = vpack.c.b16 %v7884, %v7882
    %v7947 = vpack.c.b16 %v7885, %v7883
    %v7948 = vpack.c.b16 %v7888, %v7886
    %v7949 = vpack.c.b16 %v7889, %v7887
    %v7950 = vpack.c.b16 %v7892, %v7890
    %v7951 = vpack.c.b16 %v7893, %v7891
    %v7952 = vpack.c.b16 %v7896, %v7894
    %v7953 = vpack.c.b16 %v7897, %v7895
    %v7954 = vpack.c.b16 %v7900, %v7898
    %v7955 = vpack.c.b16 %v7901, %v7899
    %v7956 = vpack.c.b16 %v7904, %v7902
    %v7957 = vpack.c.b16 %v7905, %v7903
    %v7958 = vpack.c.b16 %v7908, %v7906
    %v7959 = vpack.c.b16 %v7909, %v7907
    %v7960 = vpack.c.b16 %v7912, %v7910
    %v7961 = vpack.c.b16 %v7913, %v7911
    %v7962 = vpack.c.b16 %v7916, %v7914
    %v7963 = vpack.c.b16 %v7917, %v7915
    %v7964 = vpack.c.b16 %v7920, %v7918
    %v7965 = vpack.c.b16 %v7921, %v7919
    %v7966 = vpack.c.b16 %v7924, %v7922
    %v7967 = vpack.c.b16 %v7925, %v7923
    %v7968 = vpack.c.b16 %v7928, %v7926
    %v7969 = vpack.c.b16 %v7929, %v7927
    %v7970 = vpack.c.b16 %v7932, %v7930
    %v7971 = vpack.c.b16 %v7933, %v7931
    %v7972 = vpack.c.b16 %v7936, %v7934
    %v7973 = vpack.c.b16 %v7937, %v7935
    %v7974 = vpack.c.b16 %v7940, %v7938
    %v7975 = vpack.c.b16 %v7941, %v7939
    %v7976 = vpack.c.b16 %v7944, %v7942
    %v7977 = vpack.c.b16 %v7945, %v7943
    %8010 = vmatprep.subr.bf16.mxu0 %v7947
    %8011 = vmatpush1.bf16.msra.mxu0 %v7946
    %8012 = vmatprep.subr.bf16.mxu0 %v7949
    %8013 = vmatpush1.bf16.msra.mxu0 %v7948
    %8014 = vmatprep.subr.bf16.mxu0 %v7951
    %8015 = vmatpush1.bf16.msra.mxu0 %v7950
    %8016 = vmatprep.subr.bf16.mxu0 %v7953
    %8017 = vmatpush1.bf16.msra.mxu0 %v7952
    %8018 = vmatprep.subr.bf16.mxu0 %v7955
    %8019 = vmatpush1.bf16.msra.mxu0 %v7954
    %8020 = vmatprep.subr.bf16.mxu0 %v7957
    %8021 = vmatpush1.bf16.msra.mxu0 %v7956
    %8022 = vmatprep.subr.bf16.mxu0 %v7959
    %8023 = vmatpush1.bf16.msra.mxu0 %v7958
    %8024 = vmatprep.subr.bf16.mxu0 %v7961
    %8025 = vmatpush1.bf16.msra.mxu0 %v7960
    %8026 = vmatprep.subr.bf16.mxu0 %v7963
    %8027 = vmatpush1.bf16.msra.mxu0 %v7962
    %8028 = vmatprep.subr.bf16.mxu0 %v7965
    %8029 = vmatpush1.bf16.msra.mxu0 %v7964
    %8030 = vmatprep.subr.bf16.mxu0 %v7967
    %8031 = vmatpush1.bf16.msra.mxu0 %v7966
    %8032 = vmatprep.subr.bf16.mxu0 %v7969
    %8033 = vmatpush1.bf16.msra.mxu0 %v7968
    %8034 = vmatprep.subr.bf16.mxu0 %v7971
    %8035 = vmatpush1.bf16.msra.mxu0 %v7970
    %8036 = vmatprep.subr.bf16.mxu0 %v7973
    %8037 = vmatpush1.bf16.msra.mxu0 %v7972
    %8038 = vmatprep.subr.bf16.mxu0 %v7975
    %8039 = vmatpush1.bf16.msra.mxu0 %v7974
    %8040 = vmatprep.subr.bf16.mxu0 %v7977
    %8041 = vmatpush1.bf16.msra.mxu0 %v7976
    %8042 = vmatprep.mubr.bf16.mxu0 %v7805
    %8043 = vmatmul.mubr.bf16.gmra.mrb[0].mxu0 %v7804
    %v8044 = vpop.f32.mrb[0].mxu0
    %v8045 = vadd.f32 %v7843, %v8044
    %v8046 = vpop.f32.mrb[0].mxu0
    %v8047 = vadd.f32 %v7847, %v8046
    %v8048 = vpop.f32.mrb[0].mxu0
    %v8049 = vpop.f32.mrb[0].mxu0
    %8050 = vdwg.mxu0
    %v8051 = vmax.f32 %v8045, 0.0
    %v8052 = vmax.f32 %v8047, 0.0
    %v8053 = vld [vmem:[%s47] sm:$0x3]
    %v8055 = vlaneseq
    %v8056 = vshrl.u32 %v8055, 7
    %v8057 = vsub.s32 0, %v8056
    %v8058 = vrot.slane %v8053, %v8057
    %v8059 = vlaneseq
    %v8060 = vshrl.u32 %v8059, 7
    %v8061 = vsub.s32 1, %v8060
    %v8062 = vrot.slane %v8053, %v8061
    %v8065 = vmul.f32 %v8051, %v8058
    %v8066 = vmul.f32 %v8052, %v8062
    %v8067 = vld [vmem:[%s49] sm:$0x3]
    %v8069 = vlaneseq
    %v8070 = vshrl.u32 %v8069, 7
    %v8071 = vsub.s32 0, %v8070
    %v8072 = vrot.slane %v8067, %v8071
    %v8073 = vlaneseq
    %v8074 = vshrl.u32 %v8073, 7
    %v8075 = vsub.s32 1, %v8074
    %v8076 = vrot.slane %v8067, %v8075
    %v8079 = vadd.f32 %v8065, %v8072
    %v8080 = vadd.f32 %v8066, %v8076
    %v8081 = vpack.c.bf16 %v8079, %v8079
    %v8082 = vpack.c.bf16 %v8080, %v8080
    %v8083 = vld [vmem:[%s51] sm:$0xf]
    %v8084 = vld [vmem:[%s51 + $0x4] sm:$0xf]
    %v8085 = vld [vmem:[%s51 + $0x8] sm:$0xf]
    %v8086 = vld [vmem:[%s51 + $0xc] sm:$0xf]
    %v8087 = vld [vmem:[%s51 + $0x10] sm:$0xf]
    %v8088 = vld [vmem:[%s51 + $0x14] sm:$0xf]
    %v8089 = vld [vmem:[%s51 + $0x18] sm:$0xf]
    %v8090 = vld [vmem:[%s51 + $0x1c] sm:$0xf]
    %v8091 = vld [vmem:[%s51 + $0x20] sm:$0xf]
    %v8092 = vld [vmem:[%s51 + $0x24] sm:$0xf]
    %v8093 = vld [vmem:[%s51 + $0x28] sm:$0xf]
    %v8094 = vld [vmem:[%s51 + $0x2c] sm:$0xf]
    %v8095 = vld [vmem:[%s51 + $0x30] sm:$0xf]
    %v8096 = vld [vmem:[%s51 + $0x34] sm:$0xf]
    %v8097 = vld [vmem:[%s51 + $0x38] sm:$0xf]
    %v8098 = vld [vmem:[%s51 + $0x3c] sm:$0xf]
    %v8099 = vld [vmem:[%s51 + $0x40] sm:$0xf]
    %v8100 = vld [vmem:[%s51 + $0x44] sm:$0xf]
    %v8101 = vld [vmem:[%s51 + $0x48] sm:$0xf]
    %v8102 = vld [vmem:[%s51 + $0x4c] sm:$0xf]
    %v8103 = vld [vmem:[%s51 + $0x50] sm:$0xf]
    %v8104 = vld [vmem:[%s51 + $0x54] sm:$0xf]
    %v8105 = vld [vmem:[%s51 + $0x58] sm:$0xf]
    %v8106 = vld [vmem:[%s51 + $0x5c] sm:$0xf]
    %v8107 = vld [vmem:[%s51 + $0x60] sm:$0xf]
    %v8108 = vld [vmem:[%s51 + $0x64] sm:$0xf]
    %v8109 = vld [vmem:[%s51 + $0x68] sm:$0xf]
    %v8110 = vld [vmem:[%s51 + $0x6c] sm:$0xf]
    %v8111 = vld [vmem:[%s51 + $0x70] sm:$0xf]
    %v8112 = vld [vmem:[%s51 + $0x74] sm:$0xf]
    %v8113 = vld [vmem:[%s51 + $0x78] sm:$0xf]
    %v8114 = vld [vmem:[%s51 + $0x7c] sm:$0xf]
    %v8115 = vld [vmem:[%s53] sm:$0x1]
    %v8117 = vlaneseq
    %v8118 = vshrl.u32 %v8117, 7
    %v8119 = vsub.s32 0, %v8118
    %v8120 = vrot.slane %v8115, %v8119
    %v8154 = vunpack.c.l.b16 %v8083
    %v8155 = vunpack.c.l.b16 %v8084
    %v8156 = vunpack.c.l.b16 %v8085
    %v8157 = vunpack.c.l.b16 %v8086
    %v8158 = vunpack.c.l.b16 %v8087
    %v8159 = vunpack.c.l.b16 %v8088
    %v8160 = vunpack.c.l.b16 %v8089
    %v8161 = vunpack.c.l.b16 %v8090
    %v8162 = vunpack.c.l.b16 %v8091
    %v8163 = vunpack.c.l.b16 %v8092
    %v8164 = vunpack.c.l.b16 %v8093
    %v8165 = vunpack.c.l.b16 %v8094
    %v8166 = vunpack.c.l.b16 %v8095
    %v8167 = vunpack.c.l.b16 %v8096
    %v8168 = vunpack.c.l.b16 %v8097
    %v8169 = vunpack.c.l.b16 %v8098
    %v8170 = vunpack.c.l.b16 %v8099
    %v8171 = vunpack.c.l.b16 %v8100
    %v8172 = vunpack.c.l.b16 %v8101
    %v8173 = vunpack.c.l.b16 %v8102
    %v8174 = vunpack.c.l.b16 %v8103
    %v8175 = vunpack.c.l.b16 %v8104
    %v8176 = vunpack.c.l.b16 %v8105
    %v8177 = vunpack.c.l.b16 %v8106
    %v8178 = vunpack.c.l.b16 %v8107
    %v8179 = vunpack.c.l.b16 %v8108
    %v8180 = vunpack.c.l.b16 %v8109
    %v8181 = vunpack.c.l.b16 %v8110
    %v8182 = vunpack.c.l.b16 %v8111
    %v8183 = vunpack.c.l.b16 %v8112
    %v8184 = vunpack.c.l.b16 %v8113
    %v8185 = vunpack.c.l.b16 %v8114
    %v8186 = vpack.c.b16 %v8155, %v8154
    %v8187 = vpack.c.b16 %v8157, %v8156
    %v8188 = vpack.c.b16 %v8159, %v8158
    %v8189 = vpack.c.b16 %v8161, %v8160
    %v8190 = vpack.c.b16 %v8163, %v8162
    %v8191 = vpack.c.b16 %v8165, %v8164
    %v8192 = vpack.c.b16 %v8167, %v8166
    %v8193 = vpack.c.b16 %v8169, %v8168
    %v8194 = vpack.c.b16 %v8171, %v8170
    %v8195 = vpack.c.b16 %v8173, %v8172
    %v8196 = vpack.c.b16 %v8175, %v8174
    %v8197 = vpack.c.b16 %v8177, %v8176
    %v8198 = vpack.c.b16 %v8179, %v8178
    %v8199 = vpack.c.b16 %v8181, %v8180
    %v8200 = vpack.c.b16 %v8183, %v8182
    %v8201 = vpack.c.b16 %v8185, %v8184
    %8218 = vmatprep.subr.bf16.mxu0 0
    %8219 = vmatpush1.bf16.msra.mxu0 %v8186
    %8220 = vmatprep.subr.bf16.mxu0 0
    %8221 = vmatpush1.bf16.msra.mxu0 %v8187
    %8222 = vmatprep.subr.bf16.mxu0 0
    %8223 = vmatpush1.bf16.msra.mxu0 %v8188
    %8224 = vmatprep.subr.bf16.mxu0 0
    %8225 = vmatpush1.bf16.msra.mxu0 %v8189
    %8226 = vmatprep.subr.bf16.mxu0 0
    %8227 = vmatpush1.bf16.msra.mxu0 %v8190
    %8228 = vmatprep.subr.bf16.mxu0 0
    %8229 = vmatpush1.bf16.msra.mxu0 %v8191
    %8230 = vmatprep.subr.bf16.mxu0 0
    %8231 = vmatpush1.bf16.msra.mxu0 %v8192
    %8232 = vmatprep.subr.bf16.mxu0 0
    %8233 = vmatpush1.bf16.msra.mxu0 %v8193
    %8234 = vmatprep.subr.bf16.mxu0 0
    %8235 = vmatpush1.bf16.msra.mxu0 %v8194
    %8236 = vmatprep.subr.bf16.mxu0 0
    %8237 = vmatpush1.bf16.msra.mxu0 %v8195
    %8238 = vmatprep.subr.bf16.mxu0 0
    %8239 = vmatpush1.bf16.msra.mxu0 %v8196
    %8240 = vmatprep.subr.bf16.mxu0 0
    %8241 = vmatpush1.bf16.msra.mxu0 %v8197
    %8242 = vmatprep.subr.bf16.mxu0 0
    %8243 = vmatpush1.bf16.msra.mxu0 %v8198
    %8244 = vmatprep.subr.bf16.mxu0 0
    %8245 = vmatpush1.bf16.msra.mxu0 %v8199
    %8246 = vmatprep.subr.bf16.mxu0 0
    %8247 = vmatpush1.bf16.msra.mxu0 %v8200
    %8248 = vmatprep.subr.bf16.mxu0 0
    %8249 = vmatpush1.bf16.msra.mxu0 %v8201
    %8250 = vmatprep.mubr.bf16.mxu0 %v8082
    %8251 = vmatmul.mubr.bf16.gmra.mrb[0].mxu0 %v8081
    %v8252 = vpop.f32.mrb[0].mxu0
    %v8253 = vadd.f32 %v8120, %v8252
    %v8254 = vpop.f32.mrb[0].mxu0
    %v8255 = vpop.f32.mrb[0].mxu0
    %v8256 = vpop.f32.mrb[0].mxu0
    %8257 = vdwg.mxu0
    %v8258 = vmax.f32 %v8253, 0.0
    %v8259 = vld [vmem:[%s55] sm:$0x1]
    %v8261 = vlaneseq
    %v8262 = vshrl.u32 %v8261, 7
    %v8263 = vsub.s32 0, %v8262
    %v8264 = vrot.slane %v8259, %v8263
    %v8266 = vmul.f32 %v8258, %v8264
    %v8267 = vld [vmem:[%s57] sm:$0x1]
    %v8269 = vlaneseq
    %v8270 = vshrl.u32 %v8269, 7
    %v8271 = vsub.s32 0, %v8270
    %v8272 = vrot.slane %v8267, %v8271
    %v8274 = vadd.f32 %v8266, %v8272
    %v8275 = vpack.c.bf16 %v8274, %v8274
    %v8276 = vld [vmem:[%s59] sm:$0xf]
    %v8277 = vld [vmem:[%s59 + $0x4] sm:$0xf]
    %v8278 = vld [vmem:[%s59 + $0x8] sm:$0xf]
    %v8279 = vld [vmem:[%s59 + $0xc] sm:$0xf]
    %v8280 = vld [vmem:[%s59 + $0x10] sm:$0xf]
    %v8281 = vld [vmem:[%s59 + $0x14] sm:$0xf]
    %v8282 = vld [vmem:[%s59 + $0x18] sm:$0xf]
    %v8283 = vld [vmem:[%s59 + $0x1c] sm:$0xf]
    %v8284 = vld [vmem:[%s59 + $0x20] sm:$0xf]
    %v8285 = vld [vmem:[%s59 + $0x24] sm:$0xf]
    %v8286 = vld [vmem:[%s59 + $0x28] sm:$0xf]
    %v8287 = vld [vmem:[%s59 + $0x2c] sm:$0xf]
    %v8288 = vld [vmem:[%s59 + $0x30] sm:$0xf]
    %v8289 = vld [vmem:[%s59 + $0x34] sm:$0xf]
    %v8290 = vld [vmem:[%s59 + $0x38] sm:$0xf]
    %v8291 = vld [vmem:[%s59 + $0x3c] sm:$0xf]
    %v8292 = vld [vmem:[%s61] sm:$0x1]
    %v8294 = vlaneseq
    %v8295 = vshrl.u32 %v8294, 7
    %v8296 = vsub.s32 0, %v8295
    %v8297 = vrot.slane %v8292, %v8296
    %v8315 = vunpack.c.l.b16 %v8276
    %v8316 = vunpack.c.l.b16 %v8277
    %v8317 = vunpack.c.l.b16 %v8278
    %v8318 = vunpack.c.l.b16 %v8279
    %v8319 = vunpack.c.l.b16 %v8280
    %v8320 = vunpack.c.l.b16 %v8281
    %v8321 = vunpack.c.l.b16 %v8282
    %v8322 = vunpack.c.l.b16 %v8283
    %v8323 = vunpack.c.l.b16 %v8284
    %v8324 = vunpack.c.l.b16 %v8285
    %v8325 = vunpack.c.l.b16 %v8286
    %v8326 = vunpack.c.l.b16 %v8287
    %v8327 = vunpack.c.l.b16 %v8288
    %v8328 = vunpack.c.l.b16 %v8289
    %v8329 = vunpack.c.l.b16 %v8290
    %v8330 = vunpack.c.l.b16 %v8291
    %v8331 = vpack.c.b16 %v8316, %v8315
    %v8332 = vpack.c.b16 %v8318, %v8317
    %v8333 = vpack.c.b16 %v8320, %v8319
    %v8334 = vpack.c.b16 %v8322, %v8321
    %v8335 = vpack.c.b16 %v8324, %v8323
    %v8336 = vpack.c.b16 %v8326, %v8325
    %v8337 = vpack.c.b16 %v8328, %v8327
    %v8338 = vpack.c.b16 %v8330, %v8329
    %8347 = vmatprep.subr.bf16.mxu0 0
    %8348 = vmatpush1.bf16.msra.mxu0 %v8331
    %8349 = vmatprep.subr.bf16.mxu0 0
    %8350 = vmatpush1.bf16.msra.mxu0 %v8332
    %8351 = vmatprep.subr.bf16.mxu0 0
    %8352 = vmatpush1.bf16.msra.mxu0 %v8333
    %8353 = vmatprep.subr.bf16.mxu0 0
    %8354 = vmatpush1.bf16.msra.mxu0 %v8334
    %8355 = vmatprep.subr.bf16.mxu0 0
    %8356 = vmatpush1.bf16.msra.mxu0 %v8335
    %8357 = vmatprep.subr.bf16.mxu0 0
    %8358 = vmatpush1.bf16.msra.mxu0 %v8336
    %8359 = vmatprep.subr.bf16.mxu0 0
    %8360 = vmatpush1.bf16.msra.mxu0 %v8337
    %8361 = vmatprep.subr.bf16.mxu0 0
    %8362 = vmatpush1.bf16.msra.mxu0 %v8338
    %8363 = vmatprep.subr.bf16.mxu0 0
    %8364 = vmatpush1.bf16.msra.mxu0 0
    %8365 = vmatprep.subr.bf16.mxu0 0
    %8366 = vmatpush1.bf16.msra.mxu0 0
    %8367 = vmatprep.subr.bf16.mxu0 0
    %8368 = vmatpush1.bf16.msra.mxu0 0
    %8369 = vmatprep.subr.bf16.mxu0 0
    %8370 = vmatpush1.bf16.msra.mxu0 0
    %8371 = vmatprep.subr.bf16.mxu0 0
    %8372 = vmatpush1.bf16.msra.mxu0 0
    %8373 = vmatprep.subr.bf16.mxu0 0
    %8374 = vmatpush1.bf16.msra.mxu0 0
    %8375 = vmatprep.subr.bf16.mxu0 0
    %8376 = vmatpush1.bf16.msra.mxu0 0
    %8377 = vmatprep.subr.bf16.mxu0 0
    %8378 = vmatpush1.bf16.msra.mxu0 0
    %8379 = vmatprep.mubr.bf16.mxu0 0
    %8380 = vmatmul.mubr.bf16.gmra.mrb[0].mxu0 %v8275
    %v8381 = vpop.f32.mrb[0].mxu0
    %v8382 = vadd.f32 %v8297, %v8381
    %v8383 = vpop.f32.mrb[0].mxu0
    %v8384 = vpop.f32.mrb[0].mxu0
    %v8385 = vpop.f32.mrb[0].mxu0
    %8386 = vdwg.mxu0
    %vm8387 = vcmask 58368
    %v8388 = vsel %vm8387, %v8382, -inf
    %8389 = vmax.xlane.f32.xlu0 %v8388
    %v8390 = vpop.xlane.xlu0 %8389
    %v8391 = vsub.f32 %v8382, %v8390
    %v8392 = vmul.f32 %v8391, 1.442695
    %v8393 = vpow.pop %v8392
    %v8394 = vsel %vm8387, %v8393, 0.0
    %8395 = vadd.xlane.f32.xlu0 %v8394
    %v8396 = vpop.xlane.xlu0 %8395
    %v8397 = vlog2.pop %v8396
    %v8398 = vmul.f32 %v8397, 0.6931472
    %v8399 = vsub.f32 %v8391, %v8398
    %8400 = vst.msk [vmem:[#allocation4] sm:$0x3] %vm8387, %v8399
    // Predicated region
    $region126: #{spline_conv_net.1} parent=1 // pred_check
      _
    $region127: #{spline_conv_net.1} parent=1 // pred_check_branch
      %8402 = sbr.rel (0) target = $region129
    $region128: #{spline_conv_net.1} parent=1 // pred_region
      %s8404 = ssub.s32 32, 32
      %8405 = vsyncadd [#allocation5], %s8404
      %s8407 = sshll.u32 [#allocation4], 4
      %s8408 = int_to_ptr.vmem [resolvable:$true] %s8407
      %8410 = dma.vmem_to_hbm [thread:$0]  %s8408, 32, %s63, [#allocation5]
    $region129: #{spline_conv_net.1} parent=1 // pred_fallthru
      _
    // Predicated region
    $region130: #{spline_conv_net.1} parent=1 // pred_check
      _
    $region131: #{spline_conv_net.1} parent=1 // pred_check_branch
      %8412 = sbr.rel (0) target = $region133
    $region132: #{spline_conv_net.1} parent=1 // pred_region
      %8413 = dma.done [#allocation5], 32
    $region133: #{spline_conv_net.1} parent=1 // pred_fallthru
      _
    %8414 = vsyncpa [#allocation5], 1

</llo_original>
